<compile_context>
chip_gen: v6e
topology: v6e:2x2x1
jax: 0.10.0
libtpu: 0.0.40
codegen_flags: <defaults>
</compile_context>

<pallas_src>
import functools

import jax
import jax.numpy as jnp
from jax.experimental import pallas as pl
from jax.experimental.pallas import tpu as pltpu

EPS = 1e-5
LANE = 128
# Kernel taps per output phase for ConvTranspose2d(k=4, s=2, p=1):
# output phase r, input-window offset t (0, 1) -> kernel index _KH[r][t].
_KH = ((3, 1), (2, 0))


# ----------------------------- Pallas kernels ------------------------------ #

def _dense_bn_relu_kernel(x_ref, w_ref, g_ref, b_ref, o_ref,
                          y_ref, s_ref, q_ref):
    """Layer 1: (B,128)@(128,896) per grid step; BN(train)+ReLU at the end.

    Columns are ordered (h, w, channel): every 128-wide lane chunk is one
    spatial position across all 128 output channels, so per-channel batch
    statistics accumulate chunk-by-chunk (all slices lane-aligned)."""
    j = pl.program_id(0)
    nj = pl.num_programs(0)

    @pl.when(j == 0)
    def _():
        s_ref[...] = jnp.zeros_like(s_ref)
        q_ref[...] = jnp.zeros_like(q_ref)

    y = jnp.dot(x_ref[...], w_ref[...], preferred_element_type=jnp.float32)
    y_ref[j] = y                                   # stash raw f32 tile
    n_pos = y.shape[1] // LANE
    s = s_ref[...]
    q = q_ref[...]
    for p in range(n_pos):
        c = y[:, p * LANE:(p + 1) * LANE]
        s = s + jnp.sum(c, axis=0, keepdims=True)
        q = q + jnp.sum(c * c, axis=0, keepdims=True)
    s_ref[...] = s
    q_ref[...] = q

    @pl.when(j == nj - 1)
    def _():
        total = o_ref.shape[0] * (o_ref.shape[1] // LANE)   # B * 49
        mean = s_ref[...] / total
        var = jnp.maximum(q_ref[...] / total - mean * mean, 0.0)
        scale = jax.lax.rsqrt(var + EPS) * g_ref[...]
        shift = b_ref[...] - mean * scale
        n_tiles = y_ref.shape[0]
        tile_cols = y_ref.shape[2]
        per = tile_cols // LANE
        for jj in range(n_tiles):
            yb = y_ref[jj]                                   # (B, tile_cols)
            for p in range(per):
                col = jj * tile_cols + p * LANE
                chunk = yb[:, p * LANE:(p + 1) * LANE] * scale + shift
                o_ref[:, col:col + LANE] = jnp.maximum(chunk, 0.0).astype(o_ref.dtype)


def _conv2_bn_relu_kernel(t_ref, w_ref, g_ref, b_ref, o_ref, y_ref):
    """Layer 2: 4 sub-pixel phases, each as a sum of 4 per-tap K=128 matmuls
    over the shared 9-tap halo stack; training-mode BN+ReLU fused across all
    phases. Padded channels (64..127) have zero weights/gamma/beta -> stay 0."""
    M = t_ref.shape[1]
    s = jnp.zeros((1, LANE), jnp.float32)
    q = jnp.zeros((1, LANE), jnp.float32)
    for p in range(4):
        r, c = p // 2, p % 2
        acc = jnp.zeros((M, LANE), jnp.float32)
        for t in range(2):
            for u in range(2):
                a, b = r + t, c + u
                acc = acc + jnp.dot(t_ref[a * 3 + b], w_ref[p, 2 * t + u],
                                    preferred_element_type=jnp.float32)
        y_ref[p] = acc                                      # park un-normalized
        s = s + jnp.sum(acc, axis=0, keepdims=True)
        q = q + jnp.sum(acc * acc, axis=0, keepdims=True)
    cnt = 4 * M
    mean = s / cnt
    var = jnp.maximum(q / cnt - mean * mean, 0.0)
    scale = jax.lax.rsqrt(var + EPS) * g_ref[...]
    shift = b_ref[...] - mean * scale
    for p in range(4):
        o_ref[p] = jnp.maximum(y_ref[p] * scale + shift, 0.0).astype(o_ref.dtype)


def _conv3_tanh_kernel(t_ref, w_ref, o_ref):
    """Layer 3: phases-in-lanes. Sum of 9 per-tap K=64 matmuls into a single
    (bm, 128) slab (lanes 0..3 = the 4 sub-pixel phases), tanh once, bf16."""
    acc = jnp.dot(t_ref[0], w_ref[0], preferred_element_type=jnp.float32)
    for k in range(1, 9):
        acc = acc + jnp.dot(t_ref[k], w_ref[k],
                            preferred_element_type=jnp.float32)
    o_ref[...] = jnp.tanh(acc).astype(o_ref.dtype)


# ------------------------------ Pallas wrappers ----------------------------- #

def _dense_bn_relu(x, w, g, b, tile_cols=7 * LANE):
    M, K = x.shape
    N = w.shape[1]
    assert N % tile_cols == 0
    nt = N // tile_cols
    return pl.pallas_call(
        _dense_bn_relu_kernel,
        out_shape=jax.ShapeDtypeStruct((M, N), jnp.bfloat16),
        grid=(nt,),
        in_specs=[
            pl.BlockSpec((M, K), lambda j: (0, 0)),
            pl.BlockSpec((K, tile_cols), lambda j: (0, j)),
            pl.BlockSpec((1, LANE), lambda j: (0, 0)),
            pl.BlockSpec((1, LANE), lambda j: (0, 0)),
        ],
        out_specs=pl.BlockSpec((M, N), lambda j: (0, 0)),   # resident output
        scratch_shapes=[
            pltpu.VMEM((nt, M, tile_cols), jnp.float32),    # raw activations
            pltpu.VMEM((1, LANE), jnp.float32),             # sum
            pltpu.VMEM((1, LANE), jnp.float32),             # sum of squares
        ],
        compiler_params=pltpu.CompilerParams(
            dimension_semantics=("arbitrary",)),
    )(x, w, g, b)


def _conv2_bn_relu(taps, w, g, b):
    _, M, C = taps.shape
    N = w.shape[-1]
    return pl.pallas_call(
        _conv2_bn_relu_kernel,
        out_shape=jax.ShapeDtypeStruct((4, M, N), jnp.bfloat16),
        grid=(1,),
        in_specs=[
            pl.BlockSpec((9, M, C), lambda i: (0, 0, 0)),
            pl.BlockSpec((4, 4, C, N), lambda i: (0, 0, 0, 0)),
            pl.BlockSpec((1, N), lambda i: (0, 0)),
            pl.BlockSpec((1, N), lambda i: (0, 0)),
        ],
        out_specs=pl.BlockSpec((4, M, N), lambda i: (0, 0, 0)),
        scratch_shapes=[pltpu.VMEM((4, M, N), jnp.float32)],
    )(taps, w, g, b)


def _conv3_tanh(taps, w, block_m=128):
    _, M, C = taps.shape
    N = w.shape[-1]
    bm = min(block_m, M)
    grid = (pl.cdiv(M, bm),)
    return pl.pallas_call(
        _conv3_tanh_kernel,
        out_shape=jax.ShapeDtypeStruct((M, N), jnp.bfloat16),
        grid=grid,
        in_specs=[
            pl.BlockSpec((9, bm, C), lambda m: (0, m, 0)),
            pl.BlockSpec((9, C, N), lambda m: (0, 0, 0)),
        ],
        out_specs=pl.BlockSpec((bm, N), lambda m: (m, 0)),
        compiler_params=pltpu.CompilerParams(
            dimension_semantics=("parallel",)),
    )(taps, w)


# ----------------- ConvTranspose2d (k=4, s=2, p=1) glue --------------------- #

def _tap_stack(x):
    """NHWC x -> shared 9-tap halo stack (9, B*H*W, C); tap (a, b) with
    a,b in {0,1,2} reads padded-x rows/cols shifted by (a, b)."""
    B, H, W, C = x.shape
    xp = jnp.pad(x, ((0, 0), (1, 1), (1, 1), (0, 0)))
    taps = [xp[:, a:a + H, b:b + W, :].reshape(B * H * W, C)
            for a in range(3) for b in range(3)]
    return jnp.stack(taps, axis=0)


def _phase_tap_weights(w, n_out):
    """w: ConvTranspose2d weight (Cin, Cout, 4, 4) -> (4 phases, 4 taps, Cin,
    n_out); output channels zero-padded to n_out for lane-dense stores."""
    cin, cout = w.shape[0], w.shape[1]
    phases = []
    for r in (0, 1):
        for c in (0, 1):
            taps = []
            for t in (0, 1):
                for u in (0, 1):
                    kh, kw = _KH[r][t], _KH[c][u]
                    taps.append(w[:, :, kh, kw])            # (Cin, Cout)
            phases.append(jnp.stack(taps, axis=0))          # (4, Cin, Cout)
    wm = jnp.stack(phases, axis=0)                          # (4, 4, Cin, Cout)
    if n_out > cout:
        wm = jnp.pad(wm, ((0, 0), (0, 0), (0, 0), (0, n_out - cout)))
    return wm


def _phase_lane_weights(w, n_lanes):
    """w: ConvTranspose2d weight (Cin, 1, 4, 4) -> (9 taps, Cin, n_lanes) with
    lane p = 2*r + c holding the weights of sub-pixel phase (r, c); taps not
    used by a phase get zero rows."""
    cin = w.shape[0]
    mats = jnp.zeros((9, cin, n_lanes), jnp.float32)
    for r in (0, 1):
        for c in (0, 1):
            p = 2 * r + c
            for t in (0, 1):
                for u in (0, 1):
                    a, b = r + t, c + u
                    kh, kw = _KH[r][t], _KH[c][u]
                    mats = mats.at[a * 3 + b, :, p].set(w[:, 0, kh, kw])
    return mats


def _interleave_phases(yp, B, H, W):
    """(4, B*H*W, C) phase outputs (phase = 2*r + c) -> NHWC (B, 2H, 2W, C)."""
    C = yp.shape[-1]
    y = yp.reshape(2, 2, B, H, W, C).transpose(2, 3, 0, 4, 1, 5)
    return y.reshape(B, 2 * H, 2 * W, C)


# ------------------------------ Generator fwd ------------------------------ #

def prepare_params(params):
    """One-time weight preprocessing (keep out of the per-step forward)."""
    k_in = params["w1"].shape[0]
    kp = pl.cdiv(k_in, LANE) * LANE
    w1 = params["w1"].transpose(0, 2, 3, 1).reshape(k_in, -1)
    w1 = jnp.pad(w1, ((0, kp - k_in), (0, 0))).astype(jnp.bfloat16)
    c2 = params["g2"].shape[0]
    return {
        "embed": params["embed"],
        "k_in": k_in, "kp": kp, "c2": c2,
        "w1": w1,
        "g1": params["g1"][None, :].astype(jnp.float32),
        "b1": params["b1"][None, :].astype(jnp.float32),
        "w2": _phase_tap_weights(params["w2"], LANE).astype(jnp.bfloat16),
        "g2": jnp.pad(params["g2"], (0, LANE - c2))[None, :].astype(jnp.float32),
        "b2": jnp.pad(params["b2"], (0, LANE - c2))[None, :].astype(jnp.float32),
        "w3": _phase_lane_weights(params["w3"], LANE).astype(jnp.bfloat16),
    }


def generator_forward(p, z, labels):
    B = z.shape[0]
    # Embedding lookup + concat (XLA glue).
    emb = p["embed"][labels]                                 # (B, 10)
    x = jnp.concatenate([z, emb], axis=1)                    # (B, 110)
    x = jnp.pad(x, ((0, 0), (0, p["kp"] - p["k_in"]))).astype(jnp.bfloat16)

    # Layer 1: ConvTranspose2d(110->128, 7, 1, 0) + BN + ReLU (dense matmul).
    h = _dense_bn_relu(x, p["w1"], p["g1"], p["b1"])         # (B, 6272) bf16
    h = h.reshape(B, 7, 7, LANE)                             # NHWC

    # Layer 2: ConvTranspose2d(128->64, 4, 2, 1) + BN + ReLU (sub-pixel).
    taps2 = _tap_stack(h)                                    # (9, B*49, 128)
    y2 = _conv2_bn_relu(taps2, p["w2"], p["g2"], p["b2"])    # (4, B*49, 128)
    h2 = _interleave_phases(y2, B, 7, 7)                     # (B, 14, 14, 128)

    # Layer 3: ConvTranspose2d(64->1, 4, 2, 1) + Tanh; only the 64 real
    # channels feed the kernel (effective K = 9*64 = 576), phases in lanes.
    taps3 = _tap_stack(h2[..., :p["c2"]])                    # (9, B*196, 64)
    y3 = _conv3_tanh(taps3, p["w3"])                         # (B*196, 128) bf16
    y3 = y3[:, :4].astype(jnp.float32)                       # 4 real phases
    img = y3.reshape(B, 14, 14, 2, 2).transpose(0, 1, 3, 2, 4).reshape(B, 28, 28)
    return img[:, None, :, :]                                # NCHW (B,1,28,28)


# ------------------------- Pure-JAX reference (f32) ------------------------- #

def _conv_transpose_s2_ref(x_nhwc, w_pt):
    wref = jnp.flip(w_pt, (2, 3)).transpose(2, 3, 0, 1)      # HWIO
    return jax.lax.conv_general_dilated(
        x_nhwc, wref, window_strides=(1, 1), padding=((2, 2), (2, 2)),
        lhs_dilation=(2, 2), dimension_numbers=("NHWC", "HWIO", "NHWC"))


def _bn_relu_ref(y, g, b):
    mean = y.mean(axis=(0, 1, 2))
    var = y.var(axis=(0, 1, 2))
    return jnp.maximum((y - mean) * jax.lax.rsqrt(var + EPS) * g + b, 0.0)


def reference_forward(params, z, labels):
    emb = params["embed"][labels]
    x = jnp.concatenate([z, emb], axis=1)
    y1 = jnp.einsum("bc,cohw->bhwo", x, params["w1"])
    h = _bn_relu_ref(y1, params["g1"], params["b1"])
    h2 = _bn_relu_ref(_conv_transpose_s2_ref(h, params["w2"]),
                      params["g2"], params["b2"])
    y3 = _conv_transpose_s2_ref(h2, params["w3"])
    return jnp.tanh(y3).transpose(0, 3, 1, 2)


def init_params(key, latent_dim=100):
    ks = jax.random.split(key, 4)
    return {
        "embed": jax.random.normal(ks[0], (10, 10), jnp.float32),
        "w1": 0.05 * jax.random.normal(ks[1], (latent_dim + 10, 128, 7, 7), jnp.float32),
        "g1": jnp.ones((128,), jnp.float32),
        "b1": jnp.zeros((128,), jnp.float32),
        "w2": 0.05 * jax.random.normal(ks[2], (128, 64, 4, 4), jnp.float32),
        "g2": jnp.ones((64,), jnp.float32),
        "b2": jnp.zeros((64,), jnp.float32),
        "w3": 0.05 * jax.random.normal(ks[3], (64, 1, 4, 4), jnp.float32),
    }


if __name__ == "__main__":
    latent_dim = 100
    B = 2

    key = jax.random.PRNGKey(0)
    kparam, kz, kl = jax.random.split(key, 3)
    params = init_params(kparam, latent_dim)
    z = jax.random.normal(kz, (B, latent_dim), jnp.float32)
    labels = jax.random.randint(kl, (B,), 0, 10)

    prepped = prepare_params(params)
    fwd = jax.jit(functools.partial(generator_forward, prepped))
    out = jax.block_until_ready(fwd(z, labels))

    assert out.shape == (B, 1, 28, 28), out.shape
    assert bool(jnp.all(jnp.isfinite(out)))
    assert bool(jnp.all(jnp.abs(out) <= 1.0))

    # Numerical parity vs. pure-JAX f32 reference (bf16 matmuls => loose tol).
    ref = reference_forward(params, z, labels)
    err = float(jnp.max(jnp.abs(out - ref)))
    assert err < 8e-2, f"max abs error vs reference: {err}"

    print("KERNEL_OK")
</pallas_src>

<mosaic_0001>
module attributes {stable_mosaic.version = 11 : i64} {
  func.func @_dense_bn_relu_kernel(%arg0: i32, %arg1: memref<2x128xbf16, #tpu.memory_space<vmem>>, %arg2: memref<128x896xbf16, #tpu.memory_space<vmem>>, %arg3: memref<1x128xf32, #tpu.memory_space<vmem>>, %arg4: memref<1x128xf32, #tpu.memory_space<vmem>>, %arg5: memref<2x6272xbf16, #tpu.memory_space<vmem>>, %arg6: memref<7x2x896xf32, #tpu.memory_space<vmem>>, %arg7: memref<1x128xf32, #tpu.memory_space<vmem>>, %arg8: memref<1x128xf32, #tpu.memory_space<vmem>>) attributes {dimension_semantics = [#tpu.dimension_semantics<arbitrary>], iteration_bounds = array<i64: 7>, scalar_prefetch = 0 : i64, scratch_operands = 3 : i64, tpu.core_type = #tpu.core_type<tc>, window_params = [{pipeline_mode = #tpu.pipeline_mode<synchronous>, transform_indices = @transform_0, window_bounds = array<i64: 2, 128>}, {transform_indices = @transform_1, window_bounds = array<i64: 128, 896>}, {pipeline_mode = #tpu.pipeline_mode<synchronous>, transform_indices = @transform_2, window_bounds = array<i64: 1, 128>}, {pipeline_mode = #tpu.pipeline_mode<synchronous>, transform_indices = @transform_3, window_bounds = array<i64: 1, 128>}, {pipeline_mode = #tpu.pipeline_mode<synchronous>, transform_indices = @transform_4, window_bounds = array<i64: 2, 6272>}]} {
    %c0_i32 = arith.constant 0 : i32
    %0 = arith.cmpi eq, %arg0, %c0_i32 : i32
    %1 = arith.extui %0 : i1 to i32
    %c0_i32_0 = arith.constant 0 : i32
    %2 = arith.cmpi ne, %1, %c0_i32_0 : i32
    scf.if %2 {
      %cst_29 = arith.constant 0.000000e+00 : f32
      %73 = vector.broadcast %cst_29 : f32 to vector<1x128xf32>
      %c0_30 = arith.constant 0 : index
      %c0_31 = arith.constant 0 : index
      %74 = vector.load %arg7[%c0_30, %c0_31] : memref<1x128xf32, #tpu.memory_space<vmem>>, vector<1x128xf32>
      tpu.vector_store %arg7[%c0_30, %c0_31], %73 {strides = array<i32>} : memref<1x128xf32, #tpu.memory_space<vmem>>, vector<1x128xf32>,
      %cst_32 = arith.constant 0.000000e+00 : f32
      %75 = vector.broadcast %cst_32 : f32 to vector<1x128xf32>
      %c0_33 = arith.constant 0 : index
      %c0_34 = arith.constant 0 : index
      %76 = vector.load %arg8[%c0_33, %c0_34] : memref<1x128xf32, #tpu.memory_space<vmem>>, vector<1x128xf32>
      tpu.vector_store %arg8[%c0_33, %c0_34], %75 {strides = array<i32>} : memref<1x128xf32, #tpu.memory_space<vmem>>, vector<1x128xf32>,
    } else {
    }
    %c0 = arith.constant 0 : index
    %c0_1 = arith.constant 0 : index
    %3 = vector.load %arg1[%c0, %c0_1] : memref<2x128xbf16, #tpu.memory_space<vmem>>, vector<2x128xbf16>
    %c0_2 = arith.constant 0 : index
    %c0_3 = arith.constant 0 : index
    %4 = vector.load %arg2[%c0_2, %c0_3] : memref<128x896xbf16, #tpu.memory_space<vmem>>, vector<128x896xbf16>
    %cst = arith.constant dense<0.000000e+00> : vector<2x896xf32>
    %5 = tpu.matmul %3, %4, %cst {dimension_numbers = #tpu.dot_dimension_numbers<[1], [0], [0], [1], [0, 0, 1, 1], [], []>} : vector<2x128xbf16>, vector<128x896xbf16>, vector<2x896xf32> -> vector<2x896xf32>
    %6 = arith.index_cast %arg0 : i32 to index
    %c0_4 = arith.constant 0 : index
    %c0_5 = arith.constant 0 : index
    %7 = vector.load %arg6[%6, %c0_4, %c0_5] : memref<7x2x896xf32, #tpu.memory_space<vmem>>, vector<1x2x896xf32>
    %8 = vector.shape_cast %7 : vector<1x2x896xf32> to vector<2x896xf32>
    %9 = vector.shape_cast %5 : vector<2x896xf32> to vector<1x2x896xf32>
    tpu.vector_store %arg6[%6, %c0_4, %c0_5], %9 {strides = array<i32>} : memref<7x2x896xf32, #tpu.memory_space<vmem>>, vector<1x2x896xf32>,
    %c0_6 = arith.constant 0 : index
    %c0_7 = arith.constant 0 : index
    %10 = vector.load %arg7[%c0_6, %c0_7] : memref<1x128xf32, #tpu.memory_space<vmem>>, vector<1x128xf32>
    %c0_8 = arith.constant 0 : index
    %c0_9 = arith.constant 0 : index
    %11 = vector.load %arg8[%c0_8, %c0_9] : memref<1x128xf32, #tpu.memory_space<vmem>>, vector<1x128xf32>
    %12 = vector.extract_strided_slice %5 {offsets = [0, 0], sizes = [2, 128], strides = [1, 1]} : vector<2x896xf32> to vector<2x128xf32>
    %cst_10 = arith.constant dense<0.000000e+00> : vector<128xf32>
    %13 = vector.multi_reduction <add>, %12, %cst_10 [0] : vector<2x128xf32> to vector<128xf32>
    %14 = vector.shape_cast %13 : vector<128xf32> to vector<1x128xf32>
    %15 = arith.addf %10, %14 : vector<1x128xf32>
    %16 = arith.mulf %12, %12 : vector<2x128xf32>
    %cst_11 = arith.constant dense<0.000000e+00> : vector<128xf32>
    %17 = vector.multi_reduction <add>, %16, %cst_11 [0] : vector<2x128xf32> to vector<128xf32>
    %18 = vector.shape_cast %17 : vector<128xf32> to vector<1x128xf32>
    %19 = arith.addf %11, %18 : vector<1x128xf32>
    %20 = vector.extract_strided_slice %5 {offsets = [0, 128], sizes = [2, 128], strides = [1, 1]} : vector<2x896xf32> to vector<2x128xf32>
    %cst_12 = arith.constant dense<0.000000e+00> : vector<128xf32>
    %21 = vector.multi_reduction <add>, %20, %cst_12 [0] : vector<2x128xf32> to vector<128xf32>
    %22 = vector.shape_cast %21 : vector<128xf32> to vector<1x128xf32>
    %23 = arith.addf %15, %22 : vector<1x128xf32>
    %24 = arith.mulf %20, %20 : vector<2x128xf32>
    %cst_13 = arith.constant dense<0.000000e+00> : vector<128xf32>
    %25 = vector.multi_reduction <add>, %24, %cst_13 [0] : vector<2x128xf32> to vector<128xf32>
    %26 = vector.shape_cast %25 : vector<128xf32> to vector<1x128xf32>
    %27 = arith.addf %19, %26 : vector<1x128xf32>
    %28 = vector.extract_strided_slice %5 {offsets = [0, 256], sizes = [2, 128], strides = [1, 1]} : vector<2x896xf32> to vector<2x128xf32>
    %cst_14 = arith.constant dense<0.000000e+00> : vector<128xf32>
    %29 = vector.multi_reduction <add>, %28, %cst_14 [0] : vector<2x128xf32> to vector<128xf32>
    %30 = vector.shape_cast %29 : vector<128xf32> to vector<1x128xf32>
    %31 = arith.addf %23, %30 : vector<1x128xf32>
    %32 = arith.mulf %28, %28 : vector<2x128xf32>
    %cst_15 = arith.constant dense<0.000000e+00> : vector<128xf32>
    %33 = vector.multi_reduction <add>, %32, %cst_15 [0] : vector<2x128xf32> to vector<128xf32>
    %34 = vector.shape_cast %33 : vector<128xf32> to vector<1x128xf32>
    %35 = arith.addf %27, %34 : vector<1x128xf32>
    %36 = vector.extract_strided_slice %5 {offsets = [0, 384], sizes = [2, 128], strides = [1, 1]} : vector<2x896xf32> to vector<2x128xf32>
    %cst_16 = arith.constant dense<0.000000e+00> : vector<128xf32>
    %37 = vector.multi_reduction <add>, %36, %cst_16 [0] : vector<2x128xf32> to vector<128xf32>
    %38 = vector.shape_cast %37 : vector<128xf32> to vector<1x128xf32>
    %39 = arith.addf %31, %38 : vector<1x128xf32>
    %40 = arith.mulf %36, %36 : vector<2x128xf32>
    %cst_17 = arith.constant dense<0.000000e+00> : vector<128xf32>
    %41 = vector.multi_reduction <add>, %40, %cst_17 [0] : vector<2x128xf32> to vector<128xf32>
    %42 = vector.shape_cast %41 : vector<128xf32> to vector<1x128xf32>
    %43 = arith.addf %35, %42 : vector<1x128xf32>
    %44 = vector.extract_strided_slice %5 {offsets = [0, 512], sizes = [2, 128], strides = [1, 1]} : vector<2x896xf32> to vector<2x128xf32>
    %cst_18 = arith.constant dense<0.000000e+00> : vector<128xf32>
    %45 = vector.multi_reduction <add>, %44, %cst_18 [0] : vector<2x128xf32> to vector<128xf32>
    %46 = vector.shape_cast %45 : vector<128xf32> to vector<1x128xf32>
    %47 = arith.addf %39, %46 : vector<1x128xf32>
    %48 = arith.mulf %44, %44 : vector<2x128xf32>
    %cst_19 = arith.constant dense<0.000000e+00> : vector<128xf32>
    %49 = vector.multi_reduction <add>, %48, %cst_19 [0] : vector<2x128xf32> to vector<128xf32>
    %50 = vector.shape_cast %49 : vector<128xf32> to vector<1x128xf32>
    %51 = arith.addf %43, %50 : vector<1x128xf32>
    %52 = vector.extract_strided_slice %5 {offsets = [0, 640], sizes = [2, 128], strides = [1, 1]} : vector<2x896xf32> to vector<2x128xf32>
    %cst_20 = arith.constant dense<0.000000e+00> : vector<128xf32>
    %53 = vector.multi_reduction <add>, %52, %cst_20 [0] : vector<2x128xf32> to vector<128xf32>
    %54 = vector.shape_cast %53 : vector<128xf32> to vector<1x128xf32>
    %55 = arith.addf %47, %54 : vector<1x128xf32>
    %56 = arith.mulf %52, %52 : vector<2x128xf32>
    %cst_21 = arith.constant dense<0.000000e+00> : vector<128xf32>
    %57 = vector.multi_reduction <add>, %56, %cst_21 [0] : vector<2x128xf32> to vector<128xf32>
    %58 = vector.shape_cast %57 : vector<128xf32> to vector<1x128xf32>
    %59 = arith.addf %51, %58 : vector<1x128xf32>
    %60 = vector.extract_strided_slice %5 {offsets = [0, 768], sizes = [2, 128], strides = [1, 1]} : vector<2x896xf32> to vector<2x128xf32>
    %cst_22 = arith.constant dense<0.000000e+00> : vector<128xf32>
    %61 = vector.multi_reduction <add>, %60, %cst_22 [0] : vector<2x128xf32> to vector<128xf32>
    %62 = vector.shape_cast %61 : vector<128xf32> to vector<1x128xf32>
    %63 = arith.addf %55, %62 : vector<1x128xf32>
    %64 = arith.mulf %60, %60 : vector<2x128xf32>
    %cst_23 = arith.constant dense<0.000000e+00> : vector<128xf32>
    %65 = vector.multi_reduction <add>, %64, %cst_23 [0] : vector<2x128xf32> to vector<128xf32>
    %66 = vector.shape_cast %65 : vector<128xf32> to vector<1x128xf32>
    %67 = arith.addf %59, %66 : vector<1x128xf32>
    %c0_24 = arith.constant 0 : index
    %c0_25 = arith.constant 0 : index
    %68 = vector.load %arg7[%c0_24, %c0_25] : memref<1x128xf32, #tpu.memory_space<vmem>>, vector<1x128xf32>
    tpu.vector_store %arg7[%c0_24, %c0_25], %63 {strides = array<i32>} : memref<1x128xf32, #tpu.memory_space<vmem>>, vector<1x128xf32>,
    %c0_26 = arith.constant 0 : index
    %c0_27 = arith.constant 0 : index
    %69 = vector.load %arg8[%c0_26, %c0_27] : memref<1x128xf32, #tpu.memory_space<vmem>>, vector<1x128xf32>
    tpu.vector_store %arg8[%c0_26, %c0_27], %67 {strides = array<i32>} : memref<1x128xf32, #tpu.memory_space<vmem>>, vector<1x128xf32>,
    %c6_i32 = arith.constant 6 : i32
    %70 = arith.cmpi eq, %arg0, %c6_i32 : i32
    %71 = arith.extui %70 : i1 to i32
    %c0_i32_28 = arith.constant 0 : i32
    %72 = arith.cmpi ne, %71, %c0_i32_28 : i32
    scf.if %72 {
      %c0_29 = arith.constant 0 : index
      %c0_30 = arith.constant 0 : index
      %73 = vector.load %arg7[%c0_29, %c0_30] : memref<1x128xf32, #tpu.memory_space<vmem>>, vector<1x128xf32>
      %cst_31 = arith.constant 9.800000e+01 : f32
      %74 = vector.broadcast %cst_31 : f32 to vector<1x128xf32>
      %75 = arith.divf %73, %74 : vector<1x128xf32>
      %c0_32 = arith.constant 0 : index
      %c0_33 = arith.constant 0 : index
      %76 = vector.load %arg8[%c0_32, %c0_33] : memref<1x128xf32, #tpu.memory_space<vmem>>, vector<1x128xf32>
      %cst_34 = arith.constant 9.800000e+01 : f32
      %77 = vector.broadcast %cst_34 : f32 to vector<1x128xf32>
      %78 = arith.divf %76, %77 : vector<1x128xf32>
      %79 = arith.mulf %75, %75 : vector<1x128xf32>
      %80 = arith.subf %78, %79 : vector<1x128xf32>
      %cst_35 = arith.constant 0.000000e+00 : f32
      %81 = vector.broadcast %cst_35 : f32 to vector<1x128xf32>
      %82 = arith.maximumf %80, %81 : vector<1x128xf32>
      %cst_36 = arith.constant 9.99999974E-6 : f32
      %83 = vector.broadcast %cst_36 : f32 to vector<1x128xf32>
      %84 = arith.addf %82, %83 : vector<1x128xf32>
      %85 = math.rsqrt %84 : vector<1x128xf32>
      %c0_37 = arith.constant 0 : index
      %c0_38 = arith.constant 0 : index
      %86 = vector.load %arg3[%c0_37, %c0_38] : memref<1x128xf32, #tpu.memory_space<vmem>>, vector<1x128xf32>
      %87 = arith.mulf %85, %86 : vector<1x128xf32>
      %c0_39 = arith.constant 0 : index
      %c0_40 = arith.constant 0 : index
      %88 = vector.load %arg4[%c0_39, %c0_40] : memref<1x128xf32, #tpu.memory_space<vmem>>, vector<1x128xf32>
      %89 = arith.mulf %75, %87 : vector<1x128xf32>
      %90 = arith.subf %88, %89 : vector<1x128xf32>
      %c0_41 = arith.constant 0 : index
      %c0_42 = arith.constant 0 : index
      %c0_43 = arith.constant 0 : index
      %91 = vector.load %arg6[%c0_41, %c0_42, %c0_43] : memref<7x2x896xf32, #tpu.memory_space<vmem>>, vector<1x2x896xf32>
      %92 = vector.shape_cast %91 : vector<1x2x896xf32> to vector<2x896xf32>
      %93 = vector.extract_strided_slice %92 {offsets = [0, 0], sizes = [2, 128], strides = [1, 1]} : vector<2x896xf32> to vector<2x128xf32>
      %94 = vector.broadcast %87 : vector<1x128xf32> to vector<2x128xf32>
      %95 = arith.mulf %93, %94 : vector<2x128xf32>
      %96 = vector.broadcast %90 : vector<1x128xf32> to vector<2x128xf32>
      %97 = arith.addf %95, %96 : vector<2x128xf32>
      %cst_44 = arith.constant 0.000000e+00 : f32
      %98 = vector.broadcast %cst_44 : f32 to vector<2x128xf32>
      %99 = arith.maximumf %97, %98 : vector<2x128xf32>
      %100 = arith.truncf %99 : vector<2x128xf32> to vector<2x128xbf16>
      %c0_45 = arith.constant 0 : index
      %c0_46 = arith.constant 0 : index
      %101 = vector.load %arg5[%c0_45, %c0_46] : memref<2x6272xbf16, #tpu.memory_space<vmem>>, vector<2x128xbf16>
      tpu.vector_store %arg5[%c0_45, %c0_46], %100 {strides = array<i32>} : memref<2x6272xbf16, #tpu.memory_space<vmem>>, vector<2x128xbf16>,
      %102 = vector.extract_strided_slice %92 {offsets = [0, 128], sizes = [2, 128], strides = [1, 1]} : vector<2x896xf32> to vector<2x128xf32>
      %103 = vector.broadcast %87 : vector<1x128xf32> to vector<2x128xf32>
      %104 = arith.mulf %102, %103 : vector<2x128xf32>
      %105 = vector.broadcast %90 : vector<1x128xf32> to vector<2x128xf32>
      %106 = arith.addf %104, %105 : vector<2x128xf32>
      %cst_47 = arith.constant 0.000000e+00 : f32
      %107 = vector.broadcast %cst_47 : f32 to vector<2x128xf32>
      %108 = arith.maximumf %106, %107 : vector<2x128xf32>
      %109 = arith.truncf %108 : vector<2x128xf32> to vector<2x128xbf16>
      %c0_48 = arith.constant 0 : index
      %c128 = arith.constant 128 : index
      %110 = vector.load %arg5[%c0_48, %c128] : memref<2x6272xbf16, #tpu.memory_space<vmem>>, vector<2x128xbf16>
      tpu.vector_store %arg5[%c0_48, %c128], %109 {strides = array<i32>} : memref<2x6272xbf16, #tpu.memory_space<vmem>>, vector<2x128xbf16>,
      %111 = vector.extract_strided_slice %92 {offsets = [0, 256], sizes = [2, 128], strides = [1, 1]} : vector<2x896xf32> to vector<2x128xf32>
      %112 = vector.broadcast %87 : vector<1x128xf32> to vector<2x128xf32>
      %113 = arith.mulf %111, %112 : vector<2x128xf32>
      %114 = vector.broadcast %90 : vector<1x128xf32> to vector<2x128xf32>
      %115 = arith.addf %113, %114 : vector<2x128xf32>
      %cst_49 = arith.constant 0.000000e+00 : f32
      %116 = vector.broadcast %cst_49 : f32 to vector<2x128xf32>
      %117 = arith.maximumf %115, %116 : vector<2x128xf32>
      %118 = arith.truncf %117 : vector<2x128xf32> to vector<2x128xbf16>
      %c0_50 = arith.constant 0 : index
      %c256 = arith.constant 256 : index
      %119 = vector.load %arg5[%c0_50, %c256] : memref<2x6272xbf16, #tpu.memory_space<vmem>>, vector<2x128xbf16>
      tpu.vector_store %arg5[%c0_50, %c256], %118 {strides = array<i32>} : memref<2x6272xbf16, #tpu.memory_space<vmem>>, vector<2x128xbf16>,
      %120 = vector.extract_strided_slice %92 {offsets = [0, 384], sizes = [2, 128], strides = [1, 1]} : vector<2x896xf32> to vector<2x128xf32>
      %121 = vector.broadcast %87 : vector<1x128xf32> to vector<2x128xf32>
      %122 = arith.mulf %120, %121 : vector<2x128xf32>
      %123 = vector.broadcast %90 : vector<1x128xf32> to vector<2x128xf32>
      %124 = arith.addf %122, %123 : vector<2x128xf32>
      %cst_51 = arith.constant 0.000000e+00 : f32
      %125 = vector.broadcast %cst_51 : f32 to vector<2x128xf32>
      %126 = arith.maximumf %124, %125 : vector<2x128xf32>
      %127 = arith.truncf %126 : vector<2x128xf32> to vector<2x128xbf16>
      %c0_52 = arith.constant 0 : index
      %c384 = arith.constant 384 : index
      %128 = vector.load %arg5[%c0_52, %c384] : memref<2x6272xbf16, #tpu.memory_space<vmem>>, vector<2x128xbf16>
      tpu.vector_store %arg5[%c0_52, %c384], %127 {strides = array<i32>} : memref<2x6272xbf16, #tpu.memory_space<vmem>>, vector<2x128xbf16>,
      %129 = vector.extract_strided_slice %92 {offsets = [0, 512], sizes = [2, 128], strides = [1, 1]} : vector<2x896xf32> to vector<2x128xf32>
      %130 = vector.broadcast %87 : vector<1x128xf32> to vector<2x128xf32>
      %131 = arith.mulf %129, %130 : vector<2x128xf32>
      %132 = vector.broadcast %90 : vector<1x128xf32> to vector<2x128xf32>
      %133 = arith.addf %131, %132 : vector<2x128xf32>
      %cst_53 = arith.constant 0.000000e+00 : f32
      %134 = vector.broadcast %cst_53 : f32 to vector<2x128xf32>
      %135 = arith.maximumf %133, %134 : vector<2x128xf32>
      %136 = arith.truncf %135 : vector<2x128xf32> to vector<2x128xbf16>
      %c0_54 = arith.constant 0 : index
      %c512 = arith.constant 512 : index
      %137 = vector.load %arg5[%c0_54, %c512] : memref<2x6272xbf16, #tpu.memory_space<vmem>>, vector<2x128xbf16>
      tpu.vector_store %arg5[%c0_54, %c512], %136 {strides = array<i32>} : memref<2x6272xbf16, #tpu.memory_space<vmem>>, vector<2x128xbf16>,
      %138 = vector.extract_strided_slice %92 {offsets = [0, 640], sizes = [2, 128], strides = [1, 1]} : vector<2x896xf32> to vector<2x128xf32>
      %139 = vector.broadcast %87 : vector<1x128xf32> to vector<2x128xf32>
      %140 = arith.mulf %138, %139 : vector<2x128xf32>
      %141 = vector.broadcast %90 : vector<1x128xf32> to vector<2x128xf32>
      %142 = arith.addf %140, %141 : vector<2x128xf32>
      %cst_55 = arith.constant 0.000000e+00 : f32
      %143 = vector.broadcast %cst_55 : f32 to vector<2x128xf32>
      %144 = arith.maximumf %142, %143 : vector<2x128xf32>
      %145 = arith.truncf %144 : vector<2x128xf32> to vector<2x128xbf16>
      %c0_56 = arith.constant 0 : index
      %c640 = arith.constant 640 : index
      %146 = vector.load %arg5[%c0_56, %c640] : memref<2x6272xbf16, #tpu.memory_space<vmem>>, vector<2x128xbf16>
      tpu.vector_store %arg5[%c0_56, %c640], %145 {strides = array<i32>} : memref<2x6272xbf16, #tpu.memory_space<vmem>>, vector<2x128xbf16>,
      %147 = vector.extract_strided_slice %92 {offsets = [0, 768], sizes = [2, 128], strides = [1, 1]} : vector<2x896xf32> to vector<2x128xf32>
      %148 = vector.broadcast %87 : vector<1x128xf32> to vector<2x128xf32>
      %149 = arith.mulf %147, %148 : vector<2x128xf32>
      %150 = vector.broadcast %90 : vector<1x128xf32> to vector<2x128xf32>
      %151 = arith.addf %149, %150 : vector<2x128xf32>
      %cst_57 = arith.constant 0.000000e+00 : f32
      %152 = vector.broadcast %cst_57 : f32 to vector<2x128xf32>
      %153 = arith.maximumf %151, %152 : vector<2x128xf32>
      %154 = arith.truncf %153 : vector<2x128xf32> to vector<2x128xbf16>
      %c0_58 = arith.constant 0 : index
      %c768 = arith.constant 768 : index
      %155 = vector.load %arg5[%c0_58, %c768] : memref<2x6272xbf16, #tpu.memory_space<vmem>>, vector<2x128xbf16>
      tpu.vector_store %arg5[%c0_58, %c768], %154 {strides = array<i32>} : memref<2x6272xbf16, #tpu.memory_space<vmem>>, vector<2x128xbf16>,
      %c1 = arith.constant 1 : index
      %c0_59 = arith.constant 0 : index
      %c0_60 = arith.constant 0 : index
      %156 = vector.load %arg6[%c1, %c0_59, %c0_60] : memref<7x2x896xf32, #tpu.memory_space<vmem>>, vector<1x2x896xf32>
      %157 = vector.shape_cast %156 : vector<1x2x896xf32> to vector<2x896xf32>
      %158 = vector.extract_strided_slice %157 {offsets = [0, 0], sizes = [2, 128], strides = [1, 1]} : vector<2x896xf32> to vector<2x128xf32>
      %159 = vector.broadcast %87 : vector<1x128xf32> to vector<2x128xf32>
      %160 = arith.mulf %158, %159 : vector<2x128xf32>
      %161 = vector.broadcast %90 : vector<1x128xf32> to vector<2x128xf32>
      %162 = arith.addf %160, %161 : vector<2x128xf32>
      %cst_61 = arith.constant 0.000000e+00 : f32
      %163 = vector.broadcast %cst_61 : f32 to vector<2x128xf32>
      %164 = arith.maximumf %162, %163 : vector<2x128xf32>
      %165 = arith.truncf %164 : vector<2x128xf32> to vector<2x128xbf16>
      %c0_62 = arith.constant 0 : index
      %c896 = arith.constant 896 : index
      %166 = vector.load %arg5[%c0_62, %c896] : memref<2x6272xbf16, #tpu.memory_space<vmem>>, vector<2x128xbf16>
      tpu.vector_store %arg5[%c0_62, %c896], %165 {strides = array<i32>} : memref<2x6272xbf16, #tpu.memory_space<vmem>>, vector<2x128xbf16>,
      %167 = vector.extract_strided_slice %157 {offsets = [0, 128], sizes = [2, 128], strides = [1, 1]} : vector<2x896xf32> to vector<2x128xf32>
      %168 = vector.broadcast %87 : vector<1x128xf32> to vector<2x128xf32>
      %169 = arith.mulf %167, %168 : vector<2x128xf32>
      %170 = vector.broadcast %90 : vector<1x128xf32> to vector<2x128xf32>
      %171 = arith.addf %169, %170 : vector<2x128xf32>
      %cst_63 = arith.constant 0.000000e+00 : f32
      %172 = vector.broadcast %cst_63 : f32 to vector<2x128xf32>
      %173 = arith.maximumf %171, %172 : vector<2x128xf32>
      %174 = arith.truncf %173 : vector<2x128xf32> to vector<2x128xbf16>
      %c0_64 = arith.constant 0 : index
      %c1024 = arith.constant 1024 : index
      %175 = vector.load %arg5[%c0_64, %c1024] : memref<2x6272xbf16, #tpu.memory_space<vmem>>, vector<2x128xbf16>
      tpu.vector_store %arg5[%c0_64, %c1024], %174 {strides = array<i32>} : memref<2x6272xbf16, #tpu.memory_space<vmem>>, vector<2x128xbf16>,
      %176 = vector.extract_strided_slice %157 {offsets = [0, 256], sizes = [2, 128], strides = [1, 1]} : vector<2x896xf32> to vector<2x128xf32>
      %177 = vector.broadcast %87 : vector<1x128xf32> to vector<2x128xf32>
      %178 = arith.mulf %176, %177 : vector<2x128xf32>
      %179 = vector.broadcast %90 : vector<1x128xf32> to vector<2x128xf32>
      %180 = arith.addf %178, %179 : vector<2x128xf32>
      %cst_65 = arith.constant 0.000000e+00 : f32
      %181 = vector.broadcast %cst_65 : f32 to vector<2x128xf32>
      %182 = arith.maximumf %180, %181 : vector<2x128xf32>
      %183 = arith.truncf %182 : vector<2x128xf32> to vector<2x128xbf16>
      %c0_66 = arith.constant 0 : index
      %c1152 = arith.constant 1152 : index
      %184 = vector.load %arg5[%c0_66, %c1152] : memref<2x6272xbf16, #tpu.memory_space<vmem>>, vector<2x128xbf16>
      tpu.vector_store %arg5[%c0_66, %c1152], %183 {strides = array<i32>} : memref<2x6272xbf16, #tpu.memory_space<vmem>>, vector<2x128xbf16>,
      %185 = vector.extract_strided_slice %157 {offsets = [0, 384], sizes = [2, 128], strides = [1, 1]} : vector<2x896xf32> to vector<2x128xf32>
      %186 = vector.broadcast %87 : vector<1x128xf32> to vector<2x128xf32>
      %187 = arith.mulf %185, %186 : vector<2x128xf32>
      %188 = vector.broadcast %90 : vector<1x128xf32> to vector<2x128xf32>
      %189 = arith.addf %187, %188 : vector<2x128xf32>
      %cst_67 = arith.constant 0.000000e+00 : f32
      %190 = vector.broadcast %cst_67 : f32 to vector<2x128xf32>
      %191 = arith.maximumf %189, %190 : vector<2x128xf32>
      %192 = arith.truncf %191 : vector<2x128xf32> to vector<2x128xbf16>
      %c0_68 = arith.constant 0 : index
      %c1280 = arith.constant 1280 : index
      %193 = vector.load %arg5[%c0_68, %c1280] : memref<2x6272xbf16, #tpu.memory_space<vmem>>, vector<2x128xbf16>
      tpu.vector_store %arg5[%c0_68, %c1280], %192 {strides = array<i32>} : memref<2x6272xbf16, #tpu.memory_space<vmem>>, vector<2x128xbf16>,
      %194 = vector.extract_strided_slice %157 {offsets = [0, 512], sizes = [2, 128], strides = [1, 1]} : vector<2x896xf32> to vector<2x128xf32>
      %195 = vector.broadcast %87 : vector<1x128xf32> to vector<2x128xf32>
      %196 = arith.mulf %194, %195 : vector<2x128xf32>
      %197 = vector.broadcast %90 : vector<1x128xf32> to vector<2x128xf32>
      %198 = arith.addf %196, %197 : vector<2x128xf32>
      %cst_69 = arith.constant 0.000000e+00 : f32
      %199 = vector.broadcast %cst_69 : f32 to vector<2x128xf32>
      %200 = arith.maximumf %198, %199 : vector<2x128xf32>
      %201 = arith.truncf %200 : vector<2x128xf32> to vector<2x128xbf16>
      %c0_70 = arith.constant 0 : index
      %c1408 = arith.constant 1408 : index
      %202 = vector.load %arg5[%c0_70, %c1408] : memref<2x6272xbf16, #tpu.memory_space<vmem>>, vector<2x128xbf16>
      tpu.vector_store %arg5[%c0_70, %c1408], %201 {strides = array<i32>} : memref<2x6272xbf16, #tpu.memory_space<vmem>>, vector<2x128xbf16>,
      %203 = vector.extract_strided_slice %157 {offsets = [0, 640], sizes = [2, 128], strides = [1, 1]} : vector<2x896xf32> to vector<2x128xf32>
      %204 = vector.broadcast %87 : vector<1x128xf32> to vector<2x128xf32>
      %205 = arith.mulf %203, %204 : vector<2x128xf32>
      %206 = vector.broadcast %90 : vector<1x128xf32> to vector<2x128xf32>
      %207 = arith.addf %205, %206 : vector<2x128xf32>
      %cst_71 = arith.constant 0.000000e+00 : f32
      %208 = vector.broadcast %cst_71 : f32 to vector<2x128xf32>
      %209 = arith.maximumf %207, %208 : vector<2x128xf32>
      %210 = arith.truncf %209 : vector<2x128xf32> to vector<2x128xbf16>
      %c0_72 = arith.constant 0 : index
      %c1536 = arith.constant 1536 : index
      %211 = vector.load %arg5[%c0_72, %c1536] : memref<2x6272xbf16, #tpu.memory_space<vmem>>, vector<2x128xbf16>
      tpu.vector_store %arg5[%c0_72, %c1536], %210 {strides = array<i32>} : memref<2x6272xbf16, #tpu.memory_space<vmem>>, vector<2x128xbf16>,
      %212 = vector.extract_strided_slice %157 {offsets = [0, 768], sizes = [2, 128], strides = [1, 1]} : vector<2x896xf32> to vector<2x128xf32>
      %213 = vector.broadcast %87 : vector<1x128xf32> to vector<2x128xf32>
      %214 = arith.mulf %212, %213 : vector<2x128xf32>
      %215 = vector.broadcast %90 : vector<1x128xf32> to vector<2x128xf32>
      %216 = arith.addf %214, %215 : vector<2x128xf32>
      %cst_73 = arith.constant 0.000000e+00 : f32
      %217 = vector.broadcast %cst_73 : f32 to vector<2x128xf32>
      %218 = arith.maximumf %216, %217 : vector<2x128xf32>
      %219 = arith.truncf %218 : vector<2x128xf32> to vector<2x128xbf16>
      %c0_74 = arith.constant 0 : index
      %c1664 = arith.constant 1664 : index
      %220 = vector.load %arg5[%c0_74, %c1664] : memref<2x6272xbf16, #tpu.memory_space<vmem>>, vector<2x128xbf16>
      tpu.vector_store %arg5[%c0_74, %c1664], %219 {strides = array<i32>} : memref<2x6272xbf16, #tpu.memory_space<vmem>>, vector<2x128xbf16>,
      %c2 = arith.constant 2 : index
      %c0_75 = arith.constant 0 : index
      %c0_76 = arith.constant 0 : index
      %221 = vector.load %arg6[%c2, %c0_75, %c0_76] : memref<7x2x896xf32, #tpu.memory_space<vmem>>, vector<1x2x896xf32>
      %222 = vector.shape_cast %221 : vector<1x2x896xf32> to vector<2x896xf32>
      %223 = vector.extract_strided_slice %222 {offsets = [0, 0], sizes = [2, 128], strides = [1, 1]} : vector<2x896xf32> to vector<2x128xf32>
      %224 = vector.broadcast %87 : vector<1x128xf32> to vector<2x128xf32>
      %225 = arith.mulf %223, %224 : vector<2x128xf32>
      %226 = vector.broadcast %90 : vector<1x128xf32> to vector<2x128xf32>
      %227 = arith.addf %225, %226 : vector<2x128xf32>
      %cst_77 = arith.constant 0.000000e+00 : f32
      %228 = vector.broadcast %cst_77 : f32 to vector<2x128xf32>
      %229 = arith.maximumf %227, %228 : vector<2x128xf32>
      %230 = arith.truncf %229 : vector<2x128xf32> to vector<2x128xbf16>
      %c0_78 = arith.constant 0 : index
      %c1792 = arith.constant 1792 : index
      %231 = vector.load %arg5[%c0_78, %c1792] : memref<2x6272xbf16, #tpu.memory_space<vmem>>, vector<2x128xbf16>
      tpu.vector_store %arg5[%c0_78, %c1792], %230 {strides = array<i32>} : memref<2x6272xbf16, #tpu.memory_space<vmem>>, vector<2x128xbf16>,
      %232 = vector.extract_strided_slice %222 {offsets = [0, 128], sizes = [2, 128], strides = [1, 1]} : vector<2x896xf32> to vector<2x128xf32>
      %233 = vector.broadcast %87 : vector<1x128xf32> to vector<2x128xf32>
      %234 = arith.mulf %232, %233 : vector<2x128xf32>
      %235 = vector.broadcast %90 : vector<1x128xf32> to vector<2x128xf32>
      %236 = arith.addf %234, %235 : vector<2x128xf32>
      %cst_79 = arith.constant 0.000000e+00 : f32
      %237 = vector.broadcast %cst_79 : f32 to vector<2x128xf32>
      %238 = arith.maximumf %236, %237 : vector<2x128xf32>
      %239 = arith.truncf %238 : vector<2x128xf32> to vector<2x128xbf16>
      %c0_80 = arith.constant 0 : index
      %c1920 = arith.constant 1920 : index
      %240 = vector.load %arg5[%c0_80, %c1920] : memref<2x6272xbf16, #tpu.memory_space<vmem>>, vector<2x128xbf16>
      tpu.vector_store %arg5[%c0_80, %c1920], %239 {strides = array<i32>} : memref<2x6272xbf16, #tpu.memory_space<vmem>>, vector<2x128xbf16>,
      %241 = vector.extract_strided_slice %222 {offsets = [0, 256], sizes = [2, 128], strides = [1, 1]} : vector<2x896xf32> to vector<2x128xf32>
      %242 = vector.broadcast %87 : vector<1x128xf32> to vector<2x128xf32>
      %243 = arith.mulf %241, %242 : vector<2x128xf32>
      %244 = vector.broadcast %90 : vector<1x128xf32> to vector<2x128xf32>
      %245 = arith.addf %243, %244 : vector<2x128xf32>
      %cst_81 = arith.constant 0.000000e+00 : f32
      %246 = vector.broadcast %cst_81 : f32 to vector<2x128xf32>
      %247 = arith.maximumf %245, %246 : vector<2x128xf32>
      %248 = arith.truncf %247 : vector<2x128xf32> to vector<2x128xbf16>
      %c0_82 = arith.constant 0 : index
      %c2048 = arith.constant 2048 : index
      %249 = vector.load %arg5[%c0_82, %c2048] : memref<2x6272xbf16, #tpu.memory_space<vmem>>, vector<2x128xbf16>
      tpu.vector_store %arg5[%c0_82, %c2048], %248 {strides = array<i32>} : memref<2x6272xbf16, #tpu.memory_space<vmem>>, vector<2x128xbf16>,
      %250 = vector.extract_strided_slice %222 {offsets = [0, 384], sizes = [2, 128], strides = [1, 1]} : vector<2x896xf32> to vector<2x128xf32>
      %251 = vector.broadcast %87 : vector<1x128xf32> to vector<2x128xf32>
      %252 = arith.mulf %250, %251 : vector<2x128xf32>
      %253 = vector.broadcast %90 : vector<1x128xf32> to vector<2x128xf32>
      %254 = arith.addf %252, %253 : vector<2x128xf32>
      %cst_83 = arith.constant 0.000000e+00 : f32
      %255 = vector.broadcast %cst_83 : f32 to vector<2x128xf32>
      %256 = arith.maximumf %254, %255 : vector<2x128xf32>
      %257 = arith.truncf %256 : vector<2x128xf32> to vector<2x128xbf16>
      %c0_84 = arith.constant 0 : index
      %c2176 = arith.constant 2176 : index
      %258 = vector.load %arg5[%c0_84, %c2176] : memref<2x6272xbf16, #tpu.memory_space<vmem>>, vector<2x128xbf16>
      tpu.vector_store %arg5[%c0_84, %c2176], %257 {strides = array<i32>} : memref<2x6272xbf16, #tpu.memory_space<vmem>>, vector<2x128xbf16>,
      %259 = vector.extract_strided_slice %222 {offsets = [0, 512], sizes = [2, 128], strides = [1, 1]} : vector<2x896xf32> to vector<2x128xf32>
      %260 = vector.broadcast %87 : vector<1x128xf32> to vector<2x128xf32>
      %261 = arith.mulf %259, %260 : vector<2x128xf32>
      %262 = vector.broadcast %90 : vector<1x128xf32> to vector<2x128xf32>
      %263 = arith.addf %261, %262 : vector<2x128xf32>
      %cst_85 = arith.constant 0.000000e+00 : f32
      %264 = vector.broadcast %cst_85 : f32 to vector<2x128xf32>
      %265 = arith.maximumf %263, %264 : vector<2x128xf32>
      %266 = arith.truncf %265 : vector<2x128xf32> to vector<2x128xbf16>
      %c0_86 = arith.constant 0 : index
      %c2304 = arith.constant 2304 : index
      %267 = vector.load %arg5[%c0_86, %c2304] : memref<2x6272xbf16, #tpu.memory_space<vmem>>, vector<2x128xbf16>
      tpu.vector_store %arg5[%c0_86, %c2304], %266 {strides = array<i32>} : memref<2x6272xbf16, #tpu.memory_space<vmem>>, vector<2x128xbf16>,
      %268 = vector.extract_strided_slice %222 {offsets = [0, 640], sizes = [2, 128], strides = [1, 1]} : vector<2x896xf32> to vector<2x128xf32>
      %269 = vector.broadcast %87 : vector<1x128xf32> to vector<2x128xf32>
      %270 = arith.mulf %268, %269 : vector<2x128xf32>
      %271 = vector.broadcast %90 : vector<1x128xf32> to vector<2x128xf32>
      %272 = arith.addf %270, %271 : vector<2x128xf32>
      %cst_87 = arith.constant 0.000000e+00 : f32
      %273 = vector.broadcast %cst_87 : f32 to vector<2x128xf32>
      %274 = arith.maximumf %272, %273 : vector<2x128xf32>
      %275 = arith.truncf %274 : vector<2x128xf32> to vector<2x128xbf16>
      %c0_88 = arith.constant 0 : index
      %c2432 = arith.constant 2432 : index
      %276 = vector.load %arg5[%c0_88, %c2432] : memref<2x6272xbf16, #tpu.memory_space<vmem>>, vector<2x128xbf16>
      tpu.vector_store %arg5[%c0_88, %c2432], %275 {strides = array<i32>} : memref<2x6272xbf16, #tpu.memory_space<vmem>>, vector<2x128xbf16>,
      %277 = vector.extract_strided_slice %222 {offsets = [0, 768], sizes = [2, 128], strides = [1, 1]} : vector<2x896xf32> to vector<2x128xf32>
      %278 = vector.broadcast %87 : vector<1x128xf32> to vector<2x128xf32>
      %279 = arith.mulf %277, %278 : vector<2x128xf32>
      %280 = vector.broadcast %90 : vector<1x128xf32> to vector<2x128xf32>
      %281 = arith.addf %279, %280 : vector<2x128xf32>
      %cst_89 = arith.constant 0.000000e+00 : f32
      %282 = vector.broadcast %cst_89 : f32 to vector<2x128xf32>
      %283 = arith.maximumf %281, %282 : vector<2x128xf32>
      %284 = arith.truncf %283 : vector<2x128xf32> to vector<2x128xbf16>
      %c0_90 = arith.constant 0 : index
      %c2560 = arith.constant 2560 : index
      %285 = vector.load %arg5[%c0_90, %c2560] : memref<2x6272xbf16, #tpu.memory_space<vmem>>, vector<2x128xbf16>
      tpu.vector_store %arg5[%c0_90, %c2560], %284 {strides = array<i32>} : memref<2x6272xbf16, #tpu.memory_space<vmem>>, vector<2x128xbf16>,
      %c3 = arith.constant 3 : index
      %c0_91 = arith.constant 0 : index
      %c0_92 = arith.constant 0 : index
      %286 = vector.load %arg6[%c3, %c0_91, %c0_92] : memref<7x2x896xf32, #tpu.memory_space<vmem>>, vector<1x2x896xf32>
      %287 = vector.shape_cast %286 : vector<1x2x896xf32> to vector<2x896xf32>
      %288 = vector.extract_strided_slice %287 {offsets = [0, 0], sizes = [2, 128], strides = [1, 1]} : vector<2x896xf32> to vector<2x128xf32>
      %289 = vector.broadcast %87 : vector<1x128xf32> to vector<2x128xf32>
      %290 = arith.mulf %288, %289 : vector<2x128xf32>
      %291 = vector.broadcast %90 : vector<1x128xf32> to vector<2x128xf32>
      %292 = arith.addf %290, %291 : vector<2x128xf32>
      %cst_93 = arith.constant 0.000000e+00 : f32
      %293 = vector.broadcast %cst_93 : f32 to vector<2x128xf32>
      %294 = arith.maximumf %292, %293 : vector<2x128xf32>
      %295 = arith.truncf %294 : vector<2x128xf32> to vector<2x128xbf16>
      %c0_94 = arith.constant 0 : index
      %c2688 = arith.constant 2688 : index
      %296 = vector.load %arg5[%c0_94, %c2688] : memref<2x6272xbf16, #tpu.memory_space<vmem>>, vector<2x128xbf16>
      tpu.vector_store %arg5[%c0_94, %c2688], %295 {strides = array<i32>} : memref<2x6272xbf16, #tpu.memory_space<vmem>>, vector<2x128xbf16>,
      %297 = vector.extract_strided_slice %287 {offsets = [0, 128], sizes = [2, 128], strides = [1, 1]} : vector<2x896xf32> to vector<2x128xf32>
      %298 = vector.broadcast %87 : vector<1x128xf32> to vector<2x128xf32>
      %299 = arith.mulf %297, %298 : vector<2x128xf32>
      %300 = vector.broadcast %90 : vector<1x128xf32> to vector<2x128xf32>
      %301 = arith.addf %299, %300 : vector<2x128xf32>
      %cst_95 = arith.constant 0.000000e+00 : f32
      %302 = vector.broadcast %cst_95 : f32 to vector<2x128xf32>
      %303 = arith.maximumf %301, %302 : vector<2x128xf32>
      %304 = arith.truncf %303 : vector<2x128xf32> to vector<2x128xbf16>
      %c0_96 = arith.constant 0 : index
      %c2816 = arith.constant 2816 : index
      %305 = vector.load %arg5[%c0_96, %c2816] : memref<2x6272xbf16, #tpu.memory_space<vmem>>, vector<2x128xbf16>
      tpu.vector_store %arg5[%c0_96, %c2816], %304 {strides = array<i32>} : memref<2x6272xbf16, #tpu.memory_space<vmem>>, vector<2x128xbf16>,
      %306 = vector.extract_strided_slice %287 {offsets = [0, 256], sizes = [2, 128], strides = [1, 1]} : vector<2x896xf32> to vector<2x128xf32>
      %307 = vector.broadcast %87 : vector<1x128xf32> to vector<2x128xf32>
      %308 = arith.mulf %306, %307 : vector<2x128xf32>
      %309 = vector.broadcast %90 : vector<1x128xf32> to vector<2x128xf32>
      %310 = arith.addf %308, %309 : vector<2x128xf32>
      %cst_97 = arith.constant 0.000000e+00 : f32
      %311 = vector.broadcast %cst_97 : f32 to vector<2x128xf32>
      %312 = arith.maximumf %310, %311 : vector<2x128xf32>
      %313 = arith.truncf %312 : vector<2x128xf32> to vector<2x128xbf16>
      %c0_98 = arith.constant 0 : index
      %c2944 = arith.constant 2944 : index
      %314 = vector.load %arg5[%c0_98, %c2944] : memref<2x6272xbf16, #tpu.memory_space<vmem>>, vector<2x128xbf16>
      tpu.vector_store %arg5[%c0_98, %c2944], %313 {strides = array<i32>} : memref<2x6272xbf16, #tpu.memory_space<vmem>>, vector<2x128xbf16>,
      %315 = vector.extract_strided_slice %287 {offsets = [0, 384], sizes = [2, 128], strides = [1, 1]} : vector<2x896xf32> to vector<2x128xf32>
      %316 = vector.broadcast %87 : vector<1x128xf32> to vector<2x128xf32>
      %317 = arith.mulf %315, %316 : vector<2x128xf32>
      %318 = vector.broadcast %90 : vector<1x128xf32> to vector<2x128xf32>
      %319 = arith.addf %317, %318 : vector<2x128xf32>
      %cst_99 = arith.constant 0.000000e+00 : f32
      %320 = vector.broadcast %cst_99 : f32 to vector<2x128xf32>
      %321 = arith.maximumf %319, %320 : vector<2x128xf32>
      %322 = arith.truncf %321 : vector<2x128xf32> to vector<2x128xbf16>
      %c0_100 = arith.constant 0 : index
      %c3072 = arith.constant 3072 : index
      %323 = vector.load %arg5[%c0_100, %c3072] : memref<2x6272xbf16, #tpu.memory_space<vmem>>, vector<2x128xbf16>
      tpu.vector_store %arg5[%c0_100, %c3072], %322 {strides = array<i32>} : memref<2x6272xbf16, #tpu.memory_space<vmem>>, vector<2x128xbf16>,
      %324 = vector.extract_strided_slice %287 {offsets = [0, 512], sizes = [2, 128], strides = [1, 1]} : vector<2x896xf32> to vector<2x128xf32>
      %325 = vector.broadcast %87 : vector<1x128xf32> to vector<2x128xf32>
      %326 = arith.mulf %324, %325 : vector<2x128xf32>
      %327 = vector.broadcast %90 : vector<1x128xf32> to vector<2x128xf32>
      %328 = arith.addf %326, %327 : vector<2x128xf32>
      %cst_101 = arith.constant 0.000000e+00 : f32
      %329 = vector.broadcast %cst_101 : f32 to vector<2x128xf32>
      %330 = arith.maximumf %328, %329 : vector<2x128xf32>
      %331 = arith.truncf %330 : vector<2x128xf32> to vector<2x128xbf16>
      %c0_102 = arith.constant 0 : index
      %c3200 = arith.constant 3200 : index
      %332 = vector.load %arg5[%c0_102, %c3200] : memref<2x6272xbf16, #tpu.memory_space<vmem>>, vector<2x128xbf16>
      tpu.vector_store %arg5[%c0_102, %c3200], %331 {strides = array<i32>} : memref<2x6272xbf16, #tpu.memory_space<vmem>>, vector<2x128xbf16>,
      %333 = vector.extract_strided_slice %287 {offsets = [0, 640], sizes = [2, 128], strides = [1, 1]} : vector<2x896xf32> to vector<2x128xf32>
      %334 = vector.broadcast %87 : vector<1x128xf32> to vector<2x128xf32>
      %335 = arith.mulf %333, %334 : vector<2x128xf32>
      %336 = vector.broadcast %90 : vector<1x128xf32> to vector<2x128xf32>
      %337 = arith.addf %335, %336 : vector<2x128xf32>
      %cst_103 = arith.constant 0.000000e+00 : f32
      %338 = vector.broadcast %cst_103 : f32 to vector<2x128xf32>
      %339 = arith.maximumf %337, %338 : vector<2x128xf32>
      %340 = arith.truncf %339 : vector<2x128xf32> to vector<2x128xbf16>
      %c0_104 = arith.constant 0 : index
      %c3328 = arith.constant 3328 : index
      %341 = vector.load %arg5[%c0_104, %c3328] : memref<2x6272xbf16, #tpu.memory_space<vmem>>, vector<2x128xbf16>
      tpu.vector_store %arg5[%c0_104, %c3328], %340 {strides = array<i32>} : memref<2x6272xbf16, #tpu.memory_space<vmem>>, vector<2x128xbf16>,
      %342 = vector.extract_strided_slice %287 {offsets = [0, 768], sizes = [2, 128], strides = [1, 1]} : vector<2x896xf32> to vector<2x128xf32>
      %343 = vector.broadcast %87 : vector<1x128xf32> to vector<2x128xf32>
      %344 = arith.mulf %342, %343 : vector<2x128xf32>
      %345 = vector.broadcast %90 : vector<1x128xf32> to vector<2x128xf32>
      %346 = arith.addf %344, %345 : vector<2x128xf32>
      %cst_105 = arith.constant 0.000000e+00 : f32
      %347 = vector.broadcast %cst_105 : f32 to vector<2x128xf32>
      %348 = arith.maximumf %346, %347 : vector<2x128xf32>
      %349 = arith.truncf %348 : vector<2x128xf32> to vector<2x128xbf16>
      %c0_106 = arith.constant 0 : index
      %c3456 = arith.constant 3456 : index
      %350 = vector.load %arg5[%c0_106, %c3456] : memref<2x6272xbf16, #tpu.memory_space<vmem>>, vector<2x128xbf16>
      tpu.vector_store %arg5[%c0_106, %c3456], %349 {strides = array<i32>} : memref<2x6272xbf16, #tpu.memory_space<vmem>>, vector<2x128xbf16>,
      %c4 = arith.constant 4 : index
      %c0_107 = arith.constant 0 : index
      %c0_108 = arith.constant 0 : index
      %351 = vector.load %arg6[%c4, %c0_107, %c0_108] : memref<7x2x896xf32, #tpu.memory_space<vmem>>, vector<1x2x896xf32>
      %352 = vector.shape_cast %351 : vector<1x2x896xf32> to vector<2x896xf32>
      %353 = vector.extract_strided_slice %352 {offsets = [0, 0], sizes = [2, 128], strides = [1, 1]} : vector<2x896xf32> to vector<2x128xf32>
      %354 = vector.broadcast %87 : vector<1x128xf32> to vector<2x128xf32>
      %355 = arith.mulf %353, %354 : vector<2x128xf32>
      %356 = vector.broadcast %90 : vector<1x128xf32> to vector<2x128xf32>
      %357 = arith.addf %355, %356 : vector<2x128xf32>
      %cst_109 = arith.constant 0.000000e+00 : f32
      %358 = vector.broadcast %cst_109 : f32 to vector<2x128xf32>
      %359 = arith.maximumf %357, %358 : vector<2x128xf32>
      %360 = arith.truncf %359 : vector<2x128xf32> to vector<2x128xbf16>
      %c0_110 = arith.constant 0 : index
      %c3584 = arith.constant 3584 : index
      %361 = vector.load %arg5[%c0_110, %c3584] : memref<2x6272xbf16, #tpu.memory_space<vmem>>, vector<2x128xbf16>
      tpu.vector_store %arg5[%c0_110, %c3584], %360 {strides = array<i32>} : memref<2x6272xbf16, #tpu.memory_space<vmem>>, vector<2x128xbf16>,
      %362 = vector.extract_strided_slice %352 {offsets = [0, 128], sizes = [2, 128], strides = [1, 1]} : vector<2x896xf32> to vector<2x128xf32>
      %363 = vector.broadcast %87 : vector<1x128xf32> to vector<2x128xf32>
      %364 = arith.mulf %362, %363 : vector<2x128xf32>
      %365 = vector.broadcast %90 : vector<1x128xf32> to vector<2x128xf32>
      %366 = arith.addf %364, %365 : vector<2x128xf32>
      %cst_111 = arith.constant 0.000000e+00 : f32
      %367 = vector.broadcast %cst_111 : f32 to vector<2x128xf32>
      %368 = arith.maximumf %366, %367 : vector<2x128xf32>
      %369 = arith.truncf %368 : vector<2x128xf32> to vector<2x128xbf16>
      %c0_112 = arith.constant 0 : index
      %c3712 = arith.constant 3712 : index
      %370 = vector.load %arg5[%c0_112, %c3712] : memref<2x6272xbf16, #tpu.memory_space<vmem>>, vector<2x128xbf16>
      tpu.vector_store %arg5[%c0_112, %c3712], %369 {strides = array<i32>} : memref<2x6272xbf16, #tpu.memory_space<vmem>>, vector<2x128xbf16>,
      %371 = vector.extract_strided_slice %352 {offsets = [0, 256], sizes = [2, 128], strides = [1, 1]} : vector<2x896xf32> to vector<2x128xf32>
      %372 = vector.broadcast %87 : vector<1x128xf32> to vector<2x128xf32>
      %373 = arith.mulf %371, %372 : vector<2x128xf32>
      %374 = vector.broadcast %90 : vector<1x128xf32> to vector<2x128xf32>
      %375 = arith.addf %373, %374 : vector<2x128xf32>
      %cst_113 = arith.constant 0.000000e+00 : f32
      %376 = vector.broadcast %cst_113 : f32 to vector<2x128xf32>
      %377 = arith.maximumf %375, %376 : vector<2x128xf32>
      %378 = arith.truncf %377 : vector<2x128xf32> to vector<2x128xbf16>
      %c0_114 = arith.constant 0 : index
      %c3840 = arith.constant 3840 : index
      %379 = vector.load %arg5[%c0_114, %c3840] : memref<2x6272xbf16, #tpu.memory_space<vmem>>, vector<2x128xbf16>
      tpu.vector_store %arg5[%c0_114, %c3840], %378 {strides = array<i32>} : memref<2x6272xbf16, #tpu.memory_space<vmem>>, vector<2x128xbf16>,
      %380 = vector.extract_strided_slice %352 {offsets = [0, 384], sizes = [2, 128], strides = [1, 1]} : vector<2x896xf32> to vector<2x128xf32>
      %381 = vector.broadcast %87 : vector<1x128xf32> to vector<2x128xf32>
      %382 = arith.mulf %380, %381 : vector<2x128xf32>
      %383 = vector.broadcast %90 : vector<1x128xf32> to vector<2x128xf32>
      %384 = arith.addf %382, %383 : vector<2x128xf32>
      %cst_115 = arith.constant 0.000000e+00 : f32
      %385 = vector.broadcast %cst_115 : f32 to vector<2x128xf32>
      %386 = arith.maximumf %384, %385 : vector<2x128xf32>
      %387 = arith.truncf %386 : vector<2x128xf32> to vector<2x128xbf16>
      %c0_116 = arith.constant 0 : index
      %c3968 = arith.constant 3968 : index
      %388 = vector.load %arg5[%c0_116, %c3968] : memref<2x6272xbf16, #tpu.memory_space<vmem>>, vector<2x128xbf16>
      tpu.vector_store %arg5[%c0_116, %c3968], %387 {strides = array<i32>} : memref<2x6272xbf16, #tpu.memory_space<vmem>>, vector<2x128xbf16>,
      %389 = vector.extract_strided_slice %352 {offsets = [0, 512], sizes = [2, 128], strides = [1, 1]} : vector<2x896xf32> to vector<2x128xf32>
      %390 = vector.broadcast %87 : vector<1x128xf32> to vector<2x128xf32>
      %391 = arith.mulf %389, %390 : vector<2x128xf32>
      %392 = vector.broadcast %90 : vector<1x128xf32> to vector<2x128xf32>
      %393 = arith.addf %391, %392 : vector<2x128xf32>
      %cst_117 = arith.constant 0.000000e+00 : f32
      %394 = vector.broadcast %cst_117 : f32 to vector<2x128xf32>
      %395 = arith.maximumf %393, %394 : vector<2x128xf32>
      %396 = arith.truncf %395 : vector<2x128xf32> to vector<2x128xbf16>
      %c0_118 = arith.constant 0 : index
      %c4096 = arith.constant 4096 : index
      %397 = vector.load %arg5[%c0_118, %c4096] : memref<2x6272xbf16, #tpu.memory_space<vmem>>, vector<2x128xbf16>
      tpu.vector_store %arg5[%c0_118, %c4096], %396 {strides = array<i32>} : memref<2x6272xbf16, #tpu.memory_space<vmem>>, vector<2x128xbf16>,
      %398 = vector.extract_strided_slice %352 {offsets = [0, 640], sizes = [2, 128], strides = [1, 1]} : vector<2x896xf32> to vector<2x128xf32>
      %399 = vector.broadcast %87 : vector<1x128xf32> to vector<2x128xf32>
      %400 = arith.mulf %398, %399 : vector<2x128xf32>
      %401 = vector.broadcast %90 : vector<1x128xf32> to vector<2x128xf32>
      %402 = arith.addf %400, %401 : vector<2x128xf32>
      %cst_119 = arith.constant 0.000000e+00 : f32
      %403 = vector.broadcast %cst_119 : f32 to vector<2x128xf32>
      %404 = arith.maximumf %402, %403 : vector<2x128xf32>
      %405 = arith.truncf %404 : vector<2x128xf32> to vector<2x128xbf16>
      %c0_120 = arith.constant 0 : index
      %c4224 = arith.constant 4224 : index
      %406 = vector.load %arg5[%c0_120, %c4224] : memref<2x6272xbf16, #tpu.memory_space<vmem>>, vector<2x128xbf16>
      tpu.vector_store %arg5[%c0_120, %c4224], %405 {strides = array<i32>} : memref<2x6272xbf16, #tpu.memory_space<vmem>>, vector<2x128xbf16>,
      %407 = vector.extract_strided_slice %352 {offsets = [0, 768], sizes = [2, 128], strides = [1, 1]} : vector<2x896xf32> to vector<2x128xf32>
      %408 = vector.broadcast %87 : vector<1x128xf32> to vector<2x128xf32>
      %409 = arith.mulf %407, %408 : vector<2x128xf32>
      %410 = vector.broadcast %90 : vector<1x128xf32> to vector<2x128xf32>
      %411 = arith.addf %409, %410 : vector<2x128xf32>
      %cst_121 = arith.constant 0.000000e+00 : f32
      %412 = vector.broadcast %cst_121 : f32 to vector<2x128xf32>
      %413 = arith.maximumf %411, %412 : vector<2x128xf32>
      %414 = arith.truncf %413 : vector<2x128xf32> to vector<2x128xbf16>
      %c0_122 = arith.constant 0 : index
      %c4352 = arith.constant 4352 : index
      %415 = vector.load %arg5[%c0_122, %c4352] : memref<2x6272xbf16, #tpu.memory_space<vmem>>, vector<2x128xbf16>
      tpu.vector_store %arg5[%c0_122, %c4352], %414 {strides = array<i32>} : memref<2x6272xbf16, #tpu.memory_space<vmem>>, vector<2x128xbf16>,
      %c5 = arith.constant 5 : index
      %c0_123 = arith.constant 0 : index
      %c0_124 = arith.constant 0 : index
      %416 = vector.load %arg6[%c5, %c0_123, %c0_124] : memref<7x2x896xf32, #tpu.memory_space<vmem>>, vector<1x2x896xf32>
      %417 = vector.shape_cast %416 : vector<1x2x896xf32> to vector<2x896xf32>
      %418 = vector.extract_strided_slice %417 {offsets = [0, 0], sizes = [2, 128], strides = [1, 1]} : vector<2x896xf32> to vector<2x128xf32>
      %419 = vector.broadcast %87 : vector<1x128xf32> to vector<2x128xf32>
      %420 = arith.mulf %418, %419 : vector<2x128xf32>
      %421 = vector.broadcast %90 : vector<1x128xf32> to vector<2x128xf32>
      %422 = arith.addf %420, %421 : vector<2x128xf32>
      %cst_125 = arith.constant 0.000000e+00 : f32
      %423 = vector.broadcast %cst_125 : f32 to vector<2x128xf32>
      %424 = arith.maximumf %422, %423 : vector<2x128xf32>
      %425 = arith.truncf %424 : vector<2x128xf32> to vector<2x128xbf16>
      %c0_126 = arith.constant 0 : index
      %c4480 = arith.constant 4480 : index
      %426 = vector.load %arg5[%c0_126, %c4480] : memref<2x6272xbf16, #tpu.memory_space<vmem>>, vector<2x128xbf16>
      tpu.vector_store %arg5[%c0_126, %c4480], %425 {strides = array<i32>} : memref<2x6272xbf16, #tpu.memory_space<vmem>>, vector<2x128xbf16>,
      %427 = vector.extract_strided_slice %417 {offsets = [0, 128], sizes = [2, 128], strides = [1, 1]} : vector<2x896xf32> to vector<2x128xf32>
      %428 = vector.broadcast %87 : vector<1x128xf32> to vector<2x128xf32>
      %429 = arith.mulf %427, %428 : vector<2x128xf32>
      %430 = vector.broadcast %90 : vector<1x128xf32> to vector<2x128xf32>
      %431 = arith.addf %429, %430 : vector<2x128xf32>
      %cst_127 = arith.constant 0.000000e+00 : f32
      %432 = vector.broadcast %cst_127 : f32 to vector<2x128xf32>
      %433 = arith.maximumf %431, %432 : vector<2x128xf32>
      %434 = arith.truncf %433 : vector<2x128xf32> to vector<2x128xbf16>
      %c0_128 = arith.constant 0 : index
      %c4608 = arith.constant 4608 : index
      %435 = vector.load %arg5[%c0_128, %c4608] : memref<2x6272xbf16, #tpu.memory_space<vmem>>, vector<2x128xbf16>
      tpu.vector_store %arg5[%c0_128, %c4608], %434 {strides = array<i32>} : memref<2x6272xbf16, #tpu.memory_space<vmem>>, vector<2x128xbf16>,
      %436 = vector.extract_strided_slice %417 {offsets = [0, 256], sizes = [2, 128], strides = [1, 1]} : vector<2x896xf32> to vector<2x128xf32>
      %437 = vector.broadcast %87 : vector<1x128xf32> to vector<2x128xf32>
      %438 = arith.mulf %436, %437 : vector<2x128xf32>
      %439 = vector.broadcast %90 : vector<1x128xf32> to vector<2x128xf32>
      %440 = arith.addf %438, %439 : vector<2x128xf32>
      %cst_129 = arith.constant 0.000000e+00 : f32
      %441 = vector.broadcast %cst_129 : f32 to vector<2x128xf32>
      %442 = arith.maximumf %440, %441 : vector<2x128xf32>
      %443 = arith.truncf %442 : vector<2x128xf32> to vector<2x128xbf16>
      %c0_130 = arith.constant 0 : index
      %c4736 = arith.constant 4736 : index
      %444 = vector.load %arg5[%c0_130, %c4736] : memref<2x6272xbf16, #tpu.memory_space<vmem>>, vector<2x128xbf16>
      tpu.vector_store %arg5[%c0_130, %c4736], %443 {strides = array<i32>} : memref<2x6272xbf16, #tpu.memory_space<vmem>>, vector<2x128xbf16>,
      %445 = vector.extract_strided_slice %417 {offsets = [0, 384], sizes = [2, 128], strides = [1, 1]} : vector<2x896xf32> to vector<2x128xf32>
      %446 = vector.broadcast %87 : vector<1x128xf32> to vector<2x128xf32>
      %447 = arith.mulf %445, %446 : vector<2x128xf32>
      %448 = vector.broadcast %90 : vector<1x128xf32> to vector<2x128xf32>
      %449 = arith.addf %447, %448 : vector<2x128xf32>
      %cst_131 = arith.constant 0.000000e+00 : f32
      %450 = vector.broadcast %cst_131 : f32 to vector<2x128xf32>
      %451 = arith.maximumf %449, %450 : vector<2x128xf32>
      %452 = arith.truncf %451 : vector<2x128xf32> to vector<2x128xbf16>
      %c0_132 = arith.constant 0 : index
      %c4864 = arith.constant 4864 : index
      %453 = vector.load %arg5[%c0_132, %c4864] : memref<2x6272xbf16, #tpu.memory_space<vmem>>, vector<2x128xbf16>
      tpu.vector_store %arg5[%c0_132, %c4864], %452 {strides = array<i32>} : memref<2x6272xbf16, #tpu.memory_space<vmem>>, vector<2x128xbf16>,
      %454 = vector.extract_strided_slice %417 {offsets = [0, 512], sizes = [2, 128], strides = [1, 1]} : vector<2x896xf32> to vector<2x128xf32>
      %455 = vector.broadcast %87 : vector<1x128xf32> to vector<2x128xf32>
      %456 = arith.mulf %454, %455 : vector<2x128xf32>
      %457 = vector.broadcast %90 : vector<1x128xf32> to vector<2x128xf32>
      %458 = arith.addf %456, %457 : vector<2x128xf32>
      %cst_133 = arith.constant 0.000000e+00 : f32
      %459 = vector.broadcast %cst_133 : f32 to vector<2x128xf32>
      %460 = arith.maximumf %458, %459 : vector<2x128xf32>
      %461 = arith.truncf %460 : vector<2x128xf32> to vector<2x128xbf16>
      %c0_134 = arith.constant 0 : index
      %c4992 = arith.constant 4992 : index
      %462 = vector.load %arg5[%c0_134, %c4992] : memref<2x6272xbf16, #tpu.memory_space<vmem>>, vector<2x128xbf16>
      tpu.vector_store %arg5[%c0_134, %c4992], %461 {strides = array<i32>} : memref<2x6272xbf16, #tpu.memory_space<vmem>>, vector<2x128xbf16>,
      %463 = vector.extract_strided_slice %417 {offsets = [0, 640], sizes = [2, 128], strides = [1, 1]} : vector<2x896xf32> to vector<2x128xf32>
      %464 = vector.broadcast %87 : vector<1x128xf32> to vector<2x128xf32>
      %465 = arith.mulf %463, %464 : vector<2x128xf32>
      %466 = vector.broadcast %90 : vector<1x128xf32> to vector<2x128xf32>
      %467 = arith.addf %465, %466 : vector<2x128xf32>
      %cst_135 = arith.constant 0.000000e+00 : f32
      %468 = vector.broadcast %cst_135 : f32 to vector<2x128xf32>
      %469 = arith.maximumf %467, %468 : vector<2x128xf32>
      %470 = arith.truncf %469 : vector<2x128xf32> to vector<2x128xbf16>
      %c0_136 = arith.constant 0 : index
      %c5120 = arith.constant 5120 : index
      %471 = vector.load %arg5[%c0_136, %c5120] : memref<2x6272xbf16, #tpu.memory_space<vmem>>, vector<2x128xbf16>
      tpu.vector_store %arg5[%c0_136, %c5120], %470 {strides = array<i32>} : memref<2x6272xbf16, #tpu.memory_space<vmem>>, vector<2x128xbf16>,
      %472 = vector.extract_strided_slice %417 {offsets = [0, 768], sizes = [2, 128], strides = [1, 1]} : vector<2x896xf32> to vector<2x128xf32>
      %473 = vector.broadcast %87 : vector<1x128xf32> to vector<2x128xf32>
      %474 = arith.mulf %472, %473 : vector<2x128xf32>
      %475 = vector.broadcast %90 : vector<1x128xf32> to vector<2x128xf32>
      %476 = arith.addf %474, %475 : vector<2x128xf32>
      %cst_137 = arith.constant 0.000000e+00 : f32
      %477 = vector.broadcast %cst_137 : f32 to vector<2x128xf32>
      %478 = arith.maximumf %476, %477 : vector<2x128xf32>
      %479 = arith.truncf %478 : vector<2x128xf32> to vector<2x128xbf16>
      %c0_138 = arith.constant 0 : index
      %c5248 = arith.constant 5248 : index
      %480 = vector.load %arg5[%c0_138, %c5248] : memref<2x6272xbf16, #tpu.memory_space<vmem>>, vector<2x128xbf16>
      tpu.vector_store %arg5[%c0_138, %c5248], %479 {strides = array<i32>} : memref<2x6272xbf16, #tpu.memory_space<vmem>>, vector<2x128xbf16>,
      %c6 = arith.constant 6 : index
      %c0_139 = arith.constant 0 : index
      %c0_140 = arith.constant 0 : index
      %481 = vector.load %arg6[%c6, %c0_139, %c0_140] : memref<7x2x896xf32, #tpu.memory_space<vmem>>, vector<1x2x896xf32>
      %482 = vector.shape_cast %481 : vector<1x2x896xf32> to vector<2x896xf32>
      %483 = vector.extract_strided_slice %482 {offsets = [0, 0], sizes = [2, 128], strides = [1, 1]} : vector<2x896xf32> to vector<2x128xf32>
      %484 = vector.broadcast %87 : vector<1x128xf32> to vector<2x128xf32>
      %485 = arith.mulf %483, %484 : vector<2x128xf32>
      %486 = vector.broadcast %90 : vector<1x128xf32> to vector<2x128xf32>
      %487 = arith.addf %485, %486 : vector<2x128xf32>
      %cst_141 = arith.constant 0.000000e+00 : f32
      %488 = vector.broadcast %cst_141 : f32 to vector<2x128xf32>
      %489 = arith.maximumf %487, %488 : vector<2x128xf32>
      %490 = arith.truncf %489 : vector<2x128xf32> to vector<2x128xbf16>
      %c0_142 = arith.constant 0 : index
      %c5376 = arith.constant 5376 : index
      %491 = vector.load %arg5[%c0_142, %c5376] : memref<2x6272xbf16, #tpu.memory_space<vmem>>, vector<2x128xbf16>
      tpu.vector_store %arg5[%c0_142, %c5376], %490 {strides = array<i32>} : memref<2x6272xbf16, #tpu.memory_space<vmem>>, vector<2x128xbf16>,
      %492 = vector.extract_strided_slice %482 {offsets = [0, 128], sizes = [2, 128], strides = [1, 1]} : vector<2x896xf32> to vector<2x128xf32>
      %493 = vector.broadcast %87 : vector<1x128xf32> to vector<2x128xf32>
      %494 = arith.mulf %492, %493 : vector<2x128xf32>
      %495 = vector.broadcast %90 : vector<1x128xf32> to vector<2x128xf32>
      %496 = arith.addf %494, %495 : vector<2x128xf32>
      %cst_143 = arith.constant 0.000000e+00 : f32
      %497 = vector.broadcast %cst_143 : f32 to vector<2x128xf32>
      %498 = arith.maximumf %496, %497 : vector<2x128xf32>
      %499 = arith.truncf %498 : vector<2x128xf32> to vector<2x128xbf16>
      %c0_144 = arith.constant 0 : index
      %c5504 = arith.constant 5504 : index
      %500 = vector.load %arg5[%c0_144, %c5504] : memref<2x6272xbf16, #tpu.memory_space<vmem>>, vector<2x128xbf16>
      tpu.vector_store %arg5[%c0_144, %c5504], %499 {strides = array<i32>} : memref<2x6272xbf16, #tpu.memory_space<vmem>>, vector<2x128xbf16>,
      %501 = vector.extract_strided_slice %482 {offsets = [0, 256], sizes = [2, 128], strides = [1, 1]} : vector<2x896xf32> to vector<2x128xf32>
      %502 = vector.broadcast %87 : vector<1x128xf32> to vector<2x128xf32>
      %503 = arith.mulf %501, %502 : vector<2x128xf32>
      %504 = vector.broadcast %90 : vector<1x128xf32> to vector<2x128xf32>
      %505 = arith.addf %503, %504 : vector<2x128xf32>
      %cst_145 = arith.constant 0.000000e+00 : f32
      %506 = vector.broadcast %cst_145 : f32 to vector<2x128xf32>
      %507 = arith.maximumf %505, %506 : vector<2x128xf32>
      %508 = arith.truncf %507 : vector<2x128xf32> to vector<2x128xbf16>
      %c0_146 = arith.constant 0 : index
      %c5632 = arith.constant 5632 : index
      %509 = vector.load %arg5[%c0_146, %c5632] : memref<2x6272xbf16, #tpu.memory_space<vmem>>, vector<2x128xbf16>
      tpu.vector_store %arg5[%c0_146, %c5632], %508 {strides = array<i32>} : memref<2x6272xbf16, #tpu.memory_space<vmem>>, vector<2x128xbf16>,
      %510 = vector.extract_strided_slice %482 {offsets = [0, 384], sizes = [2, 128], strides = [1, 1]} : vector<2x896xf32> to vector<2x128xf32>
      %511 = vector.broadcast %87 : vector<1x128xf32> to vector<2x128xf32>
      %512 = arith.mulf %510, %511 : vector<2x128xf32>
      %513 = vector.broadcast %90 : vector<1x128xf32> to vector<2x128xf32>
      %514 = arith.addf %512, %513 : vector<2x128xf32>
      %cst_147 = arith.constant 0.000000e+00 : f32
      %515 = vector.broadcast %cst_147 : f32 to vector<2x128xf32>
      %516 = arith.maximumf %514, %515 : vector<2x128xf32>
      %517 = arith.truncf %516 : vector<2x128xf32> to vector<2x128xbf16>
      %c0_148 = arith.constant 0 : index
      %c5760 = arith.constant 5760 : index
      %518 = vector.load %arg5[%c0_148, %c5760] : memref<2x6272xbf16, #tpu.memory_space<vmem>>, vector<2x128xbf16>
      tpu.vector_store %arg5[%c0_148, %c5760], %517 {strides = array<i32>} : memref<2x6272xbf16, #tpu.memory_space<vmem>>, vector<2x128xbf16>,
      %519 = vector.extract_strided_slice %482 {offsets = [0, 512], sizes = [2, 128], strides = [1, 1]} : vector<2x896xf32> to vector<2x128xf32>
      %520 = vector.broadcast %87 : vector<1x128xf32> to vector<2x128xf32>
      %521 = arith.mulf %519, %520 : vector<2x128xf32>
      %522 = vector.broadcast %90 : vector<1x128xf32> to vector<2x128xf32>
      %523 = arith.addf %521, %522 : vector<2x128xf32>
      %cst_149 = arith.constant 0.000000e+00 : f32
      %524 = vector.broadcast %cst_149 : f32 to vector<2x128xf32>
      %525 = arith.maximumf %523, %524 : vector<2x128xf32>
      %526 = arith.truncf %525 : vector<2x128xf32> to vector<2x128xbf16>
      %c0_150 = arith.constant 0 : index
      %c5888 = arith.constant 5888 : index
      %527 = vector.load %arg5[%c0_150, %c5888] : memref<2x6272xbf16, #tpu.memory_space<vmem>>, vector<2x128xbf16>
      tpu.vector_store %arg5[%c0_150, %c5888], %526 {strides = array<i32>} : memref<2x6272xbf16, #tpu.memory_space<vmem>>, vector<2x128xbf16>,
      %528 = vector.extract_strided_slice %482 {offsets = [0, 640], sizes = [2, 128], strides = [1, 1]} : vector<2x896xf32> to vector<2x128xf32>
      %529 = vector.broadcast %87 : vector<1x128xf32> to vector<2x128xf32>
      %530 = arith.mulf %528, %529 : vector<2x128xf32>
      %531 = vector.broadcast %90 : vector<1x128xf32> to vector<2x128xf32>
      %532 = arith.addf %530, %531 : vector<2x128xf32>
      %cst_151 = arith.constant 0.000000e+00 : f32
      %533 = vector.broadcast %cst_151 : f32 to vector<2x128xf32>
      %534 = arith.maximumf %532, %533 : vector<2x128xf32>
      %535 = arith.truncf %534 : vector<2x128xf32> to vector<2x128xbf16>
      %c0_152 = arith.constant 0 : index
      %c6016 = arith.constant 6016 : index
      %536 = vector.load %arg5[%c0_152, %c6016] : memref<2x6272xbf16, #tpu.memory_space<vmem>>, vector<2x128xbf16>
      tpu.vector_store %arg5[%c0_152, %c6016], %535 {strides = array<i32>} : memref<2x6272xbf16, #tpu.memory_space<vmem>>, vector<2x128xbf16>,
      %537 = vector.extract_strided_slice %482 {offsets = [0, 768], sizes = [2, 128], strides = [1, 1]} : vector<2x896xf32> to vector<2x128xf32>
      %538 = vector.broadcast %87 : vector<1x128xf32> to vector<2x128xf32>
      %539 = arith.mulf %537, %538 : vector<2x128xf32>
      %540 = vector.broadcast %90 : vector<1x128xf32> to vector<2x128xf32>
      %541 = arith.addf %539, %540 : vector<2x128xf32>
      %cst_153 = arith.constant 0.000000e+00 : f32
      %542 = vector.broadcast %cst_153 : f32 to vector<2x128xf32>
      %543 = arith.maximumf %541, %542 : vector<2x128xf32>
      %544 = arith.truncf %543 : vector<2x128xf32> to vector<2x128xbf16>
      %c0_154 = arith.constant 0 : index
      %c6144 = arith.constant 6144 : index
      %545 = vector.load %arg5[%c0_154, %c6144] : memref<2x6272xbf16, #tpu.memory_space<vmem>>, vector<2x128xbf16>
      tpu.vector_store %arg5[%c0_154, %c6144], %544 {strides = array<i32>} : memref<2x6272xbf16, #tpu.memory_space<vmem>>, vector<2x128xbf16>,
    } else {
    }
    return
  }
  func.func @transform_0(%arg0: i32) -> (i32, i32) {
    %c0_i32 = arith.constant 0 : i32
    %c0_i32_0 = arith.constant 0 : i32
    %c0_i32_1 = arith.constant 0 : i32
    return %c0_i32, %c0_i32_0 : i32, i32
  }
  func.func @transform_1(%arg0: i32) -> (i32, i32) {
    %c0_i32 = arith.constant 0 : i32
    %c0_i32_0 = arith.constant 0 : i32
    return %c0_i32, %arg0 : i32, i32
  }
  func.func @transform_2(%arg0: i32) -> (i32, i32) {
    %c0_i32 = arith.constant 0 : i32
    %c0_i32_0 = arith.constant 0 : i32
    %c0_i32_1 = arith.constant 0 : i32
    return %c0_i32, %c0_i32_0 : i32, i32
  }
  func.func @transform_3(%arg0: i32) -> (i32, i32) {
    %c0_i32 = arith.constant 0 : i32
    %c0_i32_0 = arith.constant 0 : i32
    %c0_i32_1 = arith.constant 0 : i32
    return %c0_i32, %c0_i32_0 : i32, i32
  }
  func.func @transform_4(%arg0: i32) -> (i32, i32) {
    %c0_i32 = arith.constant 0 : i32
    %c0_i32_0 = arith.constant 0 : i32
    %c0_i32_1 = arith.constant 0 : i32
    return %c0_i32, %c0_i32_0 : i32, i32
  }
}

module attributes {stable_mosaic.version = 11 : i64} {
  func.func @_conv2_bn_relu_kernel(%arg0: i32, %arg1: memref<9x98x128xbf16, #tpu.memory_space<vmem>>, %arg2: memref<4x4x128x128xbf16, #tpu.memory_space<vmem>>, %arg3: memref<1x128xf32, #tpu.memory_space<vmem>>, %arg4: memref<1x128xf32, #tpu.memory_space<vmem>>, %arg5: memref<4x98x128xbf16, #tpu.memory_space<vmem>>, %arg6: memref<4x98x128xf32, #tpu.memory_space<vmem>>) attributes {dimension_semantics = [#tpu.dimension_semantics<arbitrary>], iteration_bounds = array<i64: 1>, scalar_prefetch = 0 : i64, scratch_operands = 1 : i64, tpu.core_type = #tpu.core_type<tc>, window_params = [{pipeline_mode = #tpu.pipeline_mode<synchronous>, transform_indices = @transform_0, window_bounds = array<i64: 9, 98, 128>}, {pipeline_mode = #tpu.pipeline_mode<synchronous>, transform_indices = @transform_1, window_bounds = array<i64: 4, 4, 128, 128>}, {pipeline_mode = #tpu.pipeline_mode<synchronous>, transform_indices = @transform_2, window_bounds = array<i64: 1, 128>}, {pipeline_mode = #tpu.pipeline_mode<synchronous>, transform_indices = @transform_3, window_bounds = array<i64: 1, 128>}, {pipeline_mode = #tpu.pipeline_mode<synchronous>, transform_indices = @transform_4, window_bounds = array<i64: 4, 98, 128>}]} {
    %cst = arith.constant 0.000000e+00 : f32
    %0 = vector.broadcast %cst : f32 to vector<1x128xf32>
    %cst_0 = arith.constant 0.000000e+00 : f32
    %1 = vector.broadcast %cst_0 : f32 to vector<1x128xf32>
    %cst_1 = arith.constant 0.000000e+00 : f32
    %2 = vector.broadcast %cst_1 : f32 to vector<98x128xf32>
    %c0 = arith.constant 0 : index
    %c0_2 = arith.constant 0 : index
    %c0_3 = arith.constant 0 : index
    %3 = vector.load %arg1[%c0, %c0_2, %c0_3] : memref<9x98x128xbf16, #tpu.memory_space<vmem>>, vector<1x98x128xbf16>
    %4 = vector.shape_cast %3 : vector<1x98x128xbf16> to vector<98x128xbf16>
    %c0_4 = arith.constant 0 : index
    %c0_5 = arith.constant 0 : index
    %c0_6 = arith.constant 0 : index
    %c0_7 = arith.constant 0 : index
    %5 = vector.load %arg2[%c0_4, %c0_5, %c0_6, %c0_7] : memref<4x4x128x128xbf16, #tpu.memory_space<vmem>>, vector<1x1x128x128xbf16>
    %6 = vector.shape_cast %5 : vector<1x1x128x128xbf16> to vector<128x128xbf16>
    %cst_8 = arith.constant dense<0.000000e+00> : vector<98x128xf32>
    %7 = tpu.matmul %4, %6, %cst_8 {dimension_numbers = #tpu.dot_dimension_numbers<[1], [0], [0], [1], [0, 0, 1, 1], [], []>} : vector<98x128xbf16>, vector<128x128xbf16>, vector<98x128xf32> -> vector<98x128xf32>
    %8 = arith.addf %2, %7 : vector<98x128xf32>
    %c1 = arith.constant 1 : index
    %c0_9 = arith.constant 0 : index
    %c0_10 = arith.constant 0 : index
    %9 = vector.load %arg1[%c1, %c0_9, %c0_10] : memref<9x98x128xbf16, #tpu.memory_space<vmem>>, vector<1x98x128xbf16>
    %10 = vector.shape_cast %9 : vector<1x98x128xbf16> to vector<98x128xbf16>
    %c0_11 = arith.constant 0 : index
    %c1_12 = arith.constant 1 : index
    %c0_13 = arith.constant 0 : index
    %c0_14 = arith.constant 0 : index
    %11 = vector.load %arg2[%c0_11, %c1_12, %c0_13, %c0_14] : memref<4x4x128x128xbf16, #tpu.memory_space<vmem>>, vector<1x1x128x128xbf16>
    %12 = vector.shape_cast %11 : vector<1x1x128x128xbf16> to vector<128x128xbf16>
    %cst_15 = arith.constant dense<0.000000e+00> : vector<98x128xf32>
    %13 = tpu.matmul %10, %12, %cst_15 {dimension_numbers = #tpu.dot_dimension_numbers<[1], [0], [0], [1], [0, 0, 1, 1], [], []>} : vector<98x128xbf16>, vector<128x128xbf16>, vector<98x128xf32> -> vector<98x128xf32>
    %14 = arith.addf %8, %13 : vector<98x128xf32>
    %c3 = arith.constant 3 : index
    %c0_16 = arith.constant 0 : index
    %c0_17 = arith.constant 0 : index
    %15 = vector.load %arg1[%c3, %c0_16, %c0_17] : memref<9x98x128xbf16, #tpu.memory_space<vmem>>, vector<1x98x128xbf16>
    %16 = vector.shape_cast %15 : vector<1x98x128xbf16> to vector<98x128xbf16>
    %c0_18 = arith.constant 0 : index
    %c2 = arith.constant 2 : index
    %c0_19 = arith.constant 0 : index
    %c0_20 = arith.constant 0 : index
    %17 = vector.load %arg2[%c0_18, %c2, %c0_19, %c0_20] : memref<4x4x128x128xbf16, #tpu.memory_space<vmem>>, vector<1x1x128x128xbf16>
    %18 = vector.shape_cast %17 : vector<1x1x128x128xbf16> to vector<128x128xbf16>
    %cst_21 = arith.constant dense<0.000000e+00> : vector<98x128xf32>
    %19 = tpu.matmul %16, %18, %cst_21 {dimension_numbers = #tpu.dot_dimension_numbers<[1], [0], [0], [1], [0, 0, 1, 1], [], []>} : vector<98x128xbf16>, vector<128x128xbf16>, vector<98x128xf32> -> vector<98x128xf32>
    %20 = arith.addf %14, %19 : vector<98x128xf32>
    %c4 = arith.constant 4 : index
    %c0_22 = arith.constant 0 : index
    %c0_23 = arith.constant 0 : index
    %21 = vector.load %arg1[%c4, %c0_22, %c0_23] : memref<9x98x128xbf16, #tpu.memory_space<vmem>>, vector<1x98x128xbf16>
    %22 = vector.shape_cast %21 : vector<1x98x128xbf16> to vector<98x128xbf16>
    %c0_24 = arith.constant 0 : index
    %c3_25 = arith.constant 3 : index
    %c0_26 = arith.constant 0 : index
    %c0_27 = arith.constant 0 : index
    %23 = vector.load %arg2[%c0_24, %c3_25, %c0_26, %c0_27] : memref<4x4x128x128xbf16, #tpu.memory_space<vmem>>, vector<1x1x128x128xbf16>
    %24 = vector.shape_cast %23 : vector<1x1x128x128xbf16> to vector<128x128xbf16>
    %cst_28 = arith.constant dense<0.000000e+00> : vector<98x128xf32>
    %25 = tpu.matmul %22, %24, %cst_28 {dimension_numbers = #tpu.dot_dimension_numbers<[1], [0], [0], [1], [0, 0, 1, 1], [], []>} : vector<98x128xbf16>, vector<128x128xbf16>, vector<98x128xf32> -> vector<98x128xf32>
    %26 = arith.addf %20, %25 : vector<98x128xf32>
    %c0_29 = arith.constant 0 : index
    %c0_30 = arith.constant 0 : index
    %c0_31 = arith.constant 0 : index
    %27 = vector.load %arg6[%c0_29, %c0_30, %c0_31] : memref<4x98x128xf32, #tpu.memory_space<vmem>>, vector<1x98x128xf32>
    %28 = vector.shape_cast %27 : vector<1x98x128xf32> to vector<98x128xf32>
    %29 = vector.shape_cast %26 : vector<98x128xf32> to vector<1x98x128xf32>
    tpu.vector_store %arg6[%c0_29, %c0_30, %c0_31], %29 {strides = array<i32>} : memref<4x98x128xf32, #tpu.memory_space<vmem>>, vector<1x98x128xf32>,
    %cst_32 = arith.constant dense<0.000000e+00> : vector<128xf32>
    %30 = vector.multi_reduction <add>, %26, %cst_32 [0] : vector<98x128xf32> to vector<128xf32>
    %31 = vector.shape_cast %30 : vector<128xf32> to vector<1x128xf32>
    %32 = arith.addf %0, %31 : vector<1x128xf32>
    %33 = arith.mulf %26, %26 : vector<98x128xf32>
    %cst_33 = arith.constant dense<0.000000e+00> : vector<128xf32>
    %34 = vector.multi_reduction <add>, %33, %cst_33 [0] : vector<98x128xf32> to vector<128xf32>
    %35 = vector.shape_cast %34 : vector<128xf32> to vector<1x128xf32>
    %36 = arith.addf %1, %35 : vector<1x128xf32>
    %cst_34 = arith.constant 0.000000e+00 : f32
    %37 = vector.broadcast %cst_34 : f32 to vector<98x128xf32>
    %c1_35 = arith.constant 1 : index
    %c0_36 = arith.constant 0 : index
    %c0_37 = arith.constant 0 : index
    %38 = vector.load %arg1[%c1_35, %c0_36, %c0_37] : memref<9x98x128xbf16, #tpu.memory_space<vmem>>, vector<1x98x128xbf16>
    %39 = vector.shape_cast %38 : vector<1x98x128xbf16> to vector<98x128xbf16>
    %c1_38 = arith.constant 1 : index
    %c0_39 = arith.constant 0 : index
    %c0_40 = arith.constant 0 : index
    %c0_41 = arith.constant 0 : index
    %40 = vector.load %arg2[%c1_38, %c0_39, %c0_40, %c0_41] : memref<4x4x128x128xbf16, #tpu.memory_space<vmem>>, vector<1x1x128x128xbf16>
    %41 = vector.shape_cast %40 : vector<1x1x128x128xbf16> to vector<128x128xbf16>
    %cst_42 = arith.constant dense<0.000000e+00> : vector<98x128xf32>
    %42 = tpu.matmul %39, %41, %cst_42 {dimension_numbers = #tpu.dot_dimension_numbers<[1], [0], [0], [1], [0, 0, 1, 1], [], []>} : vector<98x128xbf16>, vector<128x128xbf16>, vector<98x128xf32> -> vector<98x128xf32>
    %43 = arith.addf %37, %42 : vector<98x128xf32>
    %c2_43 = arith.constant 2 : index
    %c0_44 = arith.constant 0 : index
    %c0_45 = arith.constant 0 : index
    %44 = vector.load %arg1[%c2_43, %c0_44, %c0_45] : memref<9x98x128xbf16, #tpu.memory_space<vmem>>, vector<1x98x128xbf16>
    %45 = vector.shape_cast %44 : vector<1x98x128xbf16> to vector<98x128xbf16>
    %c1_46 = arith.constant 1 : index
    %c1_47 = arith.constant 1 : index
    %c0_48 = arith.constant 0 : index
    %c0_49 = arith.constant 0 : index
    %46 = vector.load %arg2[%c1_46, %c1_47, %c0_48, %c0_49] : memref<4x4x128x128xbf16, #tpu.memory_space<vmem>>, vector<1x1x128x128xbf16>
    %47 = vector.shape_cast %46 : vector<1x1x128x128xbf16> to vector<128x128xbf16>
    %cst_50 = arith.constant dense<0.000000e+00> : vector<98x128xf32>
    %48 = tpu.matmul %45, %47, %cst_50 {dimension_numbers = #tpu.dot_dimension_numbers<[1], [0], [0], [1], [0, 0, 1, 1], [], []>} : vector<98x128xbf16>, vector<128x128xbf16>, vector<98x128xf32> -> vector<98x128xf32>
    %49 = arith.addf %43, %48 : vector<98x128xf32>
    %c4_51 = arith.constant 4 : index
    %c0_52 = arith.constant 0 : index
    %c0_53 = arith.constant 0 : index
    %50 = vector.load %arg1[%c4_51, %c0_52, %c0_53] : memref<9x98x128xbf16, #tpu.memory_space<vmem>>, vector<1x98x128xbf16>
    %51 = vector.shape_cast %50 : vector<1x98x128xbf16> to vector<98x128xbf16>
    %c1_54 = arith.constant 1 : index
    %c2_55 = arith.constant 2 : index
    %c0_56 = arith.constant 0 : index
    %c0_57 = arith.constant 0 : index
    %52 = vector.load %arg2[%c1_54, %c2_55, %c0_56, %c0_57] : memref<4x4x128x128xbf16, #tpu.memory_space<vmem>>, vector<1x1x128x128xbf16>
    %53 = vector.shape_cast %52 : vector<1x1x128x128xbf16> to vector<128x128xbf16>
    %cst_58 = arith.constant dense<0.000000e+00> : vector<98x128xf32>
    %54 = tpu.matmul %51, %53, %cst_58 {dimension_numbers = #tpu.dot_dimension_numbers<[1], [0], [0], [1], [0, 0, 1, 1], [], []>} : vector<98x128xbf16>, vector<128x128xbf16>, vector<98x128xf32> -> vector<98x128xf32>
    %55 = arith.addf %49, %54 : vector<98x128xf32>
    %c5 = arith.constant 5 : index
    %c0_59 = arith.constant 0 : index
    %c0_60 = arith.constant 0 : index
    %56 = vector.load %arg1[%c5, %c0_59, %c0_60] : memref<9x98x128xbf16, #tpu.memory_space<vmem>>, vector<1x98x128xbf16>
    %57 = vector.shape_cast %56 : vector<1x98x128xbf16> to vector<98x128xbf16>
    %c1_61 = arith.constant 1 : index
    %c3_62 = arith.constant 3 : index
    %c0_63 = arith.constant 0 : index
    %c0_64 = arith.constant 0 : index
    %58 = vector.load %arg2[%c1_61, %c3_62, %c0_63, %c0_64] : memref<4x4x128x128xbf16, #tpu.memory_space<vmem>>, vector<1x1x128x128xbf16>
    %59 = vector.shape_cast %58 : vector<1x1x128x128xbf16> to vector<128x128xbf16>
    %cst_65 = arith.constant dense<0.000000e+00> : vector<98x128xf32>
    %60 = tpu.matmul %57, %59, %cst_65 {dimension_numbers = #tpu.dot_dimension_numbers<[1], [0], [0], [1], [0, 0, 1, 1], [], []>} : vector<98x128xbf16>, vector<128x128xbf16>, vector<98x128xf32> -> vector<98x128xf32>
    %61 = arith.addf %55, %60 : vector<98x128xf32>
    %c1_66 = arith.constant 1 : index
    %c0_67 = arith.constant 0 : index
    %c0_68 = arith.constant 0 : index
    %62 = vector.load %arg6[%c1_66, %c0_67, %c0_68] : memref<4x98x128xf32, #tpu.memory_space<vmem>>, vector<1x98x128xf32>
    %63 = vector.shape_cast %62 : vector<1x98x128xf32> to vector<98x128xf32>
    %64 = vector.shape_cast %61 : vector<98x128xf32> to vector<1x98x128xf32>
    tpu.vector_store %arg6[%c1_66, %c0_67, %c0_68], %64 {strides = array<i32>} : memref<4x98x128xf32, #tpu.memory_space<vmem>>, vector<1x98x128xf32>,
    %cst_69 = arith.constant dense<0.000000e+00> : vector<128xf32>
    %65 = vector.multi_reduction <add>, %61, %cst_69 [0] : vector<98x128xf32> to vector<128xf32>
    %66 = vector.shape_cast %65 : vector<128xf32> to vector<1x128xf32>
    %67 = arith.addf %32, %66 : vector<1x128xf32>
    %68 = arith.mulf %61, %61 : vector<98x128xf32>
    %cst_70 = arith.constant dense<0.000000e+00> : vector<128xf32>
    %69 = vector.multi_reduction <add>, %68, %cst_70 [0] : vector<98x128xf32> to vector<128xf32>
    %70 = vector.shape_cast %69 : vector<128xf32> to vector<1x128xf32>
    %71 = arith.addf %36, %70 : vector<1x128xf32>
    %cst_71 = arith.constant 0.000000e+00 : f32
    %72 = vector.broadcast %cst_71 : f32 to vector<98x128xf32>
    %c3_72 = arith.constant 3 : index
    %c0_73 = arith.constant 0 : index
    %c0_74 = arith.constant 0 : index
    %73 = vector.load %arg1[%c3_72, %c0_73, %c0_74] : memref<9x98x128xbf16, #tpu.memory_space<vmem>>, vector<1x98x128xbf16>
    %74 = vector.shape_cast %73 : vector<1x98x128xbf16> to vector<98x128xbf16>
    %c2_75 = arith.constant 2 : index
    %c0_76 = arith.constant 0 : index
    %c0_77 = arith.constant 0 : index
    %c0_78 = arith.constant 0 : index
    %75 = vector.load %arg2[%c2_75, %c0_76, %c0_77, %c0_78] : memref<4x4x128x128xbf16, #tpu.memory_space<vmem>>, vector<1x1x128x128xbf16>
    %76 = vector.shape_cast %75 : vector<1x1x128x128xbf16> to vector<128x128xbf16>
    %cst_79 = arith.constant dense<0.000000e+00> : vector<98x128xf32>
    %77 = tpu.matmul %74, %76, %cst_79 {dimension_numbers = #tpu.dot_dimension_numbers<[1], [0], [0], [1], [0, 0, 1, 1], [], []>} : vector<98x128xbf16>, vector<128x128xbf16>, vector<98x128xf32> -> vector<98x128xf32>
    %78 = arith.addf %72, %77 : vector<98x128xf32>
    %c4_80 = arith.constant 4 : index
    %c0_81 = arith.constant 0 : index
    %c0_82 = arith.constant 0 : index
    %79 = vector.load %arg1[%c4_80, %c0_81, %c0_82] : memref<9x98x128xbf16, #tpu.memory_space<vmem>>, vector<1x98x128xbf16>
    %80 = vector.shape_cast %79 : vector<1x98x128xbf16> to vector<98x128xbf16>
    %c2_83 = arith.constant 2 : index
    %c1_84 = arith.constant 1 : index
    %c0_85 = arith.constant 0 : index
    %c0_86 = arith.constant 0 : index
    %81 = vector.load %arg2[%c2_83, %c1_84, %c0_85, %c0_86] : memref<4x4x128x128xbf16, #tpu.memory_space<vmem>>, vector<1x1x128x128xbf16>
    %82 = vector.shape_cast %81 : vector<1x1x128x128xbf16> to vector<128x128xbf16>
    %cst_87 = arith.constant dense<0.000000e+00> : vector<98x128xf32>
    %83 = tpu.matmul %80, %82, %cst_87 {dimension_numbers = #tpu.dot_dimension_numbers<[1], [0], [0], [1], [0, 0, 1, 1], [], []>} : vector<98x128xbf16>, vector<128x128xbf16>, vector<98x128xf32> -> vector<98x128xf32>
    %84 = arith.addf %78, %83 : vector<98x128xf32>
    %c6 = arith.constant 6 : index
    %c0_88 = arith.constant 0 : index
    %c0_89 = arith.constant 0 : index
    %85 = vector.load %arg1[%c6, %c0_88, %c0_89] : memref<9x98x128xbf16, #tpu.memory_space<vmem>>, vector<1x98x128xbf16>
    %86 = vector.shape_cast %85 : vector<1x98x128xbf16> to vector<98x128xbf16>
    %c2_90 = arith.constant 2 : index
    %c2_91 = arith.constant 2 : index
    %c0_92 = arith.constant 0 : index
    %c0_93 = arith.constant 0 : index
    %87 = vector.load %arg2[%c2_90, %c2_91, %c0_92, %c0_93] : memref<4x4x128x128xbf16, #tpu.memory_space<vmem>>, vector<1x1x128x128xbf16>
    %88 = vector.shape_cast %87 : vector<1x1x128x128xbf16> to vector<128x128xbf16>
    %cst_94 = arith.constant dense<0.000000e+00> : vector<98x128xf32>
    %89 = tpu.matmul %86, %88, %cst_94 {dimension_numbers = #tpu.dot_dimension_numbers<[1], [0], [0], [1], [0, 0, 1, 1], [], []>} : vector<98x128xbf16>, vector<128x128xbf16>, vector<98x128xf32> -> vector<98x128xf32>
    %90 = arith.addf %84, %89 : vector<98x128xf32>
    %c7 = arith.constant 7 : index
    %c0_95 = arith.constant 0 : index
    %c0_96 = arith.constant 0 : index
    %91 = vector.load %arg1[%c7, %c0_95, %c0_96] : memref<9x98x128xbf16, #tpu.memory_space<vmem>>, vector<1x98x128xbf16>
    %92 = vector.shape_cast %91 : vector<1x98x128xbf16> to vector<98x128xbf16>
    %c2_97 = arith.constant 2 : index
    %c3_98 = arith.constant 3 : index
    %c0_99 = arith.constant 0 : index
    %c0_100 = arith.constant 0 : index
    %93 = vector.load %arg2[%c2_97, %c3_98, %c0_99, %c0_100] : memref<4x4x128x128xbf16, #tpu.memory_space<vmem>>, vector<1x1x128x128xbf16>
    %94 = vector.shape_cast %93 : vector<1x1x128x128xbf16> to vector<128x128xbf16>
    %cst_101 = arith.constant dense<0.000000e+00> : vector<98x128xf32>
    %95 = tpu.matmul %92, %94, %cst_101 {dimension_numbers = #tpu.dot_dimension_numbers<[1], [0], [0], [1], [0, 0, 1, 1], [], []>} : vector<98x128xbf16>, vector<128x128xbf16>, vector<98x128xf32> -> vector<98x128xf32>
    %96 = arith.addf %90, %95 : vector<98x128xf32>
    %c2_102 = arith.constant 2 : index
    %c0_103 = arith.constant 0 : index
    %c0_104 = arith.constant 0 : index
    %97 = vector.load %arg6[%c2_102, %c0_103, %c0_104] : memref<4x98x128xf32, #tpu.memory_space<vmem>>, vector<1x98x128xf32>
    %98 = vector.shape_cast %97 : vector<1x98x128xf32> to vector<98x128xf32>
    %99 = vector.shape_cast %96 : vector<98x128xf32> to vector<1x98x128xf32>
    tpu.vector_store %arg6[%c2_102, %c0_103, %c0_104], %99 {strides = array<i32>} : memref<4x98x128xf32, #tpu.memory_space<vmem>>, vector<1x98x128xf32>,
    %cst_105 = arith.constant dense<0.000000e+00> : vector<128xf32>
    %100 = vector.multi_reduction <add>, %96, %cst_105 [0] : vector<98x128xf32> to vector<128xf32>
    %101 = vector.shape_cast %100 : vector<128xf32> to vector<1x128xf32>
    %102 = arith.addf %67, %101 : vector<1x128xf32>
    %103 = arith.mulf %96, %96 : vector<98x128xf32>
    %cst_106 = arith.constant dense<0.000000e+00> : vector<128xf32>
    %104 = vector.multi_reduction <add>, %103, %cst_106 [0] : vector<98x128xf32> to vector<128xf32>
    %105 = vector.shape_cast %104 : vector<128xf32> to vector<1x128xf32>
    %106 = arith.addf %71, %105 : vector<1x128xf32>
    %cst_107 = arith.constant 0.000000e+00 : f32
    %107 = vector.broadcast %cst_107 : f32 to vector<98x128xf32>
    %c4_108 = arith.constant 4 : index
    %c0_109 = arith.constant 0 : index
    %c0_110 = arith.constant 0 : index
    %108 = vector.load %arg1[%c4_108, %c0_109, %c0_110] : memref<9x98x128xbf16, #tpu.memory_space<vmem>>, vector<1x98x128xbf16>
    %109 = vector.shape_cast %108 : vector<1x98x128xbf16> to vector<98x128xbf16>
    %c3_111 = arith.constant 3 : index
    %c0_112 = arith.constant 0 : index
    %c0_113 = arith.constant 0 : index
    %c0_114 = arith.constant 0 : index
    %110 = vector.load %arg2[%c3_111, %c0_112, %c0_113, %c0_114] : memref<4x4x128x128xbf16, #tpu.memory_space<vmem>>, vector<1x1x128x128xbf16>
    %111 = vector.shape_cast %110 : vector<1x1x128x128xbf16> to vector<128x128xbf16>
    %cst_115 = arith.constant dense<0.000000e+00> : vector<98x128xf32>
    %112 = tpu.matmul %109, %111, %cst_115 {dimension_numbers = #tpu.dot_dimension_numbers<[1], [0], [0], [1], [0, 0, 1, 1], [], []>} : vector<98x128xbf16>, vector<128x128xbf16>, vector<98x128xf32> -> vector<98x128xf32>
    %113 = arith.addf %107, %112 : vector<98x128xf32>
    %c5_116 = arith.constant 5 : index
    %c0_117 = arith.constant 0 : index
    %c0_118 = arith.constant 0 : index
    %114 = vector.load %arg1[%c5_116, %c0_117, %c0_118] : memref<9x98x128xbf16, #tpu.memory_space<vmem>>, vector<1x98x128xbf16>
    %115 = vector.shape_cast %114 : vector<1x98x128xbf16> to vector<98x128xbf16>
    %c3_119 = arith.constant 3 : index
    %c1_120 = arith.constant 1 : index
    %c0_121 = arith.constant 0 : index
    %c0_122 = arith.constant 0 : index
    %116 = vector.load %arg2[%c3_119, %c1_120, %c0_121, %c0_122] : memref<4x4x128x128xbf16, #tpu.memory_space<vmem>>, vector<1x1x128x128xbf16>
    %117 = vector.shape_cast %116 : vector<1x1x128x128xbf16> to vector<128x128xbf16>
    %cst_123 = arith.constant dense<0.000000e+00> : vector<98x128xf32>
    %118 = tpu.matmul %115, %117, %cst_123 {dimension_numbers = #tpu.dot_dimension_numbers<[1], [0], [0], [1], [0, 0, 1, 1], [], []>} : vector<98x128xbf16>, vector<128x128xbf16>, vector<98x128xf32> -> vector<98x128xf32>
    %119 = arith.addf %113, %118 : vector<98x128xf32>
    %c7_124 = arith.constant 7 : index
    %c0_125 = arith.constant 0 : index
    %c0_126 = arith.constant 0 : index
    %120 = vector.load %arg1[%c7_124, %c0_125, %c0_126] : memref<9x98x128xbf16, #tpu.memory_space<vmem>>, vector<1x98x128xbf16>
    %121 = vector.shape_cast %120 : vector<1x98x128xbf16> to vector<98x128xbf16>
    %c3_127 = arith.constant 3 : index
    %c2_128 = arith.constant 2 : index
    %c0_129 = arith.constant 0 : index
    %c0_130 = arith.constant 0 : index
    %122 = vector.load %arg2[%c3_127, %c2_128, %c0_129, %c0_130] : memref<4x4x128x128xbf16, #tpu.memory_space<vmem>>, vector<1x1x128x128xbf16>
    %123 = vector.shape_cast %122 : vector<1x1x128x128xbf16> to vector<128x128xbf16>
    %cst_131 = arith.constant dense<0.000000e+00> : vector<98x128xf32>
    %124 = tpu.matmul %121, %123, %cst_131 {dimension_numbers = #tpu.dot_dimension_numbers<[1], [0], [0], [1], [0, 0, 1, 1], [], []>} : vector<98x128xbf16>, vector<128x128xbf16>, vector<98x128xf32> -> vector<98x128xf32>
    %125 = arith.addf %119, %124 : vector<98x128xf32>
    %c8 = arith.constant 8 : index
    %c0_132 = arith.constant 0 : index
    %c0_133 = arith.constant 0 : index
    %126 = vector.load %arg1[%c8, %c0_132, %c0_133] : memref<9x98x128xbf16, #tpu.memory_space<vmem>>, vector<1x98x128xbf16>
    %127 = vector.shape_cast %126 : vector<1x98x128xbf16> to vector<98x128xbf16>
    %c3_134 = arith.constant 3 : index
    %c3_135 = arith.constant 3 : index
    %c0_136 = arith.constant 0 : index
    %c0_137 = arith.constant 0 : index
    %128 = vector.load %arg2[%c3_134, %c3_135, %c0_136, %c0_137] : memref<4x4x128x128xbf16, #tpu.memory_space<vmem>>, vector<1x1x128x128xbf16>
    %129 = vector.shape_cast %128 : vector<1x1x128x128xbf16> to vector<128x128xbf16>
    %cst_138 = arith.constant dense<0.000000e+00> : vector<98x128xf32>
    %130 = tpu.matmul %127, %129, %cst_138 {dimension_numbers = #tpu.dot_dimension_numbers<[1], [0], [0], [1], [0, 0, 1, 1], [], []>} : vector<98x128xbf16>, vector<128x128xbf16>, vector<98x128xf32> -> vector<98x128xf32>
    %131 = arith.addf %125, %130 : vector<98x128xf32>
    %c3_139 = arith.constant 3 : index
    %c0_140 = arith.constant 0 : index
    %c0_141 = arith.constant 0 : index
    %132 = vector.load %arg6[%c3_139, %c0_140, %c0_141] : memref<4x98x128xf32, #tpu.memory_space<vmem>>, vector<1x98x128xf32>
    %133 = vector.shape_cast %132 : vector<1x98x128xf32> to vector<98x128xf32>
    %134 = vector.shape_cast %131 : vector<98x128xf32> to vector<1x98x128xf32>
    tpu.vector_store %arg6[%c3_139, %c0_140, %c0_141], %134 {strides = array<i32>} : memref<4x98x128xf32, #tpu.memory_space<vmem>>, vector<1x98x128xf32>,
    %cst_142 = arith.constant dense<0.000000e+00> : vector<128xf32>
    %135 = vector.multi_reduction <add>, %131, %cst_142 [0] : vector<98x128xf32> to vector<128xf32>
    %136 = vector.shape_cast %135 : vector<128xf32> to vector<1x128xf32>
    %137 = arith.addf %102, %136 : vector<1x128xf32>
    %138 = arith.mulf %131, %131 : vector<98x128xf32>
    %cst_143 = arith.constant dense<0.000000e+00> : vector<128xf32>
    %139 = vector.multi_reduction <add>, %138, %cst_143 [0] : vector<98x128xf32> to vector<128xf32>
    %140 = vector.shape_cast %139 : vector<128xf32> to vector<1x128xf32>
    %141 = arith.addf %106, %140 : vector<1x128xf32>
    %cst_144 = arith.constant 3.920000e+02 : f32
    %142 = vector.broadcast %cst_144 : f32 to vector<1x128xf32>
    %143 = arith.divf %137, %142 : vector<1x128xf32>
    %cst_145 = arith.constant 3.920000e+02 : f32
    %144 = vector.broadcast %cst_145 : f32 to vector<1x128xf32>
    %145 = arith.divf %141, %144 : vector<1x128xf32>
    %146 = arith.mulf %143, %143 : vector<1x128xf32>
    %147 = arith.subf %145, %146 : vector<1x128xf32>
    %cst_146 = arith.constant 0.000000e+00 : f32
    %148 = vector.broadcast %cst_146 : f32 to vector<1x128xf32>
    %149 = arith.maximumf %147, %148 : vector<1x128xf32>
    %cst_147 = arith.constant 9.99999974E-6 : f32
    %150 = vector.broadcast %cst_147 : f32 to vector<1x128xf32>
    %151 = arith.addf %149, %150 : vector<1x128xf32>
    %152 = math.rsqrt %151 : vector<1x128xf32>
    %c0_148 = arith.constant 0 : index
    %c0_149 = arith.constant 0 : index
    %153 = vector.load %arg3[%c0_148, %c0_149] : memref<1x128xf32, #tpu.memory_space<vmem>>, vector<1x128xf32>
    %154 = arith.mulf %152, %153 : vector<1x128xf32>
    %c0_150 = arith.constant 0 : index
    %c0_151 = arith.constant 0 : index
    %155 = vector.load %arg4[%c0_150, %c0_151] : memref<1x128xf32, #tpu.memory_space<vmem>>, vector<1x128xf32>
    %156 = arith.mulf %143, %154 : vector<1x128xf32>
    %157 = arith.subf %155, %156 : vector<1x128xf32>
    %c0_152 = arith.constant 0 : index
    %c0_153 = arith.constant 0 : index
    %c0_154 = arith.constant 0 : index
    %158 = vector.load %arg6[%c0_152, %c0_153, %c0_154] : memref<4x98x128xf32, #tpu.memory_space<vmem>>, vector<1x98x128xf32>
    %159 = vector.shape_cast %158 : vector<1x98x128xf32> to vector<98x128xf32>
    %160 = vector.broadcast %154 : vector<1x128xf32> to vector<98x128xf32>
    %161 = arith.mulf %159, %160 : vector<98x128xf32>
    %162 = vector.broadcast %157 : vector<1x128xf32> to vector<98x128xf32>
    %163 = arith.addf %161, %162 : vector<98x128xf32>
    %cst_155 = arith.constant 0.000000e+00 : f32
    %164 = vector.broadcast %cst_155 : f32 to vector<98x128xf32>
    %165 = arith.maximumf %163, %164 : vector<98x128xf32>
    %166 = arith.truncf %165 : vector<98x128xf32> to vector<98x128xbf16>
    %c0_156 = arith.constant 0 : index
    %c0_157 = arith.constant 0 : index
    %c0_158 = arith.constant 0 : index
    %167 = vector.load %arg5[%c0_156, %c0_157, %c0_158] : memref<4x98x128xbf16, #tpu.memory_space<vmem>>, vector<1x98x128xbf16>
    %168 = vector.shape_cast %167 : vector<1x98x128xbf16> to vector<98x128xbf16>
    %169 = vector.shape_cast %166 : vector<98x128xbf16> to vector<1x98x128xbf16>
    tpu.vector_store %arg5[%c0_156, %c0_157, %c0_158], %169 {strides = array<i32>} : memref<4x98x128xbf16, #tpu.memory_space<vmem>>, vector<1x98x128xbf16>,
    %c1_159 = arith.constant 1 : index
    %c0_160 = arith.constant 0 : index
    %c0_161 = arith.constant 0 : index
    %170 = vector.load %arg6[%c1_159, %c0_160, %c0_161] : memref<4x98x128xf32, #tpu.memory_space<vmem>>, vector<1x98x128xf32>
    %171 = vector.shape_cast %170 : vector<1x98x128xf32> to vector<98x128xf32>
    %172 = vector.broadcast %154 : vector<1x128xf32> to vector<98x128xf32>
    %173 = arith.mulf %171, %172 : vector<98x128xf32>
    %174 = vector.broadcast %157 : vector<1x128xf32> to vector<98x128xf32>
    %175 = arith.addf %173, %174 : vector<98x128xf32>
    %cst_162 = arith.constant 0.000000e+00 : f32
    %176 = vector.broadcast %cst_162 : f32 to vector<98x128xf32>
    %177 = arith.maximumf %175, %176 : vector<98x128xf32>
    %178 = arith.truncf %177 : vector<98x128xf32> to vector<98x128xbf16>
    %c1_163 = arith.constant 1 : index
    %c0_164 = arith.constant 0 : index
    %c0_165 = arith.constant 0 : index
    %179 = vector.load %arg5[%c1_163, %c0_164, %c0_165] : memref<4x98x128xbf16, #tpu.memory_space<vmem>>, vector<1x98x128xbf16>
    %180 = vector.shape_cast %179 : vector<1x98x128xbf16> to vector<98x128xbf16>
    %181 = vector.shape_cast %178 : vector<98x128xbf16> to vector<1x98x128xbf16>
    tpu.vector_store %arg5[%c1_163, %c0_164, %c0_165], %181 {strides = array<i32>} : memref<4x98x128xbf16, #tpu.memory_space<vmem>>, vector<1x98x128xbf16>,
    %c2_166 = arith.constant 2 : index
    %c0_167 = arith.constant 0 : index
    %c0_168 = arith.constant 0 : index
    %182 = vector.load %arg6[%c2_166, %c0_167, %c0_168] : memref<4x98x128xf32, #tpu.memory_space<vmem>>, vector<1x98x128xf32>
    %183 = vector.shape_cast %182 : vector<1x98x128xf32> to vector<98x128xf32>
    %184 = vector.broadcast %154 : vector<1x128xf32> to vector<98x128xf32>
    %185 = arith.mulf %183, %184 : vector<98x128xf32>
    %186 = vector.broadcast %157 : vector<1x128xf32> to vector<98x128xf32>
    %187 = arith.addf %185, %186 : vector<98x128xf32>
    %cst_169 = arith.constant 0.000000e+00 : f32
    %188 = vector.broadcast %cst_169 : f32 to vector<98x128xf32>
    %189 = arith.maximumf %187, %188 : vector<98x128xf32>
    %190 = arith.truncf %189 : vector<98x128xf32> to vector<98x128xbf16>
    %c2_170 = arith.constant 2 : index
    %c0_171 = arith.constant 0 : index
    %c0_172 = arith.constant 0 : index
    %191 = vector.load %arg5[%c2_170, %c0_171, %c0_172] : memref<4x98x128xbf16, #tpu.memory_space<vmem>>, vector<1x98x128xbf16>
    %192 = vector.shape_cast %191 : vector<1x98x128xbf16> to vector<98x128xbf16>
    %193 = vector.shape_cast %190 : vector<98x128xbf16> to vector<1x98x128xbf16>
    tpu.vector_store %arg5[%c2_170, %c0_171, %c0_172], %193 {strides = array<i32>} : memref<4x98x128xbf16, #tpu.memory_space<vmem>>, vector<1x98x128xbf16>,
    %c3_173 = arith.constant 3 : index
    %c0_174 = arith.constant 0 : index
    %c0_175 = arith.constant 0 : index
    %194 = vector.load %arg6[%c3_173, %c0_174, %c0_175] : memref<4x98x128xf32, #tpu.memory_space<vmem>>, vector<1x98x128xf32>
    %195 = vector.shape_cast %194 : vector<1x98x128xf32> to vector<98x128xf32>
    %196 = vector.broadcast %154 : vector<1x128xf32> to vector<98x128xf32>
    %197 = arith.mulf %195, %196 : vector<98x128xf32>
    %198 = vector.broadcast %157 : vector<1x128xf32> to vector<98x128xf32>
    %199 = arith.addf %197, %198 : vector<98x128xf32>
    %cst_176 = arith.constant 0.000000e+00 : f32
    %200 = vector.broadcast %cst_176 : f32 to vector<98x128xf32>
    %201 = arith.maximumf %199, %200 : vector<98x128xf32>
    %202 = arith.truncf %201 : vector<98x128xf32> to vector<98x128xbf16>
    %c3_177 = arith.constant 3 : index
    %c0_178 = arith.constant 0 : index
    %c0_179 = arith.constant 0 : index
    %203 = vector.load %arg5[%c3_177, %c0_178, %c0_179] : memref<4x98x128xbf16, #tpu.memory_space<vmem>>, vector<1x98x128xbf16>
    %204 = vector.shape_cast %203 : vector<1x98x128xbf16> to vector<98x128xbf16>
    %205 = vector.shape_cast %202 : vector<98x128xbf16> to vector<1x98x128xbf16>
    tpu.vector_store %arg5[%c3_177, %c0_178, %c0_179], %205 {strides = array<i32>} : memref<4x98x128xbf16, #tpu.memory_space<vmem>>, vector<1x98x128xbf16>,
    return
  }
  func.func @transform_0(%arg0: i32) -> (i32, i32, i32) {
    %c0_i32 = arith.constant 0 : i32
    %c0_i32_0 = arith.constant 0 : i32
    %c0_i32_1 = arith.constant 0 : i32
    %c0_i32_2 = arith.constant 0 : i32
    return %c0_i32, %c0_i32_0, %c0_i32_1 : i32, i32, i32
  }
  func.func @transform_1(%arg0: i32) -> (i32, i32, i32, i32) {
    %c0_i32 = arith.constant 0 : i32
    %c0_i32_0 = arith.constant 0 : i32
    %c0_i32_1 = arith.constant 0 : i32
    %c0_i32_2 = arith.constant 0 : i32
    %c0_i32_3 = arith.constant 0 : i32
    return %c0_i32, %c0_i32_0, %c0_i32_1, %c0_i32_2 : i32, i32, i32, i32
  }
  func.func @transform_2(%arg0: i32) -> (i32, i32) {
    %c0_i32 = arith.constant 0 : i32
    %c0_i32_0 = arith.constant 0 : i32
    %c0_i32_1 = arith.constant 0 : i32
    return %c0_i32, %c0_i32_0 : i32, i32
  }
  func.func @transform_3(%arg0: i32) -> (i32, i32) {
    %c0_i32 = arith.constant 0 : i32
    %c0_i32_0 = arith.constant 0 : i32
    %c0_i32_1 = arith.constant 0 : i32
    return %c0_i32, %c0_i32_0 : i32, i32
  }
  func.func @transform_4(%arg0: i32) -> (i32, i32, i32) {
    %c0_i32 = arith.constant 0 : i32
    %c0_i32_0 = arith.constant 0 : i32
    %c0_i32_1 = arith.constant 0 : i32
    %c0_i32_2 = arith.constant 0 : i32
    return %c0_i32, %c0_i32_0, %c0_i32_1 : i32, i32, i32
  }
}

module attributes {stable_mosaic.version = 11 : i64} {
  func.func @_conv3_tanh_kernel(%arg0: i32, %arg1: memref<9x128x64xbf16, #tpu.memory_space<vmem>>, %arg2: memref<9x64x128xbf16, #tpu.memory_space<vmem>>, %arg3: memref<128x128xbf16, #tpu.memory_space<vmem>>) attributes {dimension_semantics = [#tpu.dimension_semantics<parallel>], iteration_bounds = array<i64: 4>, scalar_prefetch = 0 : i64, scratch_operands = 0 : i64, tpu.core_type = #tpu.core_type<tc>, window_params = [{transform_indices = @transform_0, window_bounds = array<i64: 9, 128, 64>}, {pipeline_mode = #tpu.pipeline_mode<synchronous>, transform_indices = @transform_1, window_bounds = array<i64: 9, 64, 128>}, {transform_indices = @transform_2, window_bounds = array<i64: 128, 128>}]} {
    %c0 = arith.constant 0 : index
    %c0_0 = arith.constant 0 : index
    %c0_1 = arith.constant 0 : index
    %0 = vector.load %arg1[%c0, %c0_0, %c0_1] : memref<9x128x64xbf16, #tpu.memory_space<vmem>>, vector<1x128x64xbf16>
    %1 = vector.shape_cast %0 : vector<1x128x64xbf16> to vector<128x64xbf16>
    %c0_2 = arith.constant 0 : index
    %c0_3 = arith.constant 0 : index
    %c0_4 = arith.constant 0 : index
    %2 = vector.load %arg2[%c0_2, %c0_3, %c0_4] : memref<9x64x128xbf16, #tpu.memory_space<vmem>>, vector<1x64x128xbf16>
    %3 = vector.shape_cast %2 : vector<1x64x128xbf16> to vector<64x128xbf16>
    %cst = arith.constant dense<0.000000e+00> : vector<128x128xf32>
    %4 = tpu.matmul %1, %3, %cst {dimension_numbers = #tpu.dot_dimension_numbers<[1], [0], [0], [1], [0, 0, 1, 1], [], []>} : vector<128x64xbf16>, vector<64x128xbf16>, vector<128x128xf32> -> vector<128x128xf32>
    %c1 = arith.constant 1 : index
    %c0_5 = arith.constant 0 : index
    %c0_6 = arith.constant 0 : index
    %5 = vector.load %arg1[%c1, %c0_5, %c0_6] : memref<9x128x64xbf16, #tpu.memory_space<vmem>>, vector<1x128x64xbf16>
    %6 = vector.shape_cast %5 : vector<1x128x64xbf16> to vector<128x64xbf16>
    %c1_7 = arith.constant 1 : index
    %c0_8 = arith.constant 0 : index
    %c0_9 = arith.constant 0 : index
    %7 = vector.load %arg2[%c1_7, %c0_8, %c0_9] : memref<9x64x128xbf16, #tpu.memory_space<vmem>>, vector<1x64x128xbf16>
    %8 = vector.shape_cast %7 : vector<1x64x128xbf16> to vector<64x128xbf16>
    %cst_10 = arith.constant dense<0.000000e+00> : vector<128x128xf32>
    %9 = tpu.matmul %6, %8, %cst_10 {dimension_numbers = #tpu.dot_dimension_numbers<[1], [0], [0], [1], [0, 0, 1, 1], [], []>} : vector<128x64xbf16>, vector<64x128xbf16>, vector<128x128xf32> -> vector<128x128xf32>
    %10 = arith.addf %4, %9 : vector<128x128xf32>
    %c2 = arith.constant 2 : index
    %c0_11 = arith.constant 0 : index
    %c0_12 = arith.constant 0 : index
    %11 = vector.load %arg1[%c2, %c0_11, %c0_12] : memref<9x128x64xbf16, #tpu.memory_space<vmem>>, vector<1x128x64xbf16>
    %12 = vector.shape_cast %11 : vector<1x128x64xbf16> to vector<128x64xbf16>
    %c2_13 = arith.constant 2 : index
    %c0_14 = arith.constant 0 : index
    %c0_15 = arith.constant 0 : index
    %13 = vector.load %arg2[%c2_13, %c0_14, %c0_15] : memref<9x64x128xbf16, #tpu.memory_space<vmem>>, vector<1x64x128xbf16>
    %14 = vector.shape_cast %13 : vector<1x64x128xbf16> to vector<64x128xbf16>
    %cst_16 = arith.constant dense<0.000000e+00> : vector<128x128xf32>
    %15 = tpu.matmul %12, %14, %cst_16 {dimension_numbers = #tpu.dot_dimension_numbers<[1], [0], [0], [1], [0, 0, 1, 1], [], []>} : vector<128x64xbf16>, vector<64x128xbf16>, vector<128x128xf32> -> vector<128x128xf32>
    %16 = arith.addf %10, %15 : vector<128x128xf32>
    %c3 = arith.constant 3 : index
    %c0_17 = arith.constant 0 : index
    %c0_18 = arith.constant 0 : index
    %17 = vector.load %arg1[%c3, %c0_17, %c0_18] : memref<9x128x64xbf16, #tpu.memory_space<vmem>>, vector<1x128x64xbf16>
    %18 = vector.shape_cast %17 : vector<1x128x64xbf16> to vector<128x64xbf16>
    %c3_19 = arith.constant 3 : index
    %c0_20 = arith.constant 0 : index
    %c0_21 = arith.constant 0 : index
    %19 = vector.load %arg2[%c3_19, %c0_20, %c0_21] : memref<9x64x128xbf16, #tpu.memory_space<vmem>>, vector<1x64x128xbf16>
    %20 = vector.shape_cast %19 : vector<1x64x128xbf16> to vector<64x128xbf16>
    %cst_22 = arith.constant dense<0.000000e+00> : vector<128x128xf32>
    %21 = tpu.matmul %18, %20, %cst_22 {dimension_numbers = #tpu.dot_dimension_numbers<[1], [0], [0], [1], [0, 0, 1, 1], [], []>} : vector<128x64xbf16>, vector<64x128xbf16>, vector<128x128xf32> -> vector<128x128xf32>
    %22 = arith.addf %16, %21 : vector<128x128xf32>
    %c4 = arith.constant 4 : index
    %c0_23 = arith.constant 0 : index
    %c0_24 = arith.constant 0 : index
    %23 = vector.load %arg1[%c4, %c0_23, %c0_24] : memref<9x128x64xbf16, #tpu.memory_space<vmem>>, vector<1x128x64xbf16>
    %24 = vector.shape_cast %23 : vector<1x128x64xbf16> to vector<128x64xbf16>
    %c4_25 = arith.constant 4 : index
    %c0_26 = arith.constant 0 : index
    %c0_27 = arith.constant 0 : index
    %25 = vector.load %arg2[%c4_25, %c0_26, %c0_27] : memref<9x64x128xbf16, #tpu.memory_space<vmem>>, vector<1x64x128xbf16>
    %26 = vector.shape_cast %25 : vector<1x64x128xbf16> to vector<64x128xbf16>
    %cst_28 = arith.constant dense<0.000000e+00> : vector<128x128xf32>
    %27 = tpu.matmul %24, %26, %cst_28 {dimension_numbers = #tpu.dot_dimension_numbers<[1], [0], [0], [1], [0, 0, 1, 1], [], []>} : vector<128x64xbf16>, vector<64x128xbf16>, vector<128x128xf32> -> vector<128x128xf32>
    %28 = arith.addf %22, %27 : vector<128x128xf32>
    %c5 = arith.constant 5 : index
    %c0_29 = arith.constant 0 : index
    %c0_30 = arith.constant 0 : index
    %29 = vector.load %arg1[%c5, %c0_29, %c0_30] : memref<9x128x64xbf16, #tpu.memory_space<vmem>>, vector<1x128x64xbf16>
    %30 = vector.shape_cast %29 : vector<1x128x64xbf16> to vector<128x64xbf16>
    %c5_31 = arith.constant 5 : index
    %c0_32 = arith.constant 0 : index
    %c0_33 = arith.constant 0 : index
    %31 = vector.load %arg2[%c5_31, %c0_32, %c0_33] : memref<9x64x128xbf16, #tpu.memory_space<vmem>>, vector<1x64x128xbf16>
    %32 = vector.shape_cast %31 : vector<1x64x128xbf16> to vector<64x128xbf16>
    %cst_34 = arith.constant dense<0.000000e+00> : vector<128x128xf32>
    %33 = tpu.matmul %30, %32, %cst_34 {dimension_numbers = #tpu.dot_dimension_numbers<[1], [0], [0], [1], [0, 0, 1, 1], [], []>} : vector<128x64xbf16>, vector<64x128xbf16>, vector<128x128xf32> -> vector<128x128xf32>
    %34 = arith.addf %28, %33 : vector<128x128xf32>
    %c6 = arith.constant 6 : index
    %c0_35 = arith.constant 0 : index
    %c0_36 = arith.constant 0 : index
    %35 = vector.load %arg1[%c6, %c0_35, %c0_36] : memref<9x128x64xbf16, #tpu.memory_space<vmem>>, vector<1x128x64xbf16>
    %36 = vector.shape_cast %35 : vector<1x128x64xbf16> to vector<128x64xbf16>
    %c6_37 = arith.constant 6 : index
    %c0_38 = arith.constant 0 : index
    %c0_39 = arith.constant 0 : index
    %37 = vector.load %arg2[%c6_37, %c0_38, %c0_39] : memref<9x64x128xbf16, #tpu.memory_space<vmem>>, vector<1x64x128xbf16>
    %38 = vector.shape_cast %37 : vector<1x64x128xbf16> to vector<64x128xbf16>
    %cst_40 = arith.constant dense<0.000000e+00> : vector<128x128xf32>
    %39 = tpu.matmul %36, %38, %cst_40 {dimension_numbers = #tpu.dot_dimension_numbers<[1], [0], [0], [1], [0, 0, 1, 1], [], []>} : vector<128x64xbf16>, vector<64x128xbf16>, vector<128x128xf32> -> vector<128x128xf32>
    %40 = arith.addf %34, %39 : vector<128x128xf32>
    %c7 = arith.constant 7 : index
    %c0_41 = arith.constant 0 : index
    %c0_42 = arith.constant 0 : index
    %41 = vector.load %arg1[%c7, %c0_41, %c0_42] : memref<9x128x64xbf16, #tpu.memory_space<vmem>>, vector<1x128x64xbf16>
    %42 = vector.shape_cast %41 : vector<1x128x64xbf16> to vector<128x64xbf16>
    %c7_43 = arith.constant 7 : index
    %c0_44 = arith.constant 0 : index
    %c0_45 = arith.constant 0 : index
    %43 = vector.load %arg2[%c7_43, %c0_44, %c0_45] : memref<9x64x128xbf16, #tpu.memory_space<vmem>>, vector<1x64x128xbf16>
    %44 = vector.shape_cast %43 : vector<1x64x128xbf16> to vector<64x128xbf16>
    %cst_46 = arith.constant dense<0.000000e+00> : vector<128x128xf32>
    %45 = tpu.matmul %42, %44, %cst_46 {dimension_numbers = #tpu.dot_dimension_numbers<[1], [0], [0], [1], [0, 0, 1, 1], [], []>} : vector<128x64xbf16>, vector<64x128xbf16>, vector<128x128xf32> -> vector<128x128xf32>
    %46 = arith.addf %40, %45 : vector<128x128xf32>
    %c8 = arith.constant 8 : index
    %c0_47 = arith.constant 0 : index
    %c0_48 = arith.constant 0 : index
    %47 = vector.load %arg1[%c8, %c0_47, %c0_48] : memref<9x128x64xbf16, #tpu.memory_space<vmem>>, vector<1x128x64xbf16>
    %48 = vector.shape_cast %47 : vector<1x128x64xbf16> to vector<128x64xbf16>
    %c8_49 = arith.constant 8 : index
    %c0_50 = arith.constant 0 : index
    %c0_51 = arith.constant 0 : index
    %49 = vector.load %arg2[%c8_49, %c0_50, %c0_51] : memref<9x64x128xbf16, #tpu.memory_space<vmem>>, vector<1x64x128xbf16>
    %50 = vector.shape_cast %49 : vector<1x64x128xbf16> to vector<64x128xbf16>
    %cst_52 = arith.constant dense<0.000000e+00> : vector<128x128xf32>
    %51 = tpu.matmul %48, %50, %cst_52 {dimension_numbers = #tpu.dot_dimension_numbers<[1], [0], [0], [1], [0, 0, 1, 1], [], []>} : vector<128x64xbf16>, vector<64x128xbf16>, vector<128x128xf32> -> vector<128x128xf32>
    %52 = arith.addf %46, %51 : vector<128x128xf32>
    %53 = math.tanh %52 : vector<128x128xf32>
    %54 = arith.truncf %53 : vector<128x128xf32> to vector<128x128xbf16>
    %c0_53 = arith.constant 0 : index
    %c0_54 = arith.constant 0 : index
    %55 = vector.load %arg3[%c0_53, %c0_54] : memref<128x128xbf16, #tpu.memory_space<vmem>>, vector<128x128xbf16>
    tpu.vector_store %arg3[%c0_53, %c0_54], %54 {strides = array<i32>} : memref<128x128xbf16, #tpu.memory_space<vmem>>, vector<128x128xbf16>,
    return
  }
  func.func @transform_0(%arg0: i32) -> (i32, i32, i32) {
    %c0_i32 = arith.constant 0 : i32
    %c0_i32_0 = arith.constant 0 : i32
    %c0_i32_1 = arith.constant 0 : i32
    return %c0_i32, %arg0, %c0_i32_0 : i32, i32, i32
  }
  func.func @transform_1(%arg0: i32) -> (i32, i32, i32) {
    %c0_i32 = arith.constant 0 : i32
    %c0_i32_0 = arith.constant 0 : i32
    %c0_i32_1 = arith.constant 0 : i32
    %c0_i32_2 = arith.constant 0 : i32
    return %c0_i32, %c0_i32_0, %c0_i32_1 : i32, i32, i32
  }
  func.func @transform_2(%arg0: i32) -> (i32, i32) {
    %c0_i32 = arith.constant 0 : i32
    %c0_i32_0 = arith.constant 0 : i32
    return %arg0, %c0_i32 : i32, i32
  }
}

</mosaic_0001>

<llo_original>
// kernel: generator_forward.3
$region0: #{generator_forward.3}
  #allocation0 [shape = 'u32[]', space=smem, size = 0x4, offset = 0x4, fixed_abs, tag = 'smem constant byte address 0x4 - core index']
  #allocation1 [shape = 'u32[144,128]{1,0:T(1,128)}', space=vmem, size = 0x12000, scoped, tag = 'internal scratch']
  #allocation2 [shape = 'f32[7,2,896]{2,1,0:T(2,128)}', space=vmem, size = 0xc400, scoped, tag = 'scratch operand']
  #allocation3 [shape = 'f32[1,128]{1,0:T(1,128)}', space=vmem, size = 0x200, scoped, tag = 'scratch operand']
  #allocation4 [shape = 'f32[1,128]{1,0:T(1,128)}', space=vmem, size = 0x200, scoped, tag = 'scratch operand']
  %s0 = inlined_call_operand.vmem [shape: bf16[2,128], index: 0, kind: input, shape index: {}]
  %s1 = inlined_call_operand.hbm [shape: bf16[128,6272], index: 1, kind: input, shape index: {}]
  %s2 = inlined_call_operand.vmem [shape: f32[1,128], index: 2, kind: input, shape index: {}]
  %s3 = inlined_call_operand.vmem [shape: f32[1,128], index: 3, kind: input, shape index: {}]
  %s4 = inlined_call_operand.vmem [shape: bf16[2,6272], index: 4, kind: output, shape index: {}]
  %s5 = sld [smem:[#allocation0]]
  $region61: #{generator_forward.3} parent=0
    _
  %s7 = ssub.s32 1, %s5
  %s8 = scalar_select 0, %s7, %s5
  $region1: #{generator_forward.3} parent=0
    #allocation5 [shape = 'u8[458752]{0}', space=vmem, size = 0x70000, scoped, tag = 'input window, operand 1']
    #allocation6 [shape = 's32[2]{0}', space=sflag, size = 0x8, scoped, tag = 'scoped memory for generator_forward.3']
    %9 = vsyncpa [#allocation6], 0
    %s10 = scalar_lea.sflag [#allocation6], 1
    %11 = vsyncpa %s10, 0
    loop: start=0, step=1, limit=9
    $region2: #{generator_forward.3} parent=1 // loop_pre_header
      _
    $region3: #{generator_forward.3} parent=1 // loop_header
      %s13 = sphi 0, %s17
      %p14 = scmp.ge.s32.totalorder %s13, 9
      %s21 = sphi 0, %s21
      %s23 = sphi 0, %s21
      %s24 = sphi 0, %s23
      %s38 = sphi 0, %s24
      %s44 = sphi 0, %s46
      %s47 = sphi 0, %s44
      %s48 = sphi 0, %s47
      %s64 = sphi 0, %s48
      %s68 = sphi 0, %s68
      %s70 = sphi 0, %s68
      %s71 = sphi 0, %s70
      %s85 = sphi 0, %s71
      %s89 = sphi 0, %s89
      %s91 = sphi 0, %s89
      %s92 = sphi 0, %s91
      %s106 = sphi 0, %s92
      %s110 = sphi 0, %s110
      %s112 = sphi 0, %s110
      %s113 = sphi 0, %s112
      %s127 = sphi 0, %s113
    $region4: #{generator_forward.3} parent=1 // loop_header_branch
      %16 = sbr.rel (%p14) target = $region8
    $region5: #{generator_forward.3} parent=1 // loop_body
      %s18 = ssub.s32 %s13, 1
      %s19 = ssub.s32 %s13, 2
      %s20 = sadd.s32 %s13, 1
      %s22 = sadd.s32 %s21, 1
      %p25 = scmp.eq.s32.totalorder %s13, 6
      %p26 = scmp.ne.s32.totalorder %s21, %s23
      %p27 = scmp.eq.s32.totalorder %s13, 0
      %p28 = por %p26, %p27
      %p29 = scmp.ne.s32.totalorder %s21, %s23
      %p30 = scmp.eq.s32.totalorder %s18, 6
      %p31 = por %p29, %p30
      %p32 = scmp.ne.s32.totalorder %s23, %s24
      %p33 = scmp.eq.s32.totalorder %s18, 0
      %p34 = por %p32, %p33
      %p35 = scmp.ne.s32.totalorder %s23, %s24
      %p36 = scmp.eq.s32.totalorder %s19, 6
      %p37 = por %p35, %p36
      %p39 = scmp.ne.s32.totalorder %s24, %s38
      %p40 = scmp.eq.s32.totalorder %s19, 0
      %p41 = por %p39, %p40
      %s42 = ssub.s32 %s13, %s20
      %p43 = scmp.eq.s32.totalorder %s42, 0
      %s45 = sadd.s32 %s44, 1
      %s46 = scalar_select %p43, %s44, %s45
      %p49 = pneg %p43
      %p50 = scmp.eq.s32.totalorder %s13, 6
      %p51 = por %p49, %p50
      %p52 = scmp.ne.s32.totalorder %s44, %s47
      %p53 = scmp.eq.s32.totalorder %s13, 0
      %p54 = por %p52, %p53
      %p55 = scmp.ne.s32.totalorder %s44, %s47
      %p56 = scmp.eq.s32.totalorder %s18, 6
      %p57 = por %p55, %p56
      %p58 = scmp.ne.s32.totalorder %s47, %s48
      %p59 = scmp.eq.s32.totalorder %s18, 0
      %p60 = por %p58, %p59
      %p61 = scmp.ne.s32.totalorder %s47, %s48
      %p62 = scmp.eq.s32.totalorder %s19, 6
      %p63 = por %p61, %p62
      %p65 = scmp.ne.s32.totalorder %s48, %s64
      %p66 = scmp.eq.s32.totalorder %s19, 0
      %p67 = por %p65, %p66
      %s69 = sadd.s32 %s68, 1
      %p72 = scmp.eq.s32.totalorder %s13, 6
      %p73 = scmp.ne.s32.totalorder %s68, %s70
      %p74 = scmp.eq.s32.totalorder %s13, 0
      %p75 = por %p73, %p74
      %p76 = scmp.ne.s32.totalorder %s68, %s70
      %p77 = scmp.eq.s32.totalorder %s18, 6
      %p78 = por %p76, %p77
      %p79 = scmp.ne.s32.totalorder %s70, %s71
      %p80 = scmp.eq.s32.totalorder %s18, 0
      %p81 = por %p79, %p80
      %p82 = scmp.ne.s32.totalorder %s70, %s71
      %p83 = scmp.eq.s32.totalorder %s19, 6
      %p84 = por %p82, %p83
      %p86 = scmp.ne.s32.totalorder %s71, %s85
      %p87 = scmp.eq.s32.totalorder %s19, 0
      %p88 = por %p86, %p87
      %s90 = sadd.s32 %s89, 1
      %p93 = scmp.eq.s32.totalorder %s13, 6
      %p94 = scmp.ne.s32.totalorder %s89, %s91
      %p95 = scmp.eq.s32.totalorder %s13, 0
      %p96 = por %p94, %p95
      %p97 = scmp.ne.s32.totalorder %s89, %s91
      %p98 = scmp.eq.s32.totalorder %s18, 6
      %p99 = por %p97, %p98
      %p100 = scmp.ne.s32.totalorder %s91, %s92
      %p101 = scmp.eq.s32.totalorder %s18, 0
      %p102 = por %p100, %p101
      %p103 = scmp.ne.s32.totalorder %s91, %s92
      %p104 = scmp.eq.s32.totalorder %s19, 6
      %p105 = por %p103, %p104
      %p107 = scmp.ne.s32.totalorder %s92, %s106
      %p108 = scmp.eq.s32.totalorder %s19, 0
      %p109 = por %p107, %p108
      %s111 = sadd.s32 %s110, 1
      %p114 = scmp.eq.s32.totalorder %s13, 6
      %p115 = scmp.ne.s32.totalorder %s110, %s112
      %p116 = scmp.eq.s32.totalorder %s13, 0
      %p117 = por %p115, %p116
      %p118 = scmp.ne.s32.totalorder %s110, %s112
      %p119 = scmp.eq.s32.totalorder %s18, 6
      %p120 = por %p118, %p119
      %p121 = scmp.ne.s32.totalorder %s112, %s113
      %p122 = scmp.eq.s32.totalorder %s18, 0
      %p123 = por %p121, %p122
      %p124 = scmp.ne.s32.totalorder %s112, %s113
      %p125 = scmp.eq.s32.totalorder %s19, 6
      %p126 = por %p124, %p125
      %p128 = scmp.ne.s32.totalorder %s113, %s127
      %p129 = scmp.eq.s32.totalorder %s19, 0
      %p130 = por %p128, %p129
      %p131 = scmp.le.s32.totalorder 1, %s13
      %p132 = scmp.lt.s32.totalorder %s13, 8
      %p133 = pnand %p131, %p132
      %p134 = pneg %p133
      // Predicated region
      $region9: #{generator_forward.3} parent=5 // pred_check
        _
      $region10: #{generator_forward.3} parent=5 // pred_check_branch
        %136 = sbr.rel (%p133) target = $region12
      $region11: #{generator_forward.3} parent=5 // pred_region
        %s137 = ssub.s32 %s13, 1
        // Predicated region
        $region13: #{generator_forward.3} parent=11 // pred_check
          %p138 = pneg %p34
        $region14: #{generator_forward.3} parent=11 // pred_check_branch
          %140 = sbr.rel (%p138) target = $region16
        $region15: #{generator_forward.3} parent=11 // pred_region
          _
        $region16: #{generator_forward.3} parent=11 // pred_fallthru
          _
        // Predicated region
        $region17: #{generator_forward.3} parent=11 // pred_check
          %p141 = pneg %p81
        $region18: #{generator_forward.3} parent=11 // pred_check_branch
          %143 = sbr.rel (%p141) target = $region20
        $region19: #{generator_forward.3} parent=11 // pred_region
          _
        $region20: #{generator_forward.3} parent=11 // pred_fallthru
          _
        // Predicated region
        $region21: #{generator_forward.3} parent=11 // pred_check
          %p144 = pneg %p102
        $region22: #{generator_forward.3} parent=11 // pred_check_branch
          %146 = sbr.rel (%p144) target = $region24
        $region23: #{generator_forward.3} parent=11 // pred_region
          _
        $region24: #{generator_forward.3} parent=11 // pred_fallthru
          _
      $region12: #{generator_forward.3} parent=5 // pred_fallthru
        _
      %p147 = scmp.lt.s32.totalorder %s13, 7
      // Predicated region
      $region25: #{generator_forward.3} parent=5 // pred_check
        %p148 = pneg %p147
      $region26: #{generator_forward.3} parent=5 // pred_check_branch
        %150 = sbr.rel (%p148) target = $region28
      $region27: #{generator_forward.3} parent=5 // pred_region
        // Predicated region
        $region29: #{generator_forward.3} parent=27 // pred_check
          %p151 = pneg %p54
        $region30: #{generator_forward.3} parent=27 // pred_check_branch
          %153 = sbr.rel (%p151) target = $region32
        $region31: #{generator_forward.3} parent=27 // pred_region
          %s154 = sand.u32 %s44, 1
          %s155 = scalar_lea.sflag [#allocation6], %s154
          %s156 = sand.u32 %s44, 1
          %s157 = smul.addr %s156, 448
          %s158 = scalar_lea.vmem [#allocation5], %s157
          %s159 = smul.u32 7, %s13
          %s161 = ssub.s32 7168, 7168
          %162 = vsyncadd %s155, %s161
          %s163 = smul.addr %s159, 64
          %s164 = scalar_lea.hbm %s1, %s163
          %s165 = sshll.u32 %s158, 4
          %s166 = int_to_ptr.vmem [resolvable:$true] %s165
          %171 = dma.hbm_to_vmem [thread:$0]  %s164, 7168, %s166, %s155, 3136, 448, 28
        $region32: #{generator_forward.3} parent=27 // pred_fallthru
          _
      $region28: #{generator_forward.3} parent=5 // pred_fallthru
        _
      %p172 = scmp.le.s32.totalorder 1, %s13
      %p173 = scmp.lt.s32.totalorder %s13, 8
      %p174 = pnand %p172, %p173
      %p175 = pneg %p174
      // Predicated region
      $region33: #{generator_forward.3} parent=5 // pred_check
        _
      $region34: #{generator_forward.3} parent=5 // pred_check_branch
        %177 = sbr.rel (%p174) target = $region36
      $region35: #{generator_forward.3} parent=5 // pred_region
        %s178 = ssub.s32 %s13, 1
        %s179 = sand.u32 %s47, 1
        %s180 = scalar_lea.sflag [#allocation6], %s179
        %s181 = sand.u32 %s47, 1
        %s182 = smul.addr %s181, 448
        %s183 = scalar_lea.vmem [#allocation5], %s182
        // Predicated region
        $region37: #{generator_forward.3} parent=35 // pred_check
          %p184 = pneg %p60
        $region38: #{generator_forward.3} parent=35 // pred_check_branch
          %186 = sbr.rel (%p184) target = $region40
        $region39: #{generator_forward.3} parent=35 // pred_region
          %187 = dma.done %s180, 7168
        $region40: #{generator_forward.3} parent=35 // pred_fallthru
          _
        %p188 = pneg %p34
        %p189 = pneg %p31
        %s190 = sand.u32 %s47, 1
        %s191 = scalar_lea.sflag [#allocation6], %s190
        %s192 = sand.u32 %s47, 1
        %s193 = smul.addr %s192, 448
        %s194 = scalar_lea.vmem [#allocation5], %s193
        %p195 = pneg %p60
        %p196 = pneg %p57
        %p197 = pneg %p81
        %p198 = pneg %p78
        %p199 = pneg %p102
        %p200 = pneg %p99
        %p201 = pneg %p123
        %p202 = pneg %p120
        %s203 = smul.u32 7, %s18
        %p205 = scmp.eq.s32.totalorder %s18, 0
        // Predicated region
        $region41: #{generator_forward.3} parent=35 // pred_check
          %p206 = pneg %p205
        $region42: #{generator_forward.3} parent=35 // pred_check_branch
          %208 = sbr.rel (%p206) target = $region44
        $region43: #{generator_forward.3} parent=35 // pred_region
          %209 = vst [vmem:[#allocation3] sm:$0x1] 0.0
          %210 = vst [vmem:[#allocation4] sm:$0x1] 0.0
        $region44: #{generator_forward.3} parent=35 // pred_fallthru
          _
        %v211 = vld [vmem:[%s0] sm:$0x1]
        %v212 = vld [vmem:[%s183] sm:$0xff]
        %v213 = vld [vmem:[%s183 + $0x8] sm:$0xff]
        %v214 = vld [vmem:[%s183 + $0x10] sm:$0xff]
        %v215 = vld [vmem:[%s183 + $0x18] sm:$0xf]
        %v216 = vld [vmem:[%s183 + $0x1c] sm:$0xff]
        %v217 = vld [vmem:[%s183 + $0x24] sm:$0xff]
        %v218 = vld [vmem:[%s183 + $0x2c] sm:$0xff]
        %v219 = vld [vmem:[%s183 + $0x34] sm:$0xf]
        %v220 = vld [vmem:[%s183 + $0x38] sm:$0xff]
        %v221 = vld [vmem:[%s183 + $0x40] sm:$0xff]
        %v222 = vld [vmem:[%s183 + $0x48] sm:$0xff]
        %v223 = vld [vmem:[%s183 + $0x50] sm:$0xf]
        %v224 = vld [vmem:[%s183 + $0x54] sm:$0xff]
        %v225 = vld [vmem:[%s183 + $0x5c] sm:$0xff]
        %v226 = vld [vmem:[%s183 + $0x64] sm:$0xff]
        %v227 = vld [vmem:[%s183 + $0x6c] sm:$0xf]
        %v228 = vld [vmem:[%s183 + $0x70] sm:$0xff]
        %v229 = vld [vmem:[%s183 + $0x78] sm:$0xff]
        %v230 = vld [vmem:[%s183 + $0x80] sm:$0xff]
        %v231 = vld [vmem:[%s183 + $0x88] sm:$0xf]
        %v232 = vld [vmem:[%s183 + $0x8c] sm:$0xff]
        %v233 = vld [vmem:[%s183 + $0x94] sm:$0xff]
        %v234 = vld [vmem:[%s183 + $0x9c] sm:$0xff]
        %v235 = vld [vmem:[%s183 + $0xa4] sm:$0xf]
        %v236 = vld [vmem:[%s183 + $0xa8] sm:$0xff]
        %v237 = vld [vmem:[%s183 + $0xb0] sm:$0xff]
        %v238 = vld [vmem:[%s183 + $0xb8] sm:$0xff]
        %v239 = vld [vmem:[%s183 + $0xc0] sm:$0xf]
        %v240 = vld [vmem:[%s183 + $0xc4] sm:$0xff]
        %v241 = vld [vmem:[%s183 + $0xcc] sm:$0xff]
        %v242 = vld [vmem:[%s183 + $0xd4] sm:$0xff]
        %v243 = vld [vmem:[%s183 + $0xdc] sm:$0xf]
        %v244 = vld [vmem:[%s183 + $0xe0] sm:$0xff]
        %v245 = vld [vmem:[%s183 + $0xe8] sm:$0xff]
        %v246 = vld [vmem:[%s183 + $0xf0] sm:$0xff]
        %v247 = vld [vmem:[%s183 + $0xf8] sm:$0xf]
        %v248 = vld [vmem:[%s183 + $0xfc] sm:$0xff]
        %v249 = vld [vmem:[%s183 + $0x104] sm:$0xff]
        %v250 = vld [vmem:[%s183 + $0x10c] sm:$0xff]
        %v251 = vld [vmem:[%s183 + $0x114] sm:$0xf]
        %v252 = vld [vmem:[%s183 + $0x118] sm:$0xff]
        %v253 = vld [vmem:[%s183 + $0x120] sm:$0xff]
        %v254 = vld [vmem:[%s183 + $0x128] sm:$0xff]
        %v255 = vld [vmem:[%s183 + $0x130] sm:$0xf]
        %v256 = vld [vmem:[%s183 + $0x134] sm:$0xff]
        %v257 = vld [vmem:[%s183 + $0x13c] sm:$0xff]
        %v258 = vld [vmem:[%s183 + $0x144] sm:$0xff]
        %v259 = vld [vmem:[%s183 + $0x14c] sm:$0xf]
        %v260 = vld [vmem:[%s183 + $0x150] sm:$0xff]
        %v261 = vld [vmem:[%s183 + $0x158] sm:$0xff]
        %v262 = vld [vmem:[%s183 + $0x160] sm:$0xff]
        %v263 = vld [vmem:[%s183 + $0x168] sm:$0xf]
        %v264 = vld [vmem:[%s183 + $0x16c] sm:$0xff]
        %v265 = vld [vmem:[%s183 + $0x174] sm:$0xff]
        %v266 = vld [vmem:[%s183 + $0x17c] sm:$0xff]
        %v267 = vld [vmem:[%s183 + $0x184] sm:$0xf]
        %v268 = vld [vmem:[%s183 + $0x188] sm:$0xff]
        %v269 = vld [vmem:[%s183 + $0x190] sm:$0xff]
        %v270 = vld [vmem:[%s183 + $0x198] sm:$0xff]
        %v271 = vld [vmem:[%s183 + $0x1a0] sm:$0xf]
        %v272 = vld [vmem:[%s183 + $0x1a4] sm:$0xff]
        %v273 = vld [vmem:[%s183 + $0x1ac] sm:$0xff]
        %v274 = vld [vmem:[%s183 + $0x1b4] sm:$0xff]
        %v275 = vld [vmem:[%s183 + $0x1bc] sm:$0xf]
        %v340 = vunpack.c.l.b16 %v212
        %v341 = vunpack.c.h.b16 %v212
        %v342 = vunpack.c.l.b16 %v213
        %v343 = vunpack.c.h.b16 %v213
        %v344 = vunpack.c.l.b16 %v214
        %v345 = vunpack.c.h.b16 %v214
        %v346 = vunpack.c.l.b16 %v215
        %v347 = vunpack.c.l.b16 %v216
        %v348 = vunpack.c.h.b16 %v216
        %v349 = vunpack.c.l.b16 %v217
        %v350 = vunpack.c.h.b16 %v217
        %v351 = vunpack.c.l.b16 %v218
        %v352 = vunpack.c.h.b16 %v218
        %v353 = vunpack.c.l.b16 %v219
        %v354 = vunpack.c.l.b16 %v220
        %v355 = vunpack.c.h.b16 %v220
        %v356 = vunpack.c.l.b16 %v221
        %v357 = vunpack.c.h.b16 %v221
        %v358 = vunpack.c.l.b16 %v222
        %v359 = vunpack.c.h.b16 %v222
        %v360 = vunpack.c.l.b16 %v223
        %v361 = vunpack.c.l.b16 %v224
        %v362 = vunpack.c.h.b16 %v224
        %v363 = vunpack.c.l.b16 %v225
        %v364 = vunpack.c.h.b16 %v225
        %v365 = vunpack.c.l.b16 %v226
        %v366 = vunpack.c.h.b16 %v226
        %v367 = vunpack.c.l.b16 %v227
        %v368 = vunpack.c.l.b16 %v228
        %v369 = vunpack.c.h.b16 %v228
        %v370 = vunpack.c.l.b16 %v229
        %v371 = vunpack.c.h.b16 %v229
        %v372 = vunpack.c.l.b16 %v230
        %v373 = vunpack.c.h.b16 %v230
        %v374 = vunpack.c.l.b16 %v231
        %v375 = vunpack.c.l.b16 %v232
        %v376 = vunpack.c.h.b16 %v232
        %v377 = vunpack.c.l.b16 %v233
        %v378 = vunpack.c.h.b16 %v233
        %v379 = vunpack.c.l.b16 %v234
        %v380 = vunpack.c.h.b16 %v234
        %v381 = vunpack.c.l.b16 %v235
        %v382 = vunpack.c.l.b16 %v236
        %v383 = vunpack.c.h.b16 %v236
        %v384 = vunpack.c.l.b16 %v237
        %v385 = vunpack.c.h.b16 %v237
        %v386 = vunpack.c.l.b16 %v238
        %v387 = vunpack.c.h.b16 %v238
        %v388 = vunpack.c.l.b16 %v239
        %v389 = vunpack.c.l.b16 %v240
        %v390 = vunpack.c.h.b16 %v240
        %v391 = vunpack.c.l.b16 %v241
        %v392 = vunpack.c.h.b16 %v241
        %v393 = vunpack.c.l.b16 %v242
        %v394 = vunpack.c.h.b16 %v242
        %v395 = vunpack.c.l.b16 %v243
        %v396 = vunpack.c.l.b16 %v244
        %v397 = vunpack.c.h.b16 %v244
        %v398 = vunpack.c.l.b16 %v245
        %v399 = vunpack.c.h.b16 %v245
        %v400 = vunpack.c.l.b16 %v246
        %v401 = vunpack.c.h.b16 %v246
        %v402 = vunpack.c.l.b16 %v247
        %v403 = vunpack.c.l.b16 %v248
        %v404 = vunpack.c.h.b16 %v248
        %v405 = vunpack.c.l.b16 %v249
        %v406 = vunpack.c.h.b16 %v249
        %v407 = vunpack.c.l.b16 %v250
        %v408 = vunpack.c.h.b16 %v250
        %v409 = vunpack.c.l.b16 %v251
        %v410 = vunpack.c.l.b16 %v252
        %v411 = vunpack.c.h.b16 %v252
        %v412 = vunpack.c.l.b16 %v253
        %v413 = vunpack.c.h.b16 %v253
        %v414 = vunpack.c.l.b16 %v254
        %v415 = vunpack.c.h.b16 %v254
        %v416 = vunpack.c.l.b16 %v255
        %v417 = vunpack.c.l.b16 %v256
        %v418 = vunpack.c.h.b16 %v256
        %v419 = vunpack.c.l.b16 %v257
        %v420 = vunpack.c.h.b16 %v257
        %v421 = vunpack.c.l.b16 %v258
        %v422 = vunpack.c.h.b16 %v258
        %v423 = vunpack.c.l.b16 %v259
        %v424 = vunpack.c.l.b16 %v260
        %v425 = vunpack.c.h.b16 %v260
        %v426 = vunpack.c.l.b16 %v261
        %v427 = vunpack.c.h.b16 %v261
        %v428 = vunpack.c.l.b16 %v262
        %v429 = vunpack.c.h.b16 %v262
        %v430 = vunpack.c.l.b16 %v263
        %v431 = vunpack.c.l.b16 %v264
        %v432 = vunpack.c.h.b16 %v264
        %v433 = vunpack.c.l.b16 %v265
        %v434 = vunpack.c.h.b16 %v265
        %v435 = vunpack.c.l.b16 %v266
        %v436 = vunpack.c.h.b16 %v266
        %v437 = vunpack.c.l.b16 %v267
        %v438 = vunpack.c.l.b16 %v268
        %v439 = vunpack.c.h.b16 %v268
        %v440 = vunpack.c.l.b16 %v269
        %v441 = vunpack.c.h.b16 %v269
        %v442 = vunpack.c.l.b16 %v270
        %v443 = vunpack.c.h.b16 %v270
        %v444 = vunpack.c.l.b16 %v271
        %v445 = vunpack.c.l.b16 %v272
        %v446 = vunpack.c.h.b16 %v272
        %v447 = vunpack.c.l.b16 %v273
        %v448 = vunpack.c.h.b16 %v273
        %v449 = vunpack.c.l.b16 %v274
        %v450 = vunpack.c.h.b16 %v274
        %v451 = vunpack.c.l.b16 %v275
        %v452 = vpack.c.b16 %v347, %v340
        %v453 = vpack.c.b16 %v348, %v341
        %v454 = vpack.c.b16 %v349, %v342
        %v455 = vpack.c.b16 %v350, %v343
        %v456 = vpack.c.b16 %v351, %v344
        %v457 = vpack.c.b16 %v352, %v345
        %v458 = vpack.c.b16 %v353, %v346
        %v459 = vpack.c.b16 %v361, %v354
        %v460 = vpack.c.b16 %v362, %v355
        %v461 = vpack.c.b16 %v363, %v356
        %v462 = vpack.c.b16 %v364, %v357
        %v463 = vpack.c.b16 %v365, %v358
        %v464 = vpack.c.b16 %v366, %v359
        %v465 = vpack.c.b16 %v367, %v360
        %v466 = vpack.c.b16 %v375, %v368
        %v467 = vpack.c.b16 %v376, %v369
        %v468 = vpack.c.b16 %v377, %v370
        %v469 = vpack.c.b16 %v378, %v371
        %v470 = vpack.c.b16 %v379, %v372
        %v471 = vpack.c.b16 %v380, %v373
        %v472 = vpack.c.b16 %v381, %v374
        %v473 = vpack.c.b16 %v389, %v382
        %v474 = vpack.c.b16 %v390, %v383
        %v475 = vpack.c.b16 %v391, %v384
        %v476 = vpack.c.b16 %v392, %v385
        %v477 = vpack.c.b16 %v393, %v386
        %v478 = vpack.c.b16 %v394, %v387
        %v479 = vpack.c.b16 %v395, %v388
        %v480 = vpack.c.b16 %v403, %v396
        %v481 = vpack.c.b16 %v404, %v397
        %v482 = vpack.c.b16 %v405, %v398
        %v483 = vpack.c.b16 %v406, %v399
        %v484 = vpack.c.b16 %v407, %v400
        %v485 = vpack.c.b16 %v408, %v401
        %v486 = vpack.c.b16 %v409, %v402
        %v487 = vpack.c.b16 %v417, %v410
        %v488 = vpack.c.b16 %v418, %v411
        %v489 = vpack.c.b16 %v419, %v412
        %v490 = vpack.c.b16 %v420, %v413
        %v491 = vpack.c.b16 %v421, %v414
        %v492 = vpack.c.b16 %v422, %v415
        %v493 = vpack.c.b16 %v423, %v416
        %v494 = vpack.c.b16 %v431, %v424
        %v495 = vpack.c.b16 %v432, %v425
        %v496 = vpack.c.b16 %v433, %v426
        %v497 = vpack.c.b16 %v434, %v427
        %v498 = vpack.c.b16 %v435, %v428
        %v499 = vpack.c.b16 %v436, %v429
        %v500 = vpack.c.b16 %v437, %v430
        %v501 = vpack.c.b16 %v445, %v438
        %v502 = vpack.c.b16 %v446, %v439
        %v503 = vpack.c.b16 %v447, %v440
        %v504 = vpack.c.b16 %v448, %v441
        %v505 = vpack.c.b16 %v449, %v442
        %v506 = vpack.c.b16 %v450, %v443
        %v507 = vpack.c.b16 %v451, %v444
        %564 = vmatprep.subr.bf16.mxu0 %v502
        %565 = vmatpush1.bf16.msra.mxu0 %v501
        %566 = vmatprep.subr.bf16.mxu0 %v495
        %567 = vmatpush1.bf16.msra.mxu0 %v494
        %568 = vmatprep.subr.bf16.mxu0 %v488
        %569 = vmatpush1.bf16.msra.mxu0 %v487
        %570 = vmatprep.subr.bf16.mxu0 %v481
        %571 = vmatpush1.bf16.msra.mxu0 %v480
        %572 = vmatprep.subr.bf16.mxu0 %v474
        %573 = vmatpush1.bf16.msra.mxu0 %v473
        %574 = vmatprep.subr.bf16.mxu0 %v467
        %575 = vmatpush1.bf16.msra.mxu0 %v466
        %576 = vmatprep.subr.bf16.mxu0 %v460
        %577 = vmatpush1.bf16.msra.mxu0 %v459
        %578 = vmatprep.subr.bf16.mxu0 %v453
        %579 = vmatpush1.bf16.msra.mxu0 %v452
        %580 = vmatprep.subr.bf16.mxu0 0
        %581 = vmatpush2.bf16.msra.mxu0 0
        %582 = vmatprep.subr.bf16.mxu0 0
        %583 = vmatpush2.bf16.msra.mxu0 0
        %584 = vmatprep.subr.bf16.mxu0 0
        %585 = vmatpush2.bf16.msra.mxu0 0
        %586 = vmatprep.subr.bf16.mxu0 0
        %587 = vmatpush2.bf16.msra.mxu0 0
        %588 = vmatprep.subr.bf16.mxu0 0
        %589 = vmatpush2.bf16.msra.mxu0 0
        %590 = vmatprep.subr.bf16.mxu0 0
        %591 = vmatpush2.bf16.msra.mxu0 0
        %592 = vmatprep.subr.bf16.mxu0 0
        %593 = vmatpush2.bf16.msra.mxu0 0
        %594 = vmatprep.subr.bf16.mxu0 0
        %595 = vmatpush2.bf16.msra.mxu0 0
        %596 = vmatprep.mubr.bf16.mxu0 0
        %597 = vmatmul.mubr.bf16.gmra.mxu0 %v211
        %v598 = vpop.f32.mrf.mxu0
        %v599 = vadd.f32 0.0, %v598
        %v600 = vpop.f32.mrf.mxu0
        %v601 = vadd.f32 0.0, %v600
        %v602 = vpop.f32.mrf.mxu0
        %v603 = vpop.f32.mrf.mxu0
        %604 = vdwg.mxu0
        %605 = vmatprep.subr.bf16.mxu0 %v504
        %606 = vmatpush1.bf16.msra.mxu0 %v503
        %607 = vmatprep.subr.bf16.mxu0 %v497
        %608 = vmatpush1.bf16.msra.mxu0 %v496
        %609 = vmatprep.subr.bf16.mxu0 %v490
        %610 = vmatpush1.bf16.msra.mxu0 %v489
        %611 = vmatprep.subr.bf16.mxu0 %v483
        %612 = vmatpush1.bf16.msra.mxu0 %v482
        %613 = vmatprep.subr.bf16.mxu0 %v476
        %614 = vmatpush1.bf16.msra.mxu0 %v475
        %615 = vmatprep.subr.bf16.mxu0 %v469
        %616 = vmatpush1.bf16.msra.mxu0 %v468
        %617 = vmatprep.subr.bf16.mxu0 %v462
        %618 = vmatpush1.bf16.msra.mxu0 %v461
        %619 = vmatprep.subr.bf16.mxu0 %v455
        %620 = vmatpush1.bf16.msra.mxu0 %v454
        %621 = vmatprep.subr.bf16.mxu0 0
        %622 = vmatpush2.bf16.msra.mxu0 0
        %623 = vmatprep.subr.bf16.mxu0 0
        %624 = vmatpush2.bf16.msra.mxu0 0
        %625 = vmatprep.subr.bf16.mxu0 0
        %626 = vmatpush2.bf16.msra.mxu0 0
        %627 = vmatprep.subr.bf16.mxu0 0
        %628 = vmatpush2.bf16.msra.mxu0 0
        %629 = vmatprep.subr.bf16.mxu0 0
        %630 = vmatpush2.bf16.msra.mxu0 0
        %631 = vmatprep.subr.bf16.mxu0 0
        %632 = vmatpush2.bf16.msra.mxu0 0
        %633 = vmatprep.subr.bf16.mxu0 0
        %634 = vmatpush2.bf16.msra.mxu0 0
        %635 = vmatprep.subr.bf16.mxu0 0
        %636 = vmatpush2.bf16.msra.mxu0 0
        %637 = vmatprep.mubr.bf16.mxu0 0
        %638 = vmatmul.mubr.bf16.gmra.mxu0 %v211
        %v639 = vpop.f32.mrf.mxu0
        %v640 = vadd.f32 0.0, %v639
        %v641 = vpop.f32.mrf.mxu0
        %v642 = vadd.f32 0.0, %v641
        %v643 = vpop.f32.mrf.mxu0
        %v644 = vpop.f32.mrf.mxu0
        %645 = vdwg.mxu0
        %646 = vmatprep.subr.bf16.mxu0 %v506
        %647 = vmatpush1.bf16.msra.mxu0 %v505
        %648 = vmatprep.subr.bf16.mxu0 %v499
        %649 = vmatpush1.bf16.msra.mxu0 %v498
        %650 = vmatprep.subr.bf16.mxu0 %v492
        %651 = vmatpush1.bf16.msra.mxu0 %v491
        %652 = vmatprep.subr.bf16.mxu0 %v485
        %653 = vmatpush1.bf16.msra.mxu0 %v484
        %654 = vmatprep.subr.bf16.mxu0 %v478
        %655 = vmatpush1.bf16.msra.mxu0 %v477
        %656 = vmatprep.subr.bf16.mxu0 %v471
        %657 = vmatpush1.bf16.msra.mxu0 %v470
        %658 = vmatprep.subr.bf16.mxu0 %v464
        %659 = vmatpush1.bf16.msra.mxu0 %v463
        %660 = vmatprep.subr.bf16.mxu0 %v457
        %661 = vmatpush1.bf16.msra.mxu0 %v456
        %662 = vmatprep.subr.bf16.mxu0 0
        %663 = vmatpush2.bf16.msra.mxu0 0
        %664 = vmatprep.subr.bf16.mxu0 0
        %665 = vmatpush2.bf16.msra.mxu0 0
        %666 = vmatprep.subr.bf16.mxu0 0
        %667 = vmatpush2.bf16.msra.mxu0 0
        %668 = vmatprep.subr.bf16.mxu0 0
        %669 = vmatpush2.bf16.msra.mxu0 0
        %670 = vmatprep.subr.bf16.mxu0 0
        %671 = vmatpush2.bf16.msra.mxu0 0
        %672 = vmatprep.subr.bf16.mxu0 0
        %673 = vmatpush2.bf16.msra.mxu0 0
        %674 = vmatprep.subr.bf16.mxu0 0
        %675 = vmatpush2.bf16.msra.mxu0 0
        %676 = vmatprep.subr.bf16.mxu0 0
        %677 = vmatpush2.bf16.msra.mxu0 0
        %678 = vmatprep.mubr.bf16.mxu0 0
        %679 = vmatmul.mubr.bf16.gmra.mxu0 %v211
        %v680 = vpop.f32.mrf.mxu0
        %v681 = vadd.f32 0.0, %v680
        %v682 = vpop.f32.mrf.mxu0
        %v683 = vadd.f32 0.0, %v682
        %v684 = vpop.f32.mrf.mxu0
        %v685 = vpop.f32.mrf.mxu0
        %686 = vdwg.mxu0
        %687 = vmatprep.subr.bf16.mxu0 0
        %688 = vmatpush1.bf16.msra.mxu0 %v507
        %689 = vmatprep.subr.bf16.mxu0 0
        %690 = vmatpush1.bf16.msra.mxu0 %v500
        %691 = vmatprep.subr.bf16.mxu0 0
        %692 = vmatpush1.bf16.msra.mxu0 %v493
        %693 = vmatprep.subr.bf16.mxu0 0
        %694 = vmatpush1.bf16.msra.mxu0 %v486
        %695 = vmatprep.subr.bf16.mxu0 0
        %696 = vmatpush1.bf16.msra.mxu0 %v479
        %697 = vmatprep.subr.bf16.mxu0 0
        %698 = vmatpush1.bf16.msra.mxu0 %v472
        %699 = vmatprep.subr.bf16.mxu0 0
        %700 = vmatpush1.bf16.msra.mxu0 %v465
        %701 = vmatprep.subr.bf16.mxu0 0
        %702 = vmatpush1.bf16.msra.mxu0 %v458
        %703 = vmatprep.subr.bf16.mxu0 0
        %704 = vmatpush2.bf16.msra.mxu0 0
        %705 = vmatprep.subr.bf16.mxu0 0
        %706 = vmatpush2.bf16.msra.mxu0 0
        %707 = vmatprep.subr.bf16.mxu0 0
        %708 = vmatpush2.bf16.msra.mxu0 0
        %709 = vmatprep.subr.bf16.mxu0 0
        %710 = vmatpush2.bf16.msra.mxu0 0
        %711 = vmatprep.subr.bf16.mxu0 0
        %712 = vmatpush2.bf16.msra.mxu0 0
        %713 = vmatprep.subr.bf16.mxu0 0
        %714 = vmatpush2.bf16.msra.mxu0 0
        %715 = vmatprep.subr.bf16.mxu0 0
        %716 = vmatpush2.bf16.msra.mxu0 0
        %717 = vmatprep.subr.bf16.mxu0 0
        %718 = vmatpush2.bf16.msra.mxu0 0
        %719 = vmatprep.mubr.bf16.mxu0 0
        %720 = vmatmul.mubr.bf16.gmra.mxu0 %v211
        %v721 = vpop.f32.mrf.mxu0
        %v722 = vadd.f32 0.0, %v721
        %v723 = vpop.f32.mrf.mxu0
        %v724 = vpop.f32.mrf.mxu0
        %v725 = vpop.f32.mrf.mxu0
        %726 = vdwg.mxu0
        %v734 = vcombine.low %v599, %v601
        %v735 = vcombine.low %v640, %v642
        %v737 = vunpack.c.l.s4 1983009808
        %v738 = vunpack.c.0.s8 %v737
        %v739 = vlaneseq
        %v740 = vshrl.u32 %v739, 7
        %v741 = vsub.s32 %v738, %v740
        %v742 = vrot.slane %v734, %v741
        %v744 = vunpack.c.l.s4 1983009808
        %v745 = vunpack.c.0.s8 %v744
        %v746 = vlaneseq
        %v747 = vshrl.u32 %v746, 7
        %v748 = vsub.s32 %v745, %v747
        %v749 = vrot.slane %v735, %v748
        %v750 = vcombine.low %v742, %v749
        %v751 = vcombine.low %v681, %v683
        %v753 = vunpack.c.l.s4 1983009808
        %v754 = vunpack.c.0.s8 %v753
        %v755 = vlaneseq
        %v756 = vshrl.u32 %v755, 7
        %v757 = vsub.s32 %v754, %v756
        %v758 = vrot.slane %v751, %v757
        %v760 = vunpack.c.l.s4 1983009808
        %v761 = vunpack.c.0.s8 %v760
        %v762 = vlaneseq
        %v763 = vshrl.u32 %v762, 7
        %v764 = vsub.s32 %v761, %v763
        %v765 = vrot.slane %v722, %v764
        %v766 = vcombine.low %v758, %v765
        %s769 = smul.u32 %s18, 7
        %s770 = smul.addr %s769, 2
        %s771 = scalar_lea.vmem [#allocation2], %s770
        %772 = vst [vmem:[%s771] sm:$0xff] %v750
        %773 = vst [vmem:[%s771 + $0x8] sm:$0x3f] %v766
        %v774 = vld [vmem:[#allocation3] sm:$0x1]
        %v775 = vld [vmem:[#allocation4] sm:$0x1]
        %vm776 = vcmask 1041408
        %v777 = vsel %vm776, %v599, 0.0
        %v778 = vrot.slane %v777, 4
        %v779 = vadd.f32 %v777, %v778
        %v780 = vrot.slane %v779, 2
        %v781 = vadd.f32 %v779, %v780
        %v782 = vrot.slane %v781, 1
        %v783 = vadd.f32 %v781, %v782
        %v784 = vadd.f32 %v774, %v783
        %v785 = vmul.f32 %v599, %v599
        %v786 = vsel %vm776, %v785, 0.0
        %v787 = vrot.slane %v786, 4
        %v788 = vadd.f32 %v786, %v787
        %v789 = vrot.slane %v788, 2
        %v790 = vadd.f32 %v788, %v789
        %v791 = vrot.slane %v790, 1
        %v792 = vadd.f32 %v790, %v791
        %v793 = vadd.f32 %v775, %v792
        %v794 = vsel %vm776, %v601, 0.0
        %v795 = vrot.slane %v794, 4
        %v796 = vadd.f32 %v794, %v795
        %v797 = vrot.slane %v796, 2
        %v798 = vadd.f32 %v796, %v797
        %v799 = vrot.slane %v798, 1
        %v800 = vadd.f32 %v798, %v799
        %v801 = vadd.f32 %v784, %v800
        %v802 = vmul.f32 %v601, %v601
        %v803 = vsel %vm776, %v802, 0.0
        %v804 = vrot.slane %v803, 4
        %v805 = vadd.f32 %v803, %v804
        %v806 = vrot.slane %v805, 2
        %v807 = vadd.f32 %v805, %v806
        %v808 = vrot.slane %v807, 1
        %v809 = vadd.f32 %v807, %v808
        %v810 = vadd.f32 %v793, %v809
        %v811 = vsel %vm776, %v640, 0.0
        %v812 = vrot.slane %v811, 4
        %v813 = vadd.f32 %v811, %v812
        %v814 = vrot.slane %v813, 2
        %v815 = vadd.f32 %v813, %v814
        %v816 = vrot.slane %v815, 1
        %v817 = vadd.f32 %v815, %v816
        %v818 = vadd.f32 %v801, %v817
        %v819 = vmul.f32 %v640, %v640
        %v820 = vsel %vm776, %v819, 0.0
        %v821 = vrot.slane %v820, 4
        %v822 = vadd.f32 %v820, %v821
        %v823 = vrot.slane %v822, 2
        %v824 = vadd.f32 %v822, %v823
        %v825 = vrot.slane %v824, 1
        %v826 = vadd.f32 %v824, %v825
        %v827 = vadd.f32 %v810, %v826
        %v828 = vsel %vm776, %v642, 0.0
        %v829 = vrot.slane %v828, 4
        %v830 = vadd.f32 %v828, %v829
        %v831 = vrot.slane %v830, 2
        %v832 = vadd.f32 %v830, %v831
        %v833 = vrot.slane %v832, 1
        %v834 = vadd.f32 %v832, %v833
        %v835 = vadd.f32 %v818, %v834
        %v836 = vmul.f32 %v642, %v642
        %v837 = vsel %vm776, %v836, 0.0
        %v838 = vrot.slane %v837, 4
        %v839 = vadd.f32 %v837, %v838
        %v840 = vrot.slane %v839, 2
        %v841 = vadd.f32 %v839, %v840
        %v842 = vrot.slane %v841, 1
        %v843 = vadd.f32 %v841, %v842
        %v844 = vadd.f32 %v827, %v843
        %v845 = vsel %vm776, %v681, 0.0
        %v846 = vrot.slane %v845, 4
        %v847 = vadd.f32 %v845, %v846
        %v848 = vrot.slane %v847, 2
        %v849 = vadd.f32 %v847, %v848
        %v850 = vrot.slane %v849, 1
        %v851 = vadd.f32 %v849, %v850
        %v852 = vadd.f32 %v835, %v851
        %v853 = vmul.f32 %v681, %v681
        %v854 = vsel %vm776, %v853, 0.0
        %v855 = vrot.slane %v854, 4
        %v856 = vadd.f32 %v854, %v855
        %v857 = vrot.slane %v856, 2
        %v858 = vadd.f32 %v856, %v857
        %v859 = vrot.slane %v858, 1
        %v860 = vadd.f32 %v858, %v859
        %v861 = vadd.f32 %v844, %v860
        %v862 = vsel %vm776, %v683, 0.0
        %v863 = vrot.slane %v862, 4
        %v864 = vadd.f32 %v862, %v863
        %v865 = vrot.slane %v864, 2
        %v866 = vadd.f32 %v864, %v865
        %v867 = vrot.slane %v866, 1
        %v868 = vadd.f32 %v866, %v867
        %v869 = vadd.f32 %v852, %v868
        %v870 = vmul.f32 %v683, %v683
        %v871 = vsel %vm776, %v870, 0.0
        %v872 = vrot.slane %v871, 4
        %v873 = vadd.f32 %v871, %v872
        %v874 = vrot.slane %v873, 2
        %v875 = vadd.f32 %v873, %v874
        %v876 = vrot.slane %v875, 1
        %v877 = vadd.f32 %v875, %v876
        %v878 = vadd.f32 %v861, %v877
        %v879 = vsel %vm776, %v722, 0.0
        %v880 = vrot.slane %v879, 4
        %v881 = vadd.f32 %v879, %v880
        %v882 = vrot.slane %v881, 2
        %v883 = vadd.f32 %v881, %v882
        %v884 = vrot.slane %v883, 1
        %v885 = vadd.f32 %v883, %v884
        %v886 = vadd.f32 %v869, %v885
        %v887 = vmul.f32 %v722, %v722
        %v888 = vsel %vm776, %v887, 0.0
        %v889 = vrot.slane %v888, 4
        %v890 = vadd.f32 %v888, %v889
        %v891 = vrot.slane %v890, 2
        %v892 = vadd.f32 %v890, %v891
        %v893 = vrot.slane %v892, 1
        %v894 = vadd.f32 %v892, %v893
        %v895 = vadd.f32 %v878, %v894
        %896 = vst [vmem:[#allocation3] sm:$0x1] %v886
        %897 = vst [vmem:[#allocation4] sm:$0x1] %v895
        %p898 = scmp.eq.s32.totalorder %s18, 6
        // Predicated region
        $region45: #{generator_forward.3} parent=35 // pred_check
          %p899 = pneg %p898
        $region46: #{generator_forward.3} parent=35 // pred_check_branch
          %901 = sbr.rel (%p899) target = $region48
        $region47: #{generator_forward.3} parent=35 // pred_region
          %v902 = vld [vmem:[#allocation3] sm:$0x1]
          %v903 = vrcp.pop 98.0
          %v904 = vmul.f32 %v902, %v903
          %v905 = vld [vmem:[#allocation4] sm:$0x1]
          %v906 = vmul.f32 %v905, %v903
          %v907 = vmul.f32 %v904, %v904
          %v908 = vsub.f32 %v906, %v907
          %v909 = vmax.f32 %v908, 0.0
          %v910 = vadd.f32 %v909, 1e-05
          %v911 = vrsqrt.pop %v910
          %v912 = vld [vmem:[%s2] sm:$0x1]
          %v913 = vmul.f32 %v911, %v912
          %v914 = vld [vmem:[%s3] sm:$0x1]
          %v915 = vmul.f32 %v904, %v913
          %v916 = vsub.f32 %v914, %v915
          %v917 = vld [vmem:[#allocation2] sm:$0xff]
          %v918 = vld [vmem:[#allocation2 + $0x8] sm:$0x3f]
          %v920 = vlaneseq
          %v921 = vshrl.u32 %v920, 7
          %v922 = vsub.s32 0, %v921
          %v923 = vrot.slane %v913, %v922
          %v925 = vmul.f32 %v917, %v923
          %v927 = vlaneseq
          %v928 = vshrl.u32 %v927, 7
          %v929 = vsub.s32 0, %v928
          %v930 = vrot.slane %v916, %v929
          %v932 = vadd.f32 %v925, %v930
          %v933 = vmax.f32 %v932, 0.0
          %v934 = vpack.c.bf16 %v933, %v933
          %935 = vst [vmem:[%s4] sm:$0x1] %v934
          %v937 = vrot.slane %v917, 2
          %v939 = vmul.f32 %v937, %v923
          %v940 = vadd.f32 %v939, %v930
          %v941 = vmax.f32 %v940, 0.0
          %v942 = vpack.c.bf16 %v941, %v941
          %943 = vst [vmem:[%s4 + $0x1] sm:$0x1] %v942
          %v944 = vrot.slane %v917, 4
          %v946 = vmul.f32 %v944, %v923
          %v947 = vadd.f32 %v946, %v930
          %v948 = vmax.f32 %v947, 0.0
          %v949 = vpack.c.bf16 %v948, %v948
          %950 = vst [vmem:[%s4 + $0x2] sm:$0x1] %v949
          %v951 = vrot.slane %v917, 6
          %v953 = vmul.f32 %v951, %v923
          %v954 = vadd.f32 %v953, %v930
          %v955 = vmax.f32 %v954, 0.0
          %v956 = vpack.c.bf16 %v955, %v955
          %957 = vst [vmem:[%s4 + $0x3] sm:$0x1] %v956
          %v958 = vmul.f32 %v918, %v923
          %v959 = vadd.f32 %v958, %v930
          %v960 = vmax.f32 %v959, 0.0
          %v961 = vpack.c.bf16 %v960, %v960
          %962 = vst [vmem:[%s4 + $0x4] sm:$0x1] %v961
          %v964 = vrot.slane %v918, 2
          %v966 = vmul.f32 %v964, %v923
          %v967 = vadd.f32 %v966, %v930
          %v968 = vmax.f32 %v967, 0.0
          %v969 = vpack.c.bf16 %v968, %v968
          %970 = vst [vmem:[%s4 + $0x5] sm:$0x1] %v969
          %v971 = vrot.slane %v918, 4
          %v973 = vmul.f32 %v971, %v923
          %v974 = vadd.f32 %v973, %v930
          %v975 = vmax.f32 %v974, 0.0
          %v976 = vpack.c.bf16 %v975, %v975
          %977 = vst [vmem:[%s4 + $0x6] sm:$0x1] %v976
          %s978 = scalar_lea.vmem [#allocation2], 14
          %v979 = vld [vmem:[%s978] sm:$0xff]
          %v980 = vld [vmem:[%s978 + $0x8] sm:$0x3f]
          %v981 = vmul.f32 %v979, %v923
          %v982 = vadd.f32 %v981, %v930
          %v983 = vmax.f32 %v982, 0.0
          %v984 = vpack.c.bf16 %v983, %v983
          %985 = vst [vmem:[%s4 + $0x7] sm:$0x1] %v984
          %v987 = vrot.slane %v979, 2
          %v989 = vmul.f32 %v987, %v923
          %v990 = vadd.f32 %v989, %v930
          %v991 = vmax.f32 %v990, 0.0
          %v992 = vpack.c.bf16 %v991, %v991
          %993 = vst [vmem:[%s4 + $0x8] sm:$0x1] %v992
          %v994 = vrot.slane %v979, 4
          %v996 = vmul.f32 %v994, %v923
          %v997 = vadd.f32 %v996, %v930
          %v998 = vmax.f32 %v997, 0.0
          %v999 = vpack.c.bf16 %v998, %v998
          %1000 = vst [vmem:[%s4 + $0x9] sm:$0x1] %v999
          %v1001 = vrot.slane %v979, 6
          %v1003 = vmul.f32 %v1001, %v923
          %v1004 = vadd.f32 %v1003, %v930
          %v1005 = vmax.f32 %v1004, 0.0
          %v1006 = vpack.c.bf16 %v1005, %v1005
          %1007 = vst [vmem:[%s4 + $0xa] sm:$0x1] %v1006
          %v1008 = vmul.f32 %v980, %v923
          %v1009 = vadd.f32 %v1008, %v930
          %v1010 = vmax.f32 %v1009, 0.0
          %v1011 = vpack.c.bf16 %v1010, %v1010
          %1012 = vst [vmem:[%s4 + $0xb] sm:$0x1] %v1011
          %v1014 = vrot.slane %v980, 2
          %v1016 = vmul.f32 %v1014, %v923
          %v1017 = vadd.f32 %v1016, %v930
          %v1018 = vmax.f32 %v1017, 0.0
          %v1019 = vpack.c.bf16 %v1018, %v1018
          %1020 = vst [vmem:[%s4 + $0xc] sm:$0x1] %v1019
          %v1021 = vrot.slane %v980, 4
          %v1023 = vmul.f32 %v1021, %v923
          %v1024 = vadd.f32 %v1023, %v930
          %v1025 = vmax.f32 %v1024, 0.0
          %v1026 = vpack.c.bf16 %v1025, %v1025
          %1027 = vst [vmem:[%s4 + $0xd] sm:$0x1] %v1026
          %s1028 = scalar_lea.vmem [#allocation2], 28
          %v1029 = vld [vmem:[%s1028] sm:$0xff]
          %v1030 = vld [vmem:[%s1028 + $0x8] sm:$0x3f]
          %v1031 = vmul.f32 %v1029, %v923
          %v1032 = vadd.f32 %v1031, %v930
          %v1033 = vmax.f32 %v1032, 0.0
          %v1034 = vpack.c.bf16 %v1033, %v1033
          %1035 = vst [vmem:[%s4 + $0xe] sm:$0x1] %v1034
          %v1037 = vrot.slane %v1029, 2
          %v1039 = vmul.f32 %v1037, %v923
          %v1040 = vadd.f32 %v1039, %v930
          %v1041 = vmax.f32 %v1040, 0.0
          %v1042 = vpack.c.bf16 %v1041, %v1041
          %1043 = vst [vmem:[%s4 + $0xf] sm:$0x1] %v1042
          %v1044 = vrot.slane %v1029, 4
          %v1046 = vmul.f32 %v1044, %v923
          %v1047 = vadd.f32 %v1046, %v930
          %v1048 = vmax.f32 %v1047, 0.0
          %v1049 = vpack.c.bf16 %v1048, %v1048
          %1050 = vst [vmem:[%s4 + $0x10] sm:$0x1] %v1049
          %v1051 = vrot.slane %v1029, 6
          %v1053 = vmul.f32 %v1051, %v923
          %v1054 = vadd.f32 %v1053, %v930
          %v1055 = vmax.f32 %v1054, 0.0
          %v1056 = vpack.c.bf16 %v1055, %v1055
          %1057 = vst [vmem:[%s4 + $0x11] sm:$0x1] %v1056
          %v1058 = vmul.f32 %v1030, %v923
          %v1059 = vadd.f32 %v1058, %v930
          %v1060 = vmax.f32 %v1059, 0.0
          %v1061 = vpack.c.bf16 %v1060, %v1060
          %1062 = vst [vmem:[%s4 + $0x12] sm:$0x1] %v1061
          %v1064 = vrot.slane %v1030, 2
          %v1066 = vmul.f32 %v1064, %v923
          %v1067 = vadd.f32 %v1066, %v930
          %v1068 = vmax.f32 %v1067, 0.0
          %v1069 = vpack.c.bf16 %v1068, %v1068
          %1070 = vst [vmem:[%s4 + $0x13] sm:$0x1] %v1069
          %v1071 = vrot.slane %v1030, 4
          %v1073 = vmul.f32 %v1071, %v923
          %v1074 = vadd.f32 %v1073, %v930
          %v1075 = vmax.f32 %v1074, 0.0
          %v1076 = vpack.c.bf16 %v1075, %v1075
          %1077 = vst [vmem:[%s4 + $0x14] sm:$0x1] %v1076
          %s1078 = scalar_lea.vmem [#allocation2], 42
          %v1079 = vld [vmem:[%s1078] sm:$0xff]
          %v1080 = vld [vmem:[%s1078 + $0x8] sm:$0x3f]
          %v1081 = vmul.f32 %v1079, %v923
          %v1082 = vadd.f32 %v1081, %v930
          %v1083 = vmax.f32 %v1082, 0.0
          %v1084 = vpack.c.bf16 %v1083, %v1083
          %1085 = vst [vmem:[%s4 + $0x15] sm:$0x1] %v1084
          %v1087 = vrot.slane %v1079, 2
          %v1089 = vmul.f32 %v1087, %v923
          %v1090 = vadd.f32 %v1089, %v930
          %v1091 = vmax.f32 %v1090, 0.0
          %v1092 = vpack.c.bf16 %v1091, %v1091
          %1093 = vst [vmem:[%s4 + $0x16] sm:$0x1] %v1092
          %v1094 = vrot.slane %v1079, 4
          %v1096 = vmul.f32 %v1094, %v923
          %v1097 = vadd.f32 %v1096, %v930
          %v1098 = vmax.f32 %v1097, 0.0
          %v1099 = vpack.c.bf16 %v1098, %v1098
          %1100 = vst [vmem:[%s4 + $0x17] sm:$0x1] %v1099
          %v1101 = vrot.slane %v1079, 6
          %v1103 = vmul.f32 %v1101, %v923
          %v1104 = vadd.f32 %v1103, %v930
          %v1105 = vmax.f32 %v1104, 0.0
          %v1106 = vpack.c.bf16 %v1105, %v1105
          %1107 = vst [vmem:[%s4 + $0x18] sm:$0x1] %v1106
          %v1108 = vmul.f32 %v1080, %v923
          %v1109 = vadd.f32 %v1108, %v930
          %v1110 = vmax.f32 %v1109, 0.0
          %v1111 = vpack.c.bf16 %v1110, %v1110
          %1112 = vst [vmem:[%s4 + $0x19] sm:$0x1] %v1111
          %v1114 = vrot.slane %v1080, 2
          %v1116 = vmul.f32 %v1114, %v923
          %v1117 = vadd.f32 %v1116, %v930
          %v1118 = vmax.f32 %v1117, 0.0
          %v1119 = vpack.c.bf16 %v1118, %v1118
          %1120 = vst [vmem:[%s4 + $0x1a] sm:$0x1] %v1119
          %v1121 = vrot.slane %v1080, 4
          %v1123 = vmul.f32 %v1121, %v923
          %v1124 = vadd.f32 %v1123, %v930
          %v1125 = vmax.f32 %v1124, 0.0
          %v1126 = vpack.c.bf16 %v1125, %v1125
          %1127 = vst [vmem:[%s4 + $0x1b] sm:$0x1] %v1126
          %s1128 = scalar_lea.vmem [#allocation2], 56
          %v1129 = vld [vmem:[%s1128] sm:$0xff]
          %v1130 = vld [vmem:[%s1128 + $0x8] sm:$0x3f]
          %v1131 = vmul.f32 %v1129, %v923
          %v1132 = vadd.f32 %v1131, %v930
          %v1133 = vmax.f32 %v1132, 0.0
          %v1134 = vpack.c.bf16 %v1133, %v1133
          %1135 = vst [vmem:[%s4 + $0x1c] sm:$0x1] %v1134
          %v1137 = vrot.slane %v1129, 2
          %v1139 = vmul.f32 %v1137, %v923
          %v1140 = vadd.f32 %v1139, %v930
          %v1141 = vmax.f32 %v1140, 0.0
          %v1142 = vpack.c.bf16 %v1141, %v1141
          %1143 = vst [vmem:[%s4 + $0x1d] sm:$0x1] %v1142
          %v1144 = vrot.slane %v1129, 4
          %v1146 = vmul.f32 %v1144, %v923
          %v1147 = vadd.f32 %v1146, %v930
          %v1148 = vmax.f32 %v1147, 0.0
          %v1149 = vpack.c.bf16 %v1148, %v1148
          %1150 = vst [vmem:[%s4 + $0x1e] sm:$0x1] %v1149
          %v1151 = vrot.slane %v1129, 6
          %v1153 = vmul.f32 %v1151, %v923
          %v1154 = vadd.f32 %v1153, %v930
          %v1155 = vmax.f32 %v1154, 0.0
          %v1156 = vpack.c.bf16 %v1155, %v1155
          %1157 = vst [vmem:[%s4 + $0x1f] sm:$0x1] %v1156
          %v1158 = vmul.f32 %v1130, %v923
          %v1159 = vadd.f32 %v1158, %v930
          %v1160 = vmax.f32 %v1159, 0.0
          %v1161 = vpack.c.bf16 %v1160, %v1160
          %1162 = vst [vmem:[%s4 + $0x20] sm:$0x1] %v1161
          %v1164 = vrot.slane %v1130, 2
          %v1166 = vmul.f32 %v1164, %v923
          %v1167 = vadd.f32 %v1166, %v930
          %v1168 = vmax.f32 %v1167, 0.0
          %v1169 = vpack.c.bf16 %v1168, %v1168
          %1170 = vst [vmem:[%s4 + $0x21] sm:$0x1] %v1169
          %v1171 = vrot.slane %v1130, 4
          %v1173 = vmul.f32 %v1171, %v923
          %v1174 = vadd.f32 %v1173, %v930
          %v1175 = vmax.f32 %v1174, 0.0
          %v1176 = vpack.c.bf16 %v1175, %v1175
          %1177 = vst [vmem:[%s4 + $0x22] sm:$0x1] %v1176
          %s1178 = scalar_lea.vmem [#allocation2], 70
          %v1179 = vld [vmem:[%s1178] sm:$0xff]
          %v1180 = vld [vmem:[%s1178 + $0x8] sm:$0x3f]
          %v1181 = vmul.f32 %v1179, %v923
          %v1182 = vadd.f32 %v1181, %v930
          %v1183 = vmax.f32 %v1182, 0.0
          %v1184 = vpack.c.bf16 %v1183, %v1183
          %1185 = vst [vmem:[%s4 + $0x23] sm:$0x1] %v1184
          %v1187 = vrot.slane %v1179, 2
          %v1189 = vmul.f32 %v1187, %v923
          %v1190 = vadd.f32 %v1189, %v930
          %v1191 = vmax.f32 %v1190, 0.0
          %v1192 = vpack.c.bf16 %v1191, %v1191
          %1193 = vst [vmem:[%s4 + $0x24] sm:$0x1] %v1192
          %v1194 = vrot.slane %v1179, 4
          %v1196 = vmul.f32 %v1194, %v923
          %v1197 = vadd.f32 %v1196, %v930
          %v1198 = vmax.f32 %v1197, 0.0
          %v1199 = vpack.c.bf16 %v1198, %v1198
          %1200 = vst [vmem:[%s4 + $0x25] sm:$0x1] %v1199
          %v1201 = vrot.slane %v1179, 6
          %v1203 = vmul.f32 %v1201, %v923
          %v1204 = vadd.f32 %v1203, %v930
          %v1205 = vmax.f32 %v1204, 0.0
          %v1206 = vpack.c.bf16 %v1205, %v1205
          %1207 = vst [vmem:[%s4 + $0x26] sm:$0x1] %v1206
          %v1208 = vmul.f32 %v1180, %v923
          %v1209 = vadd.f32 %v1208, %v930
          %v1210 = vmax.f32 %v1209, 0.0
          %v1211 = vpack.c.bf16 %v1210, %v1210
          %1212 = vst [vmem:[%s4 + $0x27] sm:$0x1] %v1211
          %v1214 = vrot.slane %v1180, 2
          %v1216 = vmul.f32 %v1214, %v923
          %v1217 = vadd.f32 %v1216, %v930
          %v1218 = vmax.f32 %v1217, 0.0
          %v1219 = vpack.c.bf16 %v1218, %v1218
          %1220 = vst [vmem:[%s4 + $0x28] sm:$0x1] %v1219
          %v1221 = vrot.slane %v1180, 4
          %v1223 = vmul.f32 %v1221, %v923
          %v1224 = vadd.f32 %v1223, %v930
          %v1225 = vmax.f32 %v1224, 0.0
          %v1226 = vpack.c.bf16 %v1225, %v1225
          %1227 = vst [vmem:[%s4 + $0x29] sm:$0x1] %v1226
          %s1228 = scalar_lea.vmem [#allocation2], 84
          %v1229 = vld [vmem:[%s1228] sm:$0xff]
          %v1230 = vld [vmem:[%s1228 + $0x8] sm:$0x3f]
          %v1231 = vmul.f32 %v1229, %v923
          %v1232 = vadd.f32 %v1231, %v930
          %v1233 = vmax.f32 %v1232, 0.0
          %v1234 = vpack.c.bf16 %v1233, %v1233
          %1235 = vst [vmem:[%s4 + $0x2a] sm:$0x1] %v1234
          %v1237 = vrot.slane %v1229, 2
          %v1239 = vmul.f32 %v1237, %v923
          %v1240 = vadd.f32 %v1239, %v930
          %v1241 = vmax.f32 %v1240, 0.0
          %v1242 = vpack.c.bf16 %v1241, %v1241
          %1243 = vst [vmem:[%s4 + $0x2b] sm:$0x1] %v1242
          %v1244 = vrot.slane %v1229, 4
          %v1246 = vmul.f32 %v1244, %v923
          %v1247 = vadd.f32 %v1246, %v930
          %v1248 = vmax.f32 %v1247, 0.0
          %v1249 = vpack.c.bf16 %v1248, %v1248
          %1250 = vst [vmem:[%s4 + $0x2c] sm:$0x1] %v1249
          %v1251 = vrot.slane %v1229, 6
          %v1253 = vmul.f32 %v1251, %v923
          %v1254 = vadd.f32 %v1253, %v930
          %v1255 = vmax.f32 %v1254, 0.0
          %v1256 = vpack.c.bf16 %v1255, %v1255
          %1257 = vst [vmem:[%s4 + $0x2d] sm:$0x1] %v1256
          %v1258 = vmul.f32 %v1230, %v923
          %v1259 = vadd.f32 %v1258, %v930
          %v1260 = vmax.f32 %v1259, 0.0
          %v1261 = vpack.c.bf16 %v1260, %v1260
          %1262 = vst [vmem:[%s4 + $0x2e] sm:$0x1] %v1261
          %v1264 = vrot.slane %v1230, 2
          %v1266 = vmul.f32 %v1264, %v923
          %v1267 = vadd.f32 %v1266, %v930
          %v1268 = vmax.f32 %v1267, 0.0
          %v1269 = vpack.c.bf16 %v1268, %v1268
          %1270 = vst [vmem:[%s4 + $0x2f] sm:$0x1] %v1269
          %v1271 = vrot.slane %v1230, 4
          %v1273 = vmul.f32 %v1271, %v923
          %v1274 = vadd.f32 %v1273, %v930
          %v1275 = vmax.f32 %v1274, 0.0
          %v1276 = vpack.c.bf16 %v1275, %v1275
          %1277 = vst [vmem:[%s4 + $0x30] sm:$0x1] %v1276
        $region48: #{generator_forward.3} parent=35 // pred_fallthru
          _
        // Predicated region
        $region49: #{generator_forward.3} parent=35 // pred_check
          %p1278 = pneg %p120
        $region50: #{generator_forward.3} parent=35 // pred_check_branch
          %1280 = sbr.rel (%p1278) target = $region52
        $region51: #{generator_forward.3} parent=35 // pred_region
          _
        $region52: #{generator_forward.3} parent=35 // pred_fallthru
          _
        // Predicated region
        $region53: #{generator_forward.3} parent=35 // pred_check
          %p1281 = pneg %p120
        $region54: #{generator_forward.3} parent=35 // pred_check_branch
          %1283 = sbr.rel (%p1281) target = $region56
        $region55: #{generator_forward.3} parent=35 // pred_region
          _
        $region56: #{generator_forward.3} parent=35 // pred_fallthru
          _
      $region36: #{generator_forward.3} parent=5 // pred_fallthru
        _
      %p1284 = scmp.le.s32.totalorder 2, %s13
      // Predicated region
      $region57: #{generator_forward.3} parent=5 // pred_check
        %p1285 = pneg %p1284
      $region58: #{generator_forward.3} parent=5 // pred_check_branch
        %1287 = sbr.rel (%p1285) target = $region60
      $region59: #{generator_forward.3} parent=5 // pred_region
        %s1288 = ssub.s32 %s13, 2
      $region60: #{generator_forward.3} parent=5 // pred_fallthru
        _
    $region6: #{generator_forward.3} parent=1 // loop_footer
      %s17 = sadd.s32 1, %s13
    $region7: #{generator_forward.3} parent=1 // loop_footer_branch
      %12 = sbr.rel target = $region3
    $region8: #{generator_forward.3} parent=1 // loop_exit
      _
    %1289 = vsyncpa [#allocation6], 1
    %s1290 = scalar_lea.sflag [#allocation6], 1
    %1291 = vsyncpa %s1290, 1

// kernel: generator_forward.4
$region0: #{generator_forward.4}
  #allocation0 [shape = 'u32[]', space=smem, size = 0x4, offset = 0x4, fixed_abs, tag = 'smem constant byte address 0x4 - core index']
  #allocation1 [shape = 'u32[144,128]{1,0:T(1,128)}', space=vmem, size = 0x12000, scoped, tag = 'internal scratch']
  #allocation2 [shape = 'f32[4,98,128]{2,1,0:T(8,128)}', space=vmem, size = 0x34000, scoped, tag = 'scratch operand']
  %s0 = inlined_call_operand.vmem [shape: bf16[9,98,128], index: 0, kind: input, shape index: {}]
  %s1 = inlined_call_operand.vmem [shape: bf16[4,4,128,128], index: 1, kind: input, shape index: {}]
  %s2 = inlined_call_operand.vmem [shape: f32[1,128], index: 2, kind: input, shape index: {}]
  %s3 = inlined_call_operand.vmem [shape: f32[1,128], index: 3, kind: input, shape index: {}]
  %s4 = inlined_call_operand.vmem [shape: bf16[4,98,128], index: 4, kind: output, shape index: {}]
  %s5 = sld [smem:[#allocation0]]
  $region26: #{generator_forward.4} parent=0
    _
  %s7 = ssub.s32 1, %s5
  %s8 = scalar_select 0, %s7, %s5
  // Predicated region
  $region2: #{generator_forward.4} parent=0 // pred_check
    _
  $region3: #{generator_forward.4} parent=0 // pred_check_branch
    %10 = sbr.rel (0) target = $region5
  $region4: #{generator_forward.4} parent=0 // pred_region
    _
  $region5: #{generator_forward.4} parent=0 // pred_fallthru
    _
  // Predicated region
  $region6: #{generator_forward.4} parent=0 // pred_check
    _
  $region7: #{generator_forward.4} parent=0 // pred_check_branch
    %12 = sbr.rel (0) target = $region9
  $region8: #{generator_forward.4} parent=0 // pred_region
    _
  $region9: #{generator_forward.4} parent=0 // pred_fallthru
    _
  // Predicated region
  $region10: #{generator_forward.4} parent=0 // pred_check
    _
  $region11: #{generator_forward.4} parent=0 // pred_check_branch
    %14 = sbr.rel (0) target = $region13
  $region12: #{generator_forward.4} parent=0 // pred_region
    _
  $region13: #{generator_forward.4} parent=0 // pred_fallthru
    _
  // Predicated region
  $region14: #{generator_forward.4} parent=0 // pred_check
    _
  $region15: #{generator_forward.4} parent=0 // pred_check_branch
    %16 = sbr.rel (0) target = $region17
  $region16: #{generator_forward.4} parent=0 // pred_region
    _
  $region17: #{generator_forward.4} parent=0 // pred_fallthru
    _
  %v18 = vld [vmem:[%s0] sm:$0xf]
  %v19 = vld [vmem:[%s0 + $0x4] sm:$0xf]
  %v20 = vld [vmem:[%s0 + $0x8] sm:$0xf]
  %v21 = vld [vmem:[%s0 + $0xc] sm:$0xf]
  %v22 = vld [vmem:[%s0 + $0x10] sm:$0xf]
  %v23 = vld [vmem:[%s0 + $0x14] sm:$0xf]
  %v24 = vld [vmem:[%s0 + $0x18] sm:$0xf]
  %v25 = vld [vmem:[%s0 + $0x1c] sm:$0xf]
  %v26 = vld [vmem:[%s0 + $0x20] sm:$0xf]
  %v27 = vld [vmem:[%s0 + $0x24] sm:$0xf]
  %v28 = vld [vmem:[%s0 + $0x28] sm:$0xf]
  %v29 = vld [vmem:[%s0 + $0x2c] sm:$0xf]
  %v30 = vld [vmem:[%s0 + $0x30] sm:$0x1]
  %v31 = vld [vmem:[%s1] sm:$0xf]
  %v32 = vld [vmem:[%s1 + $0x4] sm:$0xf]
  %v33 = vld [vmem:[%s1 + $0x8] sm:$0xf]
  %v34 = vld [vmem:[%s1 + $0xc] sm:$0xf]
  %v35 = vld [vmem:[%s1 + $0x10] sm:$0xf]
  %v36 = vld [vmem:[%s1 + $0x14] sm:$0xf]
  %v37 = vld [vmem:[%s1 + $0x18] sm:$0xf]
  %v38 = vld [vmem:[%s1 + $0x1c] sm:$0xf]
  %v39 = vld [vmem:[%s1 + $0x20] sm:$0xf]
  %v40 = vld [vmem:[%s1 + $0x24] sm:$0xf]
  %v41 = vld [vmem:[%s1 + $0x28] sm:$0xf]
  %v42 = vld [vmem:[%s1 + $0x2c] sm:$0xf]
  %v43 = vld [vmem:[%s1 + $0x30] sm:$0xf]
  %v44 = vld [vmem:[%s1 + $0x34] sm:$0xf]
  %v45 = vld [vmem:[%s1 + $0x38] sm:$0xf]
  %v46 = vld [vmem:[%s1 + $0x3c] sm:$0xf]
  %s47 = scalar_lea.vmem %s0, 52
  %v48 = vld [vmem:[%s47] sm:$0xf]
  %v49 = vld [vmem:[%s47 + $0x4] sm:$0xf]
  %v50 = vld [vmem:[%s47 + $0x8] sm:$0xf]
  %v51 = vld [vmem:[%s47 + $0xc] sm:$0xf]
  %v52 = vld [vmem:[%s47 + $0x10] sm:$0xf]
  %v53 = vld [vmem:[%s47 + $0x14] sm:$0xf]
  %v54 = vld [vmem:[%s47 + $0x18] sm:$0xf]
  %v55 = vld [vmem:[%s47 + $0x1c] sm:$0xf]
  %v56 = vld [vmem:[%s47 + $0x20] sm:$0xf]
  %v57 = vld [vmem:[%s47 + $0x24] sm:$0xf]
  %v58 = vld [vmem:[%s47 + $0x28] sm:$0xf]
  %v59 = vld [vmem:[%s47 + $0x2c] sm:$0xf]
  %v60 = vld [vmem:[%s47 + $0x30] sm:$0x1]
  %s61 = scalar_lea.vmem %s1, 64
  %v62 = vld [vmem:[%s61] sm:$0xf]
  %v63 = vld [vmem:[%s61 + $0x4] sm:$0xf]
  %v64 = vld [vmem:[%s61 + $0x8] sm:$0xf]
  %v65 = vld [vmem:[%s61 + $0xc] sm:$0xf]
  %v66 = vld [vmem:[%s61 + $0x10] sm:$0xf]
  %v67 = vld [vmem:[%s61 + $0x14] sm:$0xf]
  %v68 = vld [vmem:[%s61 + $0x18] sm:$0xf]
  %v69 = vld [vmem:[%s61 + $0x1c] sm:$0xf]
  %v70 = vld [vmem:[%s61 + $0x20] sm:$0xf]
  %v71 = vld [vmem:[%s61 + $0x24] sm:$0xf]
  %v72 = vld [vmem:[%s61 + $0x28] sm:$0xf]
  %v73 = vld [vmem:[%s61 + $0x2c] sm:$0xf]
  %v74 = vld [vmem:[%s61 + $0x30] sm:$0xf]
  %v75 = vld [vmem:[%s61 + $0x34] sm:$0xf]
  %v76 = vld [vmem:[%s61 + $0x38] sm:$0xf]
  %v77 = vld [vmem:[%s61 + $0x3c] sm:$0xf]
  %v91 = vunpack.c.l.b16 %v48
  %v92 = vunpack.c.l.b16 %v49
  %v93 = vunpack.c.l.b16 %v50
  %v94 = vunpack.c.l.b16 %v51
  %v95 = vunpack.c.l.b16 %v52
  %v96 = vunpack.c.l.b16 %v53
  %v97 = vunpack.c.l.b16 %v54
  %v98 = vunpack.c.l.b16 %v55
  %v99 = vunpack.c.l.b16 %v56
  %v100 = vunpack.c.l.b16 %v57
  %v101 = vunpack.c.l.b16 %v58
  %v102 = vunpack.c.l.b16 %v59
  %v103 = vunpack.c.l.b16 %v60
  %v104 = vpack.c.b16 %v92, %v91
  %v105 = vpack.c.b16 %v94, %v93
  %v106 = vpack.c.b16 %v96, %v95
  %v107 = vpack.c.b16 %v98, %v97
  %v108 = vpack.c.b16 %v100, %v99
  %v109 = vpack.c.b16 %v102, %v101
  %v110 = vpack.c.b16 %v103, %v103
  %v134 = vunpack.c.l.b16 %v62
  %v135 = vunpack.c.l.b16 %v63
  %v136 = vunpack.c.l.b16 %v64
  %v137 = vunpack.c.l.b16 %v65
  %v138 = vunpack.c.l.b16 %v66
  %v139 = vunpack.c.l.b16 %v67
  %v140 = vunpack.c.l.b16 %v68
  %v141 = vunpack.c.l.b16 %v69
  %v142 = vunpack.c.l.b16 %v70
  %v143 = vunpack.c.l.b16 %v71
  %v144 = vunpack.c.l.b16 %v72
  %v145 = vunpack.c.l.b16 %v73
  %v146 = vunpack.c.l.b16 %v74
  %v147 = vunpack.c.l.b16 %v75
  %v148 = vunpack.c.l.b16 %v76
  %v149 = vunpack.c.l.b16 %v77
  %v150 = vpack.c.b16 %v135, %v134
  %v151 = vpack.c.b16 %v137, %v136
  %v152 = vpack.c.b16 %v139, %v138
  %v153 = vpack.c.b16 %v141, %v140
  %v154 = vpack.c.b16 %v143, %v142
  %v155 = vpack.c.b16 %v145, %v144
  %v156 = vpack.c.b16 %v147, %v146
  %v157 = vpack.c.b16 %v149, %v148
  %166 = vmatprep.subr.bf16.mxu0 0
  %167 = vmatpush1.bf16.msra.mxu0 %v157
  %168 = vmatprep.subr.bf16.mxu0 0
  %169 = vmatpush1.bf16.msra.mxu0 %v156
  %170 = vmatprep.subr.bf16.mxu0 0
  %171 = vmatpush1.bf16.msra.mxu0 %v155
  %172 = vmatprep.subr.bf16.mxu0 0
  %173 = vmatpush1.bf16.msra.mxu0 %v154
  %174 = vmatprep.subr.bf16.mxu0 0
  %175 = vmatpush1.bf16.msra.mxu0 %v153
  %176 = vmatprep.subr.bf16.mxu0 0
  %177 = vmatpush1.bf16.msra.mxu0 %v152
  %178 = vmatprep.subr.bf16.mxu0 0
  %179 = vmatpush1.bf16.msra.mxu0 %v151
  %180 = vmatprep.subr.bf16.mxu0 0
  %181 = vmatpush1.bf16.msra.mxu0 %v150
  %182 = vmatprep.subr.bf16.mxu0 0
  %183 = vmatpush2.bf16.msra.mxu0 0
  %184 = vmatprep.subr.bf16.mxu0 0
  %185 = vmatpush2.bf16.msra.mxu0 0
  %186 = vmatprep.subr.bf16.mxu0 0
  %187 = vmatpush2.bf16.msra.mxu0 0
  %188 = vmatprep.subr.bf16.mxu0 0
  %189 = vmatpush2.bf16.msra.mxu0 0
  %190 = vmatprep.subr.bf16.mxu0 0
  %191 = vmatpush2.bf16.msra.mxu0 0
  %192 = vmatprep.subr.bf16.mxu0 0
  %193 = vmatpush2.bf16.msra.mxu0 0
  %194 = vmatprep.subr.bf16.mxu0 0
  %195 = vmatpush2.bf16.msra.mxu0 0
  %196 = vmatprep.subr.bf16.mxu0 0
  %197 = vmatpush2.bf16.msra.mxu0 0
  %198 = vmatprep.mubr.bf16.mxu0 0
  %199 = vmatmul.mubr.bf16.gmra.mxu0 %v104
  %v200 = vpop.f32.mrf.mxu0
  %v201 = vadd.f32 0.0, %v200
  %v202 = vpop.f32.mrf.mxu0
  %v203 = vpop.f32.mrf.mxu0
  %v204 = vadd.f32 0.0, %v203
  %v205 = vpop.f32.mrf.mxu0
  %206 = vmatprep.mubr.bf16.mxu0 0
  %207 = vmatmul.mubr.bf16.gmra.mxu0 %v105
  %v208 = vpop.f32.mrf.mxu0
  %v209 = vadd.f32 0.0, %v208
  %v210 = vpop.f32.mrf.mxu0
  %v211 = vpop.f32.mrf.mxu0
  %v212 = vadd.f32 0.0, %v211
  %v213 = vpop.f32.mrf.mxu0
  %214 = vmatprep.mubr.bf16.mxu0 0
  %215 = vmatmul.mubr.bf16.gmra.mxu0 %v106
  %v216 = vpop.f32.mrf.mxu0
  %v217 = vadd.f32 0.0, %v216
  %v218 = vpop.f32.mrf.mxu0
  %v219 = vpop.f32.mrf.mxu0
  %v220 = vadd.f32 0.0, %v219
  %v221 = vpop.f32.mrf.mxu0
  %222 = vmatprep.mubr.bf16.mxu0 0
  %223 = vmatmul.mubr.bf16.gmra.mxu0 %v107
  %v224 = vpop.f32.mrf.mxu0
  %v225 = vadd.f32 0.0, %v224
  %v226 = vpop.f32.mrf.mxu0
  %v227 = vpop.f32.mrf.mxu0
  %v228 = vadd.f32 0.0, %v227
  %v229 = vpop.f32.mrf.mxu0
  %230 = vmatprep.mubr.bf16.mxu0 0
  %231 = vmatmul.mubr.bf16.gmra.mxu0 %v108
  %v232 = vpop.f32.mrf.mxu0
  %v233 = vadd.f32 0.0, %v232
  %v234 = vpop.f32.mrf.mxu0
  %v235 = vpop.f32.mrf.mxu0
  %v236 = vadd.f32 0.0, %v235
  %v237 = vpop.f32.mrf.mxu0
  %238 = vmatprep.mubr.bf16.mxu0 0
  %239 = vmatmul.mubr.bf16.gmra.mxu0 %v109
  %v240 = vpop.f32.mrf.mxu0
  %v241 = vadd.f32 0.0, %v240
  %v242 = vpop.f32.mrf.mxu0
  %v243 = vpop.f32.mrf.mxu0
  %v244 = vadd.f32 0.0, %v243
  %v245 = vpop.f32.mrf.mxu0
  %246 = vmatprep.mubr.bf16.mxu0 0
  %247 = vmatmul.mubr.bf16.gmra.mxu0 %v110
  %v248 = vpop.f32.mrf.mxu0
  %v249 = vadd.f32 0.0, %v248
  %v250 = vpop.f32.mrf.mxu0
  %v251 = vpop.f32.mrf.mxu0
  %v252 = vpop.f32.mrf.mxu0
  %253 = vdwg.mxu0
  %v267 = vunpack.c.l.b16 %v18
  %v268 = vunpack.c.l.b16 %v19
  %v269 = vunpack.c.l.b16 %v20
  %v270 = vunpack.c.l.b16 %v21
  %v271 = vunpack.c.l.b16 %v22
  %v272 = vunpack.c.l.b16 %v23
  %v273 = vunpack.c.l.b16 %v24
  %v274 = vunpack.c.l.b16 %v25
  %v275 = vunpack.c.l.b16 %v26
  %v276 = vunpack.c.l.b16 %v27
  %v277 = vunpack.c.l.b16 %v28
  %v278 = vunpack.c.l.b16 %v29
  %v279 = vunpack.c.l.b16 %v30
  %v280 = vpack.c.b16 %v268, %v267
  %v281 = vpack.c.b16 %v270, %v269
  %v282 = vpack.c.b16 %v272, %v271
  %v283 = vpack.c.b16 %v274, %v273
  %v284 = vpack.c.b16 %v276, %v275
  %v285 = vpack.c.b16 %v278, %v277
  %v286 = vpack.c.b16 %v279, %v279
  %v310 = vunpack.c.l.b16 %v31
  %v311 = vunpack.c.l.b16 %v32
  %v312 = vunpack.c.l.b16 %v33
  %v313 = vunpack.c.l.b16 %v34
  %v314 = vunpack.c.l.b16 %v35
  %v315 = vunpack.c.l.b16 %v36
  %v316 = vunpack.c.l.b16 %v37
  %v317 = vunpack.c.l.b16 %v38
  %v318 = vunpack.c.l.b16 %v39
  %v319 = vunpack.c.l.b16 %v40
  %v320 = vunpack.c.l.b16 %v41
  %v321 = vunpack.c.l.b16 %v42
  %v322 = vunpack.c.l.b16 %v43
  %v323 = vunpack.c.l.b16 %v44
  %v324 = vunpack.c.l.b16 %v45
  %v325 = vunpack.c.l.b16 %v46
  %v326 = vpack.c.b16 %v311, %v310
  %v327 = vpack.c.b16 %v313, %v312
  %v328 = vpack.c.b16 %v315, %v314
  %v329 = vpack.c.b16 %v317, %v316
  %v330 = vpack.c.b16 %v319, %v318
  %v331 = vpack.c.b16 %v321, %v320
  %v332 = vpack.c.b16 %v323, %v322
  %v333 = vpack.c.b16 %v325, %v324
  %342 = vmatprep.subr.bf16.mxu0 0
  %343 = vmatpush1.bf16.msra.mxu0 %v333
  %344 = vmatprep.subr.bf16.mxu0 0
  %345 = vmatpush1.bf16.msra.mxu0 %v332
  %346 = vmatprep.subr.bf16.mxu0 0
  %347 = vmatpush1.bf16.msra.mxu0 %v331
  %348 = vmatprep.subr.bf16.mxu0 0
  %349 = vmatpush1.bf16.msra.mxu0 %v330
  %350 = vmatprep.subr.bf16.mxu0 0
  %351 = vmatpush1.bf16.msra.mxu0 %v329
  %352 = vmatprep.subr.bf16.mxu0 0
  %353 = vmatpush1.bf16.msra.mxu0 %v328
  %354 = vmatprep.subr.bf16.mxu0 0
  %355 = vmatpush1.bf16.msra.mxu0 %v327
  %356 = vmatprep.subr.bf16.mxu0 0
  %357 = vmatpush1.bf16.msra.mxu0 %v326
  %358 = vmatprep.subr.bf16.mxu0 0
  %359 = vmatpush2.bf16.msra.mxu0 0
  %360 = vmatprep.subr.bf16.mxu0 0
  %361 = vmatpush2.bf16.msra.mxu0 0
  %362 = vmatprep.subr.bf16.mxu0 0
  %363 = vmatpush2.bf16.msra.mxu0 0
  %364 = vmatprep.subr.bf16.mxu0 0
  %365 = vmatpush2.bf16.msra.mxu0 0
  %366 = vmatprep.subr.bf16.mxu0 0
  %367 = vmatpush2.bf16.msra.mxu0 0
  %368 = vmatprep.subr.bf16.mxu0 0
  %369 = vmatpush2.bf16.msra.mxu0 0
  %370 = vmatprep.subr.bf16.mxu0 0
  %371 = vmatpush2.bf16.msra.mxu0 0
  %372 = vmatprep.subr.bf16.mxu0 0
  %373 = vmatpush2.bf16.msra.mxu0 0
  %374 = vmatprep.mubr.bf16.mxu0 0
  %375 = vmatmul.mubr.bf16.gmra.mxu0 %v280
  %v376 = vpop.f32.mrf.mxu0
  %v377 = vadd.f32 %v201, %v376
  %v378 = vpop.f32.mrf.mxu0
  %v379 = vpop.f32.mrf.mxu0
  %v380 = vadd.f32 %v204, %v379
  %v381 = vpop.f32.mrf.mxu0
  %382 = vmatprep.mubr.bf16.mxu0 0
  %383 = vmatmul.mubr.bf16.gmra.mxu0 %v281
  %v384 = vpop.f32.mrf.mxu0
  %v385 = vadd.f32 %v209, %v384
  %v386 = vpop.f32.mrf.mxu0
  %v387 = vpop.f32.mrf.mxu0
  %v388 = vadd.f32 %v212, %v387
  %v389 = vpop.f32.mrf.mxu0
  %390 = vmatprep.mubr.bf16.mxu0 0
  %391 = vmatmul.mubr.bf16.gmra.mxu0 %v282
  %v392 = vpop.f32.mrf.mxu0
  %v393 = vadd.f32 %v217, %v392
  %v394 = vpop.f32.mrf.mxu0
  %v395 = vpop.f32.mrf.mxu0
  %v396 = vadd.f32 %v220, %v395
  %v397 = vpop.f32.mrf.mxu0
  %398 = vmatprep.mubr.bf16.mxu0 0
  %399 = vmatmul.mubr.bf16.gmra.mxu0 %v283
  %v400 = vpop.f32.mrf.mxu0
  %v401 = vadd.f32 %v225, %v400
  %v402 = vpop.f32.mrf.mxu0
  %v403 = vpop.f32.mrf.mxu0
  %v404 = vadd.f32 %v228, %v403
  %v405 = vpop.f32.mrf.mxu0
  %406 = vmatprep.mubr.bf16.mxu0 0
  %407 = vmatmul.mubr.bf16.gmra.mxu0 %v284
  %v408 = vpop.f32.mrf.mxu0
  %v409 = vadd.f32 %v233, %v408
  %v410 = vpop.f32.mrf.mxu0
  %v411 = vpop.f32.mrf.mxu0
  %v412 = vadd.f32 %v236, %v411
  %v413 = vpop.f32.mrf.mxu0
  %414 = vmatprep.mubr.bf16.mxu0 0
  %415 = vmatmul.mubr.bf16.gmra.mxu0 %v285
  %v416 = vpop.f32.mrf.mxu0
  %v417 = vadd.f32 %v241, %v416
  %v418 = vpop.f32.mrf.mxu0
  %v419 = vpop.f32.mrf.mxu0
  %v420 = vadd.f32 %v244, %v419
  %v421 = vpop.f32.mrf.mxu0
  %422 = vmatprep.mubr.bf16.mxu0 0
  %423 = vmatmul.mubr.bf16.gmra.mxu0 %v286
  %v424 = vpop.f32.mrf.mxu0
  %v425 = vadd.f32 %v249, %v424
  %v426 = vpop.f32.mrf.mxu0
  %v427 = vpop.f32.mrf.mxu0
  %v428 = vpop.f32.mrf.mxu0
  %429 = vdwg.mxu0
  %s430 = scalar_lea.vmem %s0, 156
  %v431 = vld [vmem:[%s430] sm:$0xf]
  %v432 = vld [vmem:[%s430 + $0x4] sm:$0xf]
  %v433 = vld [vmem:[%s430 + $0x8] sm:$0xf]
  %v434 = vld [vmem:[%s430 + $0xc] sm:$0xf]
  %v435 = vld [vmem:[%s430 + $0x10] sm:$0xf]
  %v436 = vld [vmem:[%s430 + $0x14] sm:$0xf]
  %v437 = vld [vmem:[%s430 + $0x18] sm:$0xf]
  %v438 = vld [vmem:[%s430 + $0x1c] sm:$0xf]
  %v439 = vld [vmem:[%s430 + $0x20] sm:$0xf]
  %v440 = vld [vmem:[%s430 + $0x24] sm:$0xf]
  %v441 = vld [vmem:[%s430 + $0x28] sm:$0xf]
  %v442 = vld [vmem:[%s430 + $0x2c] sm:$0xf]
  %v443 = vld [vmem:[%s430 + $0x30] sm:$0x1]
  %s444 = scalar_lea.vmem %s1, 128
  %v445 = vld [vmem:[%s444] sm:$0xf]
  %v446 = vld [vmem:[%s444 + $0x4] sm:$0xf]
  %v447 = vld [vmem:[%s444 + $0x8] sm:$0xf]
  %v448 = vld [vmem:[%s444 + $0xc] sm:$0xf]
  %v449 = vld [vmem:[%s444 + $0x10] sm:$0xf]
  %v450 = vld [vmem:[%s444 + $0x14] sm:$0xf]
  %v451 = vld [vmem:[%s444 + $0x18] sm:$0xf]
  %v452 = vld [vmem:[%s444 + $0x1c] sm:$0xf]
  %v453 = vld [vmem:[%s444 + $0x20] sm:$0xf]
  %v454 = vld [vmem:[%s444 + $0x24] sm:$0xf]
  %v455 = vld [vmem:[%s444 + $0x28] sm:$0xf]
  %v456 = vld [vmem:[%s444 + $0x2c] sm:$0xf]
  %v457 = vld [vmem:[%s444 + $0x30] sm:$0xf]
  %v458 = vld [vmem:[%s444 + $0x34] sm:$0xf]
  %v459 = vld [vmem:[%s444 + $0x38] sm:$0xf]
  %v460 = vld [vmem:[%s444 + $0x3c] sm:$0xf]
  %v474 = vunpack.c.l.b16 %v431
  %v475 = vunpack.c.l.b16 %v432
  %v476 = vunpack.c.l.b16 %v433
  %v477 = vunpack.c.l.b16 %v434
  %v478 = vunpack.c.l.b16 %v435
  %v479 = vunpack.c.l.b16 %v436
  %v480 = vunpack.c.l.b16 %v437
  %v481 = vunpack.c.l.b16 %v438
  %v482 = vunpack.c.l.b16 %v439
  %v483 = vunpack.c.l.b16 %v440
  %v484 = vunpack.c.l.b16 %v441
  %v485 = vunpack.c.l.b16 %v442
  %v486 = vunpack.c.l.b16 %v443
  %v487 = vpack.c.b16 %v475, %v474
  %v488 = vpack.c.b16 %v477, %v476
  %v489 = vpack.c.b16 %v479, %v478
  %v490 = vpack.c.b16 %v481, %v480
  %v491 = vpack.c.b16 %v483, %v482
  %v492 = vpack.c.b16 %v485, %v484
  %v493 = vpack.c.b16 %v486, %v486
  %v517 = vunpack.c.l.b16 %v445
  %v518 = vunpack.c.l.b16 %v446
  %v519 = vunpack.c.l.b16 %v447
  %v520 = vunpack.c.l.b16 %v448
  %v521 = vunpack.c.l.b16 %v449
  %v522 = vunpack.c.l.b16 %v450
  %v523 = vunpack.c.l.b16 %v451
  %v524 = vunpack.c.l.b16 %v452
  %v525 = vunpack.c.l.b16 %v453
  %v526 = vunpack.c.l.b16 %v454
  %v527 = vunpack.c.l.b16 %v455
  %v528 = vunpack.c.l.b16 %v456
  %v529 = vunpack.c.l.b16 %v457
  %v530 = vunpack.c.l.b16 %v458
  %v531 = vunpack.c.l.b16 %v459
  %v532 = vunpack.c.l.b16 %v460
  %v533 = vpack.c.b16 %v518, %v517
  %v534 = vpack.c.b16 %v520, %v519
  %v535 = vpack.c.b16 %v522, %v521
  %v536 = vpack.c.b16 %v524, %v523
  %v537 = vpack.c.b16 %v526, %v525
  %v538 = vpack.c.b16 %v528, %v527
  %v539 = vpack.c.b16 %v530, %v529
  %v540 = vpack.c.b16 %v532, %v531
  %549 = vmatprep.subr.bf16.mxu0 0
  %550 = vmatpush1.bf16.msra.mxu0 %v540
  %551 = vmatprep.subr.bf16.mxu0 0
  %552 = vmatpush1.bf16.msra.mxu0 %v539
  %553 = vmatprep.subr.bf16.mxu0 0
  %554 = vmatpush1.bf16.msra.mxu0 %v538
  %555 = vmatprep.subr.bf16.mxu0 0
  %556 = vmatpush1.bf16.msra.mxu0 %v537
  %557 = vmatprep.subr.bf16.mxu0 0
  %558 = vmatpush1.bf16.msra.mxu0 %v536
  %559 = vmatprep.subr.bf16.mxu0 0
  %560 = vmatpush1.bf16.msra.mxu0 %v535
  %561 = vmatprep.subr.bf16.mxu0 0
  %562 = vmatpush1.bf16.msra.mxu0 %v534
  %563 = vmatprep.subr.bf16.mxu0 0
  %564 = vmatpush1.bf16.msra.mxu0 %v533
  %565 = vmatprep.subr.bf16.mxu0 0
  %566 = vmatpush2.bf16.msra.mxu0 0
  %567 = vmatprep.subr.bf16.mxu0 0
  %568 = vmatpush2.bf16.msra.mxu0 0
  %569 = vmatprep.subr.bf16.mxu0 0
  %570 = vmatpush2.bf16.msra.mxu0 0
  %571 = vmatprep.subr.bf16.mxu0 0
  %572 = vmatpush2.bf16.msra.mxu0 0
  %573 = vmatprep.subr.bf16.mxu0 0
  %574 = vmatpush2.bf16.msra.mxu0 0
  %575 = vmatprep.subr.bf16.mxu0 0
  %576 = vmatpush2.bf16.msra.mxu0 0
  %577 = vmatprep.subr.bf16.mxu0 0
  %578 = vmatpush2.bf16.msra.mxu0 0
  %579 = vmatprep.subr.bf16.mxu0 0
  %580 = vmatpush2.bf16.msra.mxu0 0
  %581 = vmatprep.mubr.bf16.mxu0 0
  %582 = vmatmul.mubr.bf16.gmra.mxu0 %v487
  %v583 = vpop.f32.mrf.mxu0
  %v584 = vadd.f32 0.0, %v583
  %v585 = vpop.f32.mrf.mxu0
  %v586 = vpop.f32.mrf.mxu0
  %v587 = vadd.f32 0.0, %v586
  %v588 = vpop.f32.mrf.mxu0
  %589 = vmatprep.mubr.bf16.mxu0 0
  %590 = vmatmul.mubr.bf16.gmra.mxu0 %v488
  %v591 = vpop.f32.mrf.mxu0
  %v592 = vadd.f32 0.0, %v591
  %v593 = vpop.f32.mrf.mxu0
  %v594 = vpop.f32.mrf.mxu0
  %v595 = vadd.f32 0.0, %v594
  %v596 = vpop.f32.mrf.mxu0
  %597 = vmatprep.mubr.bf16.mxu0 0
  %598 = vmatmul.mubr.bf16.gmra.mxu0 %v489
  %v599 = vpop.f32.mrf.mxu0
  %v600 = vadd.f32 0.0, %v599
  %v601 = vpop.f32.mrf.mxu0
  %v602 = vpop.f32.mrf.mxu0
  %v603 = vadd.f32 0.0, %v602
  %v604 = vpop.f32.mrf.mxu0
  %605 = vmatprep.mubr.bf16.mxu0 0
  %606 = vmatmul.mubr.bf16.gmra.mxu0 %v490
  %v607 = vpop.f32.mrf.mxu0
  %v608 = vadd.f32 0.0, %v607
  %v609 = vpop.f32.mrf.mxu0
  %v610 = vpop.f32.mrf.mxu0
  %v611 = vadd.f32 0.0, %v610
  %v612 = vpop.f32.mrf.mxu0
  %613 = vmatprep.mubr.bf16.mxu0 0
  %614 = vmatmul.mubr.bf16.gmra.mxu0 %v491
  %v615 = vpop.f32.mrf.mxu0
  %v616 = vadd.f32 0.0, %v615
  %v617 = vpop.f32.mrf.mxu0
  %v618 = vpop.f32.mrf.mxu0
  %v619 = vadd.f32 0.0, %v618
  %v620 = vpop.f32.mrf.mxu0
  %621 = vmatprep.mubr.bf16.mxu0 0
  %622 = vmatmul.mubr.bf16.gmra.mxu0 %v492
  %v623 = vpop.f32.mrf.mxu0
  %v624 = vadd.f32 0.0, %v623
  %v625 = vpop.f32.mrf.mxu0
  %v626 = vpop.f32.mrf.mxu0
  %v627 = vadd.f32 0.0, %v626
  %v628 = vpop.f32.mrf.mxu0
  %629 = vmatprep.mubr.bf16.mxu0 0
  %630 = vmatmul.mubr.bf16.gmra.mxu0 %v493
  %v631 = vpop.f32.mrf.mxu0
  %v632 = vadd.f32 0.0, %v631
  %v633 = vpop.f32.mrf.mxu0
  %v634 = vpop.f32.mrf.mxu0
  %v635 = vpop.f32.mrf.mxu0
  %636 = vdwg.mxu0
  %v637 = vadd.f32 %v377, %v584
  %v638 = vadd.f32 %v380, %v587
  %v639 = vadd.f32 %v385, %v592
  %v640 = vadd.f32 %v388, %v595
  %v641 = vadd.f32 %v393, %v600
  %v642 = vadd.f32 %v396, %v603
  %v643 = vadd.f32 %v401, %v608
  %v644 = vadd.f32 %v404, %v611
  %v645 = vadd.f32 %v409, %v616
  %v646 = vadd.f32 %v412, %v619
  %v647 = vadd.f32 %v417, %v624
  %v648 = vadd.f32 %v420, %v627
  %v649 = vadd.f32 %v425, %v632
  %s650 = scalar_lea.vmem %s0, 208
  %v651 = vld [vmem:[%s650] sm:$0xf]
  %v652 = vld [vmem:[%s650 + $0x4] sm:$0xf]
  %v653 = vld [vmem:[%s650 + $0x8] sm:$0xf]
  %v654 = vld [vmem:[%s650 + $0xc] sm:$0xf]
  %v655 = vld [vmem:[%s650 + $0x10] sm:$0xf]
  %v656 = vld [vmem:[%s650 + $0x14] sm:$0xf]
  %v657 = vld [vmem:[%s650 + $0x18] sm:$0xf]
  %v658 = vld [vmem:[%s650 + $0x1c] sm:$0xf]
  %v659 = vld [vmem:[%s650 + $0x20] sm:$0xf]
  %v660 = vld [vmem:[%s650 + $0x24] sm:$0xf]
  %v661 = vld [vmem:[%s650 + $0x28] sm:$0xf]
  %v662 = vld [vmem:[%s650 + $0x2c] sm:$0xf]
  %v663 = vld [vmem:[%s650 + $0x30] sm:$0x1]
  %s664 = scalar_lea.vmem %s1, 192
  %v665 = vld [vmem:[%s664] sm:$0xf]
  %v666 = vld [vmem:[%s664 + $0x4] sm:$0xf]
  %v667 = vld [vmem:[%s664 + $0x8] sm:$0xf]
  %v668 = vld [vmem:[%s664 + $0xc] sm:$0xf]
  %v669 = vld [vmem:[%s664 + $0x10] sm:$0xf]
  %v670 = vld [vmem:[%s664 + $0x14] sm:$0xf]
  %v671 = vld [vmem:[%s664 + $0x18] sm:$0xf]
  %v672 = vld [vmem:[%s664 + $0x1c] sm:$0xf]
  %v673 = vld [vmem:[%s664 + $0x20] sm:$0xf]
  %v674 = vld [vmem:[%s664 + $0x24] sm:$0xf]
  %v675 = vld [vmem:[%s664 + $0x28] sm:$0xf]
  %v676 = vld [vmem:[%s664 + $0x2c] sm:$0xf]
  %v677 = vld [vmem:[%s664 + $0x30] sm:$0xf]
  %v678 = vld [vmem:[%s664 + $0x34] sm:$0xf]
  %v679 = vld [vmem:[%s664 + $0x38] sm:$0xf]
  %v680 = vld [vmem:[%s664 + $0x3c] sm:$0xf]
  %v694 = vunpack.c.l.b16 %v651
  %v695 = vunpack.c.l.b16 %v652
  %v696 = vunpack.c.l.b16 %v653
  %v697 = vunpack.c.l.b16 %v654
  %v698 = vunpack.c.l.b16 %v655
  %v699 = vunpack.c.l.b16 %v656
  %v700 = vunpack.c.l.b16 %v657
  %v701 = vunpack.c.l.b16 %v658
  %v702 = vunpack.c.l.b16 %v659
  %v703 = vunpack.c.l.b16 %v660
  %v704 = vunpack.c.l.b16 %v661
  %v705 = vunpack.c.l.b16 %v662
  %v706 = vunpack.c.l.b16 %v663
  %v707 = vpack.c.b16 %v695, %v694
  %v708 = vpack.c.b16 %v697, %v696
  %v709 = vpack.c.b16 %v699, %v698
  %v710 = vpack.c.b16 %v701, %v700
  %v711 = vpack.c.b16 %v703, %v702
  %v712 = vpack.c.b16 %v705, %v704
  %v713 = vpack.c.b16 %v706, %v706
  %v737 = vunpack.c.l.b16 %v665
  %v738 = vunpack.c.l.b16 %v666
  %v739 = vunpack.c.l.b16 %v667
  %v740 = vunpack.c.l.b16 %v668
  %v741 = vunpack.c.l.b16 %v669
  %v742 = vunpack.c.l.b16 %v670
  %v743 = vunpack.c.l.b16 %v671
  %v744 = vunpack.c.l.b16 %v672
  %v745 = vunpack.c.l.b16 %v673
  %v746 = vunpack.c.l.b16 %v674
  %v747 = vunpack.c.l.b16 %v675
  %v748 = vunpack.c.l.b16 %v676
  %v749 = vunpack.c.l.b16 %v677
  %v750 = vunpack.c.l.b16 %v678
  %v751 = vunpack.c.l.b16 %v679
  %v752 = vunpack.c.l.b16 %v680
  %v753 = vpack.c.b16 %v738, %v737
  %v754 = vpack.c.b16 %v740, %v739
  %v755 = vpack.c.b16 %v742, %v741
  %v756 = vpack.c.b16 %v744, %v743
  %v757 = vpack.c.b16 %v746, %v745
  %v758 = vpack.c.b16 %v748, %v747
  %v759 = vpack.c.b16 %v750, %v749
  %v760 = vpack.c.b16 %v752, %v751
  %769 = vmatprep.subr.bf16.mxu0 0
  %770 = vmatpush1.bf16.msra.mxu0 %v760
  %771 = vmatprep.subr.bf16.mxu0 0
  %772 = vmatpush1.bf16.msra.mxu0 %v759
  %773 = vmatprep.subr.bf16.mxu0 0
  %774 = vmatpush1.bf16.msra.mxu0 %v758
  %775 = vmatprep.subr.bf16.mxu0 0
  %776 = vmatpush1.bf16.msra.mxu0 %v757
  %777 = vmatprep.subr.bf16.mxu0 0
  %778 = vmatpush1.bf16.msra.mxu0 %v756
  %779 = vmatprep.subr.bf16.mxu0 0
  %780 = vmatpush1.bf16.msra.mxu0 %v755
  %781 = vmatprep.subr.bf16.mxu0 0
  %782 = vmatpush1.bf16.msra.mxu0 %v754
  %783 = vmatprep.subr.bf16.mxu0 0
  %784 = vmatpush1.bf16.msra.mxu0 %v753
  %785 = vmatprep.subr.bf16.mxu0 0
  %786 = vmatpush2.bf16.msra.mxu0 0
  %787 = vmatprep.subr.bf16.mxu0 0
  %788 = vmatpush2.bf16.msra.mxu0 0
  %789 = vmatprep.subr.bf16.mxu0 0
  %790 = vmatpush2.bf16.msra.mxu0 0
  %791 = vmatprep.subr.bf16.mxu0 0
  %792 = vmatpush2.bf16.msra.mxu0 0
  %793 = vmatprep.subr.bf16.mxu0 0
  %794 = vmatpush2.bf16.msra.mxu0 0
  %795 = vmatprep.subr.bf16.mxu0 0
  %796 = vmatpush2.bf16.msra.mxu0 0
  %797 = vmatprep.subr.bf16.mxu0 0
  %798 = vmatpush2.bf16.msra.mxu0 0
  %799 = vmatprep.subr.bf16.mxu0 0
  %800 = vmatpush2.bf16.msra.mxu0 0
  %801 = vmatprep.mubr.bf16.mxu0 0
  %802 = vmatmul.mubr.bf16.gmra.mxu0 %v707
  %v803 = vpop.f32.mrf.mxu0
  %v804 = vadd.f32 0.0, %v803
  %v805 = vpop.f32.mrf.mxu0
  %v806 = vpop.f32.mrf.mxu0
  %v807 = vadd.f32 0.0, %v806
  %v808 = vpop.f32.mrf.mxu0
  %809 = vmatprep.mubr.bf16.mxu0 0
  %810 = vmatmul.mubr.bf16.gmra.mxu0 %v708
  %v811 = vpop.f32.mrf.mxu0
  %v812 = vadd.f32 0.0, %v811
  %v813 = vpop.f32.mrf.mxu0
  %v814 = vpop.f32.mrf.mxu0
  %v815 = vadd.f32 0.0, %v814
  %v816 = vpop.f32.mrf.mxu0
  %817 = vmatprep.mubr.bf16.mxu0 0
  %818 = vmatmul.mubr.bf16.gmra.mxu0 %v709
  %v819 = vpop.f32.mrf.mxu0
  %v820 = vadd.f32 0.0, %v819
  %v821 = vpop.f32.mrf.mxu0
  %v822 = vpop.f32.mrf.mxu0
  %v823 = vadd.f32 0.0, %v822
  %v824 = vpop.f32.mrf.mxu0
  %825 = vmatprep.mubr.bf16.mxu0 0
  %826 = vmatmul.mubr.bf16.gmra.mxu0 %v710
  %v827 = vpop.f32.mrf.mxu0
  %v828 = vadd.f32 0.0, %v827
  %v829 = vpop.f32.mrf.mxu0
  %v830 = vpop.f32.mrf.mxu0
  %v831 = vadd.f32 0.0, %v830
  %v832 = vpop.f32.mrf.mxu0
  %833 = vmatprep.mubr.bf16.mxu0 0
  %834 = vmatmul.mubr.bf16.gmra.mxu0 %v711
  %v835 = vpop.f32.mrf.mxu0
  %v836 = vadd.f32 0.0, %v835
  %v837 = vpop.f32.mrf.mxu0
  %v838 = vpop.f32.mrf.mxu0
  %v839 = vadd.f32 0.0, %v838
  %v840 = vpop.f32.mrf.mxu0
  %841 = vmatprep.mubr.bf16.mxu0 0
  %842 = vmatmul.mubr.bf16.gmra.mxu0 %v712
  %v843 = vpop.f32.mrf.mxu0
  %v844 = vadd.f32 0.0, %v843
  %v845 = vpop.f32.mrf.mxu0
  %v846 = vpop.f32.mrf.mxu0
  %v847 = vadd.f32 0.0, %v846
  %v848 = vpop.f32.mrf.mxu0
  %849 = vmatprep.mubr.bf16.mxu0 0
  %850 = vmatmul.mubr.bf16.gmra.mxu0 %v713
  %v851 = vpop.f32.mrf.mxu0
  %v852 = vadd.f32 0.0, %v851
  %v853 = vpop.f32.mrf.mxu0
  %v854 = vpop.f32.mrf.mxu0
  %v855 = vpop.f32.mrf.mxu0
  %856 = vdwg.mxu0
  %v857 = vadd.f32 %v637, %v804
  %v858 = vadd.f32 %v638, %v807
  %v859 = vadd.f32 %v639, %v812
  %v860 = vadd.f32 %v640, %v815
  %v861 = vadd.f32 %v641, %v820
  %v862 = vadd.f32 %v642, %v823
  %v863 = vadd.f32 %v643, %v828
  %v864 = vadd.f32 %v644, %v831
  %v865 = vadd.f32 %v645, %v836
  %v866 = vadd.f32 %v646, %v839
  %v867 = vadd.f32 %v647, %v844
  %v868 = vadd.f32 %v648, %v847
  %v869 = vadd.f32 %v649, %v852
  %870 = vst [vmem:[#allocation2] sm:$0xff] %v857
  %871 = vst [vmem:[#allocation2 + $0x8] sm:$0xff] %v858
  %872 = vst [vmem:[#allocation2 + $0x10] sm:$0xff] %v859
  %873 = vst [vmem:[#allocation2 + $0x18] sm:$0xff] %v860
  %874 = vst [vmem:[#allocation2 + $0x20] sm:$0xff] %v861
  %875 = vst [vmem:[#allocation2 + $0x28] sm:$0xff] %v862
  %876 = vst [vmem:[#allocation2 + $0x30] sm:$0xff] %v863
  %877 = vst [vmem:[#allocation2 + $0x38] sm:$0xff] %v864
  %878 = vst [vmem:[#allocation2 + $0x40] sm:$0xff] %v865
  %879 = vst [vmem:[#allocation2 + $0x48] sm:$0xff] %v866
  %880 = vst [vmem:[#allocation2 + $0x50] sm:$0xff] %v867
  %881 = vst [vmem:[#allocation2 + $0x58] sm:$0xff] %v868
  %882 = vst [vmem:[#allocation2 + $0x60] sm:$0x3] %v869
  %v883 = vadd.f32 %v857, %v858
  %v884 = vadd.f32 %v883, %v859
  %v885 = vadd.f32 %v884, %v860
  %v886 = vadd.f32 %v885, %v861
  %v887 = vadd.f32 %v886, %v862
  %v888 = vadd.f32 %v887, %v863
  %v889 = vadd.f32 %v888, %v864
  %v890 = vadd.f32 %v889, %v865
  %v891 = vadd.f32 %v890, %v866
  %v892 = vadd.f32 %v891, %v867
  %v893 = vadd.f32 %v892, %v868
  %vm894 = vcmask 1041408
  %v895 = vsel %vm894, %v869, 0.0
  %v896 = vadd.f32 %v893, %v895
  %v897 = vrot.slane %v896, 4
  %v898 = vadd.f32 %v896, %v897
  %v899 = vrot.slane %v898, 2
  %v900 = vadd.f32 %v898, %v899
  %v901 = vrot.slane %v900, 1
  %v902 = vadd.f32 %v900, %v901
  %v903 = vadd.f32 %v902, 0.0
  %v904 = vmul.f32 %v857, %v857
  %v905 = vmul.f32 %v858, %v858
  %v906 = vmul.f32 %v859, %v859
  %v907 = vmul.f32 %v860, %v860
  %v908 = vmul.f32 %v861, %v861
  %v909 = vmul.f32 %v862, %v862
  %v910 = vmul.f32 %v863, %v863
  %v911 = vmul.f32 %v864, %v864
  %v912 = vmul.f32 %v865, %v865
  %v913 = vmul.f32 %v866, %v866
  %v914 = vmul.f32 %v867, %v867
  %v915 = vmul.f32 %v868, %v868
  %v916 = vmul.f32 %v869, %v869
  %v917 = vadd.f32 %v904, %v905
  %v918 = vadd.f32 %v917, %v906
  %v919 = vadd.f32 %v918, %v907
  %v920 = vadd.f32 %v919, %v908
  %v921 = vadd.f32 %v920, %v909
  %v922 = vadd.f32 %v921, %v910
  %v923 = vadd.f32 %v922, %v911
  %v924 = vadd.f32 %v923, %v912
  %v925 = vadd.f32 %v924, %v913
  %v926 = vadd.f32 %v925, %v914
  %v927 = vadd.f32 %v926, %v915
  %v928 = vsel %vm894, %v916, 0.0
  %v929 = vadd.f32 %v927, %v928
  %v930 = vrot.slane %v929, 4
  %v931 = vadd.f32 %v929, %v930
  %v932 = vrot.slane %v931, 2
  %v933 = vadd.f32 %v931, %v932
  %v934 = vrot.slane %v933, 1
  %v935 = vadd.f32 %v933, %v934
  %v936 = vadd.f32 %v935, 0.0
  %v937 = vld [vmem:[%s47] sm:$0xf]
  %v938 = vld [vmem:[%s47 + $0x4] sm:$0xf]
  %v939 = vld [vmem:[%s47 + $0x8] sm:$0xf]
  %v940 = vld [vmem:[%s47 + $0xc] sm:$0xf]
  %v941 = vld [vmem:[%s47 + $0x10] sm:$0xf]
  %v942 = vld [vmem:[%s47 + $0x14] sm:$0xf]
  %v943 = vld [vmem:[%s47 + $0x18] sm:$0xf]
  %v944 = vld [vmem:[%s47 + $0x1c] sm:$0xf]
  %v945 = vld [vmem:[%s47 + $0x20] sm:$0xf]
  %v946 = vld [vmem:[%s47 + $0x24] sm:$0xf]
  %v947 = vld [vmem:[%s47 + $0x28] sm:$0xf]
  %v948 = vld [vmem:[%s47 + $0x2c] sm:$0xf]
  %v949 = vld [vmem:[%s47 + $0x30] sm:$0x1]
  %s950 = scalar_lea.vmem %s1, 256
  %v951 = vld [vmem:[%s950] sm:$0xf]
  %v952 = vld [vmem:[%s950 + $0x4] sm:$0xf]
  %v953 = vld [vmem:[%s950 + $0x8] sm:$0xf]
  %v954 = vld [vmem:[%s950 + $0xc] sm:$0xf]
  %v955 = vld [vmem:[%s950 + $0x10] sm:$0xf]
  %v956 = vld [vmem:[%s950 + $0x14] sm:$0xf]
  %v957 = vld [vmem:[%s950 + $0x18] sm:$0xf]
  %v958 = vld [vmem:[%s950 + $0x1c] sm:$0xf]
  %v959 = vld [vmem:[%s950 + $0x20] sm:$0xf]
  %v960 = vld [vmem:[%s950 + $0x24] sm:$0xf]
  %v961 = vld [vmem:[%s950 + $0x28] sm:$0xf]
  %v962 = vld [vmem:[%s950 + $0x2c] sm:$0xf]
  %v963 = vld [vmem:[%s950 + $0x30] sm:$0xf]
  %v964 = vld [vmem:[%s950 + $0x34] sm:$0xf]
  %v965 = vld [vmem:[%s950 + $0x38] sm:$0xf]
  %v966 = vld [vmem:[%s950 + $0x3c] sm:$0xf]
  %s967 = scalar_lea.vmem %s0, 104
  %v968 = vld [vmem:[%s967] sm:$0xf]
  %v969 = vld [vmem:[%s967 + $0x4] sm:$0xf]
  %v970 = vld [vmem:[%s967 + $0x8] sm:$0xf]
  %v971 = vld [vmem:[%s967 + $0xc] sm:$0xf]
  %v972 = vld [vmem:[%s967 + $0x10] sm:$0xf]
  %v973 = vld [vmem:[%s967 + $0x14] sm:$0xf]
  %v974 = vld [vmem:[%s967 + $0x18] sm:$0xf]
  %v975 = vld [vmem:[%s967 + $0x1c] sm:$0xf]
  %v976 = vld [vmem:[%s967 + $0x20] sm:$0xf]
  %v977 = vld [vmem:[%s967 + $0x24] sm:$0xf]
  %v978 = vld [vmem:[%s967 + $0x28] sm:$0xf]
  %v979 = vld [vmem:[%s967 + $0x2c] sm:$0xf]
  %v980 = vld [vmem:[%s967 + $0x30] sm:$0x1]
  %s981 = scalar_lea.vmem %s1, 320
  %v982 = vld [vmem:[%s981] sm:$0xf]
  %v983 = vld [vmem:[%s981 + $0x4] sm:$0xf]
  %v984 = vld [vmem:[%s981 + $0x8] sm:$0xf]
  %v985 = vld [vmem:[%s981 + $0xc] sm:$0xf]
  %v986 = vld [vmem:[%s981 + $0x10] sm:$0xf]
  %v987 = vld [vmem:[%s981 + $0x14] sm:$0xf]
  %v988 = vld [vmem:[%s981 + $0x18] sm:$0xf]
  %v989 = vld [vmem:[%s981 + $0x1c] sm:$0xf]
  %v990 = vld [vmem:[%s981 + $0x20] sm:$0xf]
  %v991 = vld [vmem:[%s981 + $0x24] sm:$0xf]
  %v992 = vld [vmem:[%s981 + $0x28] sm:$0xf]
  %v993 = vld [vmem:[%s981 + $0x2c] sm:$0xf]
  %v994 = vld [vmem:[%s981 + $0x30] sm:$0xf]
  %v995 = vld [vmem:[%s981 + $0x34] sm:$0xf]
  %v996 = vld [vmem:[%s981 + $0x38] sm:$0xf]
  %v997 = vld [vmem:[%s981 + $0x3c] sm:$0xf]
  %v1011 = vunpack.c.l.b16 %v968
  %v1012 = vunpack.c.l.b16 %v969
  %v1013 = vunpack.c.l.b16 %v970
  %v1014 = vunpack.c.l.b16 %v971
  %v1015 = vunpack.c.l.b16 %v972
  %v1016 = vunpack.c.l.b16 %v973
  %v1017 = vunpack.c.l.b16 %v974
  %v1018 = vunpack.c.l.b16 %v975
  %v1019 = vunpack.c.l.b16 %v976
  %v1020 = vunpack.c.l.b16 %v977
  %v1021 = vunpack.c.l.b16 %v978
  %v1022 = vunpack.c.l.b16 %v979
  %v1023 = vunpack.c.l.b16 %v980
  %v1024 = vpack.c.b16 %v1012, %v1011
  %v1025 = vpack.c.b16 %v1014, %v1013
  %v1026 = vpack.c.b16 %v1016, %v1015
  %v1027 = vpack.c.b16 %v1018, %v1017
  %v1028 = vpack.c.b16 %v1020, %v1019
  %v1029 = vpack.c.b16 %v1022, %v1021
  %v1030 = vpack.c.b16 %v1023, %v1023
  %v1054 = vunpack.c.l.b16 %v982
  %v1055 = vunpack.c.l.b16 %v983
  %v1056 = vunpack.c.l.b16 %v984
  %v1057 = vunpack.c.l.b16 %v985
  %v1058 = vunpack.c.l.b16 %v986
  %v1059 = vunpack.c.l.b16 %v987
  %v1060 = vunpack.c.l.b16 %v988
  %v1061 = vunpack.c.l.b16 %v989
  %v1062 = vunpack.c.l.b16 %v990
  %v1063 = vunpack.c.l.b16 %v991
  %v1064 = vunpack.c.l.b16 %v992
  %v1065 = vunpack.c.l.b16 %v993
  %v1066 = vunpack.c.l.b16 %v994
  %v1067 = vunpack.c.l.b16 %v995
  %v1068 = vunpack.c.l.b16 %v996
  %v1069 = vunpack.c.l.b16 %v997
  %v1070 = vpack.c.b16 %v1055, %v1054
  %v1071 = vpack.c.b16 %v1057, %v1056
  %v1072 = vpack.c.b16 %v1059, %v1058
  %v1073 = vpack.c.b16 %v1061, %v1060
  %v1074 = vpack.c.b16 %v1063, %v1062
  %v1075 = vpack.c.b16 %v1065, %v1064
  %v1076 = vpack.c.b16 %v1067, %v1066
  %v1077 = vpack.c.b16 %v1069, %v1068
  %1086 = vmatprep.subr.bf16.mxu0 0
  %1087 = vmatpush1.bf16.msra.mxu0 %v1077
  %1088 = vmatprep.subr.bf16.mxu0 0
  %1089 = vmatpush1.bf16.msra.mxu0 %v1076
  %1090 = vmatprep.subr.bf16.mxu0 0
  %1091 = vmatpush1.bf16.msra.mxu0 %v1075
  %1092 = vmatprep.subr.bf16.mxu0 0
  %1093 = vmatpush1.bf16.msra.mxu0 %v1074
  %1094 = vmatprep.subr.bf16.mxu0 0
  %1095 = vmatpush1.bf16.msra.mxu0 %v1073
  %1096 = vmatprep.subr.bf16.mxu0 0
  %1097 = vmatpush1.bf16.msra.mxu0 %v1072
  %1098 = vmatprep.subr.bf16.mxu0 0
  %1099 = vmatpush1.bf16.msra.mxu0 %v1071
  %1100 = vmatprep.subr.bf16.mxu0 0
  %1101 = vmatpush1.bf16.msra.mxu0 %v1070
  %1102 = vmatprep.subr.bf16.mxu0 0
  %1103 = vmatpush2.bf16.msra.mxu0 0
  %1104 = vmatprep.subr.bf16.mxu0 0
  %1105 = vmatpush2.bf16.msra.mxu0 0
  %1106 = vmatprep.subr.bf16.mxu0 0
  %1107 = vmatpush2.bf16.msra.mxu0 0
  %1108 = vmatprep.subr.bf16.mxu0 0
  %1109 = vmatpush2.bf16.msra.mxu0 0
  %1110 = vmatprep.subr.bf16.mxu0 0
  %1111 = vmatpush2.bf16.msra.mxu0 0
  %1112 = vmatprep.subr.bf16.mxu0 0
  %1113 = vmatpush2.bf16.msra.mxu0 0
  %1114 = vmatprep.subr.bf16.mxu0 0
  %1115 = vmatpush2.bf16.msra.mxu0 0
  %1116 = vmatprep.subr.bf16.mxu0 0
  %1117 = vmatpush2.bf16.msra.mxu0 0
  %1118 = vmatprep.mubr.bf16.mxu0 0
  %1119 = vmatmul.mubr.bf16.gmra.mxu0 %v1024
  %v1120 = vpop.f32.mrf.mxu0
  %v1121 = vadd.f32 0.0, %v1120
  %v1122 = vpop.f32.mrf.mxu0
  %v1123 = vpop.f32.mrf.mxu0
  %v1124 = vadd.f32 0.0, %v1123
  %v1125 = vpop.f32.mrf.mxu0
  %1126 = vmatprep.mubr.bf16.mxu0 0
  %1127 = vmatmul.mubr.bf16.gmra.mxu0 %v1025
  %v1128 = vpop.f32.mrf.mxu0
  %v1129 = vadd.f32 0.0, %v1128
  %v1130 = vpop.f32.mrf.mxu0
  %v1131 = vpop.f32.mrf.mxu0
  %v1132 = vadd.f32 0.0, %v1131
  %v1133 = vpop.f32.mrf.mxu0
  %1134 = vmatprep.mubr.bf16.mxu0 0
  %1135 = vmatmul.mubr.bf16.gmra.mxu0 %v1026
  %v1136 = vpop.f32.mrf.mxu0
  %v1137 = vadd.f32 0.0, %v1136
  %v1138 = vpop.f32.mrf.mxu0
  %v1139 = vpop.f32.mrf.mxu0
  %v1140 = vadd.f32 0.0, %v1139
  %v1141 = vpop.f32.mrf.mxu0
  %1142 = vmatprep.mubr.bf16.mxu0 0
  %1143 = vmatmul.mubr.bf16.gmra.mxu0 %v1027
  %v1144 = vpop.f32.mrf.mxu0
  %v1145 = vadd.f32 0.0, %v1144
  %v1146 = vpop.f32.mrf.mxu0
  %v1147 = vpop.f32.mrf.mxu0
  %v1148 = vadd.f32 0.0, %v1147
  %v1149 = vpop.f32.mrf.mxu0
  %1150 = vmatprep.mubr.bf16.mxu0 0
  %1151 = vmatmul.mubr.bf16.gmra.mxu0 %v1028
  %v1152 = vpop.f32.mrf.mxu0
  %v1153 = vadd.f32 0.0, %v1152
  %v1154 = vpop.f32.mrf.mxu0
  %v1155 = vpop.f32.mrf.mxu0
  %v1156 = vadd.f32 0.0, %v1155
  %v1157 = vpop.f32.mrf.mxu0
  %1158 = vmatprep.mubr.bf16.mxu0 0
  %1159 = vmatmul.mubr.bf16.gmra.mxu0 %v1029
  %v1160 = vpop.f32.mrf.mxu0
  %v1161 = vadd.f32 0.0, %v1160
  %v1162 = vpop.f32.mrf.mxu0
  %v1163 = vpop.f32.mrf.mxu0
  %v1164 = vadd.f32 0.0, %v1163
  %v1165 = vpop.f32.mrf.mxu0
  %1166 = vmatprep.mubr.bf16.mxu0 0
  %1167 = vmatmul.mubr.bf16.gmra.mxu0 %v1030
  %v1168 = vpop.f32.mrf.mxu0
  %v1169 = vadd.f32 0.0, %v1168
  %v1170 = vpop.f32.mrf.mxu0
  %v1171 = vpop.f32.mrf.mxu0
  %v1172 = vpop.f32.mrf.mxu0
  %1173 = vdwg.mxu0
  %v1187 = vunpack.c.l.b16 %v937
  %v1188 = vunpack.c.l.b16 %v938
  %v1189 = vunpack.c.l.b16 %v939
  %v1190 = vunpack.c.l.b16 %v940
  %v1191 = vunpack.c.l.b16 %v941
  %v1192 = vunpack.c.l.b16 %v942
  %v1193 = vunpack.c.l.b16 %v943
  %v1194 = vunpack.c.l.b16 %v944
  %v1195 = vunpack.c.l.b16 %v945
  %v1196 = vunpack.c.l.b16 %v946
  %v1197 = vunpack.c.l.b16 %v947
  %v1198 = vunpack.c.l.b16 %v948
  %v1199 = vunpack.c.l.b16 %v949
  %v1200 = vpack.c.b16 %v1188, %v1187
  %v1201 = vpack.c.b16 %v1190, %v1189
  %v1202 = vpack.c.b16 %v1192, %v1191
  %v1203 = vpack.c.b16 %v1194, %v1193
  %v1204 = vpack.c.b16 %v1196, %v1195
  %v1205 = vpack.c.b16 %v1198, %v1197
  %v1206 = vpack.c.b16 %v1199, %v1199
  %v1230 = vunpack.c.l.b16 %v951
  %v1231 = vunpack.c.l.b16 %v952
  %v1232 = vunpack.c.l.b16 %v953
  %v1233 = vunpack.c.l.b16 %v954
  %v1234 = vunpack.c.l.b16 %v955
  %v1235 = vunpack.c.l.b16 %v956
  %v1236 = vunpack.c.l.b16 %v957
  %v1237 = vunpack.c.l.b16 %v958
  %v1238 = vunpack.c.l.b16 %v959
  %v1239 = vunpack.c.l.b16 %v960
  %v1240 = vunpack.c.l.b16 %v961
  %v1241 = vunpack.c.l.b16 %v962
  %v1242 = vunpack.c.l.b16 %v963
  %v1243 = vunpack.c.l.b16 %v964
  %v1244 = vunpack.c.l.b16 %v965
  %v1245 = vunpack.c.l.b16 %v966
  %v1246 = vpack.c.b16 %v1231, %v1230
  %v1247 = vpack.c.b16 %v1233, %v1232
  %v1248 = vpack.c.b16 %v1235, %v1234
  %v1249 = vpack.c.b16 %v1237, %v1236
  %v1250 = vpack.c.b16 %v1239, %v1238
  %v1251 = vpack.c.b16 %v1241, %v1240
  %v1252 = vpack.c.b16 %v1243, %v1242
  %v1253 = vpack.c.b16 %v1245, %v1244
  %1262 = vmatprep.subr.bf16.mxu0 0
  %1263 = vmatpush1.bf16.msra.mxu0 %v1253
  %1264 = vmatprep.subr.bf16.mxu0 0
  %1265 = vmatpush1.bf16.msra.mxu0 %v1252
  %1266 = vmatprep.subr.bf16.mxu0 0
  %1267 = vmatpush1.bf16.msra.mxu0 %v1251
  %1268 = vmatprep.subr.bf16.mxu0 0
  %1269 = vmatpush1.bf16.msra.mxu0 %v1250
  %1270 = vmatprep.subr.bf16.mxu0 0
  %1271 = vmatpush1.bf16.msra.mxu0 %v1249
  %1272 = vmatprep.subr.bf16.mxu0 0
  %1273 = vmatpush1.bf16.msra.mxu0 %v1248
  %1274 = vmatprep.subr.bf16.mxu0 0
  %1275 = vmatpush1.bf16.msra.mxu0 %v1247
  %1276 = vmatprep.subr.bf16.mxu0 0
  %1277 = vmatpush1.bf16.msra.mxu0 %v1246
  %1278 = vmatprep.subr.bf16.mxu0 0
  %1279 = vmatpush2.bf16.msra.mxu0 0
  %1280 = vmatprep.subr.bf16.mxu0 0
  %1281 = vmatpush2.bf16.msra.mxu0 0
  %1282 = vmatprep.subr.bf16.mxu0 0
  %1283 = vmatpush2.bf16.msra.mxu0 0
  %1284 = vmatprep.subr.bf16.mxu0 0
  %1285 = vmatpush2.bf16.msra.mxu0 0
  %1286 = vmatprep.subr.bf16.mxu0 0
  %1287 = vmatpush2.bf16.msra.mxu0 0
  %1288 = vmatprep.subr.bf16.mxu0 0
  %1289 = vmatpush2.bf16.msra.mxu0 0
  %1290 = vmatprep.subr.bf16.mxu0 0
  %1291 = vmatpush2.bf16.msra.mxu0 0
  %1292 = vmatprep.subr.bf16.mxu0 0
  %1293 = vmatpush2.bf16.msra.mxu0 0
  %1294 = vmatprep.mubr.bf16.mxu0 0
  %1295 = vmatmul.mubr.bf16.gmra.mxu0 %v1200
  %v1296 = vpop.f32.mrf.mxu0
  %v1297 = vadd.f32 %v1121, %v1296
  %v1298 = vpop.f32.mrf.mxu0
  %v1299 = vpop.f32.mrf.mxu0
  %v1300 = vadd.f32 %v1124, %v1299
  %v1301 = vpop.f32.mrf.mxu0
  %1302 = vmatprep.mubr.bf16.mxu0 0
  %1303 = vmatmul.mubr.bf16.gmra.mxu0 %v1201
  %v1304 = vpop.f32.mrf.mxu0
  %v1305 = vadd.f32 %v1129, %v1304
  %v1306 = vpop.f32.mrf.mxu0
  %v1307 = vpop.f32.mrf.mxu0
  %v1308 = vadd.f32 %v1132, %v1307
  %v1309 = vpop.f32.mrf.mxu0
  %1310 = vmatprep.mubr.bf16.mxu0 0
  %1311 = vmatmul.mubr.bf16.gmra.mxu0 %v1202
  %v1312 = vpop.f32.mrf.mxu0
  %v1313 = vadd.f32 %v1137, %v1312
  %v1314 = vpop.f32.mrf.mxu0
  %v1315 = vpop.f32.mrf.mxu0
  %v1316 = vadd.f32 %v1140, %v1315
  %v1317 = vpop.f32.mrf.mxu0
  %1318 = vmatprep.mubr.bf16.mxu0 0
  %1319 = vmatmul.mubr.bf16.gmra.mxu0 %v1203
  %v1320 = vpop.f32.mrf.mxu0
  %v1321 = vadd.f32 %v1145, %v1320
  %v1322 = vpop.f32.mrf.mxu0
  %v1323 = vpop.f32.mrf.mxu0
  %v1324 = vadd.f32 %v1148, %v1323
  %v1325 = vpop.f32.mrf.mxu0
  %1326 = vmatprep.mubr.bf16.mxu0 0
  %1327 = vmatmul.mubr.bf16.gmra.mxu0 %v1204
  %v1328 = vpop.f32.mrf.mxu0
  %v1329 = vadd.f32 %v1153, %v1328
  %v1330 = vpop.f32.mrf.mxu0
  %v1331 = vpop.f32.mrf.mxu0
  %v1332 = vadd.f32 %v1156, %v1331
  %v1333 = vpop.f32.mrf.mxu0
  %1334 = vmatprep.mubr.bf16.mxu0 0
  %1335 = vmatmul.mubr.bf16.gmra.mxu0 %v1205
  %v1336 = vpop.f32.mrf.mxu0
  %v1337 = vadd.f32 %v1161, %v1336
  %v1338 = vpop.f32.mrf.mxu0
  %v1339 = vpop.f32.mrf.mxu0
  %v1340 = vadd.f32 %v1164, %v1339
  %v1341 = vpop.f32.mrf.mxu0
  %1342 = vmatprep.mubr.bf16.mxu0 0
  %1343 = vmatmul.mubr.bf16.gmra.mxu0 %v1206
  %v1344 = vpop.f32.mrf.mxu0
  %v1345 = vadd.f32 %v1169, %v1344
  %v1346 = vpop.f32.mrf.mxu0
  %v1347 = vpop.f32.mrf.mxu0
  %v1348 = vpop.f32.mrf.mxu0
  %1349 = vdwg.mxu0
  %v1350 = vld [vmem:[%s650] sm:$0xf]
  %v1351 = vld [vmem:[%s650 + $0x4] sm:$0xf]
  %v1352 = vld [vmem:[%s650 + $0x8] sm:$0xf]
  %v1353 = vld [vmem:[%s650 + $0xc] sm:$0xf]
  %v1354 = vld [vmem:[%s650 + $0x10] sm:$0xf]
  %v1355 = vld [vmem:[%s650 + $0x14] sm:$0xf]
  %v1356 = vld [vmem:[%s650 + $0x18] sm:$0xf]
  %v1357 = vld [vmem:[%s650 + $0x1c] sm:$0xf]
  %v1358 = vld [vmem:[%s650 + $0x20] sm:$0xf]
  %v1359 = vld [vmem:[%s650 + $0x24] sm:$0xf]
  %v1360 = vld [vmem:[%s650 + $0x28] sm:$0xf]
  %v1361 = vld [vmem:[%s650 + $0x2c] sm:$0xf]
  %v1362 = vld [vmem:[%s650 + $0x30] sm:$0x1]
  %s1363 = scalar_lea.vmem %s1, 384
  %v1364 = vld [vmem:[%s1363] sm:$0xf]
  %v1365 = vld [vmem:[%s1363 + $0x4] sm:$0xf]
  %v1366 = vld [vmem:[%s1363 + $0x8] sm:$0xf]
  %v1367 = vld [vmem:[%s1363 + $0xc] sm:$0xf]
  %v1368 = vld [vmem:[%s1363 + $0x10] sm:$0xf]
  %v1369 = vld [vmem:[%s1363 + $0x14] sm:$0xf]
  %v1370 = vld [vmem:[%s1363 + $0x18] sm:$0xf]
  %v1371 = vld [vmem:[%s1363 + $0x1c] sm:$0xf]
  %v1372 = vld [vmem:[%s1363 + $0x20] sm:$0xf]
  %v1373 = vld [vmem:[%s1363 + $0x24] sm:$0xf]
  %v1374 = vld [vmem:[%s1363 + $0x28] sm:$0xf]
  %v1375 = vld [vmem:[%s1363 + $0x2c] sm:$0xf]
  %v1376 = vld [vmem:[%s1363 + $0x30] sm:$0xf]
  %v1377 = vld [vmem:[%s1363 + $0x34] sm:$0xf]
  %v1378 = vld [vmem:[%s1363 + $0x38] sm:$0xf]
  %v1379 = vld [vmem:[%s1363 + $0x3c] sm:$0xf]
  %v1393 = vunpack.c.l.b16 %v1350
  %v1394 = vunpack.c.l.b16 %v1351
  %v1395 = vunpack.c.l.b16 %v1352
  %v1396 = vunpack.c.l.b16 %v1353
  %v1397 = vunpack.c.l.b16 %v1354
  %v1398 = vunpack.c.l.b16 %v1355
  %v1399 = vunpack.c.l.b16 %v1356
  %v1400 = vunpack.c.l.b16 %v1357
  %v1401 = vunpack.c.l.b16 %v1358
  %v1402 = vunpack.c.l.b16 %v1359
  %v1403 = vunpack.c.l.b16 %v1360
  %v1404 = vunpack.c.l.b16 %v1361
  %v1405 = vunpack.c.l.b16 %v1362
  %v1406 = vpack.c.b16 %v1394, %v1393
  %v1407 = vpack.c.b16 %v1396, %v1395
  %v1408 = vpack.c.b16 %v1398, %v1397
  %v1409 = vpack.c.b16 %v1400, %v1399
  %v1410 = vpack.c.b16 %v1402, %v1401
  %v1411 = vpack.c.b16 %v1404, %v1403
  %v1412 = vpack.c.b16 %v1405, %v1405
  %v1436 = vunpack.c.l.b16 %v1364
  %v1437 = vunpack.c.l.b16 %v1365
  %v1438 = vunpack.c.l.b16 %v1366
  %v1439 = vunpack.c.l.b16 %v1367
  %v1440 = vunpack.c.l.b16 %v1368
  %v1441 = vunpack.c.l.b16 %v1369
  %v1442 = vunpack.c.l.b16 %v1370
  %v1443 = vunpack.c.l.b16 %v1371
  %v1444 = vunpack.c.l.b16 %v1372
  %v1445 = vunpack.c.l.b16 %v1373
  %v1446 = vunpack.c.l.b16 %v1374
  %v1447 = vunpack.c.l.b16 %v1375
  %v1448 = vunpack.c.l.b16 %v1376
  %v1449 = vunpack.c.l.b16 %v1377
  %v1450 = vunpack.c.l.b16 %v1378
  %v1451 = vunpack.c.l.b16 %v1379
  %v1452 = vpack.c.b16 %v1437, %v1436
  %v1453 = vpack.c.b16 %v1439, %v1438
  %v1454 = vpack.c.b16 %v1441, %v1440
  %v1455 = vpack.c.b16 %v1443, %v1442
  %v1456 = vpack.c.b16 %v1445, %v1444
  %v1457 = vpack.c.b16 %v1447, %v1446
  %v1458 = vpack.c.b16 %v1449, %v1448
  %v1459 = vpack.c.b16 %v1451, %v1450
  %1468 = vmatprep.subr.bf16.mxu0 0
  %1469 = vmatpush1.bf16.msra.mxu0 %v1459
  %1470 = vmatprep.subr.bf16.mxu0 0
  %1471 = vmatpush1.bf16.msra.mxu0 %v1458
  %1472 = vmatprep.subr.bf16.mxu0 0
  %1473 = vmatpush1.bf16.msra.mxu0 %v1457
  %1474 = vmatprep.subr.bf16.mxu0 0
  %1475 = vmatpush1.bf16.msra.mxu0 %v1456
  %1476 = vmatprep.subr.bf16.mxu0 0
  %1477 = vmatpush1.bf16.msra.mxu0 %v1455
  %1478 = vmatprep.subr.bf16.mxu0 0
  %1479 = vmatpush1.bf16.msra.mxu0 %v1454
  %1480 = vmatprep.subr.bf16.mxu0 0
  %1481 = vmatpush1.bf16.msra.mxu0 %v1453
  %1482 = vmatprep.subr.bf16.mxu0 0
  %1483 = vmatpush1.bf16.msra.mxu0 %v1452
  %1484 = vmatprep.subr.bf16.mxu0 0
  %1485 = vmatpush2.bf16.msra.mxu0 0
  %1486 = vmatprep.subr.bf16.mxu0 0
  %1487 = vmatpush2.bf16.msra.mxu0 0
  %1488 = vmatprep.subr.bf16.mxu0 0
  %1489 = vmatpush2.bf16.msra.mxu0 0
  %1490 = vmatprep.subr.bf16.mxu0 0
  %1491 = vmatpush2.bf16.msra.mxu0 0
  %1492 = vmatprep.subr.bf16.mxu0 0
  %1493 = vmatpush2.bf16.msra.mxu0 0
  %1494 = vmatprep.subr.bf16.mxu0 0
  %1495 = vmatpush2.bf16.msra.mxu0 0
  %1496 = vmatprep.subr.bf16.mxu0 0
  %1497 = vmatpush2.bf16.msra.mxu0 0
  %1498 = vmatprep.subr.bf16.mxu0 0
  %1499 = vmatpush2.bf16.msra.mxu0 0
  %1500 = vmatprep.mubr.bf16.mxu0 0
  %1501 = vmatmul.mubr.bf16.gmra.mxu0 %v1406
  %v1502 = vpop.f32.mrf.mxu0
  %v1503 = vadd.f32 0.0, %v1502
  %v1504 = vpop.f32.mrf.mxu0
  %v1505 = vpop.f32.mrf.mxu0
  %v1506 = vadd.f32 0.0, %v1505
  %v1507 = vpop.f32.mrf.mxu0
  %1508 = vmatprep.mubr.bf16.mxu0 0
  %1509 = vmatmul.mubr.bf16.gmra.mxu0 %v1407
  %v1510 = vpop.f32.mrf.mxu0
  %v1511 = vadd.f32 0.0, %v1510
  %v1512 = vpop.f32.mrf.mxu0
  %v1513 = vpop.f32.mrf.mxu0
  %v1514 = vadd.f32 0.0, %v1513
  %v1515 = vpop.f32.mrf.mxu0
  %1516 = vmatprep.mubr.bf16.mxu0 0
  %1517 = vmatmul.mubr.bf16.gmra.mxu0 %v1408
  %v1518 = vpop.f32.mrf.mxu0
  %v1519 = vadd.f32 0.0, %v1518
  %v1520 = vpop.f32.mrf.mxu0
  %v1521 = vpop.f32.mrf.mxu0
  %v1522 = vadd.f32 0.0, %v1521
  %v1523 = vpop.f32.mrf.mxu0
  %1524 = vmatprep.mubr.bf16.mxu0 0
  %1525 = vmatmul.mubr.bf16.gmra.mxu0 %v1409
  %v1526 = vpop.f32.mrf.mxu0
  %v1527 = vadd.f32 0.0, %v1526
  %v1528 = vpop.f32.mrf.mxu0
  %v1529 = vpop.f32.mrf.mxu0
  %v1530 = vadd.f32 0.0, %v1529
  %v1531 = vpop.f32.mrf.mxu0
  %1532 = vmatprep.mubr.bf16.mxu0 0
  %1533 = vmatmul.mubr.bf16.gmra.mxu0 %v1410
  %v1534 = vpop.f32.mrf.mxu0
  %v1535 = vadd.f32 0.0, %v1534
  %v1536 = vpop.f32.mrf.mxu0
  %v1537 = vpop.f32.mrf.mxu0
  %v1538 = vadd.f32 0.0, %v1537
  %v1539 = vpop.f32.mrf.mxu0
  %1540 = vmatprep.mubr.bf16.mxu0 0
  %1541 = vmatmul.mubr.bf16.gmra.mxu0 %v1411
  %v1542 = vpop.f32.mrf.mxu0
  %v1543 = vadd.f32 0.0, %v1542
  %v1544 = vpop.f32.mrf.mxu0
  %v1545 = vpop.f32.mrf.mxu0
  %v1546 = vadd.f32 0.0, %v1545
  %v1547 = vpop.f32.mrf.mxu0
  %1548 = vmatprep.mubr.bf16.mxu0 0
  %1549 = vmatmul.mubr.bf16.gmra.mxu0 %v1412
  %v1550 = vpop.f32.mrf.mxu0
  %v1551 = vadd.f32 0.0, %v1550
  %v1552 = vpop.f32.mrf.mxu0
  %v1553 = vpop.f32.mrf.mxu0
  %v1554 = vpop.f32.mrf.mxu0
  %1555 = vdwg.mxu0
  %v1556 = vadd.f32 %v1297, %v1503
  %v1557 = vadd.f32 %v1300, %v1506
  %v1558 = vadd.f32 %v1305, %v1511
  %v1559 = vadd.f32 %v1308, %v1514
  %v1560 = vadd.f32 %v1313, %v1519
  %v1561 = vadd.f32 %v1316, %v1522
  %v1562 = vadd.f32 %v1321, %v1527
  %v1563 = vadd.f32 %v1324, %v1530
  %v1564 = vadd.f32 %v1329, %v1535
  %v1565 = vadd.f32 %v1332, %v1538
  %v1566 = vadd.f32 %v1337, %v1543
  %v1567 = vadd.f32 %v1340, %v1546
  %v1568 = vadd.f32 %v1345, %v1551
  %s1569 = scalar_lea.vmem %s0, 260
  %v1570 = vld [vmem:[%s1569] sm:$0xf]
  %v1571 = vld [vmem:[%s1569 + $0x4] sm:$0xf]
  %v1572 = vld [vmem:[%s1569 + $0x8] sm:$0xf]
  %v1573 = vld [vmem:[%s1569 + $0xc] sm:$0xf]
  %v1574 = vld [vmem:[%s1569 + $0x10] sm:$0xf]
  %v1575 = vld [vmem:[%s1569 + $0x14] sm:$0xf]
  %v1576 = vld [vmem:[%s1569 + $0x18] sm:$0xf]
  %v1577 = vld [vmem:[%s1569 + $0x1c] sm:$0xf]
  %v1578 = vld [vmem:[%s1569 + $0x20] sm:$0xf]
  %v1579 = vld [vmem:[%s1569 + $0x24] sm:$0xf]
  %v1580 = vld [vmem:[%s1569 + $0x28] sm:$0xf]
  %v1581 = vld [vmem:[%s1569 + $0x2c] sm:$0xf]
  %v1582 = vld [vmem:[%s1569 + $0x30] sm:$0x1]
  %s1583 = scalar_lea.vmem %s1, 448
  %v1584 = vld [vmem:[%s1583] sm:$0xf]
  %v1585 = vld [vmem:[%s1583 + $0x4] sm:$0xf]
  %v1586 = vld [vmem:[%s1583 + $0x8] sm:$0xf]
  %v1587 = vld [vmem:[%s1583 + $0xc] sm:$0xf]
  %v1588 = vld [vmem:[%s1583 + $0x10] sm:$0xf]
  %v1589 = vld [vmem:[%s1583 + $0x14] sm:$0xf]
  %v1590 = vld [vmem:[%s1583 + $0x18] sm:$0xf]
  %v1591 = vld [vmem:[%s1583 + $0x1c] sm:$0xf]
  %v1592 = vld [vmem:[%s1583 + $0x20] sm:$0xf]
  %v1593 = vld [vmem:[%s1583 + $0x24] sm:$0xf]
  %v1594 = vld [vmem:[%s1583 + $0x28] sm:$0xf]
  %v1595 = vld [vmem:[%s1583 + $0x2c] sm:$0xf]
  %v1596 = vld [vmem:[%s1583 + $0x30] sm:$0xf]
  %v1597 = vld [vmem:[%s1583 + $0x34] sm:$0xf]
  %v1598 = vld [vmem:[%s1583 + $0x38] sm:$0xf]
  %v1599 = vld [vmem:[%s1583 + $0x3c] sm:$0xf]
  %v1613 = vunpack.c.l.b16 %v1570
  %v1614 = vunpack.c.l.b16 %v1571
  %v1615 = vunpack.c.l.b16 %v1572
  %v1616 = vunpack.c.l.b16 %v1573
  %v1617 = vunpack.c.l.b16 %v1574
  %v1618 = vunpack.c.l.b16 %v1575
  %v1619 = vunpack.c.l.b16 %v1576
  %v1620 = vunpack.c.l.b16 %v1577
  %v1621 = vunpack.c.l.b16 %v1578
  %v1622 = vunpack.c.l.b16 %v1579
  %v1623 = vunpack.c.l.b16 %v1580
  %v1624 = vunpack.c.l.b16 %v1581
  %v1625 = vunpack.c.l.b16 %v1582
  %v1626 = vpack.c.b16 %v1614, %v1613
  %v1627 = vpack.c.b16 %v1616, %v1615
  %v1628 = vpack.c.b16 %v1618, %v1617
  %v1629 = vpack.c.b16 %v1620, %v1619
  %v1630 = vpack.c.b16 %v1622, %v1621
  %v1631 = vpack.c.b16 %v1624, %v1623
  %v1632 = vpack.c.b16 %v1625, %v1625
  %v1656 = vunpack.c.l.b16 %v1584
  %v1657 = vunpack.c.l.b16 %v1585
  %v1658 = vunpack.c.l.b16 %v1586
  %v1659 = vunpack.c.l.b16 %v1587
  %v1660 = vunpack.c.l.b16 %v1588
  %v1661 = vunpack.c.l.b16 %v1589
  %v1662 = vunpack.c.l.b16 %v1590
  %v1663 = vunpack.c.l.b16 %v1591
  %v1664 = vunpack.c.l.b16 %v1592
  %v1665 = vunpack.c.l.b16 %v1593
  %v1666 = vunpack.c.l.b16 %v1594
  %v1667 = vunpack.c.l.b16 %v1595
  %v1668 = vunpack.c.l.b16 %v1596
  %v1669 = vunpack.c.l.b16 %v1597
  %v1670 = vunpack.c.l.b16 %v1598
  %v1671 = vunpack.c.l.b16 %v1599
  %v1672 = vpack.c.b16 %v1657, %v1656
  %v1673 = vpack.c.b16 %v1659, %v1658
  %v1674 = vpack.c.b16 %v1661, %v1660
  %v1675 = vpack.c.b16 %v1663, %v1662
  %v1676 = vpack.c.b16 %v1665, %v1664
  %v1677 = vpack.c.b16 %v1667, %v1666
  %v1678 = vpack.c.b16 %v1669, %v1668
  %v1679 = vpack.c.b16 %v1671, %v1670
  %1688 = vmatprep.subr.bf16.mxu0 0
  %1689 = vmatpush1.bf16.msra.mxu0 %v1679
  %1690 = vmatprep.subr.bf16.mxu0 0
  %1691 = vmatpush1.bf16.msra.mxu0 %v1678
  %1692 = vmatprep.subr.bf16.mxu0 0
  %1693 = vmatpush1.bf16.msra.mxu0 %v1677
  %1694 = vmatprep.subr.bf16.mxu0 0
  %1695 = vmatpush1.bf16.msra.mxu0 %v1676
  %1696 = vmatprep.subr.bf16.mxu0 0
  %1697 = vmatpush1.bf16.msra.mxu0 %v1675
  %1698 = vmatprep.subr.bf16.mxu0 0
  %1699 = vmatpush1.bf16.msra.mxu0 %v1674
  %1700 = vmatprep.subr.bf16.mxu0 0
  %1701 = vmatpush1.bf16.msra.mxu0 %v1673
  %1702 = vmatprep.subr.bf16.mxu0 0
  %1703 = vmatpush1.bf16.msra.mxu0 %v1672
  %1704 = vmatprep.subr.bf16.mxu0 0
  %1705 = vmatpush2.bf16.msra.mxu0 0
  %1706 = vmatprep.subr.bf16.mxu0 0
  %1707 = vmatpush2.bf16.msra.mxu0 0
  %1708 = vmatprep.subr.bf16.mxu0 0
  %1709 = vmatpush2.bf16.msra.mxu0 0
  %1710 = vmatprep.subr.bf16.mxu0 0
  %1711 = vmatpush2.bf16.msra.mxu0 0
  %1712 = vmatprep.subr.bf16.mxu0 0
  %1713 = vmatpush2.bf16.msra.mxu0 0
  %1714 = vmatprep.subr.bf16.mxu0 0
  %1715 = vmatpush2.bf16.msra.mxu0 0
  %1716 = vmatprep.subr.bf16.mxu0 0
  %1717 = vmatpush2.bf16.msra.mxu0 0
  %1718 = vmatprep.subr.bf16.mxu0 0
  %1719 = vmatpush2.bf16.msra.mxu0 0
  %1720 = vmatprep.mubr.bf16.mxu0 0
  %1721 = vmatmul.mubr.bf16.gmra.mxu0 %v1626
  %v1722 = vpop.f32.mrf.mxu0
  %v1723 = vadd.f32 0.0, %v1722
  %v1724 = vpop.f32.mrf.mxu0
  %v1725 = vpop.f32.mrf.mxu0
  %v1726 = vadd.f32 0.0, %v1725
  %v1727 = vpop.f32.mrf.mxu0
  %1728 = vmatprep.mubr.bf16.mxu0 0
  %1729 = vmatmul.mubr.bf16.gmra.mxu0 %v1627
  %v1730 = vpop.f32.mrf.mxu0
  %v1731 = vadd.f32 0.0, %v1730
  %v1732 = vpop.f32.mrf.mxu0
  %v1733 = vpop.f32.mrf.mxu0
  %v1734 = vadd.f32 0.0, %v1733
  %v1735 = vpop.f32.mrf.mxu0
  %1736 = vmatprep.mubr.bf16.mxu0 0
  %1737 = vmatmul.mubr.bf16.gmra.mxu0 %v1628
  %v1738 = vpop.f32.mrf.mxu0
  %v1739 = vadd.f32 0.0, %v1738
  %v1740 = vpop.f32.mrf.mxu0
  %v1741 = vpop.f32.mrf.mxu0
  %v1742 = vadd.f32 0.0, %v1741
  %v1743 = vpop.f32.mrf.mxu0
  %1744 = vmatprep.mubr.bf16.mxu0 0
  %1745 = vmatmul.mubr.bf16.gmra.mxu0 %v1629
  %v1746 = vpop.f32.mrf.mxu0
  %v1747 = vadd.f32 0.0, %v1746
  %v1748 = vpop.f32.mrf.mxu0
  %v1749 = vpop.f32.mrf.mxu0
  %v1750 = vadd.f32 0.0, %v1749
  %v1751 = vpop.f32.mrf.mxu0
  %1752 = vmatprep.mubr.bf16.mxu0 0
  %1753 = vmatmul.mubr.bf16.gmra.mxu0 %v1630
  %v1754 = vpop.f32.mrf.mxu0
  %v1755 = vadd.f32 0.0, %v1754
  %v1756 = vpop.f32.mrf.mxu0
  %v1757 = vpop.f32.mrf.mxu0
  %v1758 = vadd.f32 0.0, %v1757
  %v1759 = vpop.f32.mrf.mxu0
  %1760 = vmatprep.mubr.bf16.mxu0 0
  %1761 = vmatmul.mubr.bf16.gmra.mxu0 %v1631
  %v1762 = vpop.f32.mrf.mxu0
  %v1763 = vadd.f32 0.0, %v1762
  %v1764 = vpop.f32.mrf.mxu0
  %v1765 = vpop.f32.mrf.mxu0
  %v1766 = vadd.f32 0.0, %v1765
  %v1767 = vpop.f32.mrf.mxu0
  %1768 = vmatprep.mubr.bf16.mxu0 0
  %1769 = vmatmul.mubr.bf16.gmra.mxu0 %v1632
  %v1770 = vpop.f32.mrf.mxu0
  %v1771 = vadd.f32 0.0, %v1770
  %v1772 = vpop.f32.mrf.mxu0
  %v1773 = vpop.f32.mrf.mxu0
  %v1774 = vpop.f32.mrf.mxu0
  %1775 = vdwg.mxu0
  %v1776 = vadd.f32 %v1556, %v1723
  %v1777 = vadd.f32 %v1557, %v1726
  %v1778 = vadd.f32 %v1558, %v1731
  %v1779 = vadd.f32 %v1559, %v1734
  %v1780 = vadd.f32 %v1560, %v1739
  %v1781 = vadd.f32 %v1561, %v1742
  %v1782 = vadd.f32 %v1562, %v1747
  %v1783 = vadd.f32 %v1563, %v1750
  %v1784 = vadd.f32 %v1564, %v1755
  %v1785 = vadd.f32 %v1565, %v1758
  %v1786 = vadd.f32 %v1566, %v1763
  %v1787 = vadd.f32 %v1567, %v1766
  %v1788 = vadd.f32 %v1568, %v1771
  %s1789 = scalar_lea.vmem [#allocation2], 104
  %1790 = vst [vmem:[%s1789] sm:$0xff] %v1776
  %1791 = vst [vmem:[%s1789 + $0x8] sm:$0xff] %v1777
  %1792 = vst [vmem:[%s1789 + $0x10] sm:$0xff] %v1778
  %1793 = vst [vmem:[%s1789 + $0x18] sm:$0xff] %v1779
  %1794 = vst [vmem:[%s1789 + $0x20] sm:$0xff] %v1780
  %1795 = vst [vmem:[%s1789 + $0x28] sm:$0xff] %v1781
  %1796 = vst [vmem:[%s1789 + $0x30] sm:$0xff] %v1782
  %1797 = vst [vmem:[%s1789 + $0x38] sm:$0xff] %v1783
  %1798 = vst [vmem:[%s1789 + $0x40] sm:$0xff] %v1784
  %1799 = vst [vmem:[%s1789 + $0x48] sm:$0xff] %v1785
  %1800 = vst [vmem:[%s1789 + $0x50] sm:$0xff] %v1786
  %1801 = vst [vmem:[%s1789 + $0x58] sm:$0xff] %v1787
  %1802 = vst [vmem:[%s1789 + $0x60] sm:$0x3] %v1788
  %v1803 = vadd.f32 %v1776, %v1777
  %v1804 = vadd.f32 %v1803, %v1778
  %v1805 = vadd.f32 %v1804, %v1779
  %v1806 = vadd.f32 %v1805, %v1780
  %v1807 = vadd.f32 %v1806, %v1781
  %v1808 = vadd.f32 %v1807, %v1782
  %v1809 = vadd.f32 %v1808, %v1783
  %v1810 = vadd.f32 %v1809, %v1784
  %v1811 = vadd.f32 %v1810, %v1785
  %v1812 = vadd.f32 %v1811, %v1786
  %v1813 = vadd.f32 %v1812, %v1787
  %v1814 = vsel %vm894, %v1788, 0.0
  %v1815 = vadd.f32 %v1813, %v1814
  %v1816 = vrot.slane %v1815, 4
  %v1817 = vadd.f32 %v1815, %v1816
  %v1818 = vrot.slane %v1817, 2
  %v1819 = vadd.f32 %v1817, %v1818
  %v1820 = vrot.slane %v1819, 1
  %v1821 = vadd.f32 %v1819, %v1820
  %v1822 = vadd.f32 %v903, %v1821
  %v1823 = vmul.f32 %v1776, %v1776
  %v1824 = vmul.f32 %v1777, %v1777
  %v1825 = vmul.f32 %v1778, %v1778
  %v1826 = vmul.f32 %v1779, %v1779
  %v1827 = vmul.f32 %v1780, %v1780
  %v1828 = vmul.f32 %v1781, %v1781
  %v1829 = vmul.f32 %v1782, %v1782
  %v1830 = vmul.f32 %v1783, %v1783
  %v1831 = vmul.f32 %v1784, %v1784
  %v1832 = vmul.f32 %v1785, %v1785
  %v1833 = vmul.f32 %v1786, %v1786
  %v1834 = vmul.f32 %v1787, %v1787
  %v1835 = vmul.f32 %v1788, %v1788
  %v1836 = vadd.f32 %v1823, %v1824
  %v1837 = vadd.f32 %v1836, %v1825
  %v1838 = vadd.f32 %v1837, %v1826
  %v1839 = vadd.f32 %v1838, %v1827
  %v1840 = vadd.f32 %v1839, %v1828
  %v1841 = vadd.f32 %v1840, %v1829
  %v1842 = vadd.f32 %v1841, %v1830
  %v1843 = vadd.f32 %v1842, %v1831
  %v1844 = vadd.f32 %v1843, %v1832
  %v1845 = vadd.f32 %v1844, %v1833
  %v1846 = vadd.f32 %v1845, %v1834
  %v1847 = vsel %vm894, %v1835, 0.0
  %v1848 = vadd.f32 %v1846, %v1847
  %v1849 = vrot.slane %v1848, 4
  %v1850 = vadd.f32 %v1848, %v1849
  %v1851 = vrot.slane %v1850, 2
  %v1852 = vadd.f32 %v1850, %v1851
  %v1853 = vrot.slane %v1852, 1
  %v1854 = vadd.f32 %v1852, %v1853
  %v1855 = vadd.f32 %v936, %v1854
  %v1856 = vld [vmem:[%s430] sm:$0xf]
  %v1857 = vld [vmem:[%s430 + $0x4] sm:$0xf]
  %v1858 = vld [vmem:[%s430 + $0x8] sm:$0xf]
  %v1859 = vld [vmem:[%s430 + $0xc] sm:$0xf]
  %v1860 = vld [vmem:[%s430 + $0x10] sm:$0xf]
  %v1861 = vld [vmem:[%s430 + $0x14] sm:$0xf]
  %v1862 = vld [vmem:[%s430 + $0x18] sm:$0xf]
  %v1863 = vld [vmem:[%s430 + $0x1c] sm:$0xf]
  %v1864 = vld [vmem:[%s430 + $0x20] sm:$0xf]
  %v1865 = vld [vmem:[%s430 + $0x24] sm:$0xf]
  %v1866 = vld [vmem:[%s430 + $0x28] sm:$0xf]
  %v1867 = vld [vmem:[%s430 + $0x2c] sm:$0xf]
  %v1868 = vld [vmem:[%s430 + $0x30] sm:$0x1]
  %s1869 = scalar_lea.vmem %s1, 512
  %v1870 = vld [vmem:[%s1869] sm:$0xf]
  %v1871 = vld [vmem:[%s1869 + $0x4] sm:$0xf]
  %v1872 = vld [vmem:[%s1869 + $0x8] sm:$0xf]
  %v1873 = vld [vmem:[%s1869 + $0xc] sm:$0xf]
  %v1874 = vld [vmem:[%s1869 + $0x10] sm:$0xf]
  %v1875 = vld [vmem:[%s1869 + $0x14] sm:$0xf]
  %v1876 = vld [vmem:[%s1869 + $0x18] sm:$0xf]
  %v1877 = vld [vmem:[%s1869 + $0x1c] sm:$0xf]
  %v1878 = vld [vmem:[%s1869 + $0x20] sm:$0xf]
  %v1879 = vld [vmem:[%s1869 + $0x24] sm:$0xf]
  %v1880 = vld [vmem:[%s1869 + $0x28] sm:$0xf]
  %v1881 = vld [vmem:[%s1869 + $0x2c] sm:$0xf]
  %v1882 = vld [vmem:[%s1869 + $0x30] sm:$0xf]
  %v1883 = vld [vmem:[%s1869 + $0x34] sm:$0xf]
  %v1884 = vld [vmem:[%s1869 + $0x38] sm:$0xf]
  %v1885 = vld [vmem:[%s1869 + $0x3c] sm:$0xf]
  %v1886 = vld [vmem:[%s650] sm:$0xf]
  %v1887 = vld [vmem:[%s650 + $0x4] sm:$0xf]
  %v1888 = vld [vmem:[%s650 + $0x8] sm:$0xf]
  %v1889 = vld [vmem:[%s650 + $0xc] sm:$0xf]
  %v1890 = vld [vmem:[%s650 + $0x10] sm:$0xf]
  %v1891 = vld [vmem:[%s650 + $0x14] sm:$0xf]
  %v1892 = vld [vmem:[%s650 + $0x18] sm:$0xf]
  %v1893 = vld [vmem:[%s650 + $0x1c] sm:$0xf]
  %v1894 = vld [vmem:[%s650 + $0x20] sm:$0xf]
  %v1895 = vld [vmem:[%s650 + $0x24] sm:$0xf]
  %v1896 = vld [vmem:[%s650 + $0x28] sm:$0xf]
  %v1897 = vld [vmem:[%s650 + $0x2c] sm:$0xf]
  %v1898 = vld [vmem:[%s650 + $0x30] sm:$0x1]
  %s1899 = scalar_lea.vmem %s1, 576
  %v1900 = vld [vmem:[%s1899] sm:$0xf]
  %v1901 = vld [vmem:[%s1899 + $0x4] sm:$0xf]
  %v1902 = vld [vmem:[%s1899 + $0x8] sm:$0xf]
  %v1903 = vld [vmem:[%s1899 + $0xc] sm:$0xf]
  %v1904 = vld [vmem:[%s1899 + $0x10] sm:$0xf]
  %v1905 = vld [vmem:[%s1899 + $0x14] sm:$0xf]
  %v1906 = vld [vmem:[%s1899 + $0x18] sm:$0xf]
  %v1907 = vld [vmem:[%s1899 + $0x1c] sm:$0xf]
  %v1908 = vld [vmem:[%s1899 + $0x20] sm:$0xf]
  %v1909 = vld [vmem:[%s1899 + $0x24] sm:$0xf]
  %v1910 = vld [vmem:[%s1899 + $0x28] sm:$0xf]
  %v1911 = vld [vmem:[%s1899 + $0x2c] sm:$0xf]
  %v1912 = vld [vmem:[%s1899 + $0x30] sm:$0xf]
  %v1913 = vld [vmem:[%s1899 + $0x34] sm:$0xf]
  %v1914 = vld [vmem:[%s1899 + $0x38] sm:$0xf]
  %v1915 = vld [vmem:[%s1899 + $0x3c] sm:$0xf]
  %v1929 = vunpack.c.l.b16 %v1886
  %v1930 = vunpack.c.l.b16 %v1887
  %v1931 = vunpack.c.l.b16 %v1888
  %v1932 = vunpack.c.l.b16 %v1889
  %v1933 = vunpack.c.l.b16 %v1890
  %v1934 = vunpack.c.l.b16 %v1891
  %v1935 = vunpack.c.l.b16 %v1892
  %v1936 = vunpack.c.l.b16 %v1893
  %v1937 = vunpack.c.l.b16 %v1894
  %v1938 = vunpack.c.l.b16 %v1895
  %v1939 = vunpack.c.l.b16 %v1896
  %v1940 = vunpack.c.l.b16 %v1897
  %v1941 = vunpack.c.l.b16 %v1898
  %v1942 = vpack.c.b16 %v1930, %v1929
  %v1943 = vpack.c.b16 %v1932, %v1931
  %v1944 = vpack.c.b16 %v1934, %v1933
  %v1945 = vpack.c.b16 %v1936, %v1935
  %v1946 = vpack.c.b16 %v1938, %v1937
  %v1947 = vpack.c.b16 %v1940, %v1939
  %v1948 = vpack.c.b16 %v1941, %v1941
  %v1972 = vunpack.c.l.b16 %v1900
  %v1973 = vunpack.c.l.b16 %v1901
  %v1974 = vunpack.c.l.b16 %v1902
  %v1975 = vunpack.c.l.b16 %v1903
  %v1976 = vunpack.c.l.b16 %v1904
  %v1977 = vunpack.c.l.b16 %v1905
  %v1978 = vunpack.c.l.b16 %v1906
  %v1979 = vunpack.c.l.b16 %v1907
  %v1980 = vunpack.c.l.b16 %v1908
  %v1981 = vunpack.c.l.b16 %v1909
  %v1982 = vunpack.c.l.b16 %v1910
  %v1983 = vunpack.c.l.b16 %v1911
  %v1984 = vunpack.c.l.b16 %v1912
  %v1985 = vunpack.c.l.b16 %v1913
  %v1986 = vunpack.c.l.b16 %v1914
  %v1987 = vunpack.c.l.b16 %v1915
  %v1988 = vpack.c.b16 %v1973, %v1972
  %v1989 = vpack.c.b16 %v1975, %v1974
  %v1990 = vpack.c.b16 %v1977, %v1976
  %v1991 = vpack.c.b16 %v1979, %v1978
  %v1992 = vpack.c.b16 %v1981, %v1980
  %v1993 = vpack.c.b16 %v1983, %v1982
  %v1994 = vpack.c.b16 %v1985, %v1984
  %v1995 = vpack.c.b16 %v1987, %v1986
  %2004 = vmatprep.subr.bf16.mxu0 0
  %2005 = vmatpush1.bf16.msra.mxu0 %v1995
  %2006 = vmatprep.subr.bf16.mxu0 0
  %2007 = vmatpush1.bf16.msra.mxu0 %v1994
  %2008 = vmatprep.subr.bf16.mxu0 0
  %2009 = vmatpush1.bf16.msra.mxu0 %v1993
  %2010 = vmatprep.subr.bf16.mxu0 0
  %2011 = vmatpush1.bf16.msra.mxu0 %v1992
  %2012 = vmatprep.subr.bf16.mxu0 0
  %2013 = vmatpush1.bf16.msra.mxu0 %v1991
  %2014 = vmatprep.subr.bf16.mxu0 0
  %2015 = vmatpush1.bf16.msra.mxu0 %v1990
  %2016 = vmatprep.subr.bf16.mxu0 0
  %2017 = vmatpush1.bf16.msra.mxu0 %v1989
  %2018 = vmatprep.subr.bf16.mxu0 0
  %2019 = vmatpush1.bf16.msra.mxu0 %v1988
  %2020 = vmatprep.subr.bf16.mxu0 0
  %2021 = vmatpush2.bf16.msra.mxu0 0
  %2022 = vmatprep.subr.bf16.mxu0 0
  %2023 = vmatpush2.bf16.msra.mxu0 0
  %2024 = vmatprep.subr.bf16.mxu0 0
  %2025 = vmatpush2.bf16.msra.mxu0 0
  %2026 = vmatprep.subr.bf16.mxu0 0
  %2027 = vmatpush2.bf16.msra.mxu0 0
  %2028 = vmatprep.subr.bf16.mxu0 0
  %2029 = vmatpush2.bf16.msra.mxu0 0
  %2030 = vmatprep.subr.bf16.mxu0 0
  %2031 = vmatpush2.bf16.msra.mxu0 0
  %2032 = vmatprep.subr.bf16.mxu0 0
  %2033 = vmatpush2.bf16.msra.mxu0 0
  %2034 = vmatprep.subr.bf16.mxu0 0
  %2035 = vmatpush2.bf16.msra.mxu0 0
  %2036 = vmatprep.mubr.bf16.mxu0 0
  %2037 = vmatmul.mubr.bf16.gmra.mxu0 %v1942
  %v2038 = vpop.f32.mrf.mxu0
  %v2039 = vadd.f32 0.0, %v2038
  %v2040 = vpop.f32.mrf.mxu0
  %v2041 = vpop.f32.mrf.mxu0
  %v2042 = vadd.f32 0.0, %v2041
  %v2043 = vpop.f32.mrf.mxu0
  %2044 = vmatprep.mubr.bf16.mxu0 0
  %2045 = vmatmul.mubr.bf16.gmra.mxu0 %v1943
  %v2046 = vpop.f32.mrf.mxu0
  %v2047 = vadd.f32 0.0, %v2046
  %v2048 = vpop.f32.mrf.mxu0
  %v2049 = vpop.f32.mrf.mxu0
  %v2050 = vadd.f32 0.0, %v2049
  %v2051 = vpop.f32.mrf.mxu0
  %2052 = vmatprep.mubr.bf16.mxu0 0
  %2053 = vmatmul.mubr.bf16.gmra.mxu0 %v1944
  %v2054 = vpop.f32.mrf.mxu0
  %v2055 = vadd.f32 0.0, %v2054
  %v2056 = vpop.f32.mrf.mxu0
  %v2057 = vpop.f32.mrf.mxu0
  %v2058 = vadd.f32 0.0, %v2057
  %v2059 = vpop.f32.mrf.mxu0
  %2060 = vmatprep.mubr.bf16.mxu0 0
  %2061 = vmatmul.mubr.bf16.gmra.mxu0 %v1945
  %v2062 = vpop.f32.mrf.mxu0
  %v2063 = vadd.f32 0.0, %v2062
  %v2064 = vpop.f32.mrf.mxu0
  %v2065 = vpop.f32.mrf.mxu0
  %v2066 = vadd.f32 0.0, %v2065
  %v2067 = vpop.f32.mrf.mxu0
  %2068 = vmatprep.mubr.bf16.mxu0 0
  %2069 = vmatmul.mubr.bf16.gmra.mxu0 %v1946
  %v2070 = vpop.f32.mrf.mxu0
  %v2071 = vadd.f32 0.0, %v2070
  %v2072 = vpop.f32.mrf.mxu0
  %v2073 = vpop.f32.mrf.mxu0
  %v2074 = vadd.f32 0.0, %v2073
  %v2075 = vpop.f32.mrf.mxu0
  %2076 = vmatprep.mubr.bf16.mxu0 0
  %2077 = vmatmul.mubr.bf16.gmra.mxu0 %v1947
  %v2078 = vpop.f32.mrf.mxu0
  %v2079 = vadd.f32 0.0, %v2078
  %v2080 = vpop.f32.mrf.mxu0
  %v2081 = vpop.f32.mrf.mxu0
  %v2082 = vadd.f32 0.0, %v2081
  %v2083 = vpop.f32.mrf.mxu0
  %2084 = vmatprep.mubr.bf16.mxu0 0
  %2085 = vmatmul.mubr.bf16.gmra.mxu0 %v1948
  %v2086 = vpop.f32.mrf.mxu0
  %v2087 = vadd.f32 0.0, %v2086
  %v2088 = vpop.f32.mrf.mxu0
  %v2089 = vpop.f32.mrf.mxu0
  %v2090 = vpop.f32.mrf.mxu0
  %2091 = vdwg.mxu0
  %v2105 = vunpack.c.l.b16 %v1856
  %v2106 = vunpack.c.l.b16 %v1857
  %v2107 = vunpack.c.l.b16 %v1858
  %v2108 = vunpack.c.l.b16 %v1859
  %v2109 = vunpack.c.l.b16 %v1860
  %v2110 = vunpack.c.l.b16 %v1861
  %v2111 = vunpack.c.l.b16 %v1862
  %v2112 = vunpack.c.l.b16 %v1863
  %v2113 = vunpack.c.l.b16 %v1864
  %v2114 = vunpack.c.l.b16 %v1865
  %v2115 = vunpack.c.l.b16 %v1866
  %v2116 = vunpack.c.l.b16 %v1867
  %v2117 = vunpack.c.l.b16 %v1868
  %v2118 = vpack.c.b16 %v2106, %v2105
  %v2119 = vpack.c.b16 %v2108, %v2107
  %v2120 = vpack.c.b16 %v2110, %v2109
  %v2121 = vpack.c.b16 %v2112, %v2111
  %v2122 = vpack.c.b16 %v2114, %v2113
  %v2123 = vpack.c.b16 %v2116, %v2115
  %v2124 = vpack.c.b16 %v2117, %v2117
  %v2148 = vunpack.c.l.b16 %v1870
  %v2149 = vunpack.c.l.b16 %v1871
  %v2150 = vunpack.c.l.b16 %v1872
  %v2151 = vunpack.c.l.b16 %v1873
  %v2152 = vunpack.c.l.b16 %v1874
  %v2153 = vunpack.c.l.b16 %v1875
  %v2154 = vunpack.c.l.b16 %v1876
  %v2155 = vunpack.c.l.b16 %v1877
  %v2156 = vunpack.c.l.b16 %v1878
  %v2157 = vunpack.c.l.b16 %v1879
  %v2158 = vunpack.c.l.b16 %v1880
  %v2159 = vunpack.c.l.b16 %v1881
  %v2160 = vunpack.c.l.b16 %v1882
  %v2161 = vunpack.c.l.b16 %v1883
  %v2162 = vunpack.c.l.b16 %v1884
  %v2163 = vunpack.c.l.b16 %v1885
  %v2164 = vpack.c.b16 %v2149, %v2148
  %v2165 = vpack.c.b16 %v2151, %v2150
  %v2166 = vpack.c.b16 %v2153, %v2152
  %v2167 = vpack.c.b16 %v2155, %v2154
  %v2168 = vpack.c.b16 %v2157, %v2156
  %v2169 = vpack.c.b16 %v2159, %v2158
  %v2170 = vpack.c.b16 %v2161, %v2160
  %v2171 = vpack.c.b16 %v2163, %v2162
  %2180 = vmatprep.subr.bf16.mxu0 0
  %2181 = vmatpush1.bf16.msra.mxu0 %v2171
  %2182 = vmatprep.subr.bf16.mxu0 0
  %2183 = vmatpush1.bf16.msra.mxu0 %v2170
  %2184 = vmatprep.subr.bf16.mxu0 0
  %2185 = vmatpush1.bf16.msra.mxu0 %v2169
  %2186 = vmatprep.subr.bf16.mxu0 0
  %2187 = vmatpush1.bf16.msra.mxu0 %v2168
  %2188 = vmatprep.subr.bf16.mxu0 0
  %2189 = vmatpush1.bf16.msra.mxu0 %v2167
  %2190 = vmatprep.subr.bf16.mxu0 0
  %2191 = vmatpush1.bf16.msra.mxu0 %v2166
  %2192 = vmatprep.subr.bf16.mxu0 0
  %2193 = vmatpush1.bf16.msra.mxu0 %v2165
  %2194 = vmatprep.subr.bf16.mxu0 0
  %2195 = vmatpush1.bf16.msra.mxu0 %v2164
  %2196 = vmatprep.subr.bf16.mxu0 0
  %2197 = vmatpush2.bf16.msra.mxu0 0
  %2198 = vmatprep.subr.bf16.mxu0 0
  %2199 = vmatpush2.bf16.msra.mxu0 0
  %2200 = vmatprep.subr.bf16.mxu0 0
  %2201 = vmatpush2.bf16.msra.mxu0 0
  %2202 = vmatprep.subr.bf16.mxu0 0
  %2203 = vmatpush2.bf16.msra.mxu0 0
  %2204 = vmatprep.subr.bf16.mxu0 0
  %2205 = vmatpush2.bf16.msra.mxu0 0
  %2206 = vmatprep.subr.bf16.mxu0 0
  %2207 = vmatpush2.bf16.msra.mxu0 0
  %2208 = vmatprep.subr.bf16.mxu0 0
  %2209 = vmatpush2.bf16.msra.mxu0 0
  %2210 = vmatprep.subr.bf16.mxu0 0
  %2211 = vmatpush2.bf16.msra.mxu0 0
  %2212 = vmatprep.mubr.bf16.mxu0 0
  %2213 = vmatmul.mubr.bf16.gmra.mxu0 %v2118
  %v2214 = vpop.f32.mrf.mxu0
  %v2215 = vadd.f32 %v2039, %v2214
  %v2216 = vpop.f32.mrf.mxu0
  %v2217 = vpop.f32.mrf.mxu0
  %v2218 = vadd.f32 %v2042, %v2217
  %v2219 = vpop.f32.mrf.mxu0
  %2220 = vmatprep.mubr.bf16.mxu0 0
  %2221 = vmatmul.mubr.bf16.gmra.mxu0 %v2119
  %v2222 = vpop.f32.mrf.mxu0
  %v2223 = vadd.f32 %v2047, %v2222
  %v2224 = vpop.f32.mrf.mxu0
  %v2225 = vpop.f32.mrf.mxu0
  %v2226 = vadd.f32 %v2050, %v2225
  %v2227 = vpop.f32.mrf.mxu0
  %2228 = vmatprep.mubr.bf16.mxu0 0
  %2229 = vmatmul.mubr.bf16.gmra.mxu0 %v2120
  %v2230 = vpop.f32.mrf.mxu0
  %v2231 = vadd.f32 %v2055, %v2230
  %v2232 = vpop.f32.mrf.mxu0
  %v2233 = vpop.f32.mrf.mxu0
  %v2234 = vadd.f32 %v2058, %v2233
  %v2235 = vpop.f32.mrf.mxu0
  %2236 = vmatprep.mubr.bf16.mxu0 0
  %2237 = vmatmul.mubr.bf16.gmra.mxu0 %v2121
  %v2238 = vpop.f32.mrf.mxu0
  %v2239 = vadd.f32 %v2063, %v2238
  %v2240 = vpop.f32.mrf.mxu0
  %v2241 = vpop.f32.mrf.mxu0
  %v2242 = vadd.f32 %v2066, %v2241
  %v2243 = vpop.f32.mrf.mxu0
  %2244 = vmatprep.mubr.bf16.mxu0 0
  %2245 = vmatmul.mubr.bf16.gmra.mxu0 %v2122
  %v2246 = vpop.f32.mrf.mxu0
  %v2247 = vadd.f32 %v2071, %v2246
  %v2248 = vpop.f32.mrf.mxu0
  %v2249 = vpop.f32.mrf.mxu0
  %v2250 = vadd.f32 %v2074, %v2249
  %v2251 = vpop.f32.mrf.mxu0
  %2252 = vmatprep.mubr.bf16.mxu0 0
  %2253 = vmatmul.mubr.bf16.gmra.mxu0 %v2123
  %v2254 = vpop.f32.mrf.mxu0
  %v2255 = vadd.f32 %v2079, %v2254
  %v2256 = vpop.f32.mrf.mxu0
  %v2257 = vpop.f32.mrf.mxu0
  %v2258 = vadd.f32 %v2082, %v2257
  %v2259 = vpop.f32.mrf.mxu0
  %2260 = vmatprep.mubr.bf16.mxu0 0
  %2261 = vmatmul.mubr.bf16.gmra.mxu0 %v2124
  %v2262 = vpop.f32.mrf.mxu0
  %v2263 = vadd.f32 %v2087, %v2262
  %v2264 = vpop.f32.mrf.mxu0
  %v2265 = vpop.f32.mrf.mxu0
  %v2266 = vpop.f32.mrf.mxu0
  %2267 = vdwg.mxu0
  %s2268 = scalar_lea.vmem %s0, 312
  %v2269 = vld [vmem:[%s2268] sm:$0xf]
  %v2270 = vld [vmem:[%s2268 + $0x4] sm:$0xf]
  %v2271 = vld [vmem:[%s2268 + $0x8] sm:$0xf]
  %v2272 = vld [vmem:[%s2268 + $0xc] sm:$0xf]
  %v2273 = vld [vmem:[%s2268 + $0x10] sm:$0xf]
  %v2274 = vld [vmem:[%s2268 + $0x14] sm:$0xf]
  %v2275 = vld [vmem:[%s2268 + $0x18] sm:$0xf]
  %v2276 = vld [vmem:[%s2268 + $0x1c] sm:$0xf]
  %v2277 = vld [vmem:[%s2268 + $0x20] sm:$0xf]
  %v2278 = vld [vmem:[%s2268 + $0x24] sm:$0xf]
  %v2279 = vld [vmem:[%s2268 + $0x28] sm:$0xf]
  %v2280 = vld [vmem:[%s2268 + $0x2c] sm:$0xf]
  %v2281 = vld [vmem:[%s2268 + $0x30] sm:$0x1]
  %s2282 = scalar_lea.vmem %s1, 640
  %v2283 = vld [vmem:[%s2282] sm:$0xf]
  %v2284 = vld [vmem:[%s2282 + $0x4] sm:$0xf]
  %v2285 = vld [vmem:[%s2282 + $0x8] sm:$0xf]
  %v2286 = vld [vmem:[%s2282 + $0xc] sm:$0xf]
  %v2287 = vld [vmem:[%s2282 + $0x10] sm:$0xf]
  %v2288 = vld [vmem:[%s2282 + $0x14] sm:$0xf]
  %v2289 = vld [vmem:[%s2282 + $0x18] sm:$0xf]
  %v2290 = vld [vmem:[%s2282 + $0x1c] sm:$0xf]
  %v2291 = vld [vmem:[%s2282 + $0x20] sm:$0xf]
  %v2292 = vld [vmem:[%s2282 + $0x24] sm:$0xf]
  %v2293 = vld [vmem:[%s2282 + $0x28] sm:$0xf]
  %v2294 = vld [vmem:[%s2282 + $0x2c] sm:$0xf]
  %v2295 = vld [vmem:[%s2282 + $0x30] sm:$0xf]
  %v2296 = vld [vmem:[%s2282 + $0x34] sm:$0xf]
  %v2297 = vld [vmem:[%s2282 + $0x38] sm:$0xf]
  %v2298 = vld [vmem:[%s2282 + $0x3c] sm:$0xf]
  %v2312 = vunpack.c.l.b16 %v2269
  %v2313 = vunpack.c.l.b16 %v2270
  %v2314 = vunpack.c.l.b16 %v2271
  %v2315 = vunpack.c.l.b16 %v2272
  %v2316 = vunpack.c.l.b16 %v2273
  %v2317 = vunpack.c.l.b16 %v2274
  %v2318 = vunpack.c.l.b16 %v2275
  %v2319 = vunpack.c.l.b16 %v2276
  %v2320 = vunpack.c.l.b16 %v2277
  %v2321 = vunpack.c.l.b16 %v2278
  %v2322 = vunpack.c.l.b16 %v2279
  %v2323 = vunpack.c.l.b16 %v2280
  %v2324 = vunpack.c.l.b16 %v2281
  %v2325 = vpack.c.b16 %v2313, %v2312
  %v2326 = vpack.c.b16 %v2315, %v2314
  %v2327 = vpack.c.b16 %v2317, %v2316
  %v2328 = vpack.c.b16 %v2319, %v2318
  %v2329 = vpack.c.b16 %v2321, %v2320
  %v2330 = vpack.c.b16 %v2323, %v2322
  %v2331 = vpack.c.b16 %v2324, %v2324
  %v2355 = vunpack.c.l.b16 %v2283
  %v2356 = vunpack.c.l.b16 %v2284
  %v2357 = vunpack.c.l.b16 %v2285
  %v2358 = vunpack.c.l.b16 %v2286
  %v2359 = vunpack.c.l.b16 %v2287
  %v2360 = vunpack.c.l.b16 %v2288
  %v2361 = vunpack.c.l.b16 %v2289
  %v2362 = vunpack.c.l.b16 %v2290
  %v2363 = vunpack.c.l.b16 %v2291
  %v2364 = vunpack.c.l.b16 %v2292
  %v2365 = vunpack.c.l.b16 %v2293
  %v2366 = vunpack.c.l.b16 %v2294
  %v2367 = vunpack.c.l.b16 %v2295
  %v2368 = vunpack.c.l.b16 %v2296
  %v2369 = vunpack.c.l.b16 %v2297
  %v2370 = vunpack.c.l.b16 %v2298
  %v2371 = vpack.c.b16 %v2356, %v2355
  %v2372 = vpack.c.b16 %v2358, %v2357
  %v2373 = vpack.c.b16 %v2360, %v2359
  %v2374 = vpack.c.b16 %v2362, %v2361
  %v2375 = vpack.c.b16 %v2364, %v2363
  %v2376 = vpack.c.b16 %v2366, %v2365
  %v2377 = vpack.c.b16 %v2368, %v2367
  %v2378 = vpack.c.b16 %v2370, %v2369
  %2387 = vmatprep.subr.bf16.mxu0 0
  %2388 = vmatpush1.bf16.msra.mxu0 %v2378
  %2389 = vmatprep.subr.bf16.mxu0 0
  %2390 = vmatpush1.bf16.msra.mxu0 %v2377
  %2391 = vmatprep.subr.bf16.mxu0 0
  %2392 = vmatpush1.bf16.msra.mxu0 %v2376
  %2393 = vmatprep.subr.bf16.mxu0 0
  %2394 = vmatpush1.bf16.msra.mxu0 %v2375
  %2395 = vmatprep.subr.bf16.mxu0 0
  %2396 = vmatpush1.bf16.msra.mxu0 %v2374
  %2397 = vmatprep.subr.bf16.mxu0 0
  %2398 = vmatpush1.bf16.msra.mxu0 %v2373
  %2399 = vmatprep.subr.bf16.mxu0 0
  %2400 = vmatpush1.bf16.msra.mxu0 %v2372
  %2401 = vmatprep.subr.bf16.mxu0 0
  %2402 = vmatpush1.bf16.msra.mxu0 %v2371
  %2403 = vmatprep.subr.bf16.mxu0 0
  %2404 = vmatpush2.bf16.msra.mxu0 0
  %2405 = vmatprep.subr.bf16.mxu0 0
  %2406 = vmatpush2.bf16.msra.mxu0 0
  %2407 = vmatprep.subr.bf16.mxu0 0
  %2408 = vmatpush2.bf16.msra.mxu0 0
  %2409 = vmatprep.subr.bf16.mxu0 0
  %2410 = vmatpush2.bf16.msra.mxu0 0
  %2411 = vmatprep.subr.bf16.mxu0 0
  %2412 = vmatpush2.bf16.msra.mxu0 0
  %2413 = vmatprep.subr.bf16.mxu0 0
  %2414 = vmatpush2.bf16.msra.mxu0 0
  %2415 = vmatprep.subr.bf16.mxu0 0
  %2416 = vmatpush2.bf16.msra.mxu0 0
  %2417 = vmatprep.subr.bf16.mxu0 0
  %2418 = vmatpush2.bf16.msra.mxu0 0
  %2419 = vmatprep.mubr.bf16.mxu0 0
  %2420 = vmatmul.mubr.bf16.gmra.mxu0 %v2325
  %v2421 = vpop.f32.mrf.mxu0
  %v2422 = vadd.f32 0.0, %v2421
  %v2423 = vpop.f32.mrf.mxu0
  %v2424 = vpop.f32.mrf.mxu0
  %v2425 = vadd.f32 0.0, %v2424
  %v2426 = vpop.f32.mrf.mxu0
  %2427 = vmatprep.mubr.bf16.mxu0 0
  %2428 = vmatmul.mubr.bf16.gmra.mxu0 %v2326
  %v2429 = vpop.f32.mrf.mxu0
  %v2430 = vadd.f32 0.0, %v2429
  %v2431 = vpop.f32.mrf.mxu0
  %v2432 = vpop.f32.mrf.mxu0
  %v2433 = vadd.f32 0.0, %v2432
  %v2434 = vpop.f32.mrf.mxu0
  %2435 = vmatprep.mubr.bf16.mxu0 0
  %2436 = vmatmul.mubr.bf16.gmra.mxu0 %v2327
  %v2437 = vpop.f32.mrf.mxu0
  %v2438 = vadd.f32 0.0, %v2437
  %v2439 = vpop.f32.mrf.mxu0
  %v2440 = vpop.f32.mrf.mxu0
  %v2441 = vadd.f32 0.0, %v2440
  %v2442 = vpop.f32.mrf.mxu0
  %2443 = vmatprep.mubr.bf16.mxu0 0
  %2444 = vmatmul.mubr.bf16.gmra.mxu0 %v2328
  %v2445 = vpop.f32.mrf.mxu0
  %v2446 = vadd.f32 0.0, %v2445
  %v2447 = vpop.f32.mrf.mxu0
  %v2448 = vpop.f32.mrf.mxu0
  %v2449 = vadd.f32 0.0, %v2448
  %v2450 = vpop.f32.mrf.mxu0
  %2451 = vmatprep.mubr.bf16.mxu0 0
  %2452 = vmatmul.mubr.bf16.gmra.mxu0 %v2329
  %v2453 = vpop.f32.mrf.mxu0
  %v2454 = vadd.f32 0.0, %v2453
  %v2455 = vpop.f32.mrf.mxu0
  %v2456 = vpop.f32.mrf.mxu0
  %v2457 = vadd.f32 0.0, %v2456
  %v2458 = vpop.f32.mrf.mxu0
  %2459 = vmatprep.mubr.bf16.mxu0 0
  %2460 = vmatmul.mubr.bf16.gmra.mxu0 %v2330
  %v2461 = vpop.f32.mrf.mxu0
  %v2462 = vadd.f32 0.0, %v2461
  %v2463 = vpop.f32.mrf.mxu0
  %v2464 = vpop.f32.mrf.mxu0
  %v2465 = vadd.f32 0.0, %v2464
  %v2466 = vpop.f32.mrf.mxu0
  %2467 = vmatprep.mubr.bf16.mxu0 0
  %2468 = vmatmul.mubr.bf16.gmra.mxu0 %v2331
  %v2469 = vpop.f32.mrf.mxu0
  %v2470 = vadd.f32 0.0, %v2469
  %v2471 = vpop.f32.mrf.mxu0
  %v2472 = vpop.f32.mrf.mxu0
  %v2473 = vpop.f32.mrf.mxu0
  %2474 = vdwg.mxu0
  %v2475 = vadd.f32 %v2215, %v2422
  %v2476 = vadd.f32 %v2218, %v2425
  %v2477 = vadd.f32 %v2223, %v2430
  %v2478 = vadd.f32 %v2226, %v2433
  %v2479 = vadd.f32 %v2231, %v2438
  %v2480 = vadd.f32 %v2234, %v2441
  %v2481 = vadd.f32 %v2239, %v2446
  %v2482 = vadd.f32 %v2242, %v2449
  %v2483 = vadd.f32 %v2247, %v2454
  %v2484 = vadd.f32 %v2250, %v2457
  %v2485 = vadd.f32 %v2255, %v2462
  %v2486 = vadd.f32 %v2258, %v2465
  %v2487 = vadd.f32 %v2263, %v2470
  %s2488 = scalar_lea.vmem %s0, 364
  %v2489 = vld [vmem:[%s2488] sm:$0xf]
  %v2490 = vld [vmem:[%s2488 + $0x4] sm:$0xf]
  %v2491 = vld [vmem:[%s2488 + $0x8] sm:$0xf]
  %v2492 = vld [vmem:[%s2488 + $0xc] sm:$0xf]
  %v2493 = vld [vmem:[%s2488 + $0x10] sm:$0xf]
  %v2494 = vld [vmem:[%s2488 + $0x14] sm:$0xf]
  %v2495 = vld [vmem:[%s2488 + $0x18] sm:$0xf]
  %v2496 = vld [vmem:[%s2488 + $0x1c] sm:$0xf]
  %v2497 = vld [vmem:[%s2488 + $0x20] sm:$0xf]
  %v2498 = vld [vmem:[%s2488 + $0x24] sm:$0xf]
  %v2499 = vld [vmem:[%s2488 + $0x28] sm:$0xf]
  %v2500 = vld [vmem:[%s2488 + $0x2c] sm:$0xf]
  %v2501 = vld [vmem:[%s2488 + $0x30] sm:$0x1]
  %s2502 = scalar_lea.vmem %s1, 704
  %v2503 = vld [vmem:[%s2502] sm:$0xf]
  %v2504 = vld [vmem:[%s2502 + $0x4] sm:$0xf]
  %v2505 = vld [vmem:[%s2502 + $0x8] sm:$0xf]
  %v2506 = vld [vmem:[%s2502 + $0xc] sm:$0xf]
  %v2507 = vld [vmem:[%s2502 + $0x10] sm:$0xf]
  %v2508 = vld [vmem:[%s2502 + $0x14] sm:$0xf]
  %v2509 = vld [vmem:[%s2502 + $0x18] sm:$0xf]
  %v2510 = vld [vmem:[%s2502 + $0x1c] sm:$0xf]
  %v2511 = vld [vmem:[%s2502 + $0x20] sm:$0xf]
  %v2512 = vld [vmem:[%s2502 + $0x24] sm:$0xf]
  %v2513 = vld [vmem:[%s2502 + $0x28] sm:$0xf]
  %v2514 = vld [vmem:[%s2502 + $0x2c] sm:$0xf]
  %v2515 = vld [vmem:[%s2502 + $0x30] sm:$0xf]
  %v2516 = vld [vmem:[%s2502 + $0x34] sm:$0xf]
  %v2517 = vld [vmem:[%s2502 + $0x38] sm:$0xf]
  %v2518 = vld [vmem:[%s2502 + $0x3c] sm:$0xf]
  %v2532 = vunpack.c.l.b16 %v2489
  %v2533 = vunpack.c.l.b16 %v2490
  %v2534 = vunpack.c.l.b16 %v2491
  %v2535 = vunpack.c.l.b16 %v2492
  %v2536 = vunpack.c.l.b16 %v2493
  %v2537 = vunpack.c.l.b16 %v2494
  %v2538 = vunpack.c.l.b16 %v2495
  %v2539 = vunpack.c.l.b16 %v2496
  %v2540 = vunpack.c.l.b16 %v2497
  %v2541 = vunpack.c.l.b16 %v2498
  %v2542 = vunpack.c.l.b16 %v2499
  %v2543 = vunpack.c.l.b16 %v2500
  %v2544 = vunpack.c.l.b16 %v2501
  %v2545 = vpack.c.b16 %v2533, %v2532
  %v2546 = vpack.c.b16 %v2535, %v2534
  %v2547 = vpack.c.b16 %v2537, %v2536
  %v2548 = vpack.c.b16 %v2539, %v2538
  %v2549 = vpack.c.b16 %v2541, %v2540
  %v2550 = vpack.c.b16 %v2543, %v2542
  %v2551 = vpack.c.b16 %v2544, %v2544
  %v2575 = vunpack.c.l.b16 %v2503
  %v2576 = vunpack.c.l.b16 %v2504
  %v2577 = vunpack.c.l.b16 %v2505
  %v2578 = vunpack.c.l.b16 %v2506
  %v2579 = vunpack.c.l.b16 %v2507
  %v2580 = vunpack.c.l.b16 %v2508
  %v2581 = vunpack.c.l.b16 %v2509
  %v2582 = vunpack.c.l.b16 %v2510
  %v2583 = vunpack.c.l.b16 %v2511
  %v2584 = vunpack.c.l.b16 %v2512
  %v2585 = vunpack.c.l.b16 %v2513
  %v2586 = vunpack.c.l.b16 %v2514
  %v2587 = vunpack.c.l.b16 %v2515
  %v2588 = vunpack.c.l.b16 %v2516
  %v2589 = vunpack.c.l.b16 %v2517
  %v2590 = vunpack.c.l.b16 %v2518
  %v2591 = vpack.c.b16 %v2576, %v2575
  %v2592 = vpack.c.b16 %v2578, %v2577
  %v2593 = vpack.c.b16 %v2580, %v2579
  %v2594 = vpack.c.b16 %v2582, %v2581
  %v2595 = vpack.c.b16 %v2584, %v2583
  %v2596 = vpack.c.b16 %v2586, %v2585
  %v2597 = vpack.c.b16 %v2588, %v2587
  %v2598 = vpack.c.b16 %v2590, %v2589
  %2607 = vmatprep.subr.bf16.mxu0 0
  %2608 = vmatpush1.bf16.msra.mxu0 %v2598
  %2609 = vmatprep.subr.bf16.mxu0 0
  %2610 = vmatpush1.bf16.msra.mxu0 %v2597
  %2611 = vmatprep.subr.bf16.mxu0 0
  %2612 = vmatpush1.bf16.msra.mxu0 %v2596
  %2613 = vmatprep.subr.bf16.mxu0 0
  %2614 = vmatpush1.bf16.msra.mxu0 %v2595
  %2615 = vmatprep.subr.bf16.mxu0 0
  %2616 = vmatpush1.bf16.msra.mxu0 %v2594
  %2617 = vmatprep.subr.bf16.mxu0 0
  %2618 = vmatpush1.bf16.msra.mxu0 %v2593
  %2619 = vmatprep.subr.bf16.mxu0 0
  %2620 = vmatpush1.bf16.msra.mxu0 %v2592
  %2621 = vmatprep.subr.bf16.mxu0 0
  %2622 = vmatpush1.bf16.msra.mxu0 %v2591
  %2623 = vmatprep.subr.bf16.mxu0 0
  %2624 = vmatpush2.bf16.msra.mxu0 0
  %2625 = vmatprep.subr.bf16.mxu0 0
  %2626 = vmatpush2.bf16.msra.mxu0 0
  %2627 = vmatprep.subr.bf16.mxu0 0
  %2628 = vmatpush2.bf16.msra.mxu0 0
  %2629 = vmatprep.subr.bf16.mxu0 0
  %2630 = vmatpush2.bf16.msra.mxu0 0
  %2631 = vmatprep.subr.bf16.mxu0 0
  %2632 = vmatpush2.bf16.msra.mxu0 0
  %2633 = vmatprep.subr.bf16.mxu0 0
  %2634 = vmatpush2.bf16.msra.mxu0 0
  %2635 = vmatprep.subr.bf16.mxu0 0
  %2636 = vmatpush2.bf16.msra.mxu0 0
  %2637 = vmatprep.subr.bf16.mxu0 0
  %2638 = vmatpush2.bf16.msra.mxu0 0
  %2639 = vmatprep.mubr.bf16.mxu0 0
  %2640 = vmatmul.mubr.bf16.gmra.mxu0 %v2545
  %v2641 = vpop.f32.mrf.mxu0
  %v2642 = vadd.f32 0.0, %v2641
  %v2643 = vpop.f32.mrf.mxu0
  %v2644 = vpop.f32.mrf.mxu0
  %v2645 = vadd.f32 0.0, %v2644
  %v2646 = vpop.f32.mrf.mxu0
  %2647 = vmatprep.mubr.bf16.mxu0 0
  %2648 = vmatmul.mubr.bf16.gmra.mxu0 %v2546
  %v2649 = vpop.f32.mrf.mxu0
  %v2650 = vadd.f32 0.0, %v2649
  %v2651 = vpop.f32.mrf.mxu0
  %v2652 = vpop.f32.mrf.mxu0
  %v2653 = vadd.f32 0.0, %v2652
  %v2654 = vpop.f32.mrf.mxu0
  %2655 = vmatprep.mubr.bf16.mxu0 0
  %2656 = vmatmul.mubr.bf16.gmra.mxu0 %v2547
  %v2657 = vpop.f32.mrf.mxu0
  %v2658 = vadd.f32 0.0, %v2657
  %v2659 = vpop.f32.mrf.mxu0
  %v2660 = vpop.f32.mrf.mxu0
  %v2661 = vadd.f32 0.0, %v2660
  %v2662 = vpop.f32.mrf.mxu0
  %2663 = vmatprep.mubr.bf16.mxu0 0
  %2664 = vmatmul.mubr.bf16.gmra.mxu0 %v2548
  %v2665 = vpop.f32.mrf.mxu0
  %v2666 = vadd.f32 0.0, %v2665
  %v2667 = vpop.f32.mrf.mxu0
  %v2668 = vpop.f32.mrf.mxu0
  %v2669 = vadd.f32 0.0, %v2668
  %v2670 = vpop.f32.mrf.mxu0
  %2671 = vmatprep.mubr.bf16.mxu0 0
  %2672 = vmatmul.mubr.bf16.gmra.mxu0 %v2549
  %v2673 = vpop.f32.mrf.mxu0
  %v2674 = vadd.f32 0.0, %v2673
  %v2675 = vpop.f32.mrf.mxu0
  %v2676 = vpop.f32.mrf.mxu0
  %v2677 = vadd.f32 0.0, %v2676
  %v2678 = vpop.f32.mrf.mxu0
  %2679 = vmatprep.mubr.bf16.mxu0 0
  %2680 = vmatmul.mubr.bf16.gmra.mxu0 %v2550
  %v2681 = vpop.f32.mrf.mxu0
  %v2682 = vadd.f32 0.0, %v2681
  %v2683 = vpop.f32.mrf.mxu0
  %v2684 = vpop.f32.mrf.mxu0
  %v2685 = vadd.f32 0.0, %v2684
  %v2686 = vpop.f32.mrf.mxu0
  %2687 = vmatprep.mubr.bf16.mxu0 0
  %2688 = vmatmul.mubr.bf16.gmra.mxu0 %v2551
  %v2689 = vpop.f32.mrf.mxu0
  %v2690 = vadd.f32 0.0, %v2689
  %v2691 = vpop.f32.mrf.mxu0
  %v2692 = vpop.f32.mrf.mxu0
  %v2693 = vpop.f32.mrf.mxu0
  %2694 = vdwg.mxu0
  %v2695 = vadd.f32 %v2475, %v2642
  %v2696 = vadd.f32 %v2476, %v2645
  %v2697 = vadd.f32 %v2477, %v2650
  %v2698 = vadd.f32 %v2478, %v2653
  %v2699 = vadd.f32 %v2479, %v2658
  %v2700 = vadd.f32 %v2480, %v2661
  %v2701 = vadd.f32 %v2481, %v2666
  %v2702 = vadd.f32 %v2482, %v2669
  %v2703 = vadd.f32 %v2483, %v2674
  %v2704 = vadd.f32 %v2484, %v2677
  %v2705 = vadd.f32 %v2485, %v2682
  %v2706 = vadd.f32 %v2486, %v2685
  %v2707 = vadd.f32 %v2487, %v2690
  %s2708 = scalar_lea.vmem [#allocation2], 208
  %2709 = vst [vmem:[%s2708] sm:$0xff] %v2695
  %2710 = vst [vmem:[%s2708 + $0x8] sm:$0xff] %v2696
  %2711 = vst [vmem:[%s2708 + $0x10] sm:$0xff] %v2697
  %2712 = vst [vmem:[%s2708 + $0x18] sm:$0xff] %v2698
  %2713 = vst [vmem:[%s2708 + $0x20] sm:$0xff] %v2699
  %2714 = vst [vmem:[%s2708 + $0x28] sm:$0xff] %v2700
  %2715 = vst [vmem:[%s2708 + $0x30] sm:$0xff] %v2701
  %2716 = vst [vmem:[%s2708 + $0x38] sm:$0xff] %v2702
  %2717 = vst [vmem:[%s2708 + $0x40] sm:$0xff] %v2703
  %2718 = vst [vmem:[%s2708 + $0x48] sm:$0xff] %v2704
  %2719 = vst [vmem:[%s2708 + $0x50] sm:$0xff] %v2705
  %2720 = vst [vmem:[%s2708 + $0x58] sm:$0xff] %v2706
  %2721 = vst [vmem:[%s2708 + $0x60] sm:$0x3] %v2707
  %v2722 = vadd.f32 %v2695, %v2696
  %v2723 = vadd.f32 %v2722, %v2697
  %v2724 = vadd.f32 %v2723, %v2698
  %v2725 = vadd.f32 %v2724, %v2699
  %v2726 = vadd.f32 %v2725, %v2700
  %v2727 = vadd.f32 %v2726, %v2701
  %v2728 = vadd.f32 %v2727, %v2702
  %v2729 = vadd.f32 %v2728, %v2703
  %v2730 = vadd.f32 %v2729, %v2704
  %v2731 = vadd.f32 %v2730, %v2705
  %v2732 = vadd.f32 %v2731, %v2706
  %v2733 = vsel %vm894, %v2707, 0.0
  %v2734 = vadd.f32 %v2732, %v2733
  %v2735 = vrot.slane %v2734, 4
  %v2736 = vadd.f32 %v2734, %v2735
  %v2737 = vrot.slane %v2736, 2
  %v2738 = vadd.f32 %v2736, %v2737
  %v2739 = vrot.slane %v2738, 1
  %v2740 = vadd.f32 %v2738, %v2739
  %v2741 = vadd.f32 %v1822, %v2740
  %v2742 = vmul.f32 %v2695, %v2695
  %v2743 = vmul.f32 %v2696, %v2696
  %v2744 = vmul.f32 %v2697, %v2697
  %v2745 = vmul.f32 %v2698, %v2698
  %v2746 = vmul.f32 %v2699, %v2699
  %v2747 = vmul.f32 %v2700, %v2700
  %v2748 = vmul.f32 %v2701, %v2701
  %v2749 = vmul.f32 %v2702, %v2702
  %v2750 = vmul.f32 %v2703, %v2703
  %v2751 = vmul.f32 %v2704, %v2704
  %v2752 = vmul.f32 %v2705, %v2705
  %v2753 = vmul.f32 %v2706, %v2706
  %v2754 = vmul.f32 %v2707, %v2707
  %v2755 = vadd.f32 %v2742, %v2743
  %v2756 = vadd.f32 %v2755, %v2744
  %v2757 = vadd.f32 %v2756, %v2745
  %v2758 = vadd.f32 %v2757, %v2746
  %v2759 = vadd.f32 %v2758, %v2747
  %v2760 = vadd.f32 %v2759, %v2748
  %v2761 = vadd.f32 %v2760, %v2749
  %v2762 = vadd.f32 %v2761, %v2750
  %v2763 = vadd.f32 %v2762, %v2751
  %v2764 = vadd.f32 %v2763, %v2752
  %v2765 = vadd.f32 %v2764, %v2753
  %v2766 = vsel %vm894, %v2754, 0.0
  %v2767 = vadd.f32 %v2765, %v2766
  %v2768 = vrot.slane %v2767, 4
  %v2769 = vadd.f32 %v2767, %v2768
  %v2770 = vrot.slane %v2769, 2
  %v2771 = vadd.f32 %v2769, %v2770
  %v2772 = vrot.slane %v2771, 1
  %v2773 = vadd.f32 %v2771, %v2772
  %v2774 = vadd.f32 %v1855, %v2773
  %v2775 = vld [vmem:[%s650] sm:$0xf]
  %v2776 = vld [vmem:[%s650 + $0x4] sm:$0xf]
  %v2777 = vld [vmem:[%s650 + $0x8] sm:$0xf]
  %v2778 = vld [vmem:[%s650 + $0xc] sm:$0xf]
  %v2779 = vld [vmem:[%s650 + $0x10] sm:$0xf]
  %v2780 = vld [vmem:[%s650 + $0x14] sm:$0xf]
  %v2781 = vld [vmem:[%s650 + $0x18] sm:$0xf]
  %v2782 = vld [vmem:[%s650 + $0x1c] sm:$0xf]
  %v2783 = vld [vmem:[%s650 + $0x20] sm:$0xf]
  %v2784 = vld [vmem:[%s650 + $0x24] sm:$0xf]
  %v2785 = vld [vmem:[%s650 + $0x28] sm:$0xf]
  %v2786 = vld [vmem:[%s650 + $0x2c] sm:$0xf]
  %v2787 = vld [vmem:[%s650 + $0x30] sm:$0x1]
  %s2788 = scalar_lea.vmem %s1, 768
  %v2789 = vld [vmem:[%s2788] sm:$0xf]
  %v2790 = vld [vmem:[%s2788 + $0x4] sm:$0xf]
  %v2791 = vld [vmem:[%s2788 + $0x8] sm:$0xf]
  %v2792 = vld [vmem:[%s2788 + $0xc] sm:$0xf]
  %v2793 = vld [vmem:[%s2788 + $0x10] sm:$0xf]
  %v2794 = vld [vmem:[%s2788 + $0x14] sm:$0xf]
  %v2795 = vld [vmem:[%s2788 + $0x18] sm:$0xf]
  %v2796 = vld [vmem:[%s2788 + $0x1c] sm:$0xf]
  %v2797 = vld [vmem:[%s2788 + $0x20] sm:$0xf]
  %v2798 = vld [vmem:[%s2788 + $0x24] sm:$0xf]
  %v2799 = vld [vmem:[%s2788 + $0x28] sm:$0xf]
  %v2800 = vld [vmem:[%s2788 + $0x2c] sm:$0xf]
  %v2801 = vld [vmem:[%s2788 + $0x30] sm:$0xf]
  %v2802 = vld [vmem:[%s2788 + $0x34] sm:$0xf]
  %v2803 = vld [vmem:[%s2788 + $0x38] sm:$0xf]
  %v2804 = vld [vmem:[%s2788 + $0x3c] sm:$0xf]
  %v2805 = vld [vmem:[%s1569] sm:$0xf]
  %v2806 = vld [vmem:[%s1569 + $0x4] sm:$0xf]
  %v2807 = vld [vmem:[%s1569 + $0x8] sm:$0xf]
  %v2808 = vld [vmem:[%s1569 + $0xc] sm:$0xf]
  %v2809 = vld [vmem:[%s1569 + $0x10] sm:$0xf]
  %v2810 = vld [vmem:[%s1569 + $0x14] sm:$0xf]
  %v2811 = vld [vmem:[%s1569 + $0x18] sm:$0xf]
  %v2812 = vld [vmem:[%s1569 + $0x1c] sm:$0xf]
  %v2813 = vld [vmem:[%s1569 + $0x20] sm:$0xf]
  %v2814 = vld [vmem:[%s1569 + $0x24] sm:$0xf]
  %v2815 = vld [vmem:[%s1569 + $0x28] sm:$0xf]
  %v2816 = vld [vmem:[%s1569 + $0x2c] sm:$0xf]
  %v2817 = vld [vmem:[%s1569 + $0x30] sm:$0x1]
  %s2818 = scalar_lea.vmem %s1, 832
  %v2819 = vld [vmem:[%s2818] sm:$0xf]
  %v2820 = vld [vmem:[%s2818 + $0x4] sm:$0xf]
  %v2821 = vld [vmem:[%s2818 + $0x8] sm:$0xf]
  %v2822 = vld [vmem:[%s2818 + $0xc] sm:$0xf]
  %v2823 = vld [vmem:[%s2818 + $0x10] sm:$0xf]
  %v2824 = vld [vmem:[%s2818 + $0x14] sm:$0xf]
  %v2825 = vld [vmem:[%s2818 + $0x18] sm:$0xf]
  %v2826 = vld [vmem:[%s2818 + $0x1c] sm:$0xf]
  %v2827 = vld [vmem:[%s2818 + $0x20] sm:$0xf]
  %v2828 = vld [vmem:[%s2818 + $0x24] sm:$0xf]
  %v2829 = vld [vmem:[%s2818 + $0x28] sm:$0xf]
  %v2830 = vld [vmem:[%s2818 + $0x2c] sm:$0xf]
  %v2831 = vld [vmem:[%s2818 + $0x30] sm:$0xf]
  %v2832 = vld [vmem:[%s2818 + $0x34] sm:$0xf]
  %v2833 = vld [vmem:[%s2818 + $0x38] sm:$0xf]
  %v2834 = vld [vmem:[%s2818 + $0x3c] sm:$0xf]
  %v2848 = vunpack.c.l.b16 %v2805
  %v2849 = vunpack.c.l.b16 %v2806
  %v2850 = vunpack.c.l.b16 %v2807
  %v2851 = vunpack.c.l.b16 %v2808
  %v2852 = vunpack.c.l.b16 %v2809
  %v2853 = vunpack.c.l.b16 %v2810
  %v2854 = vunpack.c.l.b16 %v2811
  %v2855 = vunpack.c.l.b16 %v2812
  %v2856 = vunpack.c.l.b16 %v2813
  %v2857 = vunpack.c.l.b16 %v2814
  %v2858 = vunpack.c.l.b16 %v2815
  %v2859 = vunpack.c.l.b16 %v2816
  %v2860 = vunpack.c.l.b16 %v2817
  %v2861 = vpack.c.b16 %v2849, %v2848
  %v2862 = vpack.c.b16 %v2851, %v2850
  %v2863 = vpack.c.b16 %v2853, %v2852
  %v2864 = vpack.c.b16 %v2855, %v2854
  %v2865 = vpack.c.b16 %v2857, %v2856
  %v2866 = vpack.c.b16 %v2859, %v2858
  %v2867 = vpack.c.b16 %v2860, %v2860
  %v2891 = vunpack.c.l.b16 %v2819
  %v2892 = vunpack.c.l.b16 %v2820
  %v2893 = vunpack.c.l.b16 %v2821
  %v2894 = vunpack.c.l.b16 %v2822
  %v2895 = vunpack.c.l.b16 %v2823
  %v2896 = vunpack.c.l.b16 %v2824
  %v2897 = vunpack.c.l.b16 %v2825
  %v2898 = vunpack.c.l.b16 %v2826
  %v2899 = vunpack.c.l.b16 %v2827
  %v2900 = vunpack.c.l.b16 %v2828
  %v2901 = vunpack.c.l.b16 %v2829
  %v2902 = vunpack.c.l.b16 %v2830
  %v2903 = vunpack.c.l.b16 %v2831
  %v2904 = vunpack.c.l.b16 %v2832
  %v2905 = vunpack.c.l.b16 %v2833
  %v2906 = vunpack.c.l.b16 %v2834
  %v2907 = vpack.c.b16 %v2892, %v2891
  %v2908 = vpack.c.b16 %v2894, %v2893
  %v2909 = vpack.c.b16 %v2896, %v2895
  %v2910 = vpack.c.b16 %v2898, %v2897
  %v2911 = vpack.c.b16 %v2900, %v2899
  %v2912 = vpack.c.b16 %v2902, %v2901
  %v2913 = vpack.c.b16 %v2904, %v2903
  %v2914 = vpack.c.b16 %v2906, %v2905
  %2923 = vmatprep.subr.bf16.mxu0 0
  %2924 = vmatpush1.bf16.msra.mxu0 %v2914
  %2925 = vmatprep.subr.bf16.mxu0 0
  %2926 = vmatpush1.bf16.msra.mxu0 %v2913
  %2927 = vmatprep.subr.bf16.mxu0 0
  %2928 = vmatpush1.bf16.msra.mxu0 %v2912
  %2929 = vmatprep.subr.bf16.mxu0 0
  %2930 = vmatpush1.bf16.msra.mxu0 %v2911
  %2931 = vmatprep.subr.bf16.mxu0 0
  %2932 = vmatpush1.bf16.msra.mxu0 %v2910
  %2933 = vmatprep.subr.bf16.mxu0 0
  %2934 = vmatpush1.bf16.msra.mxu0 %v2909
  %2935 = vmatprep.subr.bf16.mxu0 0
  %2936 = vmatpush1.bf16.msra.mxu0 %v2908
  %2937 = vmatprep.subr.bf16.mxu0 0
  %2938 = vmatpush1.bf16.msra.mxu0 %v2907
  %2939 = vmatprep.subr.bf16.mxu0 0
  %2940 = vmatpush2.bf16.msra.mxu0 0
  %2941 = vmatprep.subr.bf16.mxu0 0
  %2942 = vmatpush2.bf16.msra.mxu0 0
  %2943 = vmatprep.subr.bf16.mxu0 0
  %2944 = vmatpush2.bf16.msra.mxu0 0
  %2945 = vmatprep.subr.bf16.mxu0 0
  %2946 = vmatpush2.bf16.msra.mxu0 0
  %2947 = vmatprep.subr.bf16.mxu0 0
  %2948 = vmatpush2.bf16.msra.mxu0 0
  %2949 = vmatprep.subr.bf16.mxu0 0
  %2950 = vmatpush2.bf16.msra.mxu0 0
  %2951 = vmatprep.subr.bf16.mxu0 0
  %2952 = vmatpush2.bf16.msra.mxu0 0
  %2953 = vmatprep.subr.bf16.mxu0 0
  %2954 = vmatpush2.bf16.msra.mxu0 0
  %2955 = vmatprep.mubr.bf16.mxu0 0
  %2956 = vmatmul.mubr.bf16.gmra.mxu0 %v2861
  %v2957 = vpop.f32.mrf.mxu0
  %v2958 = vadd.f32 0.0, %v2957
  %v2959 = vpop.f32.mrf.mxu0
  %v2960 = vpop.f32.mrf.mxu0
  %v2961 = vadd.f32 0.0, %v2960
  %v2962 = vpop.f32.mrf.mxu0
  %2963 = vmatprep.mubr.bf16.mxu0 0
  %2964 = vmatmul.mubr.bf16.gmra.mxu0 %v2862
  %v2965 = vpop.f32.mrf.mxu0
  %v2966 = vadd.f32 0.0, %v2965
  %v2967 = vpop.f32.mrf.mxu0
  %v2968 = vpop.f32.mrf.mxu0
  %v2969 = vadd.f32 0.0, %v2968
  %v2970 = vpop.f32.mrf.mxu0
  %2971 = vmatprep.mubr.bf16.mxu0 0
  %2972 = vmatmul.mubr.bf16.gmra.mxu0 %v2863
  %v2973 = vpop.f32.mrf.mxu0
  %v2974 = vadd.f32 0.0, %v2973
  %v2975 = vpop.f32.mrf.mxu0
  %v2976 = vpop.f32.mrf.mxu0
  %v2977 = vadd.f32 0.0, %v2976
  %v2978 = vpop.f32.mrf.mxu0
  %2979 = vmatprep.mubr.bf16.mxu0 0
  %2980 = vmatmul.mubr.bf16.gmra.mxu0 %v2864
  %v2981 = vpop.f32.mrf.mxu0
  %v2982 = vadd.f32 0.0, %v2981
  %v2983 = vpop.f32.mrf.mxu0
  %v2984 = vpop.f32.mrf.mxu0
  %v2985 = vadd.f32 0.0, %v2984
  %v2986 = vpop.f32.mrf.mxu0
  %2987 = vmatprep.mubr.bf16.mxu0 0
  %2988 = vmatmul.mubr.bf16.gmra.mxu0 %v2865
  %v2989 = vpop.f32.mrf.mxu0
  %v2990 = vadd.f32 0.0, %v2989
  %v2991 = vpop.f32.mrf.mxu0
  %v2992 = vpop.f32.mrf.mxu0
  %v2993 = vadd.f32 0.0, %v2992
  %v2994 = vpop.f32.mrf.mxu0
  %2995 = vmatprep.mubr.bf16.mxu0 0
  %2996 = vmatmul.mubr.bf16.gmra.mxu0 %v2866
  %v2997 = vpop.f32.mrf.mxu0
  %v2998 = vadd.f32 0.0, %v2997
  %v2999 = vpop.f32.mrf.mxu0
  %v3000 = vpop.f32.mrf.mxu0
  %v3001 = vadd.f32 0.0, %v3000
  %v3002 = vpop.f32.mrf.mxu0
  %3003 = vmatprep.mubr.bf16.mxu0 0
  %3004 = vmatmul.mubr.bf16.gmra.mxu0 %v2867
  %v3005 = vpop.f32.mrf.mxu0
  %v3006 = vadd.f32 0.0, %v3005
  %v3007 = vpop.f32.mrf.mxu0
  %v3008 = vpop.f32.mrf.mxu0
  %v3009 = vpop.f32.mrf.mxu0
  %3010 = vdwg.mxu0
  %v3024 = vunpack.c.l.b16 %v2775
  %v3025 = vunpack.c.l.b16 %v2776
  %v3026 = vunpack.c.l.b16 %v2777
  %v3027 = vunpack.c.l.b16 %v2778
  %v3028 = vunpack.c.l.b16 %v2779
  %v3029 = vunpack.c.l.b16 %v2780
  %v3030 = vunpack.c.l.b16 %v2781
  %v3031 = vunpack.c.l.b16 %v2782
  %v3032 = vunpack.c.l.b16 %v2783
  %v3033 = vunpack.c.l.b16 %v2784
  %v3034 = vunpack.c.l.b16 %v2785
  %v3035 = vunpack.c.l.b16 %v2786
  %v3036 = vunpack.c.l.b16 %v2787
  %v3037 = vpack.c.b16 %v3025, %v3024
  %v3038 = vpack.c.b16 %v3027, %v3026
  %v3039 = vpack.c.b16 %v3029, %v3028
  %v3040 = vpack.c.b16 %v3031, %v3030
  %v3041 = vpack.c.b16 %v3033, %v3032
  %v3042 = vpack.c.b16 %v3035, %v3034
  %v3043 = vpack.c.b16 %v3036, %v3036
  %v3067 = vunpack.c.l.b16 %v2789
  %v3068 = vunpack.c.l.b16 %v2790
  %v3069 = vunpack.c.l.b16 %v2791
  %v3070 = vunpack.c.l.b16 %v2792
  %v3071 = vunpack.c.l.b16 %v2793
  %v3072 = vunpack.c.l.b16 %v2794
  %v3073 = vunpack.c.l.b16 %v2795
  %v3074 = vunpack.c.l.b16 %v2796
  %v3075 = vunpack.c.l.b16 %v2797
  %v3076 = vunpack.c.l.b16 %v2798
  %v3077 = vunpack.c.l.b16 %v2799
  %v3078 = vunpack.c.l.b16 %v2800
  %v3079 = vunpack.c.l.b16 %v2801
  %v3080 = vunpack.c.l.b16 %v2802
  %v3081 = vunpack.c.l.b16 %v2803
  %v3082 = vunpack.c.l.b16 %v2804
  %v3083 = vpack.c.b16 %v3068, %v3067
  %v3084 = vpack.c.b16 %v3070, %v3069
  %v3085 = vpack.c.b16 %v3072, %v3071
  %v3086 = vpack.c.b16 %v3074, %v3073
  %v3087 = vpack.c.b16 %v3076, %v3075
  %v3088 = vpack.c.b16 %v3078, %v3077
  %v3089 = vpack.c.b16 %v3080, %v3079
  %v3090 = vpack.c.b16 %v3082, %v3081
  %3099 = vmatprep.subr.bf16.mxu0 0
  %3100 = vmatpush1.bf16.msra.mxu0 %v3090
  %3101 = vmatprep.subr.bf16.mxu0 0
  %3102 = vmatpush1.bf16.msra.mxu0 %v3089
  %3103 = vmatprep.subr.bf16.mxu0 0
  %3104 = vmatpush1.bf16.msra.mxu0 %v3088
  %3105 = vmatprep.subr.bf16.mxu0 0
  %3106 = vmatpush1.bf16.msra.mxu0 %v3087
  %3107 = vmatprep.subr.bf16.mxu0 0
  %3108 = vmatpush1.bf16.msra.mxu0 %v3086
  %3109 = vmatprep.subr.bf16.mxu0 0
  %3110 = vmatpush1.bf16.msra.mxu0 %v3085
  %3111 = vmatprep.subr.bf16.mxu0 0
  %3112 = vmatpush1.bf16.msra.mxu0 %v3084
  %3113 = vmatprep.subr.bf16.mxu0 0
  %3114 = vmatpush1.bf16.msra.mxu0 %v3083
  %3115 = vmatprep.subr.bf16.mxu0 0
  %3116 = vmatpush2.bf16.msra.mxu0 0
  %3117 = vmatprep.subr.bf16.mxu0 0
  %3118 = vmatpush2.bf16.msra.mxu0 0
  %3119 = vmatprep.subr.bf16.mxu0 0
  %3120 = vmatpush2.bf16.msra.mxu0 0
  %3121 = vmatprep.subr.bf16.mxu0 0
  %3122 = vmatpush2.bf16.msra.mxu0 0
  %3123 = vmatprep.subr.bf16.mxu0 0
  %3124 = vmatpush2.bf16.msra.mxu0 0
  %3125 = vmatprep.subr.bf16.mxu0 0
  %3126 = vmatpush2.bf16.msra.mxu0 0
  %3127 = vmatprep.subr.bf16.mxu0 0
  %3128 = vmatpush2.bf16.msra.mxu0 0
  %3129 = vmatprep.subr.bf16.mxu0 0
  %3130 = vmatpush2.bf16.msra.mxu0 0
  %3131 = vmatprep.mubr.bf16.mxu0 0
  %3132 = vmatmul.mubr.bf16.gmra.mxu0 %v3037
  %v3133 = vpop.f32.mrf.mxu0
  %v3134 = vadd.f32 %v2958, %v3133
  %v3135 = vpop.f32.mrf.mxu0
  %v3136 = vpop.f32.mrf.mxu0
  %v3137 = vadd.f32 %v2961, %v3136
  %v3138 = vpop.f32.mrf.mxu0
  %3139 = vmatprep.mubr.bf16.mxu0 0
  %3140 = vmatmul.mubr.bf16.gmra.mxu0 %v3038
  %v3141 = vpop.f32.mrf.mxu0
  %v3142 = vadd.f32 %v2966, %v3141
  %v3143 = vpop.f32.mrf.mxu0
  %v3144 = vpop.f32.mrf.mxu0
  %v3145 = vadd.f32 %v2969, %v3144
  %v3146 = vpop.f32.mrf.mxu0
  %3147 = vmatprep.mubr.bf16.mxu0 0
  %3148 = vmatmul.mubr.bf16.gmra.mxu0 %v3039
  %v3149 = vpop.f32.mrf.mxu0
  %v3150 = vadd.f32 %v2974, %v3149
  %v3151 = vpop.f32.mrf.mxu0
  %v3152 = vpop.f32.mrf.mxu0
  %v3153 = vadd.f32 %v2977, %v3152
  %v3154 = vpop.f32.mrf.mxu0
  %3155 = vmatprep.mubr.bf16.mxu0 0
  %3156 = vmatmul.mubr.bf16.gmra.mxu0 %v3040
  %v3157 = vpop.f32.mrf.mxu0
  %v3158 = vadd.f32 %v2982, %v3157
  %v3159 = vpop.f32.mrf.mxu0
  %v3160 = vpop.f32.mrf.mxu0
  %v3161 = vadd.f32 %v2985, %v3160
  %v3162 = vpop.f32.mrf.mxu0
  %3163 = vmatprep.mubr.bf16.mxu0 0
  %3164 = vmatmul.mubr.bf16.gmra.mxu0 %v3041
  %v3165 = vpop.f32.mrf.mxu0
  %v3166 = vadd.f32 %v2990, %v3165
  %v3167 = vpop.f32.mrf.mxu0
  %v3168 = vpop.f32.mrf.mxu0
  %v3169 = vadd.f32 %v2993, %v3168
  %v3170 = vpop.f32.mrf.mxu0
  %3171 = vmatprep.mubr.bf16.mxu0 0
  %3172 = vmatmul.mubr.bf16.gmra.mxu0 %v3042
  %v3173 = vpop.f32.mrf.mxu0
  %v3174 = vadd.f32 %v2998, %v3173
  %v3175 = vpop.f32.mrf.mxu0
  %v3176 = vpop.f32.mrf.mxu0
  %v3177 = vadd.f32 %v3001, %v3176
  %v3178 = vpop.f32.mrf.mxu0
  %3179 = vmatprep.mubr.bf16.mxu0 0
  %3180 = vmatmul.mubr.bf16.gmra.mxu0 %v3043
  %v3181 = vpop.f32.mrf.mxu0
  %v3182 = vadd.f32 %v3006, %v3181
  %v3183 = vpop.f32.mrf.mxu0
  %v3184 = vpop.f32.mrf.mxu0
  %v3185 = vpop.f32.mrf.mxu0
  %3186 = vdwg.mxu0
  %v3187 = vld [vmem:[%s2488] sm:$0xf]
  %v3188 = vld [vmem:[%s2488 + $0x4] sm:$0xf]
  %v3189 = vld [vmem:[%s2488 + $0x8] sm:$0xf]
  %v3190 = vld [vmem:[%s2488 + $0xc] sm:$0xf]
  %v3191 = vld [vmem:[%s2488 + $0x10] sm:$0xf]
  %v3192 = vld [vmem:[%s2488 + $0x14] sm:$0xf]
  %v3193 = vld [vmem:[%s2488 + $0x18] sm:$0xf]
  %v3194 = vld [vmem:[%s2488 + $0x1c] sm:$0xf]
  %v3195 = vld [vmem:[%s2488 + $0x20] sm:$0xf]
  %v3196 = vld [vmem:[%s2488 + $0x24] sm:$0xf]
  %v3197 = vld [vmem:[%s2488 + $0x28] sm:$0xf]
  %v3198 = vld [vmem:[%s2488 + $0x2c] sm:$0xf]
  %v3199 = vld [vmem:[%s2488 + $0x30] sm:$0x1]
  %s3200 = scalar_lea.vmem %s1, 896
  %v3201 = vld [vmem:[%s3200] sm:$0xf]
  %v3202 = vld [vmem:[%s3200 + $0x4] sm:$0xf]
  %v3203 = vld [vmem:[%s3200 + $0x8] sm:$0xf]
  %v3204 = vld [vmem:[%s3200 + $0xc] sm:$0xf]
  %v3205 = vld [vmem:[%s3200 + $0x10] sm:$0xf]
  %v3206 = vld [vmem:[%s3200 + $0x14] sm:$0xf]
  %v3207 = vld [vmem:[%s3200 + $0x18] sm:$0xf]
  %v3208 = vld [vmem:[%s3200 + $0x1c] sm:$0xf]
  %v3209 = vld [vmem:[%s3200 + $0x20] sm:$0xf]
  %v3210 = vld [vmem:[%s3200 + $0x24] sm:$0xf]
  %v3211 = vld [vmem:[%s3200 + $0x28] sm:$0xf]
  %v3212 = vld [vmem:[%s3200 + $0x2c] sm:$0xf]
  %v3213 = vld [vmem:[%s3200 + $0x30] sm:$0xf]
  %v3214 = vld [vmem:[%s3200 + $0x34] sm:$0xf]
  %v3215 = vld [vmem:[%s3200 + $0x38] sm:$0xf]
  %v3216 = vld [vmem:[%s3200 + $0x3c] sm:$0xf]
  %v3230 = vunpack.c.l.b16 %v3187
  %v3231 = vunpack.c.l.b16 %v3188
  %v3232 = vunpack.c.l.b16 %v3189
  %v3233 = vunpack.c.l.b16 %v3190
  %v3234 = vunpack.c.l.b16 %v3191
  %v3235 = vunpack.c.l.b16 %v3192
  %v3236 = vunpack.c.l.b16 %v3193
  %v3237 = vunpack.c.l.b16 %v3194
  %v3238 = vunpack.c.l.b16 %v3195
  %v3239 = vunpack.c.l.b16 %v3196
  %v3240 = vunpack.c.l.b16 %v3197
  %v3241 = vunpack.c.l.b16 %v3198
  %v3242 = vunpack.c.l.b16 %v3199
  %v3243 = vpack.c.b16 %v3231, %v3230
  %v3244 = vpack.c.b16 %v3233, %v3232
  %v3245 = vpack.c.b16 %v3235, %v3234
  %v3246 = vpack.c.b16 %v3237, %v3236
  %v3247 = vpack.c.b16 %v3239, %v3238
  %v3248 = vpack.c.b16 %v3241, %v3240
  %v3249 = vpack.c.b16 %v3242, %v3242
  %v3273 = vunpack.c.l.b16 %v3201
  %v3274 = vunpack.c.l.b16 %v3202
  %v3275 = vunpack.c.l.b16 %v3203
  %v3276 = vunpack.c.l.b16 %v3204
  %v3277 = vunpack.c.l.b16 %v3205
  %v3278 = vunpack.c.l.b16 %v3206
  %v3279 = vunpack.c.l.b16 %v3207
  %v3280 = vunpack.c.l.b16 %v3208
  %v3281 = vunpack.c.l.b16 %v3209
  %v3282 = vunpack.c.l.b16 %v3210
  %v3283 = vunpack.c.l.b16 %v3211
  %v3284 = vunpack.c.l.b16 %v3212
  %v3285 = vunpack.c.l.b16 %v3213
  %v3286 = vunpack.c.l.b16 %v3214
  %v3287 = vunpack.c.l.b16 %v3215
  %v3288 = vunpack.c.l.b16 %v3216
  %v3289 = vpack.c.b16 %v3274, %v3273
  %v3290 = vpack.c.b16 %v3276, %v3275
  %v3291 = vpack.c.b16 %v3278, %v3277
  %v3292 = vpack.c.b16 %v3280, %v3279
  %v3293 = vpack.c.b16 %v3282, %v3281
  %v3294 = vpack.c.b16 %v3284, %v3283
  %v3295 = vpack.c.b16 %v3286, %v3285
  %v3296 = vpack.c.b16 %v3288, %v3287
  %3305 = vmatprep.subr.bf16.mxu0 0
  %3306 = vmatpush1.bf16.msra.mxu0 %v3296
  %3307 = vmatprep.subr.bf16.mxu0 0
  %3308 = vmatpush1.bf16.msra.mxu0 %v3295
  %3309 = vmatprep.subr.bf16.mxu0 0
  %3310 = vmatpush1.bf16.msra.mxu0 %v3294
  %3311 = vmatprep.subr.bf16.mxu0 0
  %3312 = vmatpush1.bf16.msra.mxu0 %v3293
  %3313 = vmatprep.subr.bf16.mxu0 0
  %3314 = vmatpush1.bf16.msra.mxu0 %v3292
  %3315 = vmatprep.subr.bf16.mxu0 0
  %3316 = vmatpush1.bf16.msra.mxu0 %v3291
  %3317 = vmatprep.subr.bf16.mxu0 0
  %3318 = vmatpush1.bf16.msra.mxu0 %v3290
  %3319 = vmatprep.subr.bf16.mxu0 0
  %3320 = vmatpush1.bf16.msra.mxu0 %v3289
  %3321 = vmatprep.subr.bf16.mxu0 0
  %3322 = vmatpush2.bf16.msra.mxu0 0
  %3323 = vmatprep.subr.bf16.mxu0 0
  %3324 = vmatpush2.bf16.msra.mxu0 0
  %3325 = vmatprep.subr.bf16.mxu0 0
  %3326 = vmatpush2.bf16.msra.mxu0 0
  %3327 = vmatprep.subr.bf16.mxu0 0
  %3328 = vmatpush2.bf16.msra.mxu0 0
  %3329 = vmatprep.subr.bf16.mxu0 0
  %3330 = vmatpush2.bf16.msra.mxu0 0
  %3331 = vmatprep.subr.bf16.mxu0 0
  %3332 = vmatpush2.bf16.msra.mxu0 0
  %3333 = vmatprep.subr.bf16.mxu0 0
  %3334 = vmatpush2.bf16.msra.mxu0 0
  %3335 = vmatprep.subr.bf16.mxu0 0
  %3336 = vmatpush2.bf16.msra.mxu0 0
  %3337 = vmatprep.mubr.bf16.mxu0 0
  %3338 = vmatmul.mubr.bf16.gmra.mxu0 %v3243
  %v3339 = vpop.f32.mrf.mxu0
  %v3340 = vadd.f32 0.0, %v3339
  %v3341 = vpop.f32.mrf.mxu0
  %v3342 = vpop.f32.mrf.mxu0
  %v3343 = vadd.f32 0.0, %v3342
  %v3344 = vpop.f32.mrf.mxu0
  %3345 = vmatprep.mubr.bf16.mxu0 0
  %3346 = vmatmul.mubr.bf16.gmra.mxu0 %v3244
  %v3347 = vpop.f32.mrf.mxu0
  %v3348 = vadd.f32 0.0, %v3347
  %v3349 = vpop.f32.mrf.mxu0
  %v3350 = vpop.f32.mrf.mxu0
  %v3351 = vadd.f32 0.0, %v3350
  %v3352 = vpop.f32.mrf.mxu0
  %3353 = vmatprep.mubr.bf16.mxu0 0
  %3354 = vmatmul.mubr.bf16.gmra.mxu0 %v3245
  %v3355 = vpop.f32.mrf.mxu0
  %v3356 = vadd.f32 0.0, %v3355
  %v3357 = vpop.f32.mrf.mxu0
  %v3358 = vpop.f32.mrf.mxu0
  %v3359 = vadd.f32 0.0, %v3358
  %v3360 = vpop.f32.mrf.mxu0
  %3361 = vmatprep.mubr.bf16.mxu0 0
  %3362 = vmatmul.mubr.bf16.gmra.mxu0 %v3246
  %v3363 = vpop.f32.mrf.mxu0
  %v3364 = vadd.f32 0.0, %v3363
  %v3365 = vpop.f32.mrf.mxu0
  %v3366 = vpop.f32.mrf.mxu0
  %v3367 = vadd.f32 0.0, %v3366
  %v3368 = vpop.f32.mrf.mxu0
  %3369 = vmatprep.mubr.bf16.mxu0 0
  %3370 = vmatmul.mubr.bf16.gmra.mxu0 %v3247
  %v3371 = vpop.f32.mrf.mxu0
  %v3372 = vadd.f32 0.0, %v3371
  %v3373 = vpop.f32.mrf.mxu0
  %v3374 = vpop.f32.mrf.mxu0
  %v3375 = vadd.f32 0.0, %v3374
  %v3376 = vpop.f32.mrf.mxu0
  %3377 = vmatprep.mubr.bf16.mxu0 0
  %3378 = vmatmul.mubr.bf16.gmra.mxu0 %v3248
  %v3379 = vpop.f32.mrf.mxu0
  %v3380 = vadd.f32 0.0, %v3379
  %v3381 = vpop.f32.mrf.mxu0
  %v3382 = vpop.f32.mrf.mxu0
  %v3383 = vadd.f32 0.0, %v3382
  %v3384 = vpop.f32.mrf.mxu0
  %3385 = vmatprep.mubr.bf16.mxu0 0
  %3386 = vmatmul.mubr.bf16.gmra.mxu0 %v3249
  %v3387 = vpop.f32.mrf.mxu0
  %v3388 = vadd.f32 0.0, %v3387
  %v3389 = vpop.f32.mrf.mxu0
  %v3390 = vpop.f32.mrf.mxu0
  %v3391 = vpop.f32.mrf.mxu0
  %3392 = vdwg.mxu0
  %v3393 = vadd.f32 %v3134, %v3340
  %v3394 = vadd.f32 %v3137, %v3343
  %v3395 = vadd.f32 %v3142, %v3348
  %v3396 = vadd.f32 %v3145, %v3351
  %v3397 = vadd.f32 %v3150, %v3356
  %v3398 = vadd.f32 %v3153, %v3359
  %v3399 = vadd.f32 %v3158, %v3364
  %v3400 = vadd.f32 %v3161, %v3367
  %v3401 = vadd.f32 %v3166, %v3372
  %v3402 = vadd.f32 %v3169, %v3375
  %v3403 = vadd.f32 %v3174, %v3380
  %v3404 = vadd.f32 %v3177, %v3383
  %v3405 = vadd.f32 %v3182, %v3388
  %s3406 = scalar_lea.vmem %s0, 416
  %v3407 = vld [vmem:[%s3406] sm:$0xf]
  %v3408 = vld [vmem:[%s3406 + $0x4] sm:$0xf]
  %v3409 = vld [vmem:[%s3406 + $0x8] sm:$0xf]
  %v3410 = vld [vmem:[%s3406 + $0xc] sm:$0xf]
  %v3411 = vld [vmem:[%s3406 + $0x10] sm:$0xf]
  %v3412 = vld [vmem:[%s3406 + $0x14] sm:$0xf]
  %v3413 = vld [vmem:[%s3406 + $0x18] sm:$0xf]
  %v3414 = vld [vmem:[%s3406 + $0x1c] sm:$0xf]
  %v3415 = vld [vmem:[%s3406 + $0x20] sm:$0xf]
  %v3416 = vld [vmem:[%s3406 + $0x24] sm:$0xf]
  %v3417 = vld [vmem:[%s3406 + $0x28] sm:$0xf]
  %v3418 = vld [vmem:[%s3406 + $0x2c] sm:$0xf]
  %v3419 = vld [vmem:[%s3406 + $0x30] sm:$0x1]
  %s3420 = scalar_lea.vmem %s1, 960
  %v3421 = vld [vmem:[%s3420] sm:$0xf]
  %v3422 = vld [vmem:[%s3420 + $0x4] sm:$0xf]
  %v3423 = vld [vmem:[%s3420 + $0x8] sm:$0xf]
  %v3424 = vld [vmem:[%s3420 + $0xc] sm:$0xf]
  %v3425 = vld [vmem:[%s3420 + $0x10] sm:$0xf]
  %v3426 = vld [vmem:[%s3420 + $0x14] sm:$0xf]
  %v3427 = vld [vmem:[%s3420 + $0x18] sm:$0xf]
  %v3428 = vld [vmem:[%s3420 + $0x1c] sm:$0xf]
  %v3429 = vld [vmem:[%s3420 + $0x20] sm:$0xf]
  %v3430 = vld [vmem:[%s3420 + $0x24] sm:$0xf]
  %v3431 = vld [vmem:[%s3420 + $0x28] sm:$0xf]
  %v3432 = vld [vmem:[%s3420 + $0x2c] sm:$0xf]
  %v3433 = vld [vmem:[%s3420 + $0x30] sm:$0xf]
  %v3434 = vld [vmem:[%s3420 + $0x34] sm:$0xf]
  %v3435 = vld [vmem:[%s3420 + $0x38] sm:$0xf]
  %v3436 = vld [vmem:[%s3420 + $0x3c] sm:$0xf]
  %v3450 = vunpack.c.l.b16 %v3407
  %v3451 = vunpack.c.l.b16 %v3408
  %v3452 = vunpack.c.l.b16 %v3409
  %v3453 = vunpack.c.l.b16 %v3410
  %v3454 = vunpack.c.l.b16 %v3411
  %v3455 = vunpack.c.l.b16 %v3412
  %v3456 = vunpack.c.l.b16 %v3413
  %v3457 = vunpack.c.l.b16 %v3414
  %v3458 = vunpack.c.l.b16 %v3415
  %v3459 = vunpack.c.l.b16 %v3416
  %v3460 = vunpack.c.l.b16 %v3417
  %v3461 = vunpack.c.l.b16 %v3418
  %v3462 = vunpack.c.l.b16 %v3419
  %v3463 = vpack.c.b16 %v3451, %v3450
  %v3464 = vpack.c.b16 %v3453, %v3452
  %v3465 = vpack.c.b16 %v3455, %v3454
  %v3466 = vpack.c.b16 %v3457, %v3456
  %v3467 = vpack.c.b16 %v3459, %v3458
  %v3468 = vpack.c.b16 %v3461, %v3460
  %v3469 = vpack.c.b16 %v3462, %v3462
  %v3493 = vunpack.c.l.b16 %v3421
  %v3494 = vunpack.c.l.b16 %v3422
  %v3495 = vunpack.c.l.b16 %v3423
  %v3496 = vunpack.c.l.b16 %v3424
  %v3497 = vunpack.c.l.b16 %v3425
  %v3498 = vunpack.c.l.b16 %v3426
  %v3499 = vunpack.c.l.b16 %v3427
  %v3500 = vunpack.c.l.b16 %v3428
  %v3501 = vunpack.c.l.b16 %v3429
  %v3502 = vunpack.c.l.b16 %v3430
  %v3503 = vunpack.c.l.b16 %v3431
  %v3504 = vunpack.c.l.b16 %v3432
  %v3505 = vunpack.c.l.b16 %v3433
  %v3506 = vunpack.c.l.b16 %v3434
  %v3507 = vunpack.c.l.b16 %v3435
  %v3508 = vunpack.c.l.b16 %v3436
  %v3509 = vpack.c.b16 %v3494, %v3493
  %v3510 = vpack.c.b16 %v3496, %v3495
  %v3511 = vpack.c.b16 %v3498, %v3497
  %v3512 = vpack.c.b16 %v3500, %v3499
  %v3513 = vpack.c.b16 %v3502, %v3501
  %v3514 = vpack.c.b16 %v3504, %v3503
  %v3515 = vpack.c.b16 %v3506, %v3505
  %v3516 = vpack.c.b16 %v3508, %v3507
  %3525 = vmatprep.subr.bf16.mxu0 0
  %3526 = vmatpush1.bf16.msra.mxu0 %v3516
  %3527 = vmatprep.subr.bf16.mxu0 0
  %3528 = vmatpush1.bf16.msra.mxu0 %v3515
  %3529 = vmatprep.subr.bf16.mxu0 0
  %3530 = vmatpush1.bf16.msra.mxu0 %v3514
  %3531 = vmatprep.subr.bf16.mxu0 0
  %3532 = vmatpush1.bf16.msra.mxu0 %v3513
  %3533 = vmatprep.subr.bf16.mxu0 0
  %3534 = vmatpush1.bf16.msra.mxu0 %v3512
  %3535 = vmatprep.subr.bf16.mxu0 0
  %3536 = vmatpush1.bf16.msra.mxu0 %v3511
  %3537 = vmatprep.subr.bf16.mxu0 0
  %3538 = vmatpush1.bf16.msra.mxu0 %v3510
  %3539 = vmatprep.subr.bf16.mxu0 0
  %3540 = vmatpush1.bf16.msra.mxu0 %v3509
  %3541 = vmatprep.subr.bf16.mxu0 0
  %3542 = vmatpush2.bf16.msra.mxu0 0
  %3543 = vmatprep.subr.bf16.mxu0 0
  %3544 = vmatpush2.bf16.msra.mxu0 0
  %3545 = vmatprep.subr.bf16.mxu0 0
  %3546 = vmatpush2.bf16.msra.mxu0 0
  %3547 = vmatprep.subr.bf16.mxu0 0
  %3548 = vmatpush2.bf16.msra.mxu0 0
  %3549 = vmatprep.subr.bf16.mxu0 0
  %3550 = vmatpush2.bf16.msra.mxu0 0
  %3551 = vmatprep.subr.bf16.mxu0 0
  %3552 = vmatpush2.bf16.msra.mxu0 0
  %3553 = vmatprep.subr.bf16.mxu0 0
  %3554 = vmatpush2.bf16.msra.mxu0 0
  %3555 = vmatprep.subr.bf16.mxu0 0
  %3556 = vmatpush2.bf16.msra.mxu0 0
  %3557 = vmatprep.mubr.bf16.mxu0 0
  %3558 = vmatmul.mubr.bf16.gmra.mxu0 %v3463
  %v3559 = vpop.f32.mrf.mxu0
  %v3560 = vadd.f32 0.0, %v3559
  %v3561 = vpop.f32.mrf.mxu0
  %v3562 = vpop.f32.mrf.mxu0
  %v3563 = vadd.f32 0.0, %v3562
  %v3564 = vpop.f32.mrf.mxu0
  %3565 = vmatprep.mubr.bf16.mxu0 0
  %3566 = vmatmul.mubr.bf16.gmra.mxu0 %v3464
  %v3567 = vpop.f32.mrf.mxu0
  %v3568 = vadd.f32 0.0, %v3567
  %v3569 = vpop.f32.mrf.mxu0
  %v3570 = vpop.f32.mrf.mxu0
  %v3571 = vadd.f32 0.0, %v3570
  %v3572 = vpop.f32.mrf.mxu0
  %3573 = vmatprep.mubr.bf16.mxu0 0
  %3574 = vmatmul.mubr.bf16.gmra.mxu0 %v3465
  %v3575 = vpop.f32.mrf.mxu0
  %v3576 = vadd.f32 0.0, %v3575
  %v3577 = vpop.f32.mrf.mxu0
  %v3578 = vpop.f32.mrf.mxu0
  %v3579 = vadd.f32 0.0, %v3578
  %v3580 = vpop.f32.mrf.mxu0
  %3581 = vmatprep.mubr.bf16.mxu0 0
  %3582 = vmatmul.mubr.bf16.gmra.mxu0 %v3466
  %v3583 = vpop.f32.mrf.mxu0
  %v3584 = vadd.f32 0.0, %v3583
  %v3585 = vpop.f32.mrf.mxu0
  %v3586 = vpop.f32.mrf.mxu0
  %v3587 = vadd.f32 0.0, %v3586
  %v3588 = vpop.f32.mrf.mxu0
  %3589 = vmatprep.mubr.bf16.mxu0 0
  %3590 = vmatmul.mubr.bf16.gmra.mxu0 %v3467
  %v3591 = vpop.f32.mrf.mxu0
  %v3592 = vadd.f32 0.0, %v3591
  %v3593 = vpop.f32.mrf.mxu0
  %v3594 = vpop.f32.mrf.mxu0
  %v3595 = vadd.f32 0.0, %v3594
  %v3596 = vpop.f32.mrf.mxu0
  %3597 = vmatprep.mubr.bf16.mxu0 0
  %3598 = vmatmul.mubr.bf16.gmra.mxu0 %v3468
  %v3599 = vpop.f32.mrf.mxu0
  %v3600 = vadd.f32 0.0, %v3599
  %v3601 = vpop.f32.mrf.mxu0
  %v3602 = vpop.f32.mrf.mxu0
  %v3603 = vadd.f32 0.0, %v3602
  %v3604 = vpop.f32.mrf.mxu0
  %3605 = vmatprep.mubr.bf16.mxu0 0
  %3606 = vmatmul.mubr.bf16.gmra.mxu0 %v3469
  %v3607 = vpop.f32.mrf.mxu0
  %v3608 = vadd.f32 0.0, %v3607
  %v3609 = vpop.f32.mrf.mxu0
  %v3610 = vpop.f32.mrf.mxu0
  %v3611 = vpop.f32.mrf.mxu0
  %3612 = vdwg.mxu0
  %v3613 = vadd.f32 %v3393, %v3560
  %v3614 = vadd.f32 %v3394, %v3563
  %v3615 = vadd.f32 %v3395, %v3568
  %v3616 = vadd.f32 %v3396, %v3571
  %v3617 = vadd.f32 %v3397, %v3576
  %v3618 = vadd.f32 %v3398, %v3579
  %v3619 = vadd.f32 %v3399, %v3584
  %v3620 = vadd.f32 %v3400, %v3587
  %v3621 = vadd.f32 %v3401, %v3592
  %v3622 = vadd.f32 %v3402, %v3595
  %v3623 = vadd.f32 %v3403, %v3600
  %v3624 = vadd.f32 %v3404, %v3603
  %v3625 = vadd.f32 %v3405, %v3608
  %s3626 = scalar_lea.vmem [#allocation2], 312
  %3627 = vst [vmem:[%s3626] sm:$0xff] %v3613
  %3628 = vst [vmem:[%s3626 + $0x8] sm:$0xff] %v3614
  %3629 = vst [vmem:[%s3626 + $0x10] sm:$0xff] %v3615
  %3630 = vst [vmem:[%s3626 + $0x18] sm:$0xff] %v3616
  %3631 = vst [vmem:[%s3626 + $0x20] sm:$0xff] %v3617
  %3632 = vst [vmem:[%s3626 + $0x28] sm:$0xff] %v3618
  %3633 = vst [vmem:[%s3626 + $0x30] sm:$0xff] %v3619
  %3634 = vst [vmem:[%s3626 + $0x38] sm:$0xff] %v3620
  %3635 = vst [vmem:[%s3626 + $0x40] sm:$0xff] %v3621
  %3636 = vst [vmem:[%s3626 + $0x48] sm:$0xff] %v3622
  %3637 = vst [vmem:[%s3626 + $0x50] sm:$0xff] %v3623
  %3638 = vst [vmem:[%s3626 + $0x58] sm:$0xff] %v3624
  %3639 = vst [vmem:[%s3626 + $0x60] sm:$0x3] %v3625
  %v3640 = vadd.f32 %v3613, %v3614
  %v3641 = vadd.f32 %v3640, %v3615
  %v3642 = vadd.f32 %v3641, %v3616
  %v3643 = vadd.f32 %v3642, %v3617
  %v3644 = vadd.f32 %v3643, %v3618
  %v3645 = vadd.f32 %v3644, %v3619
  %v3646 = vadd.f32 %v3645, %v3620
  %v3647 = vadd.f32 %v3646, %v3621
  %v3648 = vadd.f32 %v3647, %v3622
  %v3649 = vadd.f32 %v3648, %v3623
  %v3650 = vadd.f32 %v3649, %v3624
  %v3651 = vsel %vm894, %v3625, 0.0
  %v3652 = vadd.f32 %v3650, %v3651
  %v3653 = vrot.slane %v3652, 4
  %v3654 = vadd.f32 %v3652, %v3653
  %v3655 = vrot.slane %v3654, 2
  %v3656 = vadd.f32 %v3654, %v3655
  %v3657 = vrot.slane %v3656, 1
  %v3658 = vadd.f32 %v3656, %v3657
  %v3659 = vadd.f32 %v2741, %v3658
  %v3660 = vmul.f32 %v3613, %v3613
  %v3661 = vmul.f32 %v3614, %v3614
  %v3662 = vmul.f32 %v3615, %v3615
  %v3663 = vmul.f32 %v3616, %v3616
  %v3664 = vmul.f32 %v3617, %v3617
  %v3665 = vmul.f32 %v3618, %v3618
  %v3666 = vmul.f32 %v3619, %v3619
  %v3667 = vmul.f32 %v3620, %v3620
  %v3668 = vmul.f32 %v3621, %v3621
  %v3669 = vmul.f32 %v3622, %v3622
  %v3670 = vmul.f32 %v3623, %v3623
  %v3671 = vmul.f32 %v3624, %v3624
  %v3672 = vmul.f32 %v3625, %v3625
  %v3673 = vadd.f32 %v3660, %v3661
  %v3674 = vadd.f32 %v3673, %v3662
  %v3675 = vadd.f32 %v3674, %v3663
  %v3676 = vadd.f32 %v3675, %v3664
  %v3677 = vadd.f32 %v3676, %v3665
  %v3678 = vadd.f32 %v3677, %v3666
  %v3679 = vadd.f32 %v3678, %v3667
  %v3680 = vadd.f32 %v3679, %v3668
  %v3681 = vadd.f32 %v3680, %v3669
  %v3682 = vadd.f32 %v3681, %v3670
  %v3683 = vadd.f32 %v3682, %v3671
  %v3684 = vsel %vm894, %v3672, 0.0
  %v3685 = vadd.f32 %v3683, %v3684
  %v3686 = vrot.slane %v3685, 4
  %v3687 = vadd.f32 %v3685, %v3686
  %v3688 = vrot.slane %v3687, 2
  %v3689 = vadd.f32 %v3687, %v3688
  %v3690 = vrot.slane %v3689, 1
  %v3691 = vadd.f32 %v3689, %v3690
  %v3692 = vadd.f32 %v2774, %v3691
  %v3693 = vrcp.pop 392.0
  %v3694 = vmul.f32 %v3659, %v3693
  %v3695 = vmul.f32 %v3692, %v3693
  %v3696 = vmul.f32 %v3694, %v3694
  %v3697 = vsub.f32 %v3695, %v3696
  %v3698 = vmax.f32 %v3697, 0.0
  %v3699 = vadd.f32 %v3698, 1e-05
  %v3700 = vrsqrt.pop %v3699
  %v3701 = vld [vmem:[%s2] sm:$0x1]
  %v3702 = vmul.f32 %v3700, %v3701
  %v3703 = vld [vmem:[%s3] sm:$0x1]
  %v3704 = vmul.f32 %v3694, %v3702
  %v3705 = vsub.f32 %v3703, %v3704
  %v3706 = vld [vmem:[#allocation2] sm:$0xff]
  %v3707 = vld [vmem:[#allocation2 + $0x8] sm:$0xff]
  %v3708 = vld [vmem:[#allocation2 + $0x10] sm:$0xff]
  %v3709 = vld [vmem:[#allocation2 + $0x18] sm:$0xff]
  %v3710 = vld [vmem:[#allocation2 + $0x20] sm:$0xff]
  %v3711 = vld [vmem:[#allocation2 + $0x28] sm:$0xff]
  %v3712 = vld [vmem:[#allocation2 + $0x30] sm:$0xff]
  %v3713 = vld [vmem:[#allocation2 + $0x38] sm:$0xff]
  %v3714 = vld [vmem:[#allocation2 + $0x40] sm:$0xff]
  %v3715 = vld [vmem:[#allocation2 + $0x48] sm:$0xff]
  %v3716 = vld [vmem:[#allocation2 + $0x50] sm:$0xff]
  %v3717 = vld [vmem:[#allocation2 + $0x58] sm:$0xff]
  %v3718 = vld [vmem:[#allocation2 + $0x60] sm:$0x3]
  %v3719 = vlaneseq
  %v3720 = vshrl.u32 %v3719, 7
  %v3721 = vsub.s32 0, %v3720
  %v3722 = vrot.slane %v3702, %v3721
  %v3723 = vmul.f32 %v3706, %v3722
  %v3724 = vmul.f32 %v3707, %v3722
  %v3725 = vmul.f32 %v3708, %v3722
  %v3726 = vmul.f32 %v3709, %v3722
  %v3727 = vmul.f32 %v3710, %v3722
  %v3728 = vmul.f32 %v3711, %v3722
  %v3729 = vmul.f32 %v3712, %v3722
  %v3730 = vmul.f32 %v3713, %v3722
  %v3731 = vmul.f32 %v3714, %v3722
  %v3732 = vmul.f32 %v3715, %v3722
  %v3733 = vmul.f32 %v3716, %v3722
  %v3734 = vmul.f32 %v3717, %v3722
  %v3735 = vmul.f32 %v3718, %v3722
  %v3737 = vlaneseq
  %v3738 = vshrl.u32 %v3737, 7
  %v3739 = vsub.s32 0, %v3738
  %v3740 = vrot.slane %v3705, %v3739
  %v3742 = vadd.f32 %v3723, %v3740
  %v3743 = vadd.f32 %v3724, %v3740
  %v3744 = vadd.f32 %v3725, %v3740
  %v3745 = vadd.f32 %v3726, %v3740
  %v3746 = vadd.f32 %v3727, %v3740
  %v3747 = vadd.f32 %v3728, %v3740
  %v3748 = vadd.f32 %v3729, %v3740
  %v3749 = vadd.f32 %v3730, %v3740
  %v3750 = vadd.f32 %v3731, %v3740
  %v3751 = vadd.f32 %v3732, %v3740
  %v3752 = vadd.f32 %v3733, %v3740
  %v3753 = vadd.f32 %v3734, %v3740
  %v3754 = vadd.f32 %v3735, %v3740
  %v3755 = vmax.f32 %v3742, 0.0
  %v3756 = vmax.f32 %v3743, 0.0
  %v3757 = vmax.f32 %v3744, 0.0
  %v3758 = vmax.f32 %v3745, 0.0
  %v3759 = vmax.f32 %v3746, 0.0
  %v3760 = vmax.f32 %v3747, 0.0
  %v3761 = vmax.f32 %v3748, 0.0
  %v3762 = vmax.f32 %v3749, 0.0
  %v3763 = vmax.f32 %v3750, 0.0
  %v3764 = vmax.f32 %v3751, 0.0
  %v3765 = vmax.f32 %v3752, 0.0
  %v3766 = vmax.f32 %v3753, 0.0
  %v3767 = vmax.f32 %v3754, 0.0
  %v3768 = vpack.c.bf16 %v3756, %v3755
  %v3769 = vpack.c.bf16 %v3758, %v3757
  %v3770 = vpack.c.bf16 %v3760, %v3759
  %v3771 = vpack.c.bf16 %v3762, %v3761
  %v3772 = vpack.c.bf16 %v3764, %v3763
  %v3773 = vpack.c.bf16 %v3766, %v3765
  %v3774 = vpack.c.bf16 %v3767, %v3767
  %v3782 = vunpack.c.l.b16 %v3768
  %v3783 = vunpack.c.h.b16 %v3768
  %v3784 = vunpack.c.l.b16 %v3769
  %v3785 = vunpack.c.h.b16 %v3769
  %v3786 = vunpack.c.l.b16 %v3770
  %v3787 = vunpack.c.h.b16 %v3770
  %v3788 = vunpack.c.l.b16 %v3771
  %v3789 = vunpack.c.h.b16 %v3771
  %v3790 = vunpack.c.l.b16 %v3772
  %v3791 = vunpack.c.h.b16 %v3772
  %v3792 = vunpack.c.l.b16 %v3773
  %v3793 = vunpack.c.h.b16 %v3773
  %v3794 = vunpack.c.l.b16 %v3774
  %v3795 = vpack.c.b16 %v3782, %v3782
  %v3796 = vpack.c.b16 %v3783, %v3783
  %v3797 = vpack.c.b16 %v3784, %v3784
  %v3798 = vpack.c.b16 %v3785, %v3785
  %v3799 = vpack.c.b16 %v3786, %v3786
  %v3800 = vpack.c.b16 %v3787, %v3787
  %v3801 = vpack.c.b16 %v3788, %v3788
  %v3802 = vpack.c.b16 %v3789, %v3789
  %v3803 = vpack.c.b16 %v3790, %v3790
  %v3804 = vpack.c.b16 %v3791, %v3791
  %v3805 = vpack.c.b16 %v3792, %v3792
  %v3806 = vpack.c.b16 %v3793, %v3793
  %v3807 = vpack.c.b16 %v3794, %v3794
  %3821 = vst [vmem:[%s4] sm:$0xf] %v3795
  %3822 = vst [vmem:[%s4 + $0x4] sm:$0xf] %v3796
  %3823 = vst [vmem:[%s4 + $0x8] sm:$0xf] %v3797
  %3824 = vst [vmem:[%s4 + $0xc] sm:$0xf] %v3798
  %3825 = vst [vmem:[%s4 + $0x10] sm:$0xf] %v3799
  %3826 = vst [vmem:[%s4 + $0x14] sm:$0xf] %v3800
  %3827 = vst [vmem:[%s4 + $0x18] sm:$0xf] %v3801
  %3828 = vst [vmem:[%s4 + $0x1c] sm:$0xf] %v3802
  %3829 = vst [vmem:[%s4 + $0x20] sm:$0xf] %v3803
  %3830 = vst [vmem:[%s4 + $0x24] sm:$0xf] %v3804
  %3831 = vst [vmem:[%s4 + $0x28] sm:$0xf] %v3805
  %3832 = vst [vmem:[%s4 + $0x2c] sm:$0xf] %v3806
  %3833 = vst [vmem:[%s4 + $0x30] sm:$0x1] %v3807
  %v3834 = vld [vmem:[%s1789] sm:$0xff]
  %v3835 = vld [vmem:[%s1789 + $0x8] sm:$0xff]
  %v3836 = vld [vmem:[%s1789 + $0x10] sm:$0xff]
  %v3837 = vld [vmem:[%s1789 + $0x18] sm:$0xff]
  %v3838 = vld [vmem:[%s1789 + $0x20] sm:$0xff]
  %v3839 = vld [vmem:[%s1789 + $0x28] sm:$0xff]
  %v3840 = vld [vmem:[%s1789 + $0x30] sm:$0xff]
  %v3841 = vld [vmem:[%s1789 + $0x38] sm:$0xff]
  %v3842 = vld [vmem:[%s1789 + $0x40] sm:$0xff]
  %v3843 = vld [vmem:[%s1789 + $0x48] sm:$0xff]
  %v3844 = vld [vmem:[%s1789 + $0x50] sm:$0xff]
  %v3845 = vld [vmem:[%s1789 + $0x58] sm:$0xff]
  %v3846 = vld [vmem:[%s1789 + $0x60] sm:$0x3]
  %v3847 = vmul.f32 %v3834, %v3722
  %v3848 = vmul.f32 %v3835, %v3722
  %v3849 = vmul.f32 %v3836, %v3722
  %v3850 = vmul.f32 %v3837, %v3722
  %v3851 = vmul.f32 %v3838, %v3722
  %v3852 = vmul.f32 %v3839, %v3722
  %v3853 = vmul.f32 %v3840, %v3722
  %v3854 = vmul.f32 %v3841, %v3722
  %v3855 = vmul.f32 %v3842, %v3722
  %v3856 = vmul.f32 %v3843, %v3722
  %v3857 = vmul.f32 %v3844, %v3722
  %v3858 = vmul.f32 %v3845, %v3722
  %v3859 = vmul.f32 %v3846, %v3722
  %v3860 = vadd.f32 %v3847, %v3740
  %v3861 = vadd.f32 %v3848, %v3740
  %v3862 = vadd.f32 %v3849, %v3740
  %v3863 = vadd.f32 %v3850, %v3740
  %v3864 = vadd.f32 %v3851, %v3740
  %v3865 = vadd.f32 %v3852, %v3740
  %v3866 = vadd.f32 %v3853, %v3740
  %v3867 = vadd.f32 %v3854, %v3740
  %v3868 = vadd.f32 %v3855, %v3740
  %v3869 = vadd.f32 %v3856, %v3740
  %v3870 = vadd.f32 %v3857, %v3740
  %v3871 = vadd.f32 %v3858, %v3740
  %v3872 = vadd.f32 %v3859, %v3740
  %v3873 = vmax.f32 %v3860, 0.0
  %v3874 = vmax.f32 %v3861, 0.0
  %v3875 = vmax.f32 %v3862, 0.0
  %v3876 = vmax.f32 %v3863, 0.0
  %v3877 = vmax.f32 %v3864, 0.0
  %v3878 = vmax.f32 %v3865, 0.0
  %v3879 = vmax.f32 %v3866, 0.0
  %v3880 = vmax.f32 %v3867, 0.0
  %v3881 = vmax.f32 %v3868, 0.0
  %v3882 = vmax.f32 %v3869, 0.0
  %v3883 = vmax.f32 %v3870, 0.0
  %v3884 = vmax.f32 %v3871, 0.0
  %v3885 = vmax.f32 %v3872, 0.0
  %v3886 = vpack.c.bf16 %v3874, %v3873
  %v3887 = vpack.c.bf16 %v3876, %v3875
  %v3888 = vpack.c.bf16 %v3878, %v3877
  %v3889 = vpack.c.bf16 %v3880, %v3879
  %v3890 = vpack.c.bf16 %v3882, %v3881
  %v3891 = vpack.c.bf16 %v3884, %v3883
  %v3892 = vpack.c.bf16 %v3885, %v3885
  %v3900 = vunpack.c.l.b16 %v3886
  %v3901 = vunpack.c.h.b16 %v3886
  %v3902 = vunpack.c.l.b16 %v3887
  %v3903 = vunpack.c.h.b16 %v3887
  %v3904 = vunpack.c.l.b16 %v3888
  %v3905 = vunpack.c.h.b16 %v3888
  %v3906 = vunpack.c.l.b16 %v3889
  %v3907 = vunpack.c.h.b16 %v3889
  %v3908 = vunpack.c.l.b16 %v3890
  %v3909 = vunpack.c.h.b16 %v3890
  %v3910 = vunpack.c.l.b16 %v3891
  %v3911 = vunpack.c.h.b16 %v3891
  %v3912 = vunpack.c.l.b16 %v3892
  %v3913 = vpack.c.b16 %v3900, %v3900
  %v3914 = vpack.c.b16 %v3901, %v3901
  %v3915 = vpack.c.b16 %v3902, %v3902
  %v3916 = vpack.c.b16 %v3903, %v3903
  %v3917 = vpack.c.b16 %v3904, %v3904
  %v3918 = vpack.c.b16 %v3905, %v3905
  %v3919 = vpack.c.b16 %v3906, %v3906
  %v3920 = vpack.c.b16 %v3907, %v3907
  %v3921 = vpack.c.b16 %v3908, %v3908
  %v3922 = vpack.c.b16 %v3909, %v3909
  %v3923 = vpack.c.b16 %v3910, %v3910
  %v3924 = vpack.c.b16 %v3911, %v3911
  %v3925 = vpack.c.b16 %v3912, %v3912
  %s3939 = scalar_lea.vmem %s4, 52
  %3940 = vst [vmem:[%s3939] sm:$0xf] %v3913
  %3941 = vst [vmem:[%s3939 + $0x4] sm:$0xf] %v3914
  %3942 = vst [vmem:[%s3939 + $0x8] sm:$0xf] %v3915
  %3943 = vst [vmem:[%s3939 + $0xc] sm:$0xf] %v3916
  %3944 = vst [vmem:[%s3939 + $0x10] sm:$0xf] %v3917
  %3945 = vst [vmem:[%s3939 + $0x14] sm:$0xf] %v3918
  %3946 = vst [vmem:[%s3939 + $0x18] sm:$0xf] %v3919
  %3947 = vst [vmem:[%s3939 + $0x1c] sm:$0xf] %v3920
  %3948 = vst [vmem:[%s3939 + $0x20] sm:$0xf] %v3921
  %3949 = vst [vmem:[%s3939 + $0x24] sm:$0xf] %v3922
  %3950 = vst [vmem:[%s3939 + $0x28] sm:$0xf] %v3923
  %3951 = vst [vmem:[%s3939 + $0x2c] sm:$0xf] %v3924
  %3952 = vst [vmem:[%s3939 + $0x30] sm:$0x1] %v3925
  %v3953 = vld [vmem:[%s2708] sm:$0xff]
  %v3954 = vld [vmem:[%s2708 + $0x8] sm:$0xff]
  %v3955 = vld [vmem:[%s2708 + $0x10] sm:$0xff]
  %v3956 = vld [vmem:[%s2708 + $0x18] sm:$0xff]
  %v3957 = vld [vmem:[%s2708 + $0x20] sm:$0xff]
  %v3958 = vld [vmem:[%s2708 + $0x28] sm:$0xff]
  %v3959 = vld [vmem:[%s2708 + $0x30] sm:$0xff]
  %v3960 = vld [vmem:[%s2708 + $0x38] sm:$0xff]
  %v3961 = vld [vmem:[%s2708 + $0x40] sm:$0xff]
  %v3962 = vld [vmem:[%s2708 + $0x48] sm:$0xff]
  %v3963 = vld [vmem:[%s2708 + $0x50] sm:$0xff]
  %v3964 = vld [vmem:[%s2708 + $0x58] sm:$0xff]
  %v3965 = vld [vmem:[%s2708 + $0x60] sm:$0x3]
  %v3966 = vmul.f32 %v3953, %v3722
  %v3967 = vmul.f32 %v3954, %v3722
  %v3968 = vmul.f32 %v3955, %v3722
  %v3969 = vmul.f32 %v3956, %v3722
  %v3970 = vmul.f32 %v3957, %v3722
  %v3971 = vmul.f32 %v3958, %v3722
  %v3972 = vmul.f32 %v3959, %v3722
  %v3973 = vmul.f32 %v3960, %v3722
  %v3974 = vmul.f32 %v3961, %v3722
  %v3975 = vmul.f32 %v3962, %v3722
  %v3976 = vmul.f32 %v3963, %v3722
  %v3977 = vmul.f32 %v3964, %v3722
  %v3978 = vmul.f32 %v3965, %v3722
  %v3979 = vadd.f32 %v3966, %v3740
  %v3980 = vadd.f32 %v3967, %v3740
  %v3981 = vadd.f32 %v3968, %v3740
  %v3982 = vadd.f32 %v3969, %v3740
  %v3983 = vadd.f32 %v3970, %v3740
  %v3984 = vadd.f32 %v3971, %v3740
  %v3985 = vadd.f32 %v3972, %v3740
  %v3986 = vadd.f32 %v3973, %v3740
  %v3987 = vadd.f32 %v3974, %v3740
  %v3988 = vadd.f32 %v3975, %v3740
  %v3989 = vadd.f32 %v3976, %v3740
  %v3990 = vadd.f32 %v3977, %v3740
  %v3991 = vadd.f32 %v3978, %v3740
  %v3992 = vmax.f32 %v3979, 0.0
  %v3993 = vmax.f32 %v3980, 0.0
  %v3994 = vmax.f32 %v3981, 0.0
  %v3995 = vmax.f32 %v3982, 0.0
  %v3996 = vmax.f32 %v3983, 0.0
  %v3997 = vmax.f32 %v3984, 0.0
  %v3998 = vmax.f32 %v3985, 0.0
  %v3999 = vmax.f32 %v3986, 0.0
  %v4000 = vmax.f32 %v3987, 0.0
  %v4001 = vmax.f32 %v3988, 0.0
  %v4002 = vmax.f32 %v3989, 0.0
  %v4003 = vmax.f32 %v3990, 0.0
  %v4004 = vmax.f32 %v3991, 0.0
  %v4005 = vpack.c.bf16 %v3993, %v3992
  %v4006 = vpack.c.bf16 %v3995, %v3994
  %v4007 = vpack.c.bf16 %v3997, %v3996
  %v4008 = vpack.c.bf16 %v3999, %v3998
  %v4009 = vpack.c.bf16 %v4001, %v4000
  %v4010 = vpack.c.bf16 %v4003, %v4002
  %v4011 = vpack.c.bf16 %v4004, %v4004
  %v4019 = vunpack.c.l.b16 %v4005
  %v4020 = vunpack.c.h.b16 %v4005
  %v4021 = vunpack.c.l.b16 %v4006
  %v4022 = vunpack.c.h.b16 %v4006
  %v4023 = vunpack.c.l.b16 %v4007
  %v4024 = vunpack.c.h.b16 %v4007
  %v4025 = vunpack.c.l.b16 %v4008
  %v4026 = vunpack.c.h.b16 %v4008
  %v4027 = vunpack.c.l.b16 %v4009
  %v4028 = vunpack.c.h.b16 %v4009
  %v4029 = vunpack.c.l.b16 %v4010
  %v4030 = vunpack.c.h.b16 %v4010
  %v4031 = vunpack.c.l.b16 %v4011
  %v4032 = vpack.c.b16 %v4019, %v4019
  %v4033 = vpack.c.b16 %v4020, %v4020
  %v4034 = vpack.c.b16 %v4021, %v4021
  %v4035 = vpack.c.b16 %v4022, %v4022
  %v4036 = vpack.c.b16 %v4023, %v4023
  %v4037 = vpack.c.b16 %v4024, %v4024
  %v4038 = vpack.c.b16 %v4025, %v4025
  %v4039 = vpack.c.b16 %v4026, %v4026
  %v4040 = vpack.c.b16 %v4027, %v4027
  %v4041 = vpack.c.b16 %v4028, %v4028
  %v4042 = vpack.c.b16 %v4029, %v4029
  %v4043 = vpack.c.b16 %v4030, %v4030
  %v4044 = vpack.c.b16 %v4031, %v4031
  %s4058 = scalar_lea.vmem %s4, 104
  %4059 = vst [vmem:[%s4058] sm:$0xf] %v4032
  %4060 = vst [vmem:[%s4058 + $0x4] sm:$0xf] %v4033
  %4061 = vst [vmem:[%s4058 + $0x8] sm:$0xf] %v4034
  %4062 = vst [vmem:[%s4058 + $0xc] sm:$0xf] %v4035
  %4063 = vst [vmem:[%s4058 + $0x10] sm:$0xf] %v4036
  %4064 = vst [vmem:[%s4058 + $0x14] sm:$0xf] %v4037
  %4065 = vst [vmem:[%s4058 + $0x18] sm:$0xf] %v4038
  %4066 = vst [vmem:[%s4058 + $0x1c] sm:$0xf] %v4039
  %4067 = vst [vmem:[%s4058 + $0x20] sm:$0xf] %v4040
  %4068 = vst [vmem:[%s4058 + $0x24] sm:$0xf] %v4041
  %4069 = vst [vmem:[%s4058 + $0x28] sm:$0xf] %v4042
  %4070 = vst [vmem:[%s4058 + $0x2c] sm:$0xf] %v4043
  %4071 = vst [vmem:[%s4058 + $0x30] sm:$0x1] %v4044
  %v4072 = vld [vmem:[%s3626] sm:$0xff]
  %v4073 = vld [vmem:[%s3626 + $0x8] sm:$0xff]
  %v4074 = vld [vmem:[%s3626 + $0x10] sm:$0xff]
  %v4075 = vld [vmem:[%s3626 + $0x18] sm:$0xff]
  %v4076 = vld [vmem:[%s3626 + $0x20] sm:$0xff]
  %v4077 = vld [vmem:[%s3626 + $0x28] sm:$0xff]
  %v4078 = vld [vmem:[%s3626 + $0x30] sm:$0xff]
  %v4079 = vld [vmem:[%s3626 + $0x38] sm:$0xff]
  %v4080 = vld [vmem:[%s3626 + $0x40] sm:$0xff]
  %v4081 = vld [vmem:[%s3626 + $0x48] sm:$0xff]
  %v4082 = vld [vmem:[%s3626 + $0x50] sm:$0xff]
  %v4083 = vld [vmem:[%s3626 + $0x58] sm:$0xff]
  %v4084 = vld [vmem:[%s3626 + $0x60] sm:$0x3]
  %v4085 = vmul.f32 %v4072, %v3722
  %v4086 = vmul.f32 %v4073, %v3722
  %v4087 = vmul.f32 %v4074, %v3722
  %v4088 = vmul.f32 %v4075, %v3722
  %v4089 = vmul.f32 %v4076, %v3722
  %v4090 = vmul.f32 %v4077, %v3722
  %v4091 = vmul.f32 %v4078, %v3722
  %v4092 = vmul.f32 %v4079, %v3722
  %v4093 = vmul.f32 %v4080, %v3722
  %v4094 = vmul.f32 %v4081, %v3722
  %v4095 = vmul.f32 %v4082, %v3722
  %v4096 = vmul.f32 %v4083, %v3722
  %v4097 = vmul.f32 %v4084, %v3722
  %v4098 = vadd.f32 %v4085, %v3740
  %v4099 = vadd.f32 %v4086, %v3740
  %v4100 = vadd.f32 %v4087, %v3740
  %v4101 = vadd.f32 %v4088, %v3740
  %v4102 = vadd.f32 %v4089, %v3740
  %v4103 = vadd.f32 %v4090, %v3740
  %v4104 = vadd.f32 %v4091, %v3740
  %v4105 = vadd.f32 %v4092, %v3740
  %v4106 = vadd.f32 %v4093, %v3740
  %v4107 = vadd.f32 %v4094, %v3740
  %v4108 = vadd.f32 %v4095, %v3740
  %v4109 = vadd.f32 %v4096, %v3740
  %v4110 = vadd.f32 %v4097, %v3740
  %v4111 = vmax.f32 %v4098, 0.0
  %v4112 = vmax.f32 %v4099, 0.0
  %v4113 = vmax.f32 %v4100, 0.0
  %v4114 = vmax.f32 %v4101, 0.0
  %v4115 = vmax.f32 %v4102, 0.0
  %v4116 = vmax.f32 %v4103, 0.0
  %v4117 = vmax.f32 %v4104, 0.0
  %v4118 = vmax.f32 %v4105, 0.0
  %v4119 = vmax.f32 %v4106, 0.0
  %v4120 = vmax.f32 %v4107, 0.0
  %v4121 = vmax.f32 %v4108, 0.0
  %v4122 = vmax.f32 %v4109, 0.0
  %v4123 = vmax.f32 %v4110, 0.0
  %v4124 = vpack.c.bf16 %v4112, %v4111
  %v4125 = vpack.c.bf16 %v4114, %v4113
  %v4126 = vpack.c.bf16 %v4116, %v4115
  %v4127 = vpack.c.bf16 %v4118, %v4117
  %v4128 = vpack.c.bf16 %v4120, %v4119
  %v4129 = vpack.c.bf16 %v4122, %v4121
  %v4130 = vpack.c.bf16 %v4123, %v4123
  %v4138 = vunpack.c.l.b16 %v4124
  %v4139 = vunpack.c.h.b16 %v4124
  %v4140 = vunpack.c.l.b16 %v4125
  %v4141 = vunpack.c.h.b16 %v4125
  %v4142 = vunpack.c.l.b16 %v4126
  %v4143 = vunpack.c.h.b16 %v4126
  %v4144 = vunpack.c.l.b16 %v4127
  %v4145 = vunpack.c.h.b16 %v4127
  %v4146 = vunpack.c.l.b16 %v4128
  %v4147 = vunpack.c.h.b16 %v4128
  %v4148 = vunpack.c.l.b16 %v4129
  %v4149 = vunpack.c.h.b16 %v4129
  %v4150 = vunpack.c.l.b16 %v4130
  %v4151 = vpack.c.b16 %v4138, %v4138
  %v4152 = vpack.c.b16 %v4139, %v4139
  %v4153 = vpack.c.b16 %v4140, %v4140
  %v4154 = vpack.c.b16 %v4141, %v4141
  %v4155 = vpack.c.b16 %v4142, %v4142
  %v4156 = vpack.c.b16 %v4143, %v4143
  %v4157 = vpack.c.b16 %v4144, %v4144
  %v4158 = vpack.c.b16 %v4145, %v4145
  %v4159 = vpack.c.b16 %v4146, %v4146
  %v4160 = vpack.c.b16 %v4147, %v4147
  %v4161 = vpack.c.b16 %v4148, %v4148
  %v4162 = vpack.c.b16 %v4149, %v4149
  %v4163 = vpack.c.b16 %v4150, %v4150
  %s4177 = scalar_lea.vmem %s4, 156
  %4178 = vst [vmem:[%s4177] sm:$0xf] %v4151
  %4179 = vst [vmem:[%s4177 + $0x4] sm:$0xf] %v4152
  %4180 = vst [vmem:[%s4177 + $0x8] sm:$0xf] %v4153
  %4181 = vst [vmem:[%s4177 + $0xc] sm:$0xf] %v4154
  %4182 = vst [vmem:[%s4177 + $0x10] sm:$0xf] %v4155
  %4183 = vst [vmem:[%s4177 + $0x14] sm:$0xf] %v4156
  %4184 = vst [vmem:[%s4177 + $0x18] sm:$0xf] %v4157
  %4185 = vst [vmem:[%s4177 + $0x1c] sm:$0xf] %v4158
  %4186 = vst [vmem:[%s4177 + $0x20] sm:$0xf] %v4159
  %4187 = vst [vmem:[%s4177 + $0x24] sm:$0xf] %v4160
  %4188 = vst [vmem:[%s4177 + $0x28] sm:$0xf] %v4161
  %4189 = vst [vmem:[%s4177 + $0x2c] sm:$0xf] %v4162
  %4190 = vst [vmem:[%s4177 + $0x30] sm:$0x1] %v4163
  // Predicated region
  $region18: #{generator_forward.4} parent=0 // pred_check
    _
  $region19: #{generator_forward.4} parent=0 // pred_check_branch
    %4192 = sbr.rel (0) target = $region21
  $region20: #{generator_forward.4} parent=0 // pred_region
    _
  $region21: #{generator_forward.4} parent=0 // pred_fallthru
    _
  // Predicated region
  $region22: #{generator_forward.4} parent=0 // pred_check
    _
  $region23: #{generator_forward.4} parent=0 // pred_check_branch
    %4194 = sbr.rel (0) target = $region25
  $region24: #{generator_forward.4} parent=0 // pred_region
    _
  $region25: #{generator_forward.4} parent=0 // pred_fallthru
    _

// kernel: generator_forward.5
$region0: #{generator_forward.5}
  #allocation0 [shape = 'u32[]', space=smem, size = 0x4, offset = 0x4, fixed_abs, tag = 'smem constant byte address 0x4 - core index']
  #allocation1 [shape = 'u32[144,128]{1,0:T(1,128)}', space=vmem, size = 0x12000, scoped, tag = 'internal scratch']
  %s0 = inlined_call_operand.vmem [shape: bf16[9,392,64], index: 0, kind: input, shape index: {}]
  %s1 = inlined_call_operand.vmem [shape: bf16[9,64,128], index: 1, kind: input, shape index: {}]
  %s2 = inlined_call_operand.vmem [shape: bf16[392,128], index: 2, kind: output, shape index: {}]
  %s3 = sld [smem:[#allocation0]]
  $region147: #{generator_forward.5} parent=0
    _
  %s5 = ssub.s32 1, %s3
  %s6 = scalar_select 0, %s5, %s3
  $region1: #{generator_forward.5} parent=0
    #allocation2 [shape = 'u8[589824]{0}', space=vmem, size = 0x90000, scoped, tag = 'input window, operand 0']
    #allocation3 [shape = 'u8[65536]{0}', space=vmem, size = 0x10000, scoped, tag = 'output window, operand 0']
    loop: start=0, step=1, limit=6
    $region2: #{generator_forward.5} parent=1 // loop_pre_header
      _
    $region3: #{generator_forward.5} parent=1 // loop_header
      %s8 = sphi 0, %s12
      %p9 = scmp.ge.s32.totalorder %s8, 6
      %s18 = sphi 0, %s20
      %s21 = sphi 0, %s18
      %s22 = sphi 0, %s21
      %s38 = sphi 0, %s22
      %s42 = sphi 0, %s42
      %s44 = sphi 0, %s42
      %s45 = sphi 0, %s44
      %s59 = sphi 0, %s45
      %s65 = sphi 0, %s67
      %s68 = sphi 0, %s65
      %s69 = sphi 0, %s68
      %s85 = sphi 0, %s69
    $region4: #{generator_forward.5} parent=1 // loop_header_branch
      %11 = sbr.rel (%p9) target = $region8
    $region5: #{generator_forward.5} parent=1 // loop_body
      %s13 = ssub.s32 %s8, 1
      %s14 = ssub.s32 %s8, 2
      %s15 = sadd.s32 %s8, 1
      %s16 = ssub.s32 %s8, %s15
      %p17 = scmp.eq.s32.totalorder %s16, 0
      %s19 = sadd.s32 %s18, 1
      %s20 = scalar_select %p17, %s18, %s19
      %p23 = pneg %p17
      %p24 = scmp.eq.s32.totalorder %s8, 3
      %p25 = por %p23, %p24
      %p26 = scmp.ne.s32.totalorder %s18, %s21
      %p27 = scmp.eq.s32.totalorder %s8, 0
      %p28 = por %p26, %p27
      %p29 = scmp.ne.s32.totalorder %s18, %s21
      %p30 = scmp.eq.s32.totalorder %s13, 3
      %p31 = por %p29, %p30
      %p32 = scmp.ne.s32.totalorder %s21, %s22
      %p33 = scmp.eq.s32.totalorder %s13, 0
      %p34 = por %p32, %p33
      %p35 = scmp.ne.s32.totalorder %s21, %s22
      %p36 = scmp.eq.s32.totalorder %s14, 3
      %p37 = por %p35, %p36
      %p39 = scmp.ne.s32.totalorder %s22, %s38
      %p40 = scmp.eq.s32.totalorder %s14, 0
      %p41 = por %p39, %p40
      %s43 = sadd.s32 %s42, 1
      %p46 = scmp.eq.s32.totalorder %s8, 3
      %p47 = scmp.ne.s32.totalorder %s42, %s44
      %p48 = scmp.eq.s32.totalorder %s8, 0
      %p49 = por %p47, %p48
      %p50 = scmp.ne.s32.totalorder %s42, %s44
      %p51 = scmp.eq.s32.totalorder %s13, 3
      %p52 = por %p50, %p51
      %p53 = scmp.ne.s32.totalorder %s44, %s45
      %p54 = scmp.eq.s32.totalorder %s13, 0
      %p55 = por %p53, %p54
      %p56 = scmp.ne.s32.totalorder %s44, %s45
      %p57 = scmp.eq.s32.totalorder %s14, 3
      %p58 = por %p56, %p57
      %p60 = scmp.ne.s32.totalorder %s45, %s59
      %p61 = scmp.eq.s32.totalorder %s14, 0
      %p62 = por %p60, %p61
      %s63 = ssub.s32 %s8, %s15
      %p64 = scmp.eq.s32.totalorder %s63, 0
      %s66 = sadd.s32 %s65, 1
      %s67 = scalar_select %p64, %s65, %s66
      %p70 = pneg %p64
      %p71 = scmp.eq.s32.totalorder %s8, 3
      %p72 = por %p70, %p71
      %p73 = scmp.ne.s32.totalorder %s65, %s68
      %p74 = scmp.eq.s32.totalorder %s8, 0
      %p75 = por %p73, %p74
      %p76 = scmp.ne.s32.totalorder %s65, %s68
      %p77 = scmp.eq.s32.totalorder %s13, 3
      %p78 = por %p76, %p77
      %p79 = scmp.ne.s32.totalorder %s68, %s69
      %p80 = scmp.eq.s32.totalorder %s13, 0
      %p81 = por %p79, %p80
      %p82 = scmp.ne.s32.totalorder %s68, %s69
      %p83 = scmp.eq.s32.totalorder %s14, 3
      %p84 = por %p82, %p83
      %p86 = scmp.ne.s32.totalorder %s69, %s85
      %p87 = scmp.eq.s32.totalorder %s14, 0
      %p88 = por %p86, %p87
      %p89 = scmp.le.s32.totalorder 1, %s8
      %p90 = scmp.lt.s32.totalorder %s8, 5
      %p91 = pnand %p89, %p90
      %p92 = pneg %p91
      // Predicated region
      $region9: #{generator_forward.5} parent=5 // pred_check
        _
      $region10: #{generator_forward.5} parent=5 // pred_check_branch
        %94 = sbr.rel (%p91) target = $region12
      $region11: #{generator_forward.5} parent=5 // pred_region
        %s95 = ssub.s32 %s8, 1
        // Predicated region
        $region13: #{generator_forward.5} parent=11 // pred_check
          %p96 = pneg %p55
        $region14: #{generator_forward.5} parent=11 // pred_check_branch
          %98 = sbr.rel (%p96) target = $region16
        $region15: #{generator_forward.5} parent=11 // pred_region
          _
        $region16: #{generator_forward.5} parent=11 // pred_fallthru
          _
      $region12: #{generator_forward.5} parent=5 // pred_fallthru
        _
      %p99 = scmp.lt.s32.totalorder %s8, 4
      // Predicated region
      $region17: #{generator_forward.5} parent=5 // pred_check
        %p100 = pneg %p99
      $region18: #{generator_forward.5} parent=5 // pred_check_branch
        %102 = sbr.rel (%p100) target = $region20
      $region19: #{generator_forward.5} parent=5 // pred_region
        // Predicated region
        $region21: #{generator_forward.5} parent=19 // pred_check
          %p103 = pneg %p28
        $region22: #{generator_forward.5} parent=19 // pred_check_branch
          %105 = sbr.rel (%p103) target = $region24
        $region23: #{generator_forward.5} parent=19 // pred_region
          %s106 = sand.u32 %s18, 1
          %s107 = sand.u32 %s18, 1
          %s108 = smul.addr %s107, 576
          %s109 = scalar_lea.vmem [#allocation2], %s108
          %s110 = smul.u32 16, %s8
          %s111 = ssub.s32 49, %s110
          %p112 = scmp.lt.s32.totalorder %s111, 16
          %s113 = scalar_select %p112, %s111, 16
          %s114 = smul.u32 576, %s113
          %p115 = scmp.ne.s32.totalorder 0, %s114
          %s116 = smul.addr %s110, 4
          %s117 = scalar_lea.vmem %s0, %s116
          // Predicated region
          $region25: #{generator_forward.5} parent=23 // pred_check
            %p118 = pneg %p115
          $region26: #{generator_forward.5} parent=23 // pred_check_branch
            %120 = sbr.rel (%p118) target = $region28
          $region27: #{generator_forward.5} parent=23 // pred_region
            // Predicated region
            $region29: #{generator_forward.5} parent=27 // pred_check
              _
            $region30: #{generator_forward.5} parent=27 // pred_check_branch
              %122 = sbr.rel target = $region32
            $region31: #{generator_forward.5} parent=27 // pred_region
              // Predicated region
              $region51: #{generator_forward.5} parent=31 // pred_check
                _
              $region52: #{generator_forward.5} parent=31 // pred_check_branch
                %330 = sbr.rel (0) target = $region54
              $region53: #{generator_forward.5} parent=31 // pred_region
                %s331 = sshrl.u32 %s113, 4
                // While loop
                $region55: #{generator_forward.5} parent=53 // loop_pre_header
                  _
                $region56: #{generator_forward.5} parent=53 // loop_header
                  %s333 = sphi 0, %s335
                  %p334 = scmp.ge.s32.totalorder %s333, %s331
                  %s338 = sphi 0, %s343
                  %s339 = sphi %s117, %s346
                  %s340 = sphi %s109, %s347
                $region57: #{generator_forward.5} parent=53 // loop_header_branch
                  %337 = sbr.rel (%p334) target = $region61
                $region58: #{generator_forward.5} parent=53 // loop_body
                  %s341 = sadd.s32 1, %s338
                  %p342 = scmp.ge.s32.totalorder %s341, %s331
                  %s343 = scalar_select %p342, 0, %s341
                  %s344 = smul.u32 %s343, 64
                  %s345 = smul.u32 %s343, 64
                  %s346 = scalar_lea.vmem %s117, %s344
                  %s347 = scalar_lea.vmem %s109, %s345 [#allocation2]
                $region59: #{generator_forward.5} parent=53 // loop_footer
                  %s335 = sadd.s32 %s333, 1
                $region60: #{generator_forward.5} parent=53 // loop_footer_branch
                  %332 = sbr.rel target = $region56
                $region61: #{generator_forward.5} parent=53 // loop_exit
                  _
                %s348 = sshrl.u32 %s113, 4
                %s349 = sand.u32 %s113, 15
                %s350 = smul.u32 %s348, 16
                %s351 = smul.u32 4, %s350
                %s352 = scalar_lea.vmem %s117, %s351
                %s353 = smul.u32 4, %s350
                %s354 = scalar_lea.vmem %s109, %s353 [#allocation2]
                // While loop
                $region62: #{generator_forward.5} parent=53 // loop_pre_header
                  _
                $region63: #{generator_forward.5} parent=53 // loop_header
                  %s356 = sphi 0, %s358
                  %p357 = scmp.ge.s32.totalorder %s356, %s349
                  %s361 = sphi 0, %s366
                  %s362 = sphi %s352, %s369
                  %s363 = sphi %s354, %s370
                $region64: #{generator_forward.5} parent=53 // loop_header_branch
                  %360 = sbr.rel (%p357) target = $region68
                $region65: #{generator_forward.5} parent=53 // loop_body
                  %s364 = sadd.s32 1, %s361
                  %p365 = scmp.ge.s32.totalorder %s364, %s349
                  %s366 = scalar_select %p365, 0, %s364
                  %s367 = smul.u32 %s366, 4
                  %s368 = smul.u32 %s366, 4
                  %s369 = scalar_lea.vmem %s352, %s367
                  %s370 = scalar_lea.vmem %s354, %s368 [#allocation2]
                $region66: #{generator_forward.5} parent=53 // loop_footer
                  %s358 = sadd.s32 %s356, 1
                $region67: #{generator_forward.5} parent=53 // loop_footer_branch
                  %355 = sbr.rel target = $region63
                $region68: #{generator_forward.5} parent=53 // loop_exit
                  _
                %s372 = ssub.s32 16, 1
                %s373 = sshrl.u32 %s113, 3
                // While loop
                $region69: #{generator_forward.5} parent=53 // loop_pre_header
                  _
                $region70: #{generator_forward.5} parent=53 // loop_header
                  %s375 = sphi 0, %s377
                  %p376 = scmp.ge.s32.totalorder %s375, %s373
                  %s380 = sphi 0, %s529
                  %s381 = sphi %s117, %s532
                  %s382 = sphi %s109, %s533
                $region71: #{generator_forward.5} parent=53 // loop_header_branch
                  %379 = sbr.rel (%p376) target = $region75
                $region72: #{generator_forward.5} parent=53 // loop_body
                  %v383 = vld [vmem:[%s381] sm:%s372]
                  %384 = vst [vmem:[%s382] sm:%s372] %v383
                  %v385 = vld [vmem:[%s381 + $0x4] sm:%s372]
                  %386 = vst [vmem:[%s382 + $0x4] sm:%s372] %v385
                  %v387 = vld [vmem:[%s381 + $0x8] sm:%s372]
                  %388 = vst [vmem:[%s382 + $0x8] sm:%s372] %v387
                  %v389 = vld [vmem:[%s381 + $0xc] sm:%s372]
                  %390 = vst [vmem:[%s382 + $0xc] sm:%s372] %v389
                  %v391 = vld [vmem:[%s381 + $0x10] sm:%s372]
                  %392 = vst [vmem:[%s382 + $0x10] sm:%s372] %v391
                  %v393 = vld [vmem:[%s381 + $0x14] sm:%s372]
                  %394 = vst [vmem:[%s382 + $0x14] sm:%s372] %v393
                  %v395 = vld [vmem:[%s381 + $0x18] sm:%s372]
                  %396 = vst [vmem:[%s382 + $0x18] sm:%s372] %v395
                  %v397 = vld [vmem:[%s381 + $0x1c] sm:%s372]
                  %398 = vst [vmem:[%s382 + $0x1c] sm:%s372] %v397
                  %v399 = vld [vmem:[%s381 + $0xc4] sm:%s372]
                  %400 = vst [vmem:[%s382 + $0x40] sm:%s372] %v399
                  %v401 = vld [vmem:[%s381 + $0xc8] sm:%s372]
                  %402 = vst [vmem:[%s382 + $0x44] sm:%s372] %v401
                  %v403 = vld [vmem:[%s381 + $0xcc] sm:%s372]
                  %404 = vst [vmem:[%s382 + $0x48] sm:%s372] %v403
                  %v405 = vld [vmem:[%s381 + $0xd0] sm:%s372]
                  %406 = vst [vmem:[%s382 + $0x4c] sm:%s372] %v405
                  %v407 = vld [vmem:[%s381 + $0xd4] sm:%s372]
                  %408 = vst [vmem:[%s382 + $0x50] sm:%s372] %v407
                  %v409 = vld [vmem:[%s381 + $0xd8] sm:%s372]
                  %410 = vst [vmem:[%s382 + $0x54] sm:%s372] %v409
                  %v411 = vld [vmem:[%s381 + $0xdc] sm:%s372]
                  %412 = vst [vmem:[%s382 + $0x58] sm:%s372] %v411
                  %v413 = vld [vmem:[%s381 + $0xe0] sm:%s372]
                  %414 = vst [vmem:[%s382 + $0x5c] sm:%s372] %v413
                  %v415 = vld [vmem:[%s381 + $0x188] sm:%s372]
                  %416 = vst [vmem:[%s382 + $0x80] sm:%s372] %v415
                  %v417 = vld [vmem:[%s381 + $0x18c] sm:%s372]
                  %418 = vst [vmem:[%s382 + $0x84] sm:%s372] %v417
                  %v419 = vld [vmem:[%s381 + $0x190] sm:%s372]
                  %420 = vst [vmem:[%s382 + $0x88] sm:%s372] %v419
                  %v421 = vld [vmem:[%s381 + $0x194] sm:%s372]
                  %422 = vst [vmem:[%s382 + $0x8c] sm:%s372] %v421
                  %v423 = vld [vmem:[%s381 + $0x198] sm:%s372]
                  %424 = vst [vmem:[%s382 + $0x90] sm:%s372] %v423
                  %v425 = vld [vmem:[%s381 + $0x19c] sm:%s372]
                  %426 = vst [vmem:[%s382 + $0x94] sm:%s372] %v425
                  %v427 = vld [vmem:[%s381 + $0x1a0] sm:%s372]
                  %428 = vst [vmem:[%s382 + $0x98] sm:%s372] %v427
                  %v429 = vld [vmem:[%s381 + $0x1a4] sm:%s372]
                  %430 = vst [vmem:[%s382 + $0x9c] sm:%s372] %v429
                  %v431 = vld [vmem:[%s381 + $0x24c] sm:%s372]
                  %432 = vst [vmem:[%s382 + $0xc0] sm:%s372] %v431
                  %v433 = vld [vmem:[%s381 + $0x250] sm:%s372]
                  %434 = vst [vmem:[%s382 + $0xc4] sm:%s372] %v433
                  %v435 = vld [vmem:[%s381 + $0x254] sm:%s372]
                  %436 = vst [vmem:[%s382 + $0xc8] sm:%s372] %v435
                  %v437 = vld [vmem:[%s381 + $0x258] sm:%s372]
                  %438 = vst [vmem:[%s382 + $0xcc] sm:%s372] %v437
                  %v439 = vld [vmem:[%s381 + $0x25c] sm:%s372]
                  %440 = vst [vmem:[%s382 + $0xd0] sm:%s372] %v439
                  %v441 = vld [vmem:[%s381 + $0x260] sm:%s372]
                  %442 = vst [vmem:[%s382 + $0xd4] sm:%s372] %v441
                  %v443 = vld [vmem:[%s381 + $0x264] sm:%s372]
                  %444 = vst [vmem:[%s382 + $0xd8] sm:%s372] %v443
                  %v445 = vld [vmem:[%s381 + $0x268] sm:%s372]
                  %446 = vst [vmem:[%s382 + $0xdc] sm:%s372] %v445
                  %v447 = vld [vmem:[%s381 + $0x310] sm:%s372]
                  %448 = vst [vmem:[%s382 + $0x100] sm:%s372] %v447
                  %v449 = vld [vmem:[%s381 + $0x314] sm:%s372]
                  %450 = vst [vmem:[%s382 + $0x104] sm:%s372] %v449
                  %v451 = vld [vmem:[%s381 + $0x318] sm:%s372]
                  %452 = vst [vmem:[%s382 + $0x108] sm:%s372] %v451
                  %v453 = vld [vmem:[%s381 + $0x31c] sm:%s372]
                  %454 = vst [vmem:[%s382 + $0x10c] sm:%s372] %v453
                  %v455 = vld [vmem:[%s381 + $0x320] sm:%s372]
                  %456 = vst [vmem:[%s382 + $0x110] sm:%s372] %v455
                  %v457 = vld [vmem:[%s381 + $0x324] sm:%s372]
                  %458 = vst [vmem:[%s382 + $0x114] sm:%s372] %v457
                  %v459 = vld [vmem:[%s381 + $0x328] sm:%s372]
                  %460 = vst [vmem:[%s382 + $0x118] sm:%s372] %v459
                  %v461 = vld [vmem:[%s381 + $0x32c] sm:%s372]
                  %462 = vst [vmem:[%s382 + $0x11c] sm:%s372] %v461
                  %v463 = vld [vmem:[%s381 + $0x3d4] sm:%s372]
                  %464 = vst [vmem:[%s382 + $0x140] sm:%s372] %v463
                  %v465 = vld [vmem:[%s381 + $0x3d8] sm:%s372]
                  %466 = vst [vmem:[%s382 + $0x144] sm:%s372] %v465
                  %v467 = vld [vmem:[%s381 + $0x3dc] sm:%s372]
                  %468 = vst [vmem:[%s382 + $0x148] sm:%s372] %v467
                  %v469 = vld [vmem:[%s381 + $0x3e0] sm:%s372]
                  %470 = vst [vmem:[%s382 + $0x14c] sm:%s372] %v469
                  %v471 = vld [vmem:[%s381 + $0x3e4] sm:%s372]
                  %472 = vst [vmem:[%s382 + $0x150] sm:%s372] %v471
                  %v473 = vld [vmem:[%s381 + $0x3e8] sm:%s372]
                  %474 = vst [vmem:[%s382 + $0x154] sm:%s372] %v473
                  %v475 = vld [vmem:[%s381 + $0x3ec] sm:%s372]
                  %476 = vst [vmem:[%s382 + $0x158] sm:%s372] %v475
                  %v477 = vld [vmem:[%s381 + $0x3f0] sm:%s372]
                  %478 = vst [vmem:[%s382 + $0x15c] sm:%s372] %v477
                  %v479 = vld [vmem:[%s381 + $0x498] sm:%s372]
                  %480 = vst [vmem:[%s382 + $0x180] sm:%s372] %v479
                  %v481 = vld [vmem:[%s381 + $0x49c] sm:%s372]
                  %482 = vst [vmem:[%s382 + $0x184] sm:%s372] %v481
                  %v483 = vld [vmem:[%s381 + $0x4a0] sm:%s372]
                  %484 = vst [vmem:[%s382 + $0x188] sm:%s372] %v483
                  %v485 = vld [vmem:[%s381 + $0x4a4] sm:%s372]
                  %486 = vst [vmem:[%s382 + $0x18c] sm:%s372] %v485
                  %v487 = vld [vmem:[%s381 + $0x4a8] sm:%s372]
                  %488 = vst [vmem:[%s382 + $0x190] sm:%s372] %v487
                  %v489 = vld [vmem:[%s381 + $0x4ac] sm:%s372]
                  %490 = vst [vmem:[%s382 + $0x194] sm:%s372] %v489
                  %v491 = vld [vmem:[%s381 + $0x4b0] sm:%s372]
                  %492 = vst [vmem:[%s382 + $0x198] sm:%s372] %v491
                  %v493 = vld [vmem:[%s381 + $0x4b4] sm:%s372]
                  %494 = vst [vmem:[%s382 + $0x19c] sm:%s372] %v493
                  %v495 = vld [vmem:[%s381 + $0x55c] sm:%s372]
                  %496 = vst [vmem:[%s382 + $0x1c0] sm:%s372] %v495
                  %v497 = vld [vmem:[%s381 + $0x560] sm:%s372]
                  %498 = vst [vmem:[%s382 + $0x1c4] sm:%s372] %v497
                  %v499 = vld [vmem:[%s381 + $0x564] sm:%s372]
                  %500 = vst [vmem:[%s382 + $0x1c8] sm:%s372] %v499
                  %v501 = vld [vmem:[%s381 + $0x568] sm:%s372]
                  %502 = vst [vmem:[%s382 + $0x1cc] sm:%s372] %v501
                  %v503 = vld [vmem:[%s381 + $0x56c] sm:%s372]
                  %504 = vst [vmem:[%s382 + $0x1d0] sm:%s372] %v503
                  %v505 = vld [vmem:[%s381 + $0x570] sm:%s372]
                  %506 = vst [vmem:[%s382 + $0x1d4] sm:%s372] %v505
                  %v507 = vld [vmem:[%s381 + $0x574] sm:%s372]
                  %508 = vst [vmem:[%s382 + $0x1d8] sm:%s372] %v507
                  %v509 = vld [vmem:[%s381 + $0x578] sm:%s372]
                  %510 = vst [vmem:[%s382 + $0x1dc] sm:%s372] %v509
                  %v511 = vld [vmem:[%s381 + $0x620] sm:%s372]
                  %512 = vst [vmem:[%s382 + $0x200] sm:%s372] %v511
                  %v513 = vld [vmem:[%s381 + $0x624] sm:%s372]
                  %514 = vst [vmem:[%s382 + $0x204] sm:%s372] %v513
                  %v515 = vld [vmem:[%s381 + $0x628] sm:%s372]
                  %516 = vst [vmem:[%s382 + $0x208] sm:%s372] %v515
                  %v517 = vld [vmem:[%s381 + $0x62c] sm:%s372]
                  %518 = vst [vmem:[%s382 + $0x20c] sm:%s372] %v517
                  %v519 = vld [vmem:[%s381 + $0x630] sm:%s372]
                  %520 = vst [vmem:[%s382 + $0x210] sm:%s372] %v519
                  %v521 = vld [vmem:[%s381 + $0x634] sm:%s372]
                  %522 = vst [vmem:[%s382 + $0x214] sm:%s372] %v521
                  %v523 = vld [vmem:[%s381 + $0x638] sm:%s372]
                  %524 = vst [vmem:[%s382 + $0x218] sm:%s372] %v523
                  %v525 = vld [vmem:[%s381 + $0x63c] sm:%s372]
                  %526 = vst [vmem:[%s382 + $0x21c] sm:%s372] %v525
                  %s527 = sadd.s32 1, %s380
                  %p528 = scmp.ge.s32.totalorder %s527, %s373
                  %s529 = scalar_select %p528, 0, %s527
                  %s530 = smul.u32 %s529, 32
                  %s531 = smul.u32 %s529, 32
                  %s532 = scalar_lea.vmem %s117, %s530
                  %s533 = scalar_lea.vmem %s109, %s531 [#allocation2]
                $region73: #{generator_forward.5} parent=53 // loop_footer
                  %s377 = sadd.s32 %s375, 1
                $region74: #{generator_forward.5} parent=53 // loop_footer_branch
                  %374 = sbr.rel target = $region70
                $region75: #{generator_forward.5} parent=53 // loop_exit
                  _
                %s534 = sshrl.u32 %s113, 3
                %s535 = sand.u32 %s113, 7
                %s536 = smul.u32 %s534, 8
                %s537 = smul.u32 4, %s536
                %s538 = scalar_lea.vmem %s117, %s537
                %s539 = smul.u32 4, %s536
                %s540 = scalar_lea.vmem %s109, %s539 [#allocation2]
                // While loop
                $region76: #{generator_forward.5} parent=53 // loop_pre_header
                  _
                $region77: #{generator_forward.5} parent=53 // loop_header
                  %s542 = sphi 0, %s544
                  %p543 = scmp.ge.s32.totalorder %s542, %s535
                  %s547 = sphi 0, %s570
                  %s548 = sphi %s538, %s573
                  %s549 = sphi %s540, %s574
                $region78: #{generator_forward.5} parent=53 // loop_header_branch
                  %546 = sbr.rel (%p543) target = $region82
                $region79: #{generator_forward.5} parent=53 // loop_body
                  %v550 = vld [vmem:[%s548] sm:%s372]
                  %551 = vst [vmem:[%s549] sm:%s372] %v550
                  %v552 = vld [vmem:[%s548 + $0xc4] sm:%s372]
                  %553 = vst [vmem:[%s549 + $0x40] sm:%s372] %v552
                  %v554 = vld [vmem:[%s548 + $0x188] sm:%s372]
                  %555 = vst [vmem:[%s549 + $0x80] sm:%s372] %v554
                  %v556 = vld [vmem:[%s548 + $0x24c] sm:%s372]
                  %557 = vst [vmem:[%s549 + $0xc0] sm:%s372] %v556
                  %v558 = vld [vmem:[%s548 + $0x310] sm:%s372]
                  %559 = vst [vmem:[%s549 + $0x100] sm:%s372] %v558
                  %v560 = vld [vmem:[%s548 + $0x3d4] sm:%s372]
                  %561 = vst [vmem:[%s549 + $0x140] sm:%s372] %v560
                  %v562 = vld [vmem:[%s548 + $0x498] sm:%s372]
                  %563 = vst [vmem:[%s549 + $0x180] sm:%s372] %v562
                  %v564 = vld [vmem:[%s548 + $0x55c] sm:%s372]
                  %565 = vst [vmem:[%s549 + $0x1c0] sm:%s372] %v564
                  %v566 = vld [vmem:[%s548 + $0x620] sm:%s372]
                  %567 = vst [vmem:[%s549 + $0x200] sm:%s372] %v566
                  %s568 = sadd.s32 1, %s547
                  %p569 = scmp.ge.s32.totalorder %s568, %s535
                  %s570 = scalar_select %p569, 0, %s568
                  %s571 = smul.u32 %s570, 4
                  %s572 = smul.u32 %s570, 4
                  %s573 = scalar_lea.vmem %s538, %s571
                  %s574 = scalar_lea.vmem %s540, %s572 [#allocation2]
                $region80: #{generator_forward.5} parent=53 // loop_footer
                  %s544 = sadd.s32 %s542, 1
                $region81: #{generator_forward.5} parent=53 // loop_footer_branch
                  %541 = sbr.rel target = $region77
                $region82: #{generator_forward.5} parent=53 // loop_exit
                  _
              $region54: #{generator_forward.5} parent=31 // pred_fallthru
                _
            $region32: #{generator_forward.5} parent=27 // pred_fallthru
              _
            // Predicated region
            $region33: #{generator_forward.5} parent=27 // pred_check
              _
            $region34: #{generator_forward.5} parent=27 // pred_check_branch
              %124 = sbr.rel (0) target = $region36
            $region35: #{generator_forward.5} parent=27 // pred_region
              %s126 = ssub.s32 16, 1
              %s127 = sshrl.u32 %s113, 3
              // While loop
              $region37: #{generator_forward.5} parent=35 // loop_pre_header
                _
              $region38: #{generator_forward.5} parent=35 // loop_header
                %s129 = sphi 0, %s131
                %p130 = scmp.ge.s32.totalorder %s129, %s127
                %s134 = sphi 0, %s283
                %s135 = sphi %s117, %s286
                %s136 = sphi %s109, %s287
              $region39: #{generator_forward.5} parent=35 // loop_header_branch
                %133 = sbr.rel (%p130) target = $region43
              $region40: #{generator_forward.5} parent=35 // loop_body
                %v137 = vld [vmem:[%s135] sm:%s126]
                %138 = vst [vmem:[%s136] sm:%s126] %v137
                %v139 = vld [vmem:[%s135 + $0x4] sm:%s126]
                %140 = vst [vmem:[%s136 + $0x4] sm:%s126] %v139
                %v141 = vld [vmem:[%s135 + $0x8] sm:%s126]
                %142 = vst [vmem:[%s136 + $0x8] sm:%s126] %v141
                %v143 = vld [vmem:[%s135 + $0xc] sm:%s126]
                %144 = vst [vmem:[%s136 + $0xc] sm:%s126] %v143
                %v145 = vld [vmem:[%s135 + $0x10] sm:%s126]
                %146 = vst [vmem:[%s136 + $0x10] sm:%s126] %v145
                %v147 = vld [vmem:[%s135 + $0x14] sm:%s126]
                %148 = vst [vmem:[%s136 + $0x14] sm:%s126] %v147
                %v149 = vld [vmem:[%s135 + $0x18] sm:%s126]
                %150 = vst [vmem:[%s136 + $0x18] sm:%s126] %v149
                %v151 = vld [vmem:[%s135 + $0x1c] sm:%s126]
                %152 = vst [vmem:[%s136 + $0x1c] sm:%s126] %v151
                %v153 = vld [vmem:[%s135 + $0xc4] sm:%s126]
                %154 = vst [vmem:[%s136 + $0x40] sm:%s126] %v153
                %v155 = vld [vmem:[%s135 + $0xc8] sm:%s126]
                %156 = vst [vmem:[%s136 + $0x44] sm:%s126] %v155
                %v157 = vld [vmem:[%s135 + $0xcc] sm:%s126]
                %158 = vst [vmem:[%s136 + $0x48] sm:%s126] %v157
                %v159 = vld [vmem:[%s135 + $0xd0] sm:%s126]
                %160 = vst [vmem:[%s136 + $0x4c] sm:%s126] %v159
                %v161 = vld [vmem:[%s135 + $0xd4] sm:%s126]
                %162 = vst [vmem:[%s136 + $0x50] sm:%s126] %v161
                %v163 = vld [vmem:[%s135 + $0xd8] sm:%s126]
                %164 = vst [vmem:[%s136 + $0x54] sm:%s126] %v163
                %v165 = vld [vmem:[%s135 + $0xdc] sm:%s126]
                %166 = vst [vmem:[%s136 + $0x58] sm:%s126] %v165
                %v167 = vld [vmem:[%s135 + $0xe0] sm:%s126]
                %168 = vst [vmem:[%s136 + $0x5c] sm:%s126] %v167
                %v169 = vld [vmem:[%s135 + $0x188] sm:%s126]
                %170 = vst [vmem:[%s136 + $0x80] sm:%s126] %v169
                %v171 = vld [vmem:[%s135 + $0x18c] sm:%s126]
                %172 = vst [vmem:[%s136 + $0x84] sm:%s126] %v171
                %v173 = vld [vmem:[%s135 + $0x190] sm:%s126]
                %174 = vst [vmem:[%s136 + $0x88] sm:%s126] %v173
                %v175 = vld [vmem:[%s135 + $0x194] sm:%s126]
                %176 = vst [vmem:[%s136 + $0x8c] sm:%s126] %v175
                %v177 = vld [vmem:[%s135 + $0x198] sm:%s126]
                %178 = vst [vmem:[%s136 + $0x90] sm:%s126] %v177
                %v179 = vld [vmem:[%s135 + $0x19c] sm:%s126]
                %180 = vst [vmem:[%s136 + $0x94] sm:%s126] %v179
                %v181 = vld [vmem:[%s135 + $0x1a0] sm:%s126]
                %182 = vst [vmem:[%s136 + $0x98] sm:%s126] %v181
                %v183 = vld [vmem:[%s135 + $0x1a4] sm:%s126]
                %184 = vst [vmem:[%s136 + $0x9c] sm:%s126] %v183
                %v185 = vld [vmem:[%s135 + $0x24c] sm:%s126]
                %186 = vst [vmem:[%s136 + $0xc0] sm:%s126] %v185
                %v187 = vld [vmem:[%s135 + $0x250] sm:%s126]
                %188 = vst [vmem:[%s136 + $0xc4] sm:%s126] %v187
                %v189 = vld [vmem:[%s135 + $0x254] sm:%s126]
                %190 = vst [vmem:[%s136 + $0xc8] sm:%s126] %v189
                %v191 = vld [vmem:[%s135 + $0x258] sm:%s126]
                %192 = vst [vmem:[%s136 + $0xcc] sm:%s126] %v191
                %v193 = vld [vmem:[%s135 + $0x25c] sm:%s126]
                %194 = vst [vmem:[%s136 + $0xd0] sm:%s126] %v193
                %v195 = vld [vmem:[%s135 + $0x260] sm:%s126]
                %196 = vst [vmem:[%s136 + $0xd4] sm:%s126] %v195
                %v197 = vld [vmem:[%s135 + $0x264] sm:%s126]
                %198 = vst [vmem:[%s136 + $0xd8] sm:%s126] %v197
                %v199 = vld [vmem:[%s135 + $0x268] sm:%s126]
                %200 = vst [vmem:[%s136 + $0xdc] sm:%s126] %v199
                %v201 = vld [vmem:[%s135 + $0x310] sm:%s126]
                %202 = vst [vmem:[%s136 + $0x100] sm:%s126] %v201
                %v203 = vld [vmem:[%s135 + $0x314] sm:%s126]
                %204 = vst [vmem:[%s136 + $0x104] sm:%s126] %v203
                %v205 = vld [vmem:[%s135 + $0x318] sm:%s126]
                %206 = vst [vmem:[%s136 + $0x108] sm:%s126] %v205
                %v207 = vld [vmem:[%s135 + $0x31c] sm:%s126]
                %208 = vst [vmem:[%s136 + $0x10c] sm:%s126] %v207
                %v209 = vld [vmem:[%s135 + $0x320] sm:%s126]
                %210 = vst [vmem:[%s136 + $0x110] sm:%s126] %v209
                %v211 = vld [vmem:[%s135 + $0x324] sm:%s126]
                %212 = vst [vmem:[%s136 + $0x114] sm:%s126] %v211
                %v213 = vld [vmem:[%s135 + $0x328] sm:%s126]
                %214 = vst [vmem:[%s136 + $0x118] sm:%s126] %v213
                %v215 = vld [vmem:[%s135 + $0x32c] sm:%s126]
                %216 = vst [vmem:[%s136 + $0x11c] sm:%s126] %v215
                %v217 = vld [vmem:[%s135 + $0x3d4] sm:%s126]
                %218 = vst [vmem:[%s136 + $0x140] sm:%s126] %v217
                %v219 = vld [vmem:[%s135 + $0x3d8] sm:%s126]
                %220 = vst [vmem:[%s136 + $0x144] sm:%s126] %v219
                %v221 = vld [vmem:[%s135 + $0x3dc] sm:%s126]
                %222 = vst [vmem:[%s136 + $0x148] sm:%s126] %v221
                %v223 = vld [vmem:[%s135 + $0x3e0] sm:%s126]
                %224 = vst [vmem:[%s136 + $0x14c] sm:%s126] %v223
                %v225 = vld [vmem:[%s135 + $0x3e4] sm:%s126]
                %226 = vst [vmem:[%s136 + $0x150] sm:%s126] %v225
                %v227 = vld [vmem:[%s135 + $0x3e8] sm:%s126]
                %228 = vst [vmem:[%s136 + $0x154] sm:%s126] %v227
                %v229 = vld [vmem:[%s135 + $0x3ec] sm:%s126]
                %230 = vst [vmem:[%s136 + $0x158] sm:%s126] %v229
                %v231 = vld [vmem:[%s135 + $0x3f0] sm:%s126]
                %232 = vst [vmem:[%s136 + $0x15c] sm:%s126] %v231
                %v233 = vld [vmem:[%s135 + $0x498] sm:%s126]
                %234 = vst [vmem:[%s136 + $0x180] sm:%s126] %v233
                %v235 = vld [vmem:[%s135 + $0x49c] sm:%s126]
                %236 = vst [vmem:[%s136 + $0x184] sm:%s126] %v235
                %v237 = vld [vmem:[%s135 + $0x4a0] sm:%s126]
                %238 = vst [vmem:[%s136 + $0x188] sm:%s126] %v237
                %v239 = vld [vmem:[%s135 + $0x4a4] sm:%s126]
                %240 = vst [vmem:[%s136 + $0x18c] sm:%s126] %v239
                %v241 = vld [vmem:[%s135 + $0x4a8] sm:%s126]
                %242 = vst [vmem:[%s136 + $0x190] sm:%s126] %v241
                %v243 = vld [vmem:[%s135 + $0x4ac] sm:%s126]
                %244 = vst [vmem:[%s136 + $0x194] sm:%s126] %v243
                %v245 = vld [vmem:[%s135 + $0x4b0] sm:%s126]
                %246 = vst [vmem:[%s136 + $0x198] sm:%s126] %v245
                %v247 = vld [vmem:[%s135 + $0x4b4] sm:%s126]
                %248 = vst [vmem:[%s136 + $0x19c] sm:%s126] %v247
                %v249 = vld [vmem:[%s135 + $0x55c] sm:%s126]
                %250 = vst [vmem:[%s136 + $0x1c0] sm:%s126] %v249
                %v251 = vld [vmem:[%s135 + $0x560] sm:%s126]
                %252 = vst [vmem:[%s136 + $0x1c4] sm:%s126] %v251
                %v253 = vld [vmem:[%s135 + $0x564] sm:%s126]
                %254 = vst [vmem:[%s136 + $0x1c8] sm:%s126] %v253
                %v255 = vld [vmem:[%s135 + $0x568] sm:%s126]
                %256 = vst [vmem:[%s136 + $0x1cc] sm:%s126] %v255
                %v257 = vld [vmem:[%s135 + $0x56c] sm:%s126]
                %258 = vst [vmem:[%s136 + $0x1d0] sm:%s126] %v257
                %v259 = vld [vmem:[%s135 + $0x570] sm:%s126]
                %260 = vst [vmem:[%s136 + $0x1d4] sm:%s126] %v259
                %v261 = vld [vmem:[%s135 + $0x574] sm:%s126]
                %262 = vst [vmem:[%s136 + $0x1d8] sm:%s126] %v261
                %v263 = vld [vmem:[%s135 + $0x578] sm:%s126]
                %264 = vst [vmem:[%s136 + $0x1dc] sm:%s126] %v263
                %v265 = vld [vmem:[%s135 + $0x620] sm:%s126]
                %266 = vst [vmem:[%s136 + $0x200] sm:%s126] %v265
                %v267 = vld [vmem:[%s135 + $0x624] sm:%s126]
                %268 = vst [vmem:[%s136 + $0x204] sm:%s126] %v267
                %v269 = vld [vmem:[%s135 + $0x628] sm:%s126]
                %270 = vst [vmem:[%s136 + $0x208] sm:%s126] %v269
                %v271 = vld [vmem:[%s135 + $0x62c] sm:%s126]
                %272 = vst [vmem:[%s136 + $0x20c] sm:%s126] %v271
                %v273 = vld [vmem:[%s135 + $0x630] sm:%s126]
                %274 = vst [vmem:[%s136 + $0x210] sm:%s126] %v273
                %v275 = vld [vmem:[%s135 + $0x634] sm:%s126]
                %276 = vst [vmem:[%s136 + $0x214] sm:%s126] %v275
                %v277 = vld [vmem:[%s135 + $0x638] sm:%s126]
                %278 = vst [vmem:[%s136 + $0x218] sm:%s126] %v277
                %v279 = vld [vmem:[%s135 + $0x63c] sm:%s126]
                %280 = vst [vmem:[%s136 + $0x21c] sm:%s126] %v279
                %s281 = sadd.s32 1, %s134
                %p282 = scmp.ge.s32.totalorder %s281, %s127
                %s283 = scalar_select %p282, 0, %s281
                %s284 = smul.u32 %s283, 32
                %s285 = smul.u32 %s283, 32
                %s286 = scalar_lea.vmem %s117, %s284
                %s287 = scalar_lea.vmem %s109, %s285 [#allocation2]
              $region41: #{generator_forward.5} parent=35 // loop_footer
                %s131 = sadd.s32 %s129, 1
              $region42: #{generator_forward.5} parent=35 // loop_footer_branch
                %128 = sbr.rel target = $region38
              $region43: #{generator_forward.5} parent=35 // loop_exit
                _
              %s288 = sshrl.u32 %s113, 3
              %s289 = sand.u32 %s113, 7
              %s290 = smul.u32 %s288, 8
              %s291 = smul.u32 4, %s290
              %s292 = scalar_lea.vmem %s117, %s291
              %s293 = smul.u32 4, %s290
              %s294 = scalar_lea.vmem %s109, %s293 [#allocation2]
              // While loop
              $region44: #{generator_forward.5} parent=35 // loop_pre_header
                _
              $region45: #{generator_forward.5} parent=35 // loop_header
                %s296 = sphi 0, %s298
                %p297 = scmp.ge.s32.totalorder %s296, %s289
                %s301 = sphi 0, %s324
                %s302 = sphi %s292, %s327
                %s303 = sphi %s294, %s328
              $region46: #{generator_forward.5} parent=35 // loop_header_branch
                %300 = sbr.rel (%p297) target = $region50
              $region47: #{generator_forward.5} parent=35 // loop_body
                %v304 = vld [vmem:[%s302] sm:%s126]
                %305 = vst [vmem:[%s303] sm:%s126] %v304
                %v306 = vld [vmem:[%s302 + $0xc4] sm:%s126]
                %307 = vst [vmem:[%s303 + $0x40] sm:%s126] %v306
                %v308 = vld [vmem:[%s302 + $0x188] sm:%s126]
                %309 = vst [vmem:[%s303 + $0x80] sm:%s126] %v308
                %v310 = vld [vmem:[%s302 + $0x24c] sm:%s126]
                %311 = vst [vmem:[%s303 + $0xc0] sm:%s126] %v310
                %v312 = vld [vmem:[%s302 + $0x310] sm:%s126]
                %313 = vst [vmem:[%s303 + $0x100] sm:%s126] %v312
                %v314 = vld [vmem:[%s302 + $0x3d4] sm:%s126]
                %315 = vst [vmem:[%s303 + $0x140] sm:%s126] %v314
                %v316 = vld [vmem:[%s302 + $0x498] sm:%s126]
                %317 = vst [vmem:[%s303 + $0x180] sm:%s126] %v316
                %v318 = vld [vmem:[%s302 + $0x55c] sm:%s126]
                %319 = vst [vmem:[%s303 + $0x1c0] sm:%s126] %v318
                %v320 = vld [vmem:[%s302 + $0x620] sm:%s126]
                %321 = vst [vmem:[%s303 + $0x200] sm:%s126] %v320
                %s322 = sadd.s32 1, %s301
                %p323 = scmp.ge.s32.totalorder %s322, %s289
                %s324 = scalar_select %p323, 0, %s322
                %s325 = smul.u32 %s324, 4
                %s326 = smul.u32 %s324, 4
                %s327 = scalar_lea.vmem %s292, %s325
                %s328 = scalar_lea.vmem %s294, %s326 [#allocation2]
              $region48: #{generator_forward.5} parent=35 // loop_footer
                %s298 = sadd.s32 %s296, 1
              $region49: #{generator_forward.5} parent=35 // loop_footer_branch
                %295 = sbr.rel target = $region45
              $region50: #{generator_forward.5} parent=35 // loop_exit
                _
            $region36: #{generator_forward.5} parent=27 // pred_fallthru
              _
          $region28: #{generator_forward.5} parent=23 // pred_fallthru
            _
          %575 = vnop
        $region24: #{generator_forward.5} parent=19 // pred_fallthru
          _
      $region20: #{generator_forward.5} parent=5 // pred_fallthru
        _
      %p576 = scmp.le.s32.totalorder 1, %s8
      %p577 = scmp.lt.s32.totalorder %s8, 5
      %p578 = pnand %p576, %p577
      %p579 = pneg %p578
      // Predicated region
      $region83: #{generator_forward.5} parent=5 // pred_check
        _
      $region84: #{generator_forward.5} parent=5 // pred_check_branch
        %581 = sbr.rel (%p578) target = $region86
      $region85: #{generator_forward.5} parent=5 // pred_region
        %s582 = ssub.s32 %s8, 1
        %s583 = sand.u32 %s21, 1
        %s584 = sand.u32 %s21, 1
        %s585 = smul.addr %s584, 576
        %s586 = scalar_lea.vmem [#allocation2], %s585
        // Predicated region
        $region87: #{generator_forward.5} parent=85 // pred_check
          %p587 = pneg %p34
        $region88: #{generator_forward.5} parent=85 // pred_check_branch
          %589 = sbr.rel (%p587) target = $region90
        $region89: #{generator_forward.5} parent=85 // pred_region
          _
        $region90: #{generator_forward.5} parent=85 // pred_fallthru
          _
        %s590 = sand.u32 %s21, 1
        %s591 = sand.u32 %s21, 1
        %s592 = smul.addr %s591, 576
        %s593 = scalar_lea.vmem [#allocation2], %s592
        %p594 = pneg %p34
        %p595 = pneg %p31
        %p596 = pneg %p55
        %p597 = pneg %p52
        %p598 = pneg %p81
        %p599 = pneg %p78
        %s600 = sand.u32 %s68, 1
        %s601 = sand.u32 %s68, 1
        %s602 = smul.addr %s601, 64
        %s603 = scalar_lea.vmem [#allocation3], %s602
        %s604 = smul.u32 16, %s13
        %s605 = ssub.s32 49, %s604
        %p606 = scmp.lt.s32.totalorder %s605, 16
        %s607 = scalar_select %p606, %s605, 16
        %s608 = smul.u32 576, %s607
        %s609 = smul.u32 16, %s13
        %s610 = ssub.s32 49, %s609
        %p611 = scmp.lt.s32.totalorder %s610, 16
        %s612 = scalar_select %p611, %s610, 16
        %s613 = smul.u32 64, %s612
        %v615 = vld [vmem:[%s586] sm:$0xf]
        %v616 = vld [vmem:[%s586 + $0x4] sm:$0xf]
        %v617 = vld [vmem:[%s586 + $0x8] sm:$0xf]
        %v618 = vld [vmem:[%s586 + $0xc] sm:$0xf]
        %v619 = vld [vmem:[%s586 + $0x10] sm:$0xf]
        %v620 = vld [vmem:[%s586 + $0x14] sm:$0xf]
        %v621 = vld [vmem:[%s586 + $0x18] sm:$0xf]
        %v622 = vld [vmem:[%s586 + $0x1c] sm:$0xf]
        %v623 = vld [vmem:[%s586 + $0x20] sm:$0xf]
        %v624 = vld [vmem:[%s586 + $0x24] sm:$0xf]
        %v625 = vld [vmem:[%s586 + $0x28] sm:$0xf]
        %v626 = vld [vmem:[%s586 + $0x2c] sm:$0xf]
        %v627 = vld [vmem:[%s586 + $0x30] sm:$0xf]
        %v628 = vld [vmem:[%s586 + $0x34] sm:$0xf]
        %v629 = vld [vmem:[%s586 + $0x38] sm:$0xf]
        %v630 = vld [vmem:[%s586 + $0x3c] sm:$0xf]
        %v631 = vld [vmem:[%s1] sm:$0xf]
        %v632 = vld [vmem:[%s1 + $0x4] sm:$0xf]
        %v633 = vld [vmem:[%s1 + $0x8] sm:$0xf]
        %v634 = vld [vmem:[%s1 + $0xc] sm:$0xf]
        %v635 = vld [vmem:[%s1 + $0x10] sm:$0xf]
        %v636 = vld [vmem:[%s1 + $0x14] sm:$0xf]
        %v637 = vld [vmem:[%s1 + $0x18] sm:$0xf]
        %v638 = vld [vmem:[%s1 + $0x1c] sm:$0xf]
        %s639 = scalar_lea.vmem %s586, 64 [#allocation2]
        %v640 = vld [vmem:[%s639] sm:$0xf]
        %v641 = vld [vmem:[%s639 + $0x4] sm:$0xf]
        %v642 = vld [vmem:[%s639 + $0x8] sm:$0xf]
        %v643 = vld [vmem:[%s639 + $0xc] sm:$0xf]
        %v644 = vld [vmem:[%s639 + $0x10] sm:$0xf]
        %v645 = vld [vmem:[%s639 + $0x14] sm:$0xf]
        %v646 = vld [vmem:[%s639 + $0x18] sm:$0xf]
        %v647 = vld [vmem:[%s639 + $0x1c] sm:$0xf]
        %v648 = vld [vmem:[%s639 + $0x20] sm:$0xf]
        %v649 = vld [vmem:[%s639 + $0x24] sm:$0xf]
        %v650 = vld [vmem:[%s639 + $0x28] sm:$0xf]
        %v651 = vld [vmem:[%s639 + $0x2c] sm:$0xf]
        %v652 = vld [vmem:[%s639 + $0x30] sm:$0xf]
        %v653 = vld [vmem:[%s639 + $0x34] sm:$0xf]
        %v654 = vld [vmem:[%s639 + $0x38] sm:$0xf]
        %v655 = vld [vmem:[%s639 + $0x3c] sm:$0xf]
        %s656 = scalar_lea.vmem %s1, 32
        %v657 = vld [vmem:[%s656] sm:$0xf]
        %v658 = vld [vmem:[%s656 + $0x4] sm:$0xf]
        %v659 = vld [vmem:[%s656 + $0x8] sm:$0xf]
        %v660 = vld [vmem:[%s656 + $0xc] sm:$0xf]
        %v661 = vld [vmem:[%s656 + $0x10] sm:$0xf]
        %v662 = vld [vmem:[%s656 + $0x14] sm:$0xf]
        %v663 = vld [vmem:[%s656 + $0x18] sm:$0xf]
        %v664 = vld [vmem:[%s656 + $0x1c] sm:$0xf]
        %v681 = vunpack.c.l.b16 %v640
        %v682 = vunpack.c.l.b16 %v641
        %v683 = vunpack.c.l.b16 %v642
        %v684 = vunpack.c.l.b16 %v643
        %v685 = vunpack.c.l.b16 %v644
        %v686 = vunpack.c.l.b16 %v645
        %v687 = vunpack.c.l.b16 %v646
        %v688 = vunpack.c.l.b16 %v647
        %v689 = vunpack.c.l.b16 %v648
        %v690 = vunpack.c.l.b16 %v649
        %v691 = vunpack.c.l.b16 %v650
        %v692 = vunpack.c.l.b16 %v651
        %v693 = vunpack.c.l.b16 %v652
        %v694 = vunpack.c.l.b16 %v653
        %v695 = vunpack.c.l.b16 %v654
        %v696 = vunpack.c.l.b16 %v655
        %v697 = vpack.c.b16 %v682, %v681
        %v698 = vpack.c.b16 %v684, %v683
        %v699 = vpack.c.b16 %v686, %v685
        %v700 = vpack.c.b16 %v688, %v687
        %v701 = vpack.c.b16 %v690, %v689
        %v702 = vpack.c.b16 %v692, %v691
        %v703 = vpack.c.b16 %v694, %v693
        %v704 = vpack.c.b16 %v696, %v695
        %v713 = vunpack.c.l.b16 %v657
        %v714 = vunpack.c.l.b16 %v658
        %v715 = vunpack.c.l.b16 %v659
        %v716 = vunpack.c.l.b16 %v660
        %v717 = vunpack.c.l.b16 %v661
        %v718 = vunpack.c.l.b16 %v662
        %v719 = vunpack.c.l.b16 %v663
        %v720 = vunpack.c.l.b16 %v664
        %v721 = vpack.c.b16 %v714, %v713
        %v722 = vpack.c.b16 %v716, %v715
        %v723 = vpack.c.b16 %v718, %v717
        %v724 = vpack.c.b16 %v720, %v719
        %vm729 = vcmask 523264
        %v731 = vsel %vm729, %v697, 0
        %v734 = vsel %vm729, %v698, 0
        %v737 = vsel %vm729, %v699, 0
        %v740 = vsel %vm729, %v700, 0
        %v743 = vsel %vm729, %v701, 0
        %v746 = vsel %vm729, %v702, 0
        %v749 = vsel %vm729, %v703, 0
        %v752 = vsel %vm729, %v704, 0
        %754 = vmatprep.subr.bf16.mxu0 0
        %755 = vmatpush1.bf16.msra.mxu0 0
        %756 = vmatprep.subr.bf16.mxu0 0
        %757 = vmatpush1.bf16.msra.mxu0 0
        %758 = vmatprep.subr.bf16.mxu0 0
        %759 = vmatpush1.bf16.msra.mxu0 0
        %760 = vmatprep.subr.bf16.mxu0 0
        %761 = vmatpush1.bf16.msra.mxu0 0
        %762 = vmatprep.subr.bf16.mxu0 0
        %763 = vmatpush1.bf16.msra.mxu0 %v724
        %764 = vmatprep.subr.bf16.mxu0 0
        %765 = vmatpush1.bf16.msra.mxu0 %v723
        %766 = vmatprep.subr.bf16.mxu0 0
        %767 = vmatpush1.bf16.msra.mxu0 %v722
        %768 = vmatprep.subr.bf16.mxu0 0
        %769 = vmatpush1.bf16.msra.mxu0 %v721
        %770 = vmatprep.subr.bf16.mxu0 0
        %771 = vmatpush2.bf16.msra.mxu0 0
        %772 = vmatprep.subr.bf16.mxu0 0
        %773 = vmatpush2.bf16.msra.mxu0 0
        %774 = vmatprep.subr.bf16.mxu0 0
        %775 = vmatpush2.bf16.msra.mxu0 0
        %776 = vmatprep.subr.bf16.mxu0 0
        %777 = vmatpush2.bf16.msra.mxu0 0
        %778 = vmatprep.subr.bf16.mxu0 0
        %779 = vmatpush2.bf16.msra.mxu0 0
        %780 = vmatprep.subr.bf16.mxu0 0
        %781 = vmatpush2.bf16.msra.mxu0 0
        %782 = vmatprep.subr.bf16.mxu0 0
        %783 = vmatpush2.bf16.msra.mxu0 0
        %784 = vmatprep.subr.bf16.mxu0 0
        %785 = vmatpush2.bf16.msra.mxu0 0
        %786 = vmatprep.mubr.bf16.mxu0 0
        %787 = vmatmul.mubr.bf16.gmra.mxu0 %v731
        %v788 = vpop.f32.mrf.mxu0
        %v789 = vadd.f32 0.0, %v788
        %v790 = vpop.f32.mrf.mxu0
        %v791 = vpop.f32.mrf.mxu0
        %v792 = vadd.f32 0.0, %v791
        %v793 = vpop.f32.mrf.mxu0
        %794 = vmatprep.mubr.bf16.mxu0 0
        %795 = vmatmul.mubr.bf16.gmra.mxu0 %v734
        %v796 = vpop.f32.mrf.mxu0
        %v797 = vadd.f32 0.0, %v796
        %v798 = vpop.f32.mrf.mxu0
        %v799 = vpop.f32.mrf.mxu0
        %v800 = vadd.f32 0.0, %v799
        %v801 = vpop.f32.mrf.mxu0
        %802 = vmatprep.mubr.bf16.mxu0 0
        %803 = vmatmul.mubr.bf16.gmra.mxu0 %v737
        %v804 = vpop.f32.mrf.mxu0
        %v805 = vadd.f32 0.0, %v804
        %v806 = vpop.f32.mrf.mxu0
        %v807 = vpop.f32.mrf.mxu0
        %v808 = vadd.f32 0.0, %v807
        %v809 = vpop.f32.mrf.mxu0
        %810 = vmatprep.mubr.bf16.mxu0 0
        %811 = vmatmul.mubr.bf16.gmra.mxu0 %v740
        %v812 = vpop.f32.mrf.mxu0
        %v813 = vadd.f32 0.0, %v812
        %v814 = vpop.f32.mrf.mxu0
        %v815 = vpop.f32.mrf.mxu0
        %v816 = vadd.f32 0.0, %v815
        %v817 = vpop.f32.mrf.mxu0
        %818 = vmatprep.mubr.bf16.mxu0 0
        %819 = vmatmul.mubr.bf16.gmra.mxu0 %v743
        %v820 = vpop.f32.mrf.mxu0
        %v821 = vadd.f32 0.0, %v820
        %v822 = vpop.f32.mrf.mxu0
        %v823 = vpop.f32.mrf.mxu0
        %v824 = vadd.f32 0.0, %v823
        %v825 = vpop.f32.mrf.mxu0
        %826 = vmatprep.mubr.bf16.mxu0 0
        %827 = vmatmul.mubr.bf16.gmra.mxu0 %v746
        %v828 = vpop.f32.mrf.mxu0
        %v829 = vadd.f32 0.0, %v828
        %v830 = vpop.f32.mrf.mxu0
        %v831 = vpop.f32.mrf.mxu0
        %v832 = vadd.f32 0.0, %v831
        %v833 = vpop.f32.mrf.mxu0
        %834 = vmatprep.mubr.bf16.mxu0 0
        %835 = vmatmul.mubr.bf16.gmra.mxu0 %v749
        %v836 = vpop.f32.mrf.mxu0
        %v837 = vadd.f32 0.0, %v836
        %v838 = vpop.f32.mrf.mxu0
        %v839 = vpop.f32.mrf.mxu0
        %v840 = vadd.f32 0.0, %v839
        %v841 = vpop.f32.mrf.mxu0
        %842 = vmatprep.mubr.bf16.mxu0 0
        %843 = vmatmul.mubr.bf16.gmra.mxu0 %v752
        %v844 = vpop.f32.mrf.mxu0
        %v845 = vadd.f32 0.0, %v844
        %v846 = vpop.f32.mrf.mxu0
        %v847 = vpop.f32.mrf.mxu0
        %v848 = vadd.f32 0.0, %v847
        %v849 = vpop.f32.mrf.mxu0
        %850 = vdwg.mxu0
        %v867 = vunpack.c.l.b16 %v615
        %v868 = vunpack.c.l.b16 %v616
        %v869 = vunpack.c.l.b16 %v617
        %v870 = vunpack.c.l.b16 %v618
        %v871 = vunpack.c.l.b16 %v619
        %v872 = vunpack.c.l.b16 %v620
        %v873 = vunpack.c.l.b16 %v621
        %v874 = vunpack.c.l.b16 %v622
        %v875 = vunpack.c.l.b16 %v623
        %v876 = vunpack.c.l.b16 %v624
        %v877 = vunpack.c.l.b16 %v625
        %v878 = vunpack.c.l.b16 %v626
        %v879 = vunpack.c.l.b16 %v627
        %v880 = vunpack.c.l.b16 %v628
        %v881 = vunpack.c.l.b16 %v629
        %v882 = vunpack.c.l.b16 %v630
        %v883 = vpack.c.b16 %v868, %v867
        %v884 = vpack.c.b16 %v870, %v869
        %v885 = vpack.c.b16 %v872, %v871
        %v886 = vpack.c.b16 %v874, %v873
        %v887 = vpack.c.b16 %v876, %v875
        %v888 = vpack.c.b16 %v878, %v877
        %v889 = vpack.c.b16 %v880, %v879
        %v890 = vpack.c.b16 %v882, %v881
        %v899 = vunpack.c.l.b16 %v631
        %v900 = vunpack.c.l.b16 %v632
        %v901 = vunpack.c.l.b16 %v633
        %v902 = vunpack.c.l.b16 %v634
        %v903 = vunpack.c.l.b16 %v635
        %v904 = vunpack.c.l.b16 %v636
        %v905 = vunpack.c.l.b16 %v637
        %v906 = vunpack.c.l.b16 %v638
        %v907 = vpack.c.b16 %v900, %v899
        %v908 = vpack.c.b16 %v902, %v901
        %v909 = vpack.c.b16 %v904, %v903
        %v910 = vpack.c.b16 %v906, %v905
        %v916 = vsel %vm729, %v883, 0
        %v919 = vsel %vm729, %v884, 0
        %v922 = vsel %vm729, %v885, 0
        %v925 = vsel %vm729, %v886, 0
        %v928 = vsel %vm729, %v887, 0
        %v931 = vsel %vm729, %v888, 0
        %v934 = vsel %vm729, %v889, 0
        %v937 = vsel %vm729, %v890, 0
        %939 = vmatprep.subr.bf16.mxu0 0
        %940 = vmatpush1.bf16.msra.mxu0 0
        %941 = vmatprep.subr.bf16.mxu0 0
        %942 = vmatpush1.bf16.msra.mxu0 0
        %943 = vmatprep.subr.bf16.mxu0 0
        %944 = vmatpush1.bf16.msra.mxu0 0
        %945 = vmatprep.subr.bf16.mxu0 0
        %946 = vmatpush1.bf16.msra.mxu0 0
        %947 = vmatprep.subr.bf16.mxu0 0
        %948 = vmatpush1.bf16.msra.mxu0 %v910
        %949 = vmatprep.subr.bf16.mxu0 0
        %950 = vmatpush1.bf16.msra.mxu0 %v909
        %951 = vmatprep.subr.bf16.mxu0 0
        %952 = vmatpush1.bf16.msra.mxu0 %v908
        %953 = vmatprep.subr.bf16.mxu0 0
        %954 = vmatpush1.bf16.msra.mxu0 %v907
        %955 = vmatprep.subr.bf16.mxu0 0
        %956 = vmatpush2.bf16.msra.mxu0 0
        %957 = vmatprep.subr.bf16.mxu0 0
        %958 = vmatpush2.bf16.msra.mxu0 0
        %959 = vmatprep.subr.bf16.mxu0 0
        %960 = vmatpush2.bf16.msra.mxu0 0
        %961 = vmatprep.subr.bf16.mxu0 0
        %962 = vmatpush2.bf16.msra.mxu0 0
        %963 = vmatprep.subr.bf16.mxu0 0
        %964 = vmatpush2.bf16.msra.mxu0 0
        %965 = vmatprep.subr.bf16.mxu0 0
        %966 = vmatpush2.bf16.msra.mxu0 0
        %967 = vmatprep.subr.bf16.mxu0 0
        %968 = vmatpush2.bf16.msra.mxu0 0
        %969 = vmatprep.subr.bf16.mxu0 0
        %970 = vmatpush2.bf16.msra.mxu0 0
        %971 = vmatprep.mubr.bf16.mxu0 0
        %972 = vmatmul.mubr.bf16.gmra.mxu0 %v916
        %v973 = vpop.f32.mrf.mxu0
        %v974 = vadd.f32 %v789, %v973
        %v975 = vpop.f32.mrf.mxu0
        %v976 = vpop.f32.mrf.mxu0
        %v977 = vadd.f32 %v792, %v976
        %v978 = vpop.f32.mrf.mxu0
        %979 = vmatprep.mubr.bf16.mxu0 0
        %980 = vmatmul.mubr.bf16.gmra.mxu0 %v919
        %v981 = vpop.f32.mrf.mxu0
        %v982 = vadd.f32 %v797, %v981
        %v983 = vpop.f32.mrf.mxu0
        %v984 = vpop.f32.mrf.mxu0
        %v985 = vadd.f32 %v800, %v984
        %v986 = vpop.f32.mrf.mxu0
        %987 = vmatprep.mubr.bf16.mxu0 0
        %988 = vmatmul.mubr.bf16.gmra.mxu0 %v922
        %v989 = vpop.f32.mrf.mxu0
        %v990 = vadd.f32 %v805, %v989
        %v991 = vpop.f32.mrf.mxu0
        %v992 = vpop.f32.mrf.mxu0
        %v993 = vadd.f32 %v808, %v992
        %v994 = vpop.f32.mrf.mxu0
        %995 = vmatprep.mubr.bf16.mxu0 0
        %996 = vmatmul.mubr.bf16.gmra.mxu0 %v925
        %v997 = vpop.f32.mrf.mxu0
        %v998 = vadd.f32 %v813, %v997
        %v999 = vpop.f32.mrf.mxu0
        %v1000 = vpop.f32.mrf.mxu0
        %v1001 = vadd.f32 %v816, %v1000
        %v1002 = vpop.f32.mrf.mxu0
        %1003 = vmatprep.mubr.bf16.mxu0 0
        %1004 = vmatmul.mubr.bf16.gmra.mxu0 %v928
        %v1005 = vpop.f32.mrf.mxu0
        %v1006 = vadd.f32 %v821, %v1005
        %v1007 = vpop.f32.mrf.mxu0
        %v1008 = vpop.f32.mrf.mxu0
        %v1009 = vadd.f32 %v824, %v1008
        %v1010 = vpop.f32.mrf.mxu0
        %1011 = vmatprep.mubr.bf16.mxu0 0
        %1012 = vmatmul.mubr.bf16.gmra.mxu0 %v931
        %v1013 = vpop.f32.mrf.mxu0
        %v1014 = vadd.f32 %v829, %v1013
        %v1015 = vpop.f32.mrf.mxu0
        %v1016 = vpop.f32.mrf.mxu0
        %v1017 = vadd.f32 %v832, %v1016
        %v1018 = vpop.f32.mrf.mxu0
        %1019 = vmatprep.mubr.bf16.mxu0 0
        %1020 = vmatmul.mubr.bf16.gmra.mxu0 %v934
        %v1021 = vpop.f32.mrf.mxu0
        %v1022 = vadd.f32 %v837, %v1021
        %v1023 = vpop.f32.mrf.mxu0
        %v1024 = vpop.f32.mrf.mxu0
        %v1025 = vadd.f32 %v840, %v1024
        %v1026 = vpop.f32.mrf.mxu0
        %1027 = vmatprep.mubr.bf16.mxu0 0
        %1028 = vmatmul.mubr.bf16.gmra.mxu0 %v937
        %v1029 = vpop.f32.mrf.mxu0
        %v1030 = vadd.f32 %v845, %v1029
        %v1031 = vpop.f32.mrf.mxu0
        %v1032 = vpop.f32.mrf.mxu0
        %v1033 = vadd.f32 %v848, %v1032
        %v1034 = vpop.f32.mrf.mxu0
        %1035 = vdwg.mxu0
        %s1036 = scalar_lea.vmem %s586, 128 [#allocation2]
        %v1037 = vld [vmem:[%s1036] sm:$0xf]
        %v1038 = vld [vmem:[%s1036 + $0x4] sm:$0xf]
        %v1039 = vld [vmem:[%s1036 + $0x8] sm:$0xf]
        %v1040 = vld [vmem:[%s1036 + $0xc] sm:$0xf]
        %v1041 = vld [vmem:[%s1036 + $0x10] sm:$0xf]
        %v1042 = vld [vmem:[%s1036 + $0x14] sm:$0xf]
        %v1043 = vld [vmem:[%s1036 + $0x18] sm:$0xf]
        %v1044 = vld [vmem:[%s1036 + $0x1c] sm:$0xf]
        %v1045 = vld [vmem:[%s1036 + $0x20] sm:$0xf]
        %v1046 = vld [vmem:[%s1036 + $0x24] sm:$0xf]
        %v1047 = vld [vmem:[%s1036 + $0x28] sm:$0xf]
        %v1048 = vld [vmem:[%s1036 + $0x2c] sm:$0xf]
        %v1049 = vld [vmem:[%s1036 + $0x30] sm:$0xf]
        %v1050 = vld [vmem:[%s1036 + $0x34] sm:$0xf]
        %v1051 = vld [vmem:[%s1036 + $0x38] sm:$0xf]
        %v1052 = vld [vmem:[%s1036 + $0x3c] sm:$0xf]
        %s1053 = scalar_lea.vmem %s1, 64
        %v1054 = vld [vmem:[%s1053] sm:$0xf]
        %v1055 = vld [vmem:[%s1053 + $0x4] sm:$0xf]
        %v1056 = vld [vmem:[%s1053 + $0x8] sm:$0xf]
        %v1057 = vld [vmem:[%s1053 + $0xc] sm:$0xf]
        %v1058 = vld [vmem:[%s1053 + $0x10] sm:$0xf]
        %v1059 = vld [vmem:[%s1053 + $0x14] sm:$0xf]
        %v1060 = vld [vmem:[%s1053 + $0x18] sm:$0xf]
        %v1061 = vld [vmem:[%s1053 + $0x1c] sm:$0xf]
        %v1078 = vunpack.c.l.b16 %v1037
        %v1079 = vunpack.c.l.b16 %v1038
        %v1080 = vunpack.c.l.b16 %v1039
        %v1081 = vunpack.c.l.b16 %v1040
        %v1082 = vunpack.c.l.b16 %v1041
        %v1083 = vunpack.c.l.b16 %v1042
        %v1084 = vunpack.c.l.b16 %v1043
        %v1085 = vunpack.c.l.b16 %v1044
        %v1086 = vunpack.c.l.b16 %v1045
        %v1087 = vunpack.c.l.b16 %v1046
        %v1088 = vunpack.c.l.b16 %v1047
        %v1089 = vunpack.c.l.b16 %v1048
        %v1090 = vunpack.c.l.b16 %v1049
        %v1091 = vunpack.c.l.b16 %v1050
        %v1092 = vunpack.c.l.b16 %v1051
        %v1093 = vunpack.c.l.b16 %v1052
        %v1094 = vpack.c.b16 %v1079, %v1078
        %v1095 = vpack.c.b16 %v1081, %v1080
        %v1096 = vpack.c.b16 %v1083, %v1082
        %v1097 = vpack.c.b16 %v1085, %v1084
        %v1098 = vpack.c.b16 %v1087, %v1086
        %v1099 = vpack.c.b16 %v1089, %v1088
        %v1100 = vpack.c.b16 %v1091, %v1090
        %v1101 = vpack.c.b16 %v1093, %v1092
        %v1110 = vunpack.c.l.b16 %v1054
        %v1111 = vunpack.c.l.b16 %v1055
        %v1112 = vunpack.c.l.b16 %v1056
        %v1113 = vunpack.c.l.b16 %v1057
        %v1114 = vunpack.c.l.b16 %v1058
        %v1115 = vunpack.c.l.b16 %v1059
        %v1116 = vunpack.c.l.b16 %v1060
        %v1117 = vunpack.c.l.b16 %v1061
        %v1118 = vpack.c.b16 %v1111, %v1110
        %v1119 = vpack.c.b16 %v1113, %v1112
        %v1120 = vpack.c.b16 %v1115, %v1114
        %v1121 = vpack.c.b16 %v1117, %v1116
        %v1127 = vsel %vm729, %v1094, 0
        %v1130 = vsel %vm729, %v1095, 0
        %v1133 = vsel %vm729, %v1096, 0
        %v1136 = vsel %vm729, %v1097, 0
        %v1139 = vsel %vm729, %v1098, 0
        %v1142 = vsel %vm729, %v1099, 0
        %v1145 = vsel %vm729, %v1100, 0
        %v1148 = vsel %vm729, %v1101, 0
        %1150 = vmatprep.subr.bf16.mxu0 0
        %1151 = vmatpush1.bf16.msra.mxu0 0
        %1152 = vmatprep.subr.bf16.mxu0 0
        %1153 = vmatpush1.bf16.msra.mxu0 0
        %1154 = vmatprep.subr.bf16.mxu0 0
        %1155 = vmatpush1.bf16.msra.mxu0 0
        %1156 = vmatprep.subr.bf16.mxu0 0
        %1157 = vmatpush1.bf16.msra.mxu0 0
        %1158 = vmatprep.subr.bf16.mxu0 0
        %1159 = vmatpush1.bf16.msra.mxu0 %v1121
        %1160 = vmatprep.subr.bf16.mxu0 0
        %1161 = vmatpush1.bf16.msra.mxu0 %v1120
        %1162 = vmatprep.subr.bf16.mxu0 0
        %1163 = vmatpush1.bf16.msra.mxu0 %v1119
        %1164 = vmatprep.subr.bf16.mxu0 0
        %1165 = vmatpush1.bf16.msra.mxu0 %v1118
        %1166 = vmatprep.subr.bf16.mxu0 0
        %1167 = vmatpush2.bf16.msra.mxu0 0
        %1168 = vmatprep.subr.bf16.mxu0 0
        %1169 = vmatpush2.bf16.msra.mxu0 0
        %1170 = vmatprep.subr.bf16.mxu0 0
        %1171 = vmatpush2.bf16.msra.mxu0 0
        %1172 = vmatprep.subr.bf16.mxu0 0
        %1173 = vmatpush2.bf16.msra.mxu0 0
        %1174 = vmatprep.subr.bf16.mxu0 0
        %1175 = vmatpush2.bf16.msra.mxu0 0
        %1176 = vmatprep.subr.bf16.mxu0 0
        %1177 = vmatpush2.bf16.msra.mxu0 0
        %1178 = vmatprep.subr.bf16.mxu0 0
        %1179 = vmatpush2.bf16.msra.mxu0 0
        %1180 = vmatprep.subr.bf16.mxu0 0
        %1181 = vmatpush2.bf16.msra.mxu0 0
        %1182 = vmatprep.mubr.bf16.mxu0 0
        %1183 = vmatmul.mubr.bf16.gmra.mxu0 %v1127
        %v1184 = vpop.f32.mrf.mxu0
        %v1185 = vadd.f32 0.0, %v1184
        %v1186 = vpop.f32.mrf.mxu0
        %v1187 = vpop.f32.mrf.mxu0
        %v1188 = vadd.f32 0.0, %v1187
        %v1189 = vpop.f32.mrf.mxu0
        %1190 = vmatprep.mubr.bf16.mxu0 0
        %1191 = vmatmul.mubr.bf16.gmra.mxu0 %v1130
        %v1192 = vpop.f32.mrf.mxu0
        %v1193 = vadd.f32 0.0, %v1192
        %v1194 = vpop.f32.mrf.mxu0
        %v1195 = vpop.f32.mrf.mxu0
        %v1196 = vadd.f32 0.0, %v1195
        %v1197 = vpop.f32.mrf.mxu0
        %1198 = vmatprep.mubr.bf16.mxu0 0
        %1199 = vmatmul.mubr.bf16.gmra.mxu0 %v1133
        %v1200 = vpop.f32.mrf.mxu0
        %v1201 = vadd.f32 0.0, %v1200
        %v1202 = vpop.f32.mrf.mxu0
        %v1203 = vpop.f32.mrf.mxu0
        %v1204 = vadd.f32 0.0, %v1203
        %v1205 = vpop.f32.mrf.mxu0
        %1206 = vmatprep.mubr.bf16.mxu0 0
        %1207 = vmatmul.mubr.bf16.gmra.mxu0 %v1136
        %v1208 = vpop.f32.mrf.mxu0
        %v1209 = vadd.f32 0.0, %v1208
        %v1210 = vpop.f32.mrf.mxu0
        %v1211 = vpop.f32.mrf.mxu0
        %v1212 = vadd.f32 0.0, %v1211
        %v1213 = vpop.f32.mrf.mxu0
        %1214 = vmatprep.mubr.bf16.mxu0 0
        %1215 = vmatmul.mubr.bf16.gmra.mxu0 %v1139
        %v1216 = vpop.f32.mrf.mxu0
        %v1217 = vadd.f32 0.0, %v1216
        %v1218 = vpop.f32.mrf.mxu0
        %v1219 = vpop.f32.mrf.mxu0
        %v1220 = vadd.f32 0.0, %v1219
        %v1221 = vpop.f32.mrf.mxu0
        %1222 = vmatprep.mubr.bf16.mxu0 0
        %1223 = vmatmul.mubr.bf16.gmra.mxu0 %v1142
        %v1224 = vpop.f32.mrf.mxu0
        %v1225 = vadd.f32 0.0, %v1224
        %v1226 = vpop.f32.mrf.mxu0
        %v1227 = vpop.f32.mrf.mxu0
        %v1228 = vadd.f32 0.0, %v1227
        %v1229 = vpop.f32.mrf.mxu0
        %1230 = vmatprep.mubr.bf16.mxu0 0
        %1231 = vmatmul.mubr.bf16.gmra.mxu0 %v1145
        %v1232 = vpop.f32.mrf.mxu0
        %v1233 = vadd.f32 0.0, %v1232
        %v1234 = vpop.f32.mrf.mxu0
        %v1235 = vpop.f32.mrf.mxu0
        %v1236 = vadd.f32 0.0, %v1235
        %v1237 = vpop.f32.mrf.mxu0
        %1238 = vmatprep.mubr.bf16.mxu0 0
        %1239 = vmatmul.mubr.bf16.gmra.mxu0 %v1148
        %v1240 = vpop.f32.mrf.mxu0
        %v1241 = vadd.f32 0.0, %v1240
        %v1242 = vpop.f32.mrf.mxu0
        %v1243 = vpop.f32.mrf.mxu0
        %v1244 = vadd.f32 0.0, %v1243
        %v1245 = vpop.f32.mrf.mxu0
        %1246 = vdwg.mxu0
        %v1247 = vadd.f32 %v974, %v1185
        %v1248 = vadd.f32 %v977, %v1188
        %v1249 = vadd.f32 %v982, %v1193
        %v1250 = vadd.f32 %v985, %v1196
        %v1251 = vadd.f32 %v990, %v1201
        %v1252 = vadd.f32 %v993, %v1204
        %v1253 = vadd.f32 %v998, %v1209
        %v1254 = vadd.f32 %v1001, %v1212
        %v1255 = vadd.f32 %v1006, %v1217
        %v1256 = vadd.f32 %v1009, %v1220
        %v1257 = vadd.f32 %v1014, %v1225
        %v1258 = vadd.f32 %v1017, %v1228
        %v1259 = vadd.f32 %v1022, %v1233
        %v1260 = vadd.f32 %v1025, %v1236
        %v1261 = vadd.f32 %v1030, %v1241
        %v1262 = vadd.f32 %v1033, %v1244
        %s1263 = scalar_lea.vmem %s586, 192 [#allocation2]
        %v1264 = vld [vmem:[%s1263] sm:$0xf]
        %v1265 = vld [vmem:[%s1263 + $0x4] sm:$0xf]
        %v1266 = vld [vmem:[%s1263 + $0x8] sm:$0xf]
        %v1267 = vld [vmem:[%s1263 + $0xc] sm:$0xf]
        %v1268 = vld [vmem:[%s1263 + $0x10] sm:$0xf]
        %v1269 = vld [vmem:[%s1263 + $0x14] sm:$0xf]
        %v1270 = vld [vmem:[%s1263 + $0x18] sm:$0xf]
        %v1271 = vld [vmem:[%s1263 + $0x1c] sm:$0xf]
        %v1272 = vld [vmem:[%s1263 + $0x20] sm:$0xf]
        %v1273 = vld [vmem:[%s1263 + $0x24] sm:$0xf]
        %v1274 = vld [vmem:[%s1263 + $0x28] sm:$0xf]
        %v1275 = vld [vmem:[%s1263 + $0x2c] sm:$0xf]
        %v1276 = vld [vmem:[%s1263 + $0x30] sm:$0xf]
        %v1277 = vld [vmem:[%s1263 + $0x34] sm:$0xf]
        %v1278 = vld [vmem:[%s1263 + $0x38] sm:$0xf]
        %v1279 = vld [vmem:[%s1263 + $0x3c] sm:$0xf]
        %s1280 = scalar_lea.vmem %s1, 96
        %v1281 = vld [vmem:[%s1280] sm:$0xf]
        %v1282 = vld [vmem:[%s1280 + $0x4] sm:$0xf]
        %v1283 = vld [vmem:[%s1280 + $0x8] sm:$0xf]
        %v1284 = vld [vmem:[%s1280 + $0xc] sm:$0xf]
        %v1285 = vld [vmem:[%s1280 + $0x10] sm:$0xf]
        %v1286 = vld [vmem:[%s1280 + $0x14] sm:$0xf]
        %v1287 = vld [vmem:[%s1280 + $0x18] sm:$0xf]
        %v1288 = vld [vmem:[%s1280 + $0x1c] sm:$0xf]
        %v1305 = vunpack.c.l.b16 %v1264
        %v1306 = vunpack.c.l.b16 %v1265
        %v1307 = vunpack.c.l.b16 %v1266
        %v1308 = vunpack.c.l.b16 %v1267
        %v1309 = vunpack.c.l.b16 %v1268
        %v1310 = vunpack.c.l.b16 %v1269
        %v1311 = vunpack.c.l.b16 %v1270
        %v1312 = vunpack.c.l.b16 %v1271
        %v1313 = vunpack.c.l.b16 %v1272
        %v1314 = vunpack.c.l.b16 %v1273
        %v1315 = vunpack.c.l.b16 %v1274
        %v1316 = vunpack.c.l.b16 %v1275
        %v1317 = vunpack.c.l.b16 %v1276
        %v1318 = vunpack.c.l.b16 %v1277
        %v1319 = vunpack.c.l.b16 %v1278
        %v1320 = vunpack.c.l.b16 %v1279
        %v1321 = vpack.c.b16 %v1306, %v1305
        %v1322 = vpack.c.b16 %v1308, %v1307
        %v1323 = vpack.c.b16 %v1310, %v1309
        %v1324 = vpack.c.b16 %v1312, %v1311
        %v1325 = vpack.c.b16 %v1314, %v1313
        %v1326 = vpack.c.b16 %v1316, %v1315
        %v1327 = vpack.c.b16 %v1318, %v1317
        %v1328 = vpack.c.b16 %v1320, %v1319
        %v1337 = vunpack.c.l.b16 %v1281
        %v1338 = vunpack.c.l.b16 %v1282
        %v1339 = vunpack.c.l.b16 %v1283
        %v1340 = vunpack.c.l.b16 %v1284
        %v1341 = vunpack.c.l.b16 %v1285
        %v1342 = vunpack.c.l.b16 %v1286
        %v1343 = vunpack.c.l.b16 %v1287
        %v1344 = vunpack.c.l.b16 %v1288
        %v1345 = vpack.c.b16 %v1338, %v1337
        %v1346 = vpack.c.b16 %v1340, %v1339
        %v1347 = vpack.c.b16 %v1342, %v1341
        %v1348 = vpack.c.b16 %v1344, %v1343
        %v1354 = vsel %vm729, %v1321, 0
        %v1357 = vsel %vm729, %v1322, 0
        %v1360 = vsel %vm729, %v1323, 0
        %v1363 = vsel %vm729, %v1324, 0
        %v1366 = vsel %vm729, %v1325, 0
        %v1369 = vsel %vm729, %v1326, 0
        %v1372 = vsel %vm729, %v1327, 0
        %v1375 = vsel %vm729, %v1328, 0
        %1377 = vmatprep.subr.bf16.mxu0 0
        %1378 = vmatpush1.bf16.msra.mxu0 0
        %1379 = vmatprep.subr.bf16.mxu0 0
        %1380 = vmatpush1.bf16.msra.mxu0 0
        %1381 = vmatprep.subr.bf16.mxu0 0
        %1382 = vmatpush1.bf16.msra.mxu0 0
        %1383 = vmatprep.subr.bf16.mxu0 0
        %1384 = vmatpush1.bf16.msra.mxu0 0
        %1385 = vmatprep.subr.bf16.mxu0 0
        %1386 = vmatpush1.bf16.msra.mxu0 %v1348
        %1387 = vmatprep.subr.bf16.mxu0 0
        %1388 = vmatpush1.bf16.msra.mxu0 %v1347
        %1389 = vmatprep.subr.bf16.mxu0 0
        %1390 = vmatpush1.bf16.msra.mxu0 %v1346
        %1391 = vmatprep.subr.bf16.mxu0 0
        %1392 = vmatpush1.bf16.msra.mxu0 %v1345
        %1393 = vmatprep.subr.bf16.mxu0 0
        %1394 = vmatpush2.bf16.msra.mxu0 0
        %1395 = vmatprep.subr.bf16.mxu0 0
        %1396 = vmatpush2.bf16.msra.mxu0 0
        %1397 = vmatprep.subr.bf16.mxu0 0
        %1398 = vmatpush2.bf16.msra.mxu0 0
        %1399 = vmatprep.subr.bf16.mxu0 0
        %1400 = vmatpush2.bf16.msra.mxu0 0
        %1401 = vmatprep.subr.bf16.mxu0 0
        %1402 = vmatpush2.bf16.msra.mxu0 0
        %1403 = vmatprep.subr.bf16.mxu0 0
        %1404 = vmatpush2.bf16.msra.mxu0 0
        %1405 = vmatprep.subr.bf16.mxu0 0
        %1406 = vmatpush2.bf16.msra.mxu0 0
        %1407 = vmatprep.subr.bf16.mxu0 0
        %1408 = vmatpush2.bf16.msra.mxu0 0
        %1409 = vmatprep.mubr.bf16.mxu0 0
        %1410 = vmatmul.mubr.bf16.gmra.mxu0 %v1354
        %v1411 = vpop.f32.mrf.mxu0
        %v1412 = vadd.f32 0.0, %v1411
        %v1413 = vpop.f32.mrf.mxu0
        %v1414 = vpop.f32.mrf.mxu0
        %v1415 = vadd.f32 0.0, %v1414
        %v1416 = vpop.f32.mrf.mxu0
        %1417 = vmatprep.mubr.bf16.mxu0 0
        %1418 = vmatmul.mubr.bf16.gmra.mxu0 %v1357
        %v1419 = vpop.f32.mrf.mxu0
        %v1420 = vadd.f32 0.0, %v1419
        %v1421 = vpop.f32.mrf.mxu0
        %v1422 = vpop.f32.mrf.mxu0
        %v1423 = vadd.f32 0.0, %v1422
        %v1424 = vpop.f32.mrf.mxu0
        %1425 = vmatprep.mubr.bf16.mxu0 0
        %1426 = vmatmul.mubr.bf16.gmra.mxu0 %v1360
        %v1427 = vpop.f32.mrf.mxu0
        %v1428 = vadd.f32 0.0, %v1427
        %v1429 = vpop.f32.mrf.mxu0
        %v1430 = vpop.f32.mrf.mxu0
        %v1431 = vadd.f32 0.0, %v1430
        %v1432 = vpop.f32.mrf.mxu0
        %1433 = vmatprep.mubr.bf16.mxu0 0
        %1434 = vmatmul.mubr.bf16.gmra.mxu0 %v1363
        %v1435 = vpop.f32.mrf.mxu0
        %v1436 = vadd.f32 0.0, %v1435
        %v1437 = vpop.f32.mrf.mxu0
        %v1438 = vpop.f32.mrf.mxu0
        %v1439 = vadd.f32 0.0, %v1438
        %v1440 = vpop.f32.mrf.mxu0
        %1441 = vmatprep.mubr.bf16.mxu0 0
        %1442 = vmatmul.mubr.bf16.gmra.mxu0 %v1366
        %v1443 = vpop.f32.mrf.mxu0
        %v1444 = vadd.f32 0.0, %v1443
        %v1445 = vpop.f32.mrf.mxu0
        %v1446 = vpop.f32.mrf.mxu0
        %v1447 = vadd.f32 0.0, %v1446
        %v1448 = vpop.f32.mrf.mxu0
        %1449 = vmatprep.mubr.bf16.mxu0 0
        %1450 = vmatmul.mubr.bf16.gmra.mxu0 %v1369
        %v1451 = vpop.f32.mrf.mxu0
        %v1452 = vadd.f32 0.0, %v1451
        %v1453 = vpop.f32.mrf.mxu0
        %v1454 = vpop.f32.mrf.mxu0
        %v1455 = vadd.f32 0.0, %v1454
        %v1456 = vpop.f32.mrf.mxu0
        %1457 = vmatprep.mubr.bf16.mxu0 0
        %1458 = vmatmul.mubr.bf16.gmra.mxu0 %v1372
        %v1459 = vpop.f32.mrf.mxu0
        %v1460 = vadd.f32 0.0, %v1459
        %v1461 = vpop.f32.mrf.mxu0
        %v1462 = vpop.f32.mrf.mxu0
        %v1463 = vadd.f32 0.0, %v1462
        %v1464 = vpop.f32.mrf.mxu0
        %1465 = vmatprep.mubr.bf16.mxu0 0
        %1466 = vmatmul.mubr.bf16.gmra.mxu0 %v1375
        %v1467 = vpop.f32.mrf.mxu0
        %v1468 = vadd.f32 0.0, %v1467
        %v1469 = vpop.f32.mrf.mxu0
        %v1470 = vpop.f32.mrf.mxu0
        %v1471 = vadd.f32 0.0, %v1470
        %v1472 = vpop.f32.mrf.mxu0
        %1473 = vdwg.mxu0
        %v1474 = vadd.f32 %v1247, %v1412
        %v1475 = vadd.f32 %v1248, %v1415
        %v1476 = vadd.f32 %v1249, %v1420
        %v1477 = vadd.f32 %v1250, %v1423
        %v1478 = vadd.f32 %v1251, %v1428
        %v1479 = vadd.f32 %v1252, %v1431
        %v1480 = vadd.f32 %v1253, %v1436
        %v1481 = vadd.f32 %v1254, %v1439
        %v1482 = vadd.f32 %v1255, %v1444
        %v1483 = vadd.f32 %v1256, %v1447
        %v1484 = vadd.f32 %v1257, %v1452
        %v1485 = vadd.f32 %v1258, %v1455
        %v1486 = vadd.f32 %v1259, %v1460
        %v1487 = vadd.f32 %v1260, %v1463
        %v1488 = vadd.f32 %v1261, %v1468
        %v1489 = vadd.f32 %v1262, %v1471
        %s1490 = scalar_lea.vmem %s586, 256 [#allocation2]
        %v1491 = vld [vmem:[%s1490] sm:$0xf]
        %v1492 = vld [vmem:[%s1490 + $0x4] sm:$0xf]
        %v1493 = vld [vmem:[%s1490 + $0x8] sm:$0xf]
        %v1494 = vld [vmem:[%s1490 + $0xc] sm:$0xf]
        %v1495 = vld [vmem:[%s1490 + $0x10] sm:$0xf]
        %v1496 = vld [vmem:[%s1490 + $0x14] sm:$0xf]
        %v1497 = vld [vmem:[%s1490 + $0x18] sm:$0xf]
        %v1498 = vld [vmem:[%s1490 + $0x1c] sm:$0xf]
        %v1499 = vld [vmem:[%s1490 + $0x20] sm:$0xf]
        %v1500 = vld [vmem:[%s1490 + $0x24] sm:$0xf]
        %v1501 = vld [vmem:[%s1490 + $0x28] sm:$0xf]
        %v1502 = vld [vmem:[%s1490 + $0x2c] sm:$0xf]
        %v1503 = vld [vmem:[%s1490 + $0x30] sm:$0xf]
        %v1504 = vld [vmem:[%s1490 + $0x34] sm:$0xf]
        %v1505 = vld [vmem:[%s1490 + $0x38] sm:$0xf]
        %v1506 = vld [vmem:[%s1490 + $0x3c] sm:$0xf]
        %s1507 = scalar_lea.vmem %s1, 128
        %v1508 = vld [vmem:[%s1507] sm:$0xf]
        %v1509 = vld [vmem:[%s1507 + $0x4] sm:$0xf]
        %v1510 = vld [vmem:[%s1507 + $0x8] sm:$0xf]
        %v1511 = vld [vmem:[%s1507 + $0xc] sm:$0xf]
        %v1512 = vld [vmem:[%s1507 + $0x10] sm:$0xf]
        %v1513 = vld [vmem:[%s1507 + $0x14] sm:$0xf]
        %v1514 = vld [vmem:[%s1507 + $0x18] sm:$0xf]
        %v1515 = vld [vmem:[%s1507 + $0x1c] sm:$0xf]
        %v1532 = vunpack.c.l.b16 %v1491
        %v1533 = vunpack.c.l.b16 %v1492
        %v1534 = vunpack.c.l.b16 %v1493
        %v1535 = vunpack.c.l.b16 %v1494
        %v1536 = vunpack.c.l.b16 %v1495
        %v1537 = vunpack.c.l.b16 %v1496
        %v1538 = vunpack.c.l.b16 %v1497
        %v1539 = vunpack.c.l.b16 %v1498
        %v1540 = vunpack.c.l.b16 %v1499
        %v1541 = vunpack.c.l.b16 %v1500
        %v1542 = vunpack.c.l.b16 %v1501
        %v1543 = vunpack.c.l.b16 %v1502
        %v1544 = vunpack.c.l.b16 %v1503
        %v1545 = vunpack.c.l.b16 %v1504
        %v1546 = vunpack.c.l.b16 %v1505
        %v1547 = vunpack.c.l.b16 %v1506
        %v1548 = vpack.c.b16 %v1533, %v1532
        %v1549 = vpack.c.b16 %v1535, %v1534
        %v1550 = vpack.c.b16 %v1537, %v1536
        %v1551 = vpack.c.b16 %v1539, %v1538
        %v1552 = vpack.c.b16 %v1541, %v1540
        %v1553 = vpack.c.b16 %v1543, %v1542
        %v1554 = vpack.c.b16 %v1545, %v1544
        %v1555 = vpack.c.b16 %v1547, %v1546
        %v1564 = vunpack.c.l.b16 %v1508
        %v1565 = vunpack.c.l.b16 %v1509
        %v1566 = vunpack.c.l.b16 %v1510
        %v1567 = vunpack.c.l.b16 %v1511
        %v1568 = vunpack.c.l.b16 %v1512
        %v1569 = vunpack.c.l.b16 %v1513
        %v1570 = vunpack.c.l.b16 %v1514
        %v1571 = vunpack.c.l.b16 %v1515
        %v1572 = vpack.c.b16 %v1565, %v1564
        %v1573 = vpack.c.b16 %v1567, %v1566
        %v1574 = vpack.c.b16 %v1569, %v1568
        %v1575 = vpack.c.b16 %v1571, %v1570
        %v1581 = vsel %vm729, %v1548, 0
        %v1584 = vsel %vm729, %v1549, 0
        %v1587 = vsel %vm729, %v1550, 0
        %v1590 = vsel %vm729, %v1551, 0
        %v1593 = vsel %vm729, %v1552, 0
        %v1596 = vsel %vm729, %v1553, 0
        %v1599 = vsel %vm729, %v1554, 0
        %v1602 = vsel %vm729, %v1555, 0
        %1604 = vmatprep.subr.bf16.mxu0 0
        %1605 = vmatpush1.bf16.msra.mxu0 0
        %1606 = vmatprep.subr.bf16.mxu0 0
        %1607 = vmatpush1.bf16.msra.mxu0 0
        %1608 = vmatprep.subr.bf16.mxu0 0
        %1609 = vmatpush1.bf16.msra.mxu0 0
        %1610 = vmatprep.subr.bf16.mxu0 0
        %1611 = vmatpush1.bf16.msra.mxu0 0
        %1612 = vmatprep.subr.bf16.mxu0 0
        %1613 = vmatpush1.bf16.msra.mxu0 %v1575
        %1614 = vmatprep.subr.bf16.mxu0 0
        %1615 = vmatpush1.bf16.msra.mxu0 %v1574
        %1616 = vmatprep.subr.bf16.mxu0 0
        %1617 = vmatpush1.bf16.msra.mxu0 %v1573
        %1618 = vmatprep.subr.bf16.mxu0 0
        %1619 = vmatpush1.bf16.msra.mxu0 %v1572
        %1620 = vmatprep.subr.bf16.mxu0 0
        %1621 = vmatpush2.bf16.msra.mxu0 0
        %1622 = vmatprep.subr.bf16.mxu0 0
        %1623 = vmatpush2.bf16.msra.mxu0 0
        %1624 = vmatprep.subr.bf16.mxu0 0
        %1625 = vmatpush2.bf16.msra.mxu0 0
        %1626 = vmatprep.subr.bf16.mxu0 0
        %1627 = vmatpush2.bf16.msra.mxu0 0
        %1628 = vmatprep.subr.bf16.mxu0 0
        %1629 = vmatpush2.bf16.msra.mxu0 0
        %1630 = vmatprep.subr.bf16.mxu0 0
        %1631 = vmatpush2.bf16.msra.mxu0 0
        %1632 = vmatprep.subr.bf16.mxu0 0
        %1633 = vmatpush2.bf16.msra.mxu0 0
        %1634 = vmatprep.subr.bf16.mxu0 0
        %1635 = vmatpush2.bf16.msra.mxu0 0
        %1636 = vmatprep.mubr.bf16.mxu0 0
        %1637 = vmatmul.mubr.bf16.gmra.mxu0 %v1581
        %v1638 = vpop.f32.mrf.mxu0
        %v1639 = vadd.f32 0.0, %v1638
        %v1640 = vpop.f32.mrf.mxu0
        %v1641 = vpop.f32.mrf.mxu0
        %v1642 = vadd.f32 0.0, %v1641
        %v1643 = vpop.f32.mrf.mxu0
        %1644 = vmatprep.mubr.bf16.mxu0 0
        %1645 = vmatmul.mubr.bf16.gmra.mxu0 %v1584
        %v1646 = vpop.f32.mrf.mxu0
        %v1647 = vadd.f32 0.0, %v1646
        %v1648 = vpop.f32.mrf.mxu0
        %v1649 = vpop.f32.mrf.mxu0
        %v1650 = vadd.f32 0.0, %v1649
        %v1651 = vpop.f32.mrf.mxu0
        %1652 = vmatprep.mubr.bf16.mxu0 0
        %1653 = vmatmul.mubr.bf16.gmra.mxu0 %v1587
        %v1654 = vpop.f32.mrf.mxu0
        %v1655 = vadd.f32 0.0, %v1654
        %v1656 = vpop.f32.mrf.mxu0
        %v1657 = vpop.f32.mrf.mxu0
        %v1658 = vadd.f32 0.0, %v1657
        %v1659 = vpop.f32.mrf.mxu0
        %1660 = vmatprep.mubr.bf16.mxu0 0
        %1661 = vmatmul.mubr.bf16.gmra.mxu0 %v1590
        %v1662 = vpop.f32.mrf.mxu0
        %v1663 = vadd.f32 0.0, %v1662
        %v1664 = vpop.f32.mrf.mxu0
        %v1665 = vpop.f32.mrf.mxu0
        %v1666 = vadd.f32 0.0, %v1665
        %v1667 = vpop.f32.mrf.mxu0
        %1668 = vmatprep.mubr.bf16.mxu0 0
        %1669 = vmatmul.mubr.bf16.gmra.mxu0 %v1593
        %v1670 = vpop.f32.mrf.mxu0
        %v1671 = vadd.f32 0.0, %v1670
        %v1672 = vpop.f32.mrf.mxu0
        %v1673 = vpop.f32.mrf.mxu0
        %v1674 = vadd.f32 0.0, %v1673
        %v1675 = vpop.f32.mrf.mxu0
        %1676 = vmatprep.mubr.bf16.mxu0 0
        %1677 = vmatmul.mubr.bf16.gmra.mxu0 %v1596
        %v1678 = vpop.f32.mrf.mxu0
        %v1679 = vadd.f32 0.0, %v1678
        %v1680 = vpop.f32.mrf.mxu0
        %v1681 = vpop.f32.mrf.mxu0
        %v1682 = vadd.f32 0.0, %v1681
        %v1683 = vpop.f32.mrf.mxu0
        %1684 = vmatprep.mubr.bf16.mxu0 0
        %1685 = vmatmul.mubr.bf16.gmra.mxu0 %v1599
        %v1686 = vpop.f32.mrf.mxu0
        %v1687 = vadd.f32 0.0, %v1686
        %v1688 = vpop.f32.mrf.mxu0
        %v1689 = vpop.f32.mrf.mxu0
        %v1690 = vadd.f32 0.0, %v1689
        %v1691 = vpop.f32.mrf.mxu0
        %1692 = vmatprep.mubr.bf16.mxu0 0
        %1693 = vmatmul.mubr.bf16.gmra.mxu0 %v1602
        %v1694 = vpop.f32.mrf.mxu0
        %v1695 = vadd.f32 0.0, %v1694
        %v1696 = vpop.f32.mrf.mxu0
        %v1697 = vpop.f32.mrf.mxu0
        %v1698 = vadd.f32 0.0, %v1697
        %v1699 = vpop.f32.mrf.mxu0
        %1700 = vdwg.mxu0
        %v1701 = vadd.f32 %v1474, %v1639
        %v1702 = vadd.f32 %v1475, %v1642
        %v1703 = vadd.f32 %v1476, %v1647
        %v1704 = vadd.f32 %v1477, %v1650
        %v1705 = vadd.f32 %v1478, %v1655
        %v1706 = vadd.f32 %v1479, %v1658
        %v1707 = vadd.f32 %v1480, %v1663
        %v1708 = vadd.f32 %v1481, %v1666
        %v1709 = vadd.f32 %v1482, %v1671
        %v1710 = vadd.f32 %v1483, %v1674
        %v1711 = vadd.f32 %v1484, %v1679
        %v1712 = vadd.f32 %v1485, %v1682
        %v1713 = vadd.f32 %v1486, %v1687
        %v1714 = vadd.f32 %v1487, %v1690
        %v1715 = vadd.f32 %v1488, %v1695
        %v1716 = vadd.f32 %v1489, %v1698
        %s1717 = scalar_lea.vmem %s586, 320 [#allocation2]
        %v1718 = vld [vmem:[%s1717] sm:$0xf]
        %v1719 = vld [vmem:[%s1717 + $0x4] sm:$0xf]
        %v1720 = vld [vmem:[%s1717 + $0x8] sm:$0xf]
        %v1721 = vld [vmem:[%s1717 + $0xc] sm:$0xf]
        %v1722 = vld [vmem:[%s1717 + $0x10] sm:$0xf]
        %v1723 = vld [vmem:[%s1717 + $0x14] sm:$0xf]
        %v1724 = vld [vmem:[%s1717 + $0x18] sm:$0xf]
        %v1725 = vld [vmem:[%s1717 + $0x1c] sm:$0xf]
        %v1726 = vld [vmem:[%s1717 + $0x20] sm:$0xf]
        %v1727 = vld [vmem:[%s1717 + $0x24] sm:$0xf]
        %v1728 = vld [vmem:[%s1717 + $0x28] sm:$0xf]
        %v1729 = vld [vmem:[%s1717 + $0x2c] sm:$0xf]
        %v1730 = vld [vmem:[%s1717 + $0x30] sm:$0xf]
        %v1731 = vld [vmem:[%s1717 + $0x34] sm:$0xf]
        %v1732 = vld [vmem:[%s1717 + $0x38] sm:$0xf]
        %v1733 = vld [vmem:[%s1717 + $0x3c] sm:$0xf]
        %s1734 = scalar_lea.vmem %s1, 160
        %v1735 = vld [vmem:[%s1734] sm:$0xf]
        %v1736 = vld [vmem:[%s1734 + $0x4] sm:$0xf]
        %v1737 = vld [vmem:[%s1734 + $0x8] sm:$0xf]
        %v1738 = vld [vmem:[%s1734 + $0xc] sm:$0xf]
        %v1739 = vld [vmem:[%s1734 + $0x10] sm:$0xf]
        %v1740 = vld [vmem:[%s1734 + $0x14] sm:$0xf]
        %v1741 = vld [vmem:[%s1734 + $0x18] sm:$0xf]
        %v1742 = vld [vmem:[%s1734 + $0x1c] sm:$0xf]
        %v1759 = vunpack.c.l.b16 %v1718
        %v1760 = vunpack.c.l.b16 %v1719
        %v1761 = vunpack.c.l.b16 %v1720
        %v1762 = vunpack.c.l.b16 %v1721
        %v1763 = vunpack.c.l.b16 %v1722
        %v1764 = vunpack.c.l.b16 %v1723
        %v1765 = vunpack.c.l.b16 %v1724
        %v1766 = vunpack.c.l.b16 %v1725
        %v1767 = vunpack.c.l.b16 %v1726
        %v1768 = vunpack.c.l.b16 %v1727
        %v1769 = vunpack.c.l.b16 %v1728
        %v1770 = vunpack.c.l.b16 %v1729
        %v1771 = vunpack.c.l.b16 %v1730
        %v1772 = vunpack.c.l.b16 %v1731
        %v1773 = vunpack.c.l.b16 %v1732
        %v1774 = vunpack.c.l.b16 %v1733
        %v1775 = vpack.c.b16 %v1760, %v1759
        %v1776 = vpack.c.b16 %v1762, %v1761
        %v1777 = vpack.c.b16 %v1764, %v1763
        %v1778 = vpack.c.b16 %v1766, %v1765
        %v1779 = vpack.c.b16 %v1768, %v1767
        %v1780 = vpack.c.b16 %v1770, %v1769
        %v1781 = vpack.c.b16 %v1772, %v1771
        %v1782 = vpack.c.b16 %v1774, %v1773
        %v1791 = vunpack.c.l.b16 %v1735
        %v1792 = vunpack.c.l.b16 %v1736
        %v1793 = vunpack.c.l.b16 %v1737
        %v1794 = vunpack.c.l.b16 %v1738
        %v1795 = vunpack.c.l.b16 %v1739
        %v1796 = vunpack.c.l.b16 %v1740
        %v1797 = vunpack.c.l.b16 %v1741
        %v1798 = vunpack.c.l.b16 %v1742
        %v1799 = vpack.c.b16 %v1792, %v1791
        %v1800 = vpack.c.b16 %v1794, %v1793
        %v1801 = vpack.c.b16 %v1796, %v1795
        %v1802 = vpack.c.b16 %v1798, %v1797
        %v1808 = vsel %vm729, %v1775, 0
        %v1811 = vsel %vm729, %v1776, 0
        %v1814 = vsel %vm729, %v1777, 0
        %v1817 = vsel %vm729, %v1778, 0
        %v1820 = vsel %vm729, %v1779, 0
        %v1823 = vsel %vm729, %v1780, 0
        %v1826 = vsel %vm729, %v1781, 0
        %v1829 = vsel %vm729, %v1782, 0
        %1831 = vmatprep.subr.bf16.mxu0 0
        %1832 = vmatpush1.bf16.msra.mxu0 0
        %1833 = vmatprep.subr.bf16.mxu0 0
        %1834 = vmatpush1.bf16.msra.mxu0 0
        %1835 = vmatprep.subr.bf16.mxu0 0
        %1836 = vmatpush1.bf16.msra.mxu0 0
        %1837 = vmatprep.subr.bf16.mxu0 0
        %1838 = vmatpush1.bf16.msra.mxu0 0
        %1839 = vmatprep.subr.bf16.mxu0 0
        %1840 = vmatpush1.bf16.msra.mxu0 %v1802
        %1841 = vmatprep.subr.bf16.mxu0 0
        %1842 = vmatpush1.bf16.msra.mxu0 %v1801
        %1843 = vmatprep.subr.bf16.mxu0 0
        %1844 = vmatpush1.bf16.msra.mxu0 %v1800
        %1845 = vmatprep.subr.bf16.mxu0 0
        %1846 = vmatpush1.bf16.msra.mxu0 %v1799
        %1847 = vmatprep.subr.bf16.mxu0 0
        %1848 = vmatpush2.bf16.msra.mxu0 0
        %1849 = vmatprep.subr.bf16.mxu0 0
        %1850 = vmatpush2.bf16.msra.mxu0 0
        %1851 = vmatprep.subr.bf16.mxu0 0
        %1852 = vmatpush2.bf16.msra.mxu0 0
        %1853 = vmatprep.subr.bf16.mxu0 0
        %1854 = vmatpush2.bf16.msra.mxu0 0
        %1855 = vmatprep.subr.bf16.mxu0 0
        %1856 = vmatpush2.bf16.msra.mxu0 0
        %1857 = vmatprep.subr.bf16.mxu0 0
        %1858 = vmatpush2.bf16.msra.mxu0 0
        %1859 = vmatprep.subr.bf16.mxu0 0
        %1860 = vmatpush2.bf16.msra.mxu0 0
        %1861 = vmatprep.subr.bf16.mxu0 0
        %1862 = vmatpush2.bf16.msra.mxu0 0
        %1863 = vmatprep.mubr.bf16.mxu0 0
        %1864 = vmatmul.mubr.bf16.gmra.mxu0 %v1808
        %v1865 = vpop.f32.mrf.mxu0
        %v1866 = vadd.f32 0.0, %v1865
        %v1867 = vpop.f32.mrf.mxu0
        %v1868 = vpop.f32.mrf.mxu0
        %v1869 = vadd.f32 0.0, %v1868
        %v1870 = vpop.f32.mrf.mxu0
        %1871 = vmatprep.mubr.bf16.mxu0 0
        %1872 = vmatmul.mubr.bf16.gmra.mxu0 %v1811
        %v1873 = vpop.f32.mrf.mxu0
        %v1874 = vadd.f32 0.0, %v1873
        %v1875 = vpop.f32.mrf.mxu0
        %v1876 = vpop.f32.mrf.mxu0
        %v1877 = vadd.f32 0.0, %v1876
        %v1878 = vpop.f32.mrf.mxu0
        %1879 = vmatprep.mubr.bf16.mxu0 0
        %1880 = vmatmul.mubr.bf16.gmra.mxu0 %v1814
        %v1881 = vpop.f32.mrf.mxu0
        %v1882 = vadd.f32 0.0, %v1881
        %v1883 = vpop.f32.mrf.mxu0
        %v1884 = vpop.f32.mrf.mxu0
        %v1885 = vadd.f32 0.0, %v1884
        %v1886 = vpop.f32.mrf.mxu0
        %1887 = vmatprep.mubr.bf16.mxu0 0
        %1888 = vmatmul.mubr.bf16.gmra.mxu0 %v1817
        %v1889 = vpop.f32.mrf.mxu0
        %v1890 = vadd.f32 0.0, %v1889
        %v1891 = vpop.f32.mrf.mxu0
        %v1892 = vpop.f32.mrf.mxu0
        %v1893 = vadd.f32 0.0, %v1892
        %v1894 = vpop.f32.mrf.mxu0
        %1895 = vmatprep.mubr.bf16.mxu0 0
        %1896 = vmatmul.mubr.bf16.gmra.mxu0 %v1820
        %v1897 = vpop.f32.mrf.mxu0
        %v1898 = vadd.f32 0.0, %v1897
        %v1899 = vpop.f32.mrf.mxu0
        %v1900 = vpop.f32.mrf.mxu0
        %v1901 = vadd.f32 0.0, %v1900
        %v1902 = vpop.f32.mrf.mxu0
        %1903 = vmatprep.mubr.bf16.mxu0 0
        %1904 = vmatmul.mubr.bf16.gmra.mxu0 %v1823
        %v1905 = vpop.f32.mrf.mxu0
        %v1906 = vadd.f32 0.0, %v1905
        %v1907 = vpop.f32.mrf.mxu0
        %v1908 = vpop.f32.mrf.mxu0
        %v1909 = vadd.f32 0.0, %v1908
        %v1910 = vpop.f32.mrf.mxu0
        %1911 = vmatprep.mubr.bf16.mxu0 0
        %1912 = vmatmul.mubr.bf16.gmra.mxu0 %v1826
        %v1913 = vpop.f32.mrf.mxu0
        %v1914 = vadd.f32 0.0, %v1913
        %v1915 = vpop.f32.mrf.mxu0
        %v1916 = vpop.f32.mrf.mxu0
        %v1917 = vadd.f32 0.0, %v1916
        %v1918 = vpop.f32.mrf.mxu0
        %1919 = vmatprep.mubr.bf16.mxu0 0
        %1920 = vmatmul.mubr.bf16.gmra.mxu0 %v1829
        %v1921 = vpop.f32.mrf.mxu0
        %v1922 = vadd.f32 0.0, %v1921
        %v1923 = vpop.f32.mrf.mxu0
        %v1924 = vpop.f32.mrf.mxu0
        %v1925 = vadd.f32 0.0, %v1924
        %v1926 = vpop.f32.mrf.mxu0
        %1927 = vdwg.mxu0
        %v1928 = vadd.f32 %v1701, %v1866
        %v1929 = vadd.f32 %v1702, %v1869
        %v1930 = vadd.f32 %v1703, %v1874
        %v1931 = vadd.f32 %v1704, %v1877
        %v1932 = vadd.f32 %v1705, %v1882
        %v1933 = vadd.f32 %v1706, %v1885
        %v1934 = vadd.f32 %v1707, %v1890
        %v1935 = vadd.f32 %v1708, %v1893
        %v1936 = vadd.f32 %v1709, %v1898
        %v1937 = vadd.f32 %v1710, %v1901
        %v1938 = vadd.f32 %v1711, %v1906
        %v1939 = vadd.f32 %v1712, %v1909
        %v1940 = vadd.f32 %v1713, %v1914
        %v1941 = vadd.f32 %v1714, %v1917
        %v1942 = vadd.f32 %v1715, %v1922
        %v1943 = vadd.f32 %v1716, %v1925
        %s1944 = scalar_lea.vmem %s586, 384 [#allocation2]
        %v1945 = vld [vmem:[%s1944] sm:$0xf]
        %v1946 = vld [vmem:[%s1944 + $0x4] sm:$0xf]
        %v1947 = vld [vmem:[%s1944 + $0x8] sm:$0xf]
        %v1948 = vld [vmem:[%s1944 + $0xc] sm:$0xf]
        %v1949 = vld [vmem:[%s1944 + $0x10] sm:$0xf]
        %v1950 = vld [vmem:[%s1944 + $0x14] sm:$0xf]
        %v1951 = vld [vmem:[%s1944 + $0x18] sm:$0xf]
        %v1952 = vld [vmem:[%s1944 + $0x1c] sm:$0xf]
        %v1953 = vld [vmem:[%s1944 + $0x20] sm:$0xf]
        %v1954 = vld [vmem:[%s1944 + $0x24] sm:$0xf]
        %v1955 = vld [vmem:[%s1944 + $0x28] sm:$0xf]
        %v1956 = vld [vmem:[%s1944 + $0x2c] sm:$0xf]
        %v1957 = vld [vmem:[%s1944 + $0x30] sm:$0xf]
        %v1958 = vld [vmem:[%s1944 + $0x34] sm:$0xf]
        %v1959 = vld [vmem:[%s1944 + $0x38] sm:$0xf]
        %v1960 = vld [vmem:[%s1944 + $0x3c] sm:$0xf]
        %s1961 = scalar_lea.vmem %s1, 192
        %v1962 = vld [vmem:[%s1961] sm:$0xf]
        %v1963 = vld [vmem:[%s1961 + $0x4] sm:$0xf]
        %v1964 = vld [vmem:[%s1961 + $0x8] sm:$0xf]
        %v1965 = vld [vmem:[%s1961 + $0xc] sm:$0xf]
        %v1966 = vld [vmem:[%s1961 + $0x10] sm:$0xf]
        %v1967 = vld [vmem:[%s1961 + $0x14] sm:$0xf]
        %v1968 = vld [vmem:[%s1961 + $0x18] sm:$0xf]
        %v1969 = vld [vmem:[%s1961 + $0x1c] sm:$0xf]
        %v1986 = vunpack.c.l.b16 %v1945
        %v1987 = vunpack.c.l.b16 %v1946
        %v1988 = vunpack.c.l.b16 %v1947
        %v1989 = vunpack.c.l.b16 %v1948
        %v1990 = vunpack.c.l.b16 %v1949
        %v1991 = vunpack.c.l.b16 %v1950
        %v1992 = vunpack.c.l.b16 %v1951
        %v1993 = vunpack.c.l.b16 %v1952
        %v1994 = vunpack.c.l.b16 %v1953
        %v1995 = vunpack.c.l.b16 %v1954
        %v1996 = vunpack.c.l.b16 %v1955
        %v1997 = vunpack.c.l.b16 %v1956
        %v1998 = vunpack.c.l.b16 %v1957
        %v1999 = vunpack.c.l.b16 %v1958
        %v2000 = vunpack.c.l.b16 %v1959
        %v2001 = vunpack.c.l.b16 %v1960
        %v2002 = vpack.c.b16 %v1987, %v1986
        %v2003 = vpack.c.b16 %v1989, %v1988
        %v2004 = vpack.c.b16 %v1991, %v1990
        %v2005 = vpack.c.b16 %v1993, %v1992
        %v2006 = vpack.c.b16 %v1995, %v1994
        %v2007 = vpack.c.b16 %v1997, %v1996
        %v2008 = vpack.c.b16 %v1999, %v1998
        %v2009 = vpack.c.b16 %v2001, %v2000
        %v2018 = vunpack.c.l.b16 %v1962
        %v2019 = vunpack.c.l.b16 %v1963
        %v2020 = vunpack.c.l.b16 %v1964
        %v2021 = vunpack.c.l.b16 %v1965
        %v2022 = vunpack.c.l.b16 %v1966
        %v2023 = vunpack.c.l.b16 %v1967
        %v2024 = vunpack.c.l.b16 %v1968
        %v2025 = vunpack.c.l.b16 %v1969
        %v2026 = vpack.c.b16 %v2019, %v2018
        %v2027 = vpack.c.b16 %v2021, %v2020
        %v2028 = vpack.c.b16 %v2023, %v2022
        %v2029 = vpack.c.b16 %v2025, %v2024
        %v2035 = vsel %vm729, %v2002, 0
        %v2038 = vsel %vm729, %v2003, 0
        %v2041 = vsel %vm729, %v2004, 0
        %v2044 = vsel %vm729, %v2005, 0
        %v2047 = vsel %vm729, %v2006, 0
        %v2050 = vsel %vm729, %v2007, 0
        %v2053 = vsel %vm729, %v2008, 0
        %v2056 = vsel %vm729, %v2009, 0
        %2058 = vmatprep.subr.bf16.mxu0 0
        %2059 = vmatpush1.bf16.msra.mxu0 0
        %2060 = vmatprep.subr.bf16.mxu0 0
        %2061 = vmatpush1.bf16.msra.mxu0 0
        %2062 = vmatprep.subr.bf16.mxu0 0
        %2063 = vmatpush1.bf16.msra.mxu0 0
        %2064 = vmatprep.subr.bf16.mxu0 0
        %2065 = vmatpush1.bf16.msra.mxu0 0
        %2066 = vmatprep.subr.bf16.mxu0 0
        %2067 = vmatpush1.bf16.msra.mxu0 %v2029
        %2068 = vmatprep.subr.bf16.mxu0 0
        %2069 = vmatpush1.bf16.msra.mxu0 %v2028
        %2070 = vmatprep.subr.bf16.mxu0 0
        %2071 = vmatpush1.bf16.msra.mxu0 %v2027
        %2072 = vmatprep.subr.bf16.mxu0 0
        %2073 = vmatpush1.bf16.msra.mxu0 %v2026
        %2074 = vmatprep.subr.bf16.mxu0 0
        %2075 = vmatpush2.bf16.msra.mxu0 0
        %2076 = vmatprep.subr.bf16.mxu0 0
        %2077 = vmatpush2.bf16.msra.mxu0 0
        %2078 = vmatprep.subr.bf16.mxu0 0
        %2079 = vmatpush2.bf16.msra.mxu0 0
        %2080 = vmatprep.subr.bf16.mxu0 0
        %2081 = vmatpush2.bf16.msra.mxu0 0
        %2082 = vmatprep.subr.bf16.mxu0 0
        %2083 = vmatpush2.bf16.msra.mxu0 0
        %2084 = vmatprep.subr.bf16.mxu0 0
        %2085 = vmatpush2.bf16.msra.mxu0 0
        %2086 = vmatprep.subr.bf16.mxu0 0
        %2087 = vmatpush2.bf16.msra.mxu0 0
        %2088 = vmatprep.subr.bf16.mxu0 0
        %2089 = vmatpush2.bf16.msra.mxu0 0
        %2090 = vmatprep.mubr.bf16.mxu0 0
        %2091 = vmatmul.mubr.bf16.gmra.mxu0 %v2035
        %v2092 = vpop.f32.mrf.mxu0
        %v2093 = vadd.f32 0.0, %v2092
        %v2094 = vpop.f32.mrf.mxu0
        %v2095 = vpop.f32.mrf.mxu0
        %v2096 = vadd.f32 0.0, %v2095
        %v2097 = vpop.f32.mrf.mxu0
        %2098 = vmatprep.mubr.bf16.mxu0 0
        %2099 = vmatmul.mubr.bf16.gmra.mxu0 %v2038
        %v2100 = vpop.f32.mrf.mxu0
        %v2101 = vadd.f32 0.0, %v2100
        %v2102 = vpop.f32.mrf.mxu0
        %v2103 = vpop.f32.mrf.mxu0
        %v2104 = vadd.f32 0.0, %v2103
        %v2105 = vpop.f32.mrf.mxu0
        %2106 = vmatprep.mubr.bf16.mxu0 0
        %2107 = vmatmul.mubr.bf16.gmra.mxu0 %v2041
        %v2108 = vpop.f32.mrf.mxu0
        %v2109 = vadd.f32 0.0, %v2108
        %v2110 = vpop.f32.mrf.mxu0
        %v2111 = vpop.f32.mrf.mxu0
        %v2112 = vadd.f32 0.0, %v2111
        %v2113 = vpop.f32.mrf.mxu0
        %2114 = vmatprep.mubr.bf16.mxu0 0
        %2115 = vmatmul.mubr.bf16.gmra.mxu0 %v2044
        %v2116 = vpop.f32.mrf.mxu0
        %v2117 = vadd.f32 0.0, %v2116
        %v2118 = vpop.f32.mrf.mxu0
        %v2119 = vpop.f32.mrf.mxu0
        %v2120 = vadd.f32 0.0, %v2119
        %v2121 = vpop.f32.mrf.mxu0
        %2122 = vmatprep.mubr.bf16.mxu0 0
        %2123 = vmatmul.mubr.bf16.gmra.mxu0 %v2047
        %v2124 = vpop.f32.mrf.mxu0
        %v2125 = vadd.f32 0.0, %v2124
        %v2126 = vpop.f32.mrf.mxu0
        %v2127 = vpop.f32.mrf.mxu0
        %v2128 = vadd.f32 0.0, %v2127
        %v2129 = vpop.f32.mrf.mxu0
        %2130 = vmatprep.mubr.bf16.mxu0 0
        %2131 = vmatmul.mubr.bf16.gmra.mxu0 %v2050
        %v2132 = vpop.f32.mrf.mxu0
        %v2133 = vadd.f32 0.0, %v2132
        %v2134 = vpop.f32.mrf.mxu0
        %v2135 = vpop.f32.mrf.mxu0
        %v2136 = vadd.f32 0.0, %v2135
        %v2137 = vpop.f32.mrf.mxu0
        %2138 = vmatprep.mubr.bf16.mxu0 0
        %2139 = vmatmul.mubr.bf16.gmra.mxu0 %v2053
        %v2140 = vpop.f32.mrf.mxu0
        %v2141 = vadd.f32 0.0, %v2140
        %v2142 = vpop.f32.mrf.mxu0
        %v2143 = vpop.f32.mrf.mxu0
        %v2144 = vadd.f32 0.0, %v2143
        %v2145 = vpop.f32.mrf.mxu0
        %2146 = vmatprep.mubr.bf16.mxu0 0
        %2147 = vmatmul.mubr.bf16.gmra.mxu0 %v2056
        %v2148 = vpop.f32.mrf.mxu0
        %v2149 = vadd.f32 0.0, %v2148
        %v2150 = vpop.f32.mrf.mxu0
        %v2151 = vpop.f32.mrf.mxu0
        %v2152 = vadd.f32 0.0, %v2151
        %v2153 = vpop.f32.mrf.mxu0
        %2154 = vdwg.mxu0
        %v2155 = vadd.f32 %v1928, %v2093
        %v2156 = vadd.f32 %v1929, %v2096
        %v2157 = vadd.f32 %v1930, %v2101
        %v2158 = vadd.f32 %v1931, %v2104
        %v2159 = vadd.f32 %v1932, %v2109
        %v2160 = vadd.f32 %v1933, %v2112
        %v2161 = vadd.f32 %v1934, %v2117
        %v2162 = vadd.f32 %v1935, %v2120
        %v2163 = vadd.f32 %v1936, %v2125
        %v2164 = vadd.f32 %v1937, %v2128
        %v2165 = vadd.f32 %v1938, %v2133
        %v2166 = vadd.f32 %v1939, %v2136
        %v2167 = vadd.f32 %v1940, %v2141
        %v2168 = vadd.f32 %v1941, %v2144
        %v2169 = vadd.f32 %v1942, %v2149
        %v2170 = vadd.f32 %v1943, %v2152
        %s2171 = scalar_lea.vmem %s586, 448 [#allocation2]
        %v2172 = vld [vmem:[%s2171] sm:$0xf]
        %v2173 = vld [vmem:[%s2171 + $0x4] sm:$0xf]
        %v2174 = vld [vmem:[%s2171 + $0x8] sm:$0xf]
        %v2175 = vld [vmem:[%s2171 + $0xc] sm:$0xf]
        %v2176 = vld [vmem:[%s2171 + $0x10] sm:$0xf]
        %v2177 = vld [vmem:[%s2171 + $0x14] sm:$0xf]
        %v2178 = vld [vmem:[%s2171 + $0x18] sm:$0xf]
        %v2179 = vld [vmem:[%s2171 + $0x1c] sm:$0xf]
        %v2180 = vld [vmem:[%s2171 + $0x20] sm:$0xf]
        %v2181 = vld [vmem:[%s2171 + $0x24] sm:$0xf]
        %v2182 = vld [vmem:[%s2171 + $0x28] sm:$0xf]
        %v2183 = vld [vmem:[%s2171 + $0x2c] sm:$0xf]
        %v2184 = vld [vmem:[%s2171 + $0x30] sm:$0xf]
        %v2185 = vld [vmem:[%s2171 + $0x34] sm:$0xf]
        %v2186 = vld [vmem:[%s2171 + $0x38] sm:$0xf]
        %v2187 = vld [vmem:[%s2171 + $0x3c] sm:$0xf]
        %s2188 = scalar_lea.vmem %s1, 224
        %v2189 = vld [vmem:[%s2188] sm:$0xf]
        %v2190 = vld [vmem:[%s2188 + $0x4] sm:$0xf]
        %v2191 = vld [vmem:[%s2188 + $0x8] sm:$0xf]
        %v2192 = vld [vmem:[%s2188 + $0xc] sm:$0xf]
        %v2193 = vld [vmem:[%s2188 + $0x10] sm:$0xf]
        %v2194 = vld [vmem:[%s2188 + $0x14] sm:$0xf]
        %v2195 = vld [vmem:[%s2188 + $0x18] sm:$0xf]
        %v2196 = vld [vmem:[%s2188 + $0x1c] sm:$0xf]
        %v2213 = vunpack.c.l.b16 %v2172
        %v2214 = vunpack.c.l.b16 %v2173
        %v2215 = vunpack.c.l.b16 %v2174
        %v2216 = vunpack.c.l.b16 %v2175
        %v2217 = vunpack.c.l.b16 %v2176
        %v2218 = vunpack.c.l.b16 %v2177
        %v2219 = vunpack.c.l.b16 %v2178
        %v2220 = vunpack.c.l.b16 %v2179
        %v2221 = vunpack.c.l.b16 %v2180
        %v2222 = vunpack.c.l.b16 %v2181
        %v2223 = vunpack.c.l.b16 %v2182
        %v2224 = vunpack.c.l.b16 %v2183
        %v2225 = vunpack.c.l.b16 %v2184
        %v2226 = vunpack.c.l.b16 %v2185
        %v2227 = vunpack.c.l.b16 %v2186
        %v2228 = vunpack.c.l.b16 %v2187
        %v2229 = vpack.c.b16 %v2214, %v2213
        %v2230 = vpack.c.b16 %v2216, %v2215
        %v2231 = vpack.c.b16 %v2218, %v2217
        %v2232 = vpack.c.b16 %v2220, %v2219
        %v2233 = vpack.c.b16 %v2222, %v2221
        %v2234 = vpack.c.b16 %v2224, %v2223
        %v2235 = vpack.c.b16 %v2226, %v2225
        %v2236 = vpack.c.b16 %v2228, %v2227
        %v2245 = vunpack.c.l.b16 %v2189
        %v2246 = vunpack.c.l.b16 %v2190
        %v2247 = vunpack.c.l.b16 %v2191
        %v2248 = vunpack.c.l.b16 %v2192
        %v2249 = vunpack.c.l.b16 %v2193
        %v2250 = vunpack.c.l.b16 %v2194
        %v2251 = vunpack.c.l.b16 %v2195
        %v2252 = vunpack.c.l.b16 %v2196
        %v2253 = vpack.c.b16 %v2246, %v2245
        %v2254 = vpack.c.b16 %v2248, %v2247
        %v2255 = vpack.c.b16 %v2250, %v2249
        %v2256 = vpack.c.b16 %v2252, %v2251
        %v2262 = vsel %vm729, %v2229, 0
        %v2265 = vsel %vm729, %v2230, 0
        %v2268 = vsel %vm729, %v2231, 0
        %v2271 = vsel %vm729, %v2232, 0
        %v2274 = vsel %vm729, %v2233, 0
        %v2277 = vsel %vm729, %v2234, 0
        %v2280 = vsel %vm729, %v2235, 0
        %v2283 = vsel %vm729, %v2236, 0
        %2285 = vmatprep.subr.bf16.mxu0 0
        %2286 = vmatpush1.bf16.msra.mxu0 0
        %2287 = vmatprep.subr.bf16.mxu0 0
        %2288 = vmatpush1.bf16.msra.mxu0 0
        %2289 = vmatprep.subr.bf16.mxu0 0
        %2290 = vmatpush1.bf16.msra.mxu0 0
        %2291 = vmatprep.subr.bf16.mxu0 0
        %2292 = vmatpush1.bf16.msra.mxu0 0
        %2293 = vmatprep.subr.bf16.mxu0 0
        %2294 = vmatpush1.bf16.msra.mxu0 %v2256
        %2295 = vmatprep.subr.bf16.mxu0 0
        %2296 = vmatpush1.bf16.msra.mxu0 %v2255
        %2297 = vmatprep.subr.bf16.mxu0 0
        %2298 = vmatpush1.bf16.msra.mxu0 %v2254
        %2299 = vmatprep.subr.bf16.mxu0 0
        %2300 = vmatpush1.bf16.msra.mxu0 %v2253
        %2301 = vmatprep.subr.bf16.mxu0 0
        %2302 = vmatpush2.bf16.msra.mxu0 0
        %2303 = vmatprep.subr.bf16.mxu0 0
        %2304 = vmatpush2.bf16.msra.mxu0 0
        %2305 = vmatprep.subr.bf16.mxu0 0
        %2306 = vmatpush2.bf16.msra.mxu0 0
        %2307 = vmatprep.subr.bf16.mxu0 0
        %2308 = vmatpush2.bf16.msra.mxu0 0
        %2309 = vmatprep.subr.bf16.mxu0 0
        %2310 = vmatpush2.bf16.msra.mxu0 0
        %2311 = vmatprep.subr.bf16.mxu0 0
        %2312 = vmatpush2.bf16.msra.mxu0 0
        %2313 = vmatprep.subr.bf16.mxu0 0
        %2314 = vmatpush2.bf16.msra.mxu0 0
        %2315 = vmatprep.subr.bf16.mxu0 0
        %2316 = vmatpush2.bf16.msra.mxu0 0
        %2317 = vmatprep.mubr.bf16.mxu0 0
        %2318 = vmatmul.mubr.bf16.gmra.mxu0 %v2262
        %v2319 = vpop.f32.mrf.mxu0
        %v2320 = vadd.f32 0.0, %v2319
        %v2321 = vpop.f32.mrf.mxu0
        %v2322 = vpop.f32.mrf.mxu0
        %v2323 = vadd.f32 0.0, %v2322
        %v2324 = vpop.f32.mrf.mxu0
        %2325 = vmatprep.mubr.bf16.mxu0 0
        %2326 = vmatmul.mubr.bf16.gmra.mxu0 %v2265
        %v2327 = vpop.f32.mrf.mxu0
        %v2328 = vadd.f32 0.0, %v2327
        %v2329 = vpop.f32.mrf.mxu0
        %v2330 = vpop.f32.mrf.mxu0
        %v2331 = vadd.f32 0.0, %v2330
        %v2332 = vpop.f32.mrf.mxu0
        %2333 = vmatprep.mubr.bf16.mxu0 0
        %2334 = vmatmul.mubr.bf16.gmra.mxu0 %v2268
        %v2335 = vpop.f32.mrf.mxu0
        %v2336 = vadd.f32 0.0, %v2335
        %v2337 = vpop.f32.mrf.mxu0
        %v2338 = vpop.f32.mrf.mxu0
        %v2339 = vadd.f32 0.0, %v2338
        %v2340 = vpop.f32.mrf.mxu0
        %2341 = vmatprep.mubr.bf16.mxu0 0
        %2342 = vmatmul.mubr.bf16.gmra.mxu0 %v2271
        %v2343 = vpop.f32.mrf.mxu0
        %v2344 = vadd.f32 0.0, %v2343
        %v2345 = vpop.f32.mrf.mxu0
        %v2346 = vpop.f32.mrf.mxu0
        %v2347 = vadd.f32 0.0, %v2346
        %v2348 = vpop.f32.mrf.mxu0
        %2349 = vmatprep.mubr.bf16.mxu0 0
        %2350 = vmatmul.mubr.bf16.gmra.mxu0 %v2274
        %v2351 = vpop.f32.mrf.mxu0
        %v2352 = vadd.f32 0.0, %v2351
        %v2353 = vpop.f32.mrf.mxu0
        %v2354 = vpop.f32.mrf.mxu0
        %v2355 = vadd.f32 0.0, %v2354
        %v2356 = vpop.f32.mrf.mxu0
        %2357 = vmatprep.mubr.bf16.mxu0 0
        %2358 = vmatmul.mubr.bf16.gmra.mxu0 %v2277
        %v2359 = vpop.f32.mrf.mxu0
        %v2360 = vadd.f32 0.0, %v2359
        %v2361 = vpop.f32.mrf.mxu0
        %v2362 = vpop.f32.mrf.mxu0
        %v2363 = vadd.f32 0.0, %v2362
        %v2364 = vpop.f32.mrf.mxu0
        %2365 = vmatprep.mubr.bf16.mxu0 0
        %2366 = vmatmul.mubr.bf16.gmra.mxu0 %v2280
        %v2367 = vpop.f32.mrf.mxu0
        %v2368 = vadd.f32 0.0, %v2367
        %v2369 = vpop.f32.mrf.mxu0
        %v2370 = vpop.f32.mrf.mxu0
        %v2371 = vadd.f32 0.0, %v2370
        %v2372 = vpop.f32.mrf.mxu0
        %2373 = vmatprep.mubr.bf16.mxu0 0
        %2374 = vmatmul.mubr.bf16.gmra.mxu0 %v2283
        %v2375 = vpop.f32.mrf.mxu0
        %v2376 = vadd.f32 0.0, %v2375
        %v2377 = vpop.f32.mrf.mxu0
        %v2378 = vpop.f32.mrf.mxu0
        %v2379 = vadd.f32 0.0, %v2378
        %v2380 = vpop.f32.mrf.mxu0
        %2381 = vdwg.mxu0
        %v2382 = vadd.f32 %v2155, %v2320
        %v2383 = vadd.f32 %v2156, %v2323
        %v2384 = vadd.f32 %v2157, %v2328
        %v2385 = vadd.f32 %v2158, %v2331
        %v2386 = vadd.f32 %v2159, %v2336
        %v2387 = vadd.f32 %v2160, %v2339
        %v2388 = vadd.f32 %v2161, %v2344
        %v2389 = vadd.f32 %v2162, %v2347
        %v2390 = vadd.f32 %v2163, %v2352
        %v2391 = vadd.f32 %v2164, %v2355
        %v2392 = vadd.f32 %v2165, %v2360
        %v2393 = vadd.f32 %v2166, %v2363
        %v2394 = vadd.f32 %v2167, %v2368
        %v2395 = vadd.f32 %v2168, %v2371
        %v2396 = vadd.f32 %v2169, %v2376
        %v2397 = vadd.f32 %v2170, %v2379
        %s2398 = scalar_lea.vmem %s586, 512 [#allocation2]
        %v2399 = vld [vmem:[%s2398] sm:$0xf]
        %v2400 = vld [vmem:[%s2398 + $0x4] sm:$0xf]
        %v2401 = vld [vmem:[%s2398 + $0x8] sm:$0xf]
        %v2402 = vld [vmem:[%s2398 + $0xc] sm:$0xf]
        %v2403 = vld [vmem:[%s2398 + $0x10] sm:$0xf]
        %v2404 = vld [vmem:[%s2398 + $0x14] sm:$0xf]
        %v2405 = vld [vmem:[%s2398 + $0x18] sm:$0xf]
        %v2406 = vld [vmem:[%s2398 + $0x1c] sm:$0xf]
        %v2407 = vld [vmem:[%s2398 + $0x20] sm:$0xf]
        %v2408 = vld [vmem:[%s2398 + $0x24] sm:$0xf]
        %v2409 = vld [vmem:[%s2398 + $0x28] sm:$0xf]
        %v2410 = vld [vmem:[%s2398 + $0x2c] sm:$0xf]
        %v2411 = vld [vmem:[%s2398 + $0x30] sm:$0xf]
        %v2412 = vld [vmem:[%s2398 + $0x34] sm:$0xf]
        %v2413 = vld [vmem:[%s2398 + $0x38] sm:$0xf]
        %v2414 = vld [vmem:[%s2398 + $0x3c] sm:$0xf]
        %s2415 = scalar_lea.vmem %s1, 256
        %v2416 = vld [vmem:[%s2415] sm:$0xf]
        %v2417 = vld [vmem:[%s2415 + $0x4] sm:$0xf]
        %v2418 = vld [vmem:[%s2415 + $0x8] sm:$0xf]
        %v2419 = vld [vmem:[%s2415 + $0xc] sm:$0xf]
        %v2420 = vld [vmem:[%s2415 + $0x10] sm:$0xf]
        %v2421 = vld [vmem:[%s2415 + $0x14] sm:$0xf]
        %v2422 = vld [vmem:[%s2415 + $0x18] sm:$0xf]
        %v2423 = vld [vmem:[%s2415 + $0x1c] sm:$0xf]
        %v2440 = vunpack.c.l.b16 %v2399
        %v2441 = vunpack.c.l.b16 %v2400
        %v2442 = vunpack.c.l.b16 %v2401
        %v2443 = vunpack.c.l.b16 %v2402
        %v2444 = vunpack.c.l.b16 %v2403
        %v2445 = vunpack.c.l.b16 %v2404
        %v2446 = vunpack.c.l.b16 %v2405
        %v2447 = vunpack.c.l.b16 %v2406
        %v2448 = vunpack.c.l.b16 %v2407
        %v2449 = vunpack.c.l.b16 %v2408
        %v2450 = vunpack.c.l.b16 %v2409
        %v2451 = vunpack.c.l.b16 %v2410
        %v2452 = vunpack.c.l.b16 %v2411
        %v2453 = vunpack.c.l.b16 %v2412
        %v2454 = vunpack.c.l.b16 %v2413
        %v2455 = vunpack.c.l.b16 %v2414
        %v2456 = vpack.c.b16 %v2441, %v2440
        %v2457 = vpack.c.b16 %v2443, %v2442
        %v2458 = vpack.c.b16 %v2445, %v2444
        %v2459 = vpack.c.b16 %v2447, %v2446
        %v2460 = vpack.c.b16 %v2449, %v2448
        %v2461 = vpack.c.b16 %v2451, %v2450
        %v2462 = vpack.c.b16 %v2453, %v2452
        %v2463 = vpack.c.b16 %v2455, %v2454
        %v2472 = vunpack.c.l.b16 %v2416
        %v2473 = vunpack.c.l.b16 %v2417
        %v2474 = vunpack.c.l.b16 %v2418
        %v2475 = vunpack.c.l.b16 %v2419
        %v2476 = vunpack.c.l.b16 %v2420
        %v2477 = vunpack.c.l.b16 %v2421
        %v2478 = vunpack.c.l.b16 %v2422
        %v2479 = vunpack.c.l.b16 %v2423
        %v2480 = vpack.c.b16 %v2473, %v2472
        %v2481 = vpack.c.b16 %v2475, %v2474
        %v2482 = vpack.c.b16 %v2477, %v2476
        %v2483 = vpack.c.b16 %v2479, %v2478
        %v2489 = vsel %vm729, %v2456, 0
        %v2492 = vsel %vm729, %v2457, 0
        %v2495 = vsel %vm729, %v2458, 0
        %v2498 = vsel %vm729, %v2459, 0
        %v2501 = vsel %vm729, %v2460, 0
        %v2504 = vsel %vm729, %v2461, 0
        %v2507 = vsel %vm729, %v2462, 0
        %v2510 = vsel %vm729, %v2463, 0
        %2512 = vmatprep.subr.bf16.mxu0 0
        %2513 = vmatpush1.bf16.msra.mxu0 0
        %2514 = vmatprep.subr.bf16.mxu0 0
        %2515 = vmatpush1.bf16.msra.mxu0 0
        %2516 = vmatprep.subr.bf16.mxu0 0
        %2517 = vmatpush1.bf16.msra.mxu0 0
        %2518 = vmatprep.subr.bf16.mxu0 0
        %2519 = vmatpush1.bf16.msra.mxu0 0
        %2520 = vmatprep.subr.bf16.mxu0 0
        %2521 = vmatpush1.bf16.msra.mxu0 %v2483
        %2522 = vmatprep.subr.bf16.mxu0 0
        %2523 = vmatpush1.bf16.msra.mxu0 %v2482
        %2524 = vmatprep.subr.bf16.mxu0 0
        %2525 = vmatpush1.bf16.msra.mxu0 %v2481
        %2526 = vmatprep.subr.bf16.mxu0 0
        %2527 = vmatpush1.bf16.msra.mxu0 %v2480
        %2528 = vmatprep.subr.bf16.mxu0 0
        %2529 = vmatpush2.bf16.msra.mxu0 0
        %2530 = vmatprep.subr.bf16.mxu0 0
        %2531 = vmatpush2.bf16.msra.mxu0 0
        %2532 = vmatprep.subr.bf16.mxu0 0
        %2533 = vmatpush2.bf16.msra.mxu0 0
        %2534 = vmatprep.subr.bf16.mxu0 0
        %2535 = vmatpush2.bf16.msra.mxu0 0
        %2536 = vmatprep.subr.bf16.mxu0 0
        %2537 = vmatpush2.bf16.msra.mxu0 0
        %2538 = vmatprep.subr.bf16.mxu0 0
        %2539 = vmatpush2.bf16.msra.mxu0 0
        %2540 = vmatprep.subr.bf16.mxu0 0
        %2541 = vmatpush2.bf16.msra.mxu0 0
        %2542 = vmatprep.subr.bf16.mxu0 0
        %2543 = vmatpush2.bf16.msra.mxu0 0
        %2544 = vmatprep.mubr.bf16.mxu0 0
        %2545 = vmatmul.mubr.bf16.gmra.mxu0 %v2489
        %v2546 = vpop.f32.mrf.mxu0
        %v2547 = vadd.f32 0.0, %v2546
        %v2548 = vpop.f32.mrf.mxu0
        %v2549 = vpop.f32.mrf.mxu0
        %v2550 = vadd.f32 0.0, %v2549
        %v2551 = vpop.f32.mrf.mxu0
        %2552 = vmatprep.mubr.bf16.mxu0 0
        %2553 = vmatmul.mubr.bf16.gmra.mxu0 %v2492
        %v2554 = vpop.f32.mrf.mxu0
        %v2555 = vadd.f32 0.0, %v2554
        %v2556 = vpop.f32.mrf.mxu0
        %v2557 = vpop.f32.mrf.mxu0
        %v2558 = vadd.f32 0.0, %v2557
        %v2559 = vpop.f32.mrf.mxu0
        %2560 = vmatprep.mubr.bf16.mxu0 0
        %2561 = vmatmul.mubr.bf16.gmra.mxu0 %v2495
        %v2562 = vpop.f32.mrf.mxu0
        %v2563 = vadd.f32 0.0, %v2562
        %v2564 = vpop.f32.mrf.mxu0
        %v2565 = vpop.f32.mrf.mxu0
        %v2566 = vadd.f32 0.0, %v2565
        %v2567 = vpop.f32.mrf.mxu0
        %2568 = vmatprep.mubr.bf16.mxu0 0
        %2569 = vmatmul.mubr.bf16.gmra.mxu0 %v2498
        %v2570 = vpop.f32.mrf.mxu0
        %v2571 = vadd.f32 0.0, %v2570
        %v2572 = vpop.f32.mrf.mxu0
        %v2573 = vpop.f32.mrf.mxu0
        %v2574 = vadd.f32 0.0, %v2573
        %v2575 = vpop.f32.mrf.mxu0
        %2576 = vmatprep.mubr.bf16.mxu0 0
        %2577 = vmatmul.mubr.bf16.gmra.mxu0 %v2501
        %v2578 = vpop.f32.mrf.mxu0
        %v2579 = vadd.f32 0.0, %v2578
        %v2580 = vpop.f32.mrf.mxu0
        %v2581 = vpop.f32.mrf.mxu0
        %v2582 = vadd.f32 0.0, %v2581
        %v2583 = vpop.f32.mrf.mxu0
        %2584 = vmatprep.mubr.bf16.mxu0 0
        %2585 = vmatmul.mubr.bf16.gmra.mxu0 %v2504
        %v2586 = vpop.f32.mrf.mxu0
        %v2587 = vadd.f32 0.0, %v2586
        %v2588 = vpop.f32.mrf.mxu0
        %v2589 = vpop.f32.mrf.mxu0
        %v2590 = vadd.f32 0.0, %v2589
        %v2591 = vpop.f32.mrf.mxu0
        %2592 = vmatprep.mubr.bf16.mxu0 0
        %2593 = vmatmul.mubr.bf16.gmra.mxu0 %v2507
        %v2594 = vpop.f32.mrf.mxu0
        %v2595 = vadd.f32 0.0, %v2594
        %v2596 = vpop.f32.mrf.mxu0
        %v2597 = vpop.f32.mrf.mxu0
        %v2598 = vadd.f32 0.0, %v2597
        %v2599 = vpop.f32.mrf.mxu0
        %2600 = vmatprep.mubr.bf16.mxu0 0
        %2601 = vmatmul.mubr.bf16.gmra.mxu0 %v2510
        %v2602 = vpop.f32.mrf.mxu0
        %v2603 = vadd.f32 0.0, %v2602
        %v2604 = vpop.f32.mrf.mxu0
        %v2605 = vpop.f32.mrf.mxu0
        %v2606 = vadd.f32 0.0, %v2605
        %v2607 = vpop.f32.mrf.mxu0
        %2608 = vdwg.mxu0
        %v2609 = vadd.f32 %v2382, %v2547
        %v2610 = vadd.f32 %v2383, %v2550
        %v2611 = vadd.f32 %v2384, %v2555
        %v2612 = vadd.f32 %v2385, %v2558
        %v2613 = vadd.f32 %v2386, %v2563
        %v2614 = vadd.f32 %v2387, %v2566
        %v2615 = vadd.f32 %v2388, %v2571
        %v2616 = vadd.f32 %v2389, %v2574
        %v2617 = vadd.f32 %v2390, %v2579
        %v2618 = vadd.f32 %v2391, %v2582
        %v2619 = vadd.f32 %v2392, %v2587
        %v2620 = vadd.f32 %v2393, %v2590
        %v2621 = vadd.f32 %v2394, %v2595
        %v2622 = vadd.f32 %v2395, %v2598
        %v2623 = vadd.f32 %v2396, %v2603
        %v2624 = vadd.f32 %v2397, %v2606
        %v2625 = vtanh.pop %v2609
        %v2626 = vtanh.pop %v2610
        %v2627 = vtanh.pop %v2611
        %v2628 = vtanh.pop %v2612
        %v2629 = vtanh.pop %v2613
        %v2630 = vtanh.pop %v2614
        %v2631 = vtanh.pop %v2615
        %v2632 = vtanh.pop %v2616
        %v2633 = vtanh.pop %v2617
        %v2634 = vtanh.pop %v2618
        %v2635 = vtanh.pop %v2619
        %v2636 = vtanh.pop %v2620
        %v2637 = vtanh.pop %v2621
        %v2638 = vtanh.pop %v2622
        %v2639 = vtanh.pop %v2623
        %v2640 = vtanh.pop %v2624
        %v2641 = vpack.c.bf16 %v2626, %v2625
        %v2642 = vpack.c.bf16 %v2628, %v2627
        %v2643 = vpack.c.bf16 %v2630, %v2629
        %v2644 = vpack.c.bf16 %v2632, %v2631
        %v2645 = vpack.c.bf16 %v2634, %v2633
        %v2646 = vpack.c.bf16 %v2636, %v2635
        %v2647 = vpack.c.bf16 %v2638, %v2637
        %v2648 = vpack.c.bf16 %v2640, %v2639
        %v2657 = vunpack.c.l.b16 %v2641
        %v2658 = vunpack.c.h.b16 %v2641
        %v2659 = vunpack.c.l.b16 %v2642
        %v2660 = vunpack.c.h.b16 %v2642
        %v2661 = vunpack.c.l.b16 %v2643
        %v2662 = vunpack.c.h.b16 %v2643
        %v2663 = vunpack.c.l.b16 %v2644
        %v2664 = vunpack.c.h.b16 %v2644
        %v2665 = vunpack.c.l.b16 %v2645
        %v2666 = vunpack.c.h.b16 %v2645
        %v2667 = vunpack.c.l.b16 %v2646
        %v2668 = vunpack.c.h.b16 %v2646
        %v2669 = vunpack.c.l.b16 %v2647
        %v2670 = vunpack.c.h.b16 %v2647
        %v2671 = vunpack.c.l.b16 %v2648
        %v2672 = vunpack.c.h.b16 %v2648
        %v2673 = vpack.c.b16 %v2657, %v2657
        %v2674 = vpack.c.b16 %v2658, %v2658
        %v2675 = vpack.c.b16 %v2659, %v2659
        %v2676 = vpack.c.b16 %v2660, %v2660
        %v2677 = vpack.c.b16 %v2661, %v2661
        %v2678 = vpack.c.b16 %v2662, %v2662
        %v2679 = vpack.c.b16 %v2663, %v2663
        %v2680 = vpack.c.b16 %v2664, %v2664
        %v2681 = vpack.c.b16 %v2665, %v2665
        %v2682 = vpack.c.b16 %v2666, %v2666
        %v2683 = vpack.c.b16 %v2667, %v2667
        %v2684 = vpack.c.b16 %v2668, %v2668
        %v2685 = vpack.c.b16 %v2669, %v2669
        %v2686 = vpack.c.b16 %v2670, %v2670
        %v2687 = vpack.c.b16 %v2671, %v2671
        %v2688 = vpack.c.b16 %v2672, %v2672
        %2705 = vst [vmem:[%s603] sm:$0xf] %v2673
        %2706 = vst [vmem:[%s603 + $0x4] sm:$0xf] %v2674
        %2707 = vst [vmem:[%s603 + $0x8] sm:$0xf] %v2675
        %2708 = vst [vmem:[%s603 + $0xc] sm:$0xf] %v2676
        %2709 = vst [vmem:[%s603 + $0x10] sm:$0xf] %v2677
        %2710 = vst [vmem:[%s603 + $0x14] sm:$0xf] %v2678
        %2711 = vst [vmem:[%s603 + $0x18] sm:$0xf] %v2679
        %2712 = vst [vmem:[%s603 + $0x1c] sm:$0xf] %v2680
        %2713 = vst [vmem:[%s603 + $0x20] sm:$0xf] %v2681
        %2714 = vst [vmem:[%s603 + $0x24] sm:$0xf] %v2682
        %2715 = vst [vmem:[%s603 + $0x28] sm:$0xf] %v2683
        %2716 = vst [vmem:[%s603 + $0x2c] sm:$0xf] %v2684
        %2717 = vst [vmem:[%s603 + $0x30] sm:$0xf] %v2685
        %2718 = vst [vmem:[%s603 + $0x34] sm:$0xf] %v2686
        %2719 = vst [vmem:[%s603 + $0x38] sm:$0xf] %v2687
        %2720 = vst [vmem:[%s603 + $0x3c] sm:$0xf] %v2688
        %s2721 = sand.u32 %s68, 1
        %s2722 = sand.u32 %s68, 1
        %s2723 = smul.addr %s2722, 64
        %s2724 = scalar_lea.vmem [#allocation3], %s2723
        // Predicated region
        $region91: #{generator_forward.5} parent=85 // pred_check
          %p2725 = pneg %p78
        $region92: #{generator_forward.5} parent=85 // pred_check_branch
          %2727 = sbr.rel (%p2725) target = $region94
        $region93: #{generator_forward.5} parent=85 // pred_region
          %s2728 = smul.u32 16, %s13
          %s2729 = ssub.s32 49, %s2728
          %p2730 = scmp.lt.s32.totalorder %s2729, 16
          %s2731 = scalar_select %p2730, %s2729, 16
          %s2732 = smul.u32 64, %s2731
          %p2733 = scmp.ne.s32.totalorder 0, %s2732
          %s2734 = smul.addr %s2728, 4
          %s2735 = scalar_lea.vmem %s2, %s2734
          // Predicated region
          $region95: #{generator_forward.5} parent=93 // pred_check
            %p2736 = pneg %p2733
          $region96: #{generator_forward.5} parent=93 // pred_check_branch
            %2738 = sbr.rel (%p2736) target = $region98
          $region97: #{generator_forward.5} parent=93 // pred_region
            // Predicated region
            $region99: #{generator_forward.5} parent=97 // pred_check
              _
            $region100: #{generator_forward.5} parent=97 // pred_check_branch
              %2740 = sbr.rel target = $region102
            $region101: #{generator_forward.5} parent=97 // pred_region
              // Predicated region
              $region121: #{generator_forward.5} parent=101 // pred_check
                _
              $region122: #{generator_forward.5} parent=101 // pred_check_branch
                %2820 = sbr.rel (0) target = $region124
              $region123: #{generator_forward.5} parent=101 // pred_region
                %s2822 = ssub.s32 16, 1
                %s2823 = sshrl.u32 %s2731, 4
                // While loop
                $region125: #{generator_forward.5} parent=123 // loop_pre_header
                  _
                $region126: #{generator_forward.5} parent=123 // loop_header
                  %s2825 = sphi 0, %s2827
                  %p2826 = scmp.ge.s32.totalorder %s2825, %s2823
                  %s2830 = sphi 0, %s2867
                  %s2831 = sphi %s2724, %s2870
                  %s2832 = sphi %s2735, %s2871
                $region127: #{generator_forward.5} parent=123 // loop_header_branch
                  %2829 = sbr.rel (%p2826) target = $region131
                $region128: #{generator_forward.5} parent=123 // loop_body
                  %v2833 = vld [vmem:[%s2831] sm:%s2822]
                  %2834 = vst [vmem:[%s2832] sm:%s2822] %v2833
                  %v2835 = vld [vmem:[%s2831 + $0x4] sm:%s2822]
                  %2836 = vst [vmem:[%s2832 + $0x4] sm:%s2822] %v2835
                  %v2837 = vld [vmem:[%s2831 + $0x8] sm:%s2822]
                  %2838 = vst [vmem:[%s2832 + $0x8] sm:%s2822] %v2837
                  %v2839 = vld [vmem:[%s2831 + $0xc] sm:%s2822]
                  %2840 = vst [vmem:[%s2832 + $0xc] sm:%s2822] %v2839
                  %v2841 = vld [vmem:[%s2831 + $0x10] sm:%s2822]
                  %2842 = vst [vmem:[%s2832 + $0x10] sm:%s2822] %v2841
                  %v2843 = vld [vmem:[%s2831 + $0x14] sm:%s2822]
                  %2844 = vst [vmem:[%s2832 + $0x14] sm:%s2822] %v2843
                  %v2845 = vld [vmem:[%s2831 + $0x18] sm:%s2822]
                  %2846 = vst [vmem:[%s2832 + $0x18] sm:%s2822] %v2845
                  %v2847 = vld [vmem:[%s2831 + $0x1c] sm:%s2822]
                  %2848 = vst [vmem:[%s2832 + $0x1c] sm:%s2822] %v2847
                  %v2849 = vld [vmem:[%s2831 + $0x20] sm:%s2822]
                  %2850 = vst [vmem:[%s2832 + $0x20] sm:%s2822] %v2849
                  %v2851 = vld [vmem:[%s2831 + $0x24] sm:%s2822]
                  %2852 = vst [vmem:[%s2832 + $0x24] sm:%s2822] %v2851
                  %v2853 = vld [vmem:[%s2831 + $0x28] sm:%s2822]
                  %2854 = vst [vmem:[%s2832 + $0x28] sm:%s2822] %v2853
                  %v2855 = vld [vmem:[%s2831 + $0x2c] sm:%s2822]
                  %2856 = vst [vmem:[%s2832 + $0x2c] sm:%s2822] %v2855
                  %v2857 = vld [vmem:[%s2831 + $0x30] sm:%s2822]
                  %2858 = vst [vmem:[%s2832 + $0x30] sm:%s2822] %v2857
                  %v2859 = vld [vmem:[%s2831 + $0x34] sm:%s2822]
                  %2860 = vst [vmem:[%s2832 + $0x34] sm:%s2822] %v2859
                  %v2861 = vld [vmem:[%s2831 + $0x38] sm:%s2822]
                  %2862 = vst [vmem:[%s2832 + $0x38] sm:%s2822] %v2861
                  %v2863 = vld [vmem:[%s2831 + $0x3c] sm:%s2822]
                  %2864 = vst [vmem:[%s2832 + $0x3c] sm:%s2822] %v2863
                  %s2865 = sadd.s32 1, %s2830
                  %p2866 = scmp.ge.s32.totalorder %s2865, %s2823
                  %s2867 = scalar_select %p2866, 0, %s2865
                  %s2868 = smul.u32 %s2867, 64
                  %s2869 = smul.u32 %s2867, 64
                  %s2870 = scalar_lea.vmem %s2724, %s2868 [#allocation3]
                  %s2871 = scalar_lea.vmem %s2735, %s2869
                $region129: #{generator_forward.5} parent=123 // loop_footer
                  %s2827 = sadd.s32 %s2825, 1
                $region130: #{generator_forward.5} parent=123 // loop_footer_branch
                  %2824 = sbr.rel target = $region126
                $region131: #{generator_forward.5} parent=123 // loop_exit
                  _
                %s2872 = sshrl.u32 %s2731, 4
                %s2873 = sand.u32 %s2731, 15
                %s2874 = smul.u32 %s2872, 16
                %s2875 = smul.u32 4, %s2874
                %s2876 = scalar_lea.vmem %s2724, %s2875 [#allocation3]
                %s2877 = smul.u32 4, %s2874
                %s2878 = scalar_lea.vmem %s2735, %s2877
                // While loop
                $region132: #{generator_forward.5} parent=123 // loop_pre_header
                  _
                $region133: #{generator_forward.5} parent=123 // loop_header
                  %s2880 = sphi 0, %s2882
                  %p2881 = scmp.ge.s32.totalorder %s2880, %s2873
                  %s2885 = sphi 0, %s2892
                  %s2886 = sphi %s2876, %s2895
                  %s2887 = sphi %s2878, %s2896
                $region134: #{generator_forward.5} parent=123 // loop_header_branch
                  %2884 = sbr.rel (%p2881) target = $region138
                $region135: #{generator_forward.5} parent=123 // loop_body
                  %v2888 = vld [vmem:[%s2886] sm:%s2822]
                  %2889 = vst [vmem:[%s2887] sm:%s2822] %v2888
                  %s2890 = sadd.s32 1, %s2885
                  %p2891 = scmp.ge.s32.totalorder %s2890, %s2873
                  %s2892 = scalar_select %p2891, 0, %s2890
                  %s2893 = smul.u32 %s2892, 4
                  %s2894 = smul.u32 %s2892, 4
                  %s2895 = scalar_lea.vmem %s2876, %s2893 [#allocation3]
                  %s2896 = scalar_lea.vmem %s2878, %s2894
                $region136: #{generator_forward.5} parent=123 // loop_footer
                  %s2882 = sadd.s32 %s2880, 1
                $region137: #{generator_forward.5} parent=123 // loop_footer_branch
                  %2879 = sbr.rel target = $region133
                $region138: #{generator_forward.5} parent=123 // loop_exit
                  _
              $region124: #{generator_forward.5} parent=101 // pred_fallthru
                _
            $region102: #{generator_forward.5} parent=97 // pred_fallthru
              _
            // Predicated region
            $region103: #{generator_forward.5} parent=97 // pred_check
              _
            $region104: #{generator_forward.5} parent=97 // pred_check_branch
              %2742 = sbr.rel (0) target = $region106
            $region105: #{generator_forward.5} parent=97 // pred_region
              %s2744 = ssub.s32 16, 1
              %s2745 = sshrl.u32 %s2731, 4
              // While loop
              $region107: #{generator_forward.5} parent=105 // loop_pre_header
                _
              $region108: #{generator_forward.5} parent=105 // loop_header
                %s2747 = sphi 0, %s2749
                %p2748 = scmp.ge.s32.totalorder %s2747, %s2745
                %s2752 = sphi 0, %s2789
                %s2753 = sphi %s2724, %s2792
                %s2754 = sphi %s2735, %s2793
              $region109: #{generator_forward.5} parent=105 // loop_header_branch
                %2751 = sbr.rel (%p2748) target = $region113
              $region110: #{generator_forward.5} parent=105 // loop_body
                %v2755 = vld [vmem:[%s2753] sm:%s2744]
                %2756 = vst [vmem:[%s2754] sm:%s2744] %v2755
                %v2757 = vld [vmem:[%s2753 + $0x4] sm:%s2744]
                %2758 = vst [vmem:[%s2754 + $0x4] sm:%s2744] %v2757
                %v2759 = vld [vmem:[%s2753 + $0x8] sm:%s2744]
                %2760 = vst [vmem:[%s2754 + $0x8] sm:%s2744] %v2759
                %v2761 = vld [vmem:[%s2753 + $0xc] sm:%s2744]
                %2762 = vst [vmem:[%s2754 + $0xc] sm:%s2744] %v2761
                %v2763 = vld [vmem:[%s2753 + $0x10] sm:%s2744]
                %2764 = vst [vmem:[%s2754 + $0x10] sm:%s2744] %v2763
                %v2765 = vld [vmem:[%s2753 + $0x14] sm:%s2744]
                %2766 = vst [vmem:[%s2754 + $0x14] sm:%s2744] %v2765
                %v2767 = vld [vmem:[%s2753 + $0x18] sm:%s2744]
                %2768 = vst [vmem:[%s2754 + $0x18] sm:%s2744] %v2767
                %v2769 = vld [vmem:[%s2753 + $0x1c] sm:%s2744]
                %2770 = vst [vmem:[%s2754 + $0x1c] sm:%s2744] %v2769
                %v2771 = vld [vmem:[%s2753 + $0x20] sm:%s2744]
                %2772 = vst [vmem:[%s2754 + $0x20] sm:%s2744] %v2771
                %v2773 = vld [vmem:[%s2753 + $0x24] sm:%s2744]
                %2774 = vst [vmem:[%s2754 + $0x24] sm:%s2744] %v2773
                %v2775 = vld [vmem:[%s2753 + $0x28] sm:%s2744]
                %2776 = vst [vmem:[%s2754 + $0x28] sm:%s2744] %v2775
                %v2777 = vld [vmem:[%s2753 + $0x2c] sm:%s2744]
                %2778 = vst [vmem:[%s2754 + $0x2c] sm:%s2744] %v2777
                %v2779 = vld [vmem:[%s2753 + $0x30] sm:%s2744]
                %2780 = vst [vmem:[%s2754 + $0x30] sm:%s2744] %v2779
                %v2781 = vld [vmem:[%s2753 + $0x34] sm:%s2744]
                %2782 = vst [vmem:[%s2754 + $0x34] sm:%s2744] %v2781
                %v2783 = vld [vmem:[%s2753 + $0x38] sm:%s2744]
                %2784 = vst [vmem:[%s2754 + $0x38] sm:%s2744] %v2783
                %v2785 = vld [vmem:[%s2753 + $0x3c] sm:%s2744]
                %2786 = vst [vmem:[%s2754 + $0x3c] sm:%s2744] %v2785
                %s2787 = sadd.s32 1, %s2752
                %p2788 = scmp.ge.s32.totalorder %s2787, %s2745
                %s2789 = scalar_select %p2788, 0, %s2787
                %s2790 = smul.u32 %s2789, 64
                %s2791 = smul.u32 %s2789, 64
                %s2792 = scalar_lea.vmem %s2724, %s2790 [#allocation3]
                %s2793 = scalar_lea.vmem %s2735, %s2791
              $region111: #{generator_forward.5} parent=105 // loop_footer
                %s2749 = sadd.s32 %s2747, 1
              $region112: #{generator_forward.5} parent=105 // loop_footer_branch
                %2746 = sbr.rel target = $region108
              $region113: #{generator_forward.5} parent=105 // loop_exit
                _
              %s2794 = sshrl.u32 %s2731, 4
              %s2795 = sand.u32 %s2731, 15
              %s2796 = smul.u32 %s2794, 16
              %s2797 = smul.u32 4, %s2796
              %s2798 = scalar_lea.vmem %s2724, %s2797 [#allocation3]
              %s2799 = smul.u32 4, %s2796
              %s2800 = scalar_lea.vmem %s2735, %s2799
              // While loop
              $region114: #{generator_forward.5} parent=105 // loop_pre_header
                _
              $region115: #{generator_forward.5} parent=105 // loop_header
                %s2802 = sphi 0, %s2804
                %p2803 = scmp.ge.s32.totalorder %s2802, %s2795
                %s2807 = sphi 0, %s2814
                %s2808 = sphi %s2798, %s2817
                %s2809 = sphi %s2800, %s2818
              $region116: #{generator_forward.5} parent=105 // loop_header_branch
                %2806 = sbr.rel (%p2803) target = $region120
              $region117: #{generator_forward.5} parent=105 // loop_body
                %v2810 = vld [vmem:[%s2808] sm:%s2744]
                %2811 = vst [vmem:[%s2809] sm:%s2744] %v2810
                %s2812 = sadd.s32 1, %s2807
                %p2813 = scmp.ge.s32.totalorder %s2812, %s2795
                %s2814 = scalar_select %p2813, 0, %s2812
                %s2815 = smul.u32 %s2814, 4
                %s2816 = smul.u32 %s2814, 4
                %s2817 = scalar_lea.vmem %s2798, %s2815 [#allocation3]
                %s2818 = scalar_lea.vmem %s2800, %s2816
              $region118: #{generator_forward.5} parent=105 // loop_footer
                %s2804 = sadd.s32 %s2802, 1
              $region119: #{generator_forward.5} parent=105 // loop_footer_branch
                %2801 = sbr.rel target = $region115
              $region120: #{generator_forward.5} parent=105 // loop_exit
                _
            $region106: #{generator_forward.5} parent=97 // pred_fallthru
              _
          $region98: #{generator_forward.5} parent=93 // pred_fallthru
            _
          %2897 = vnop
        $region94: #{generator_forward.5} parent=85 // pred_fallthru
          _
      $region86: #{generator_forward.5} parent=5 // pred_fallthru
        _
      %p2898 = scmp.le.s32.totalorder 2, %s8
      // Predicated region
      $region139: #{generator_forward.5} parent=5 // pred_check
        %p2899 = pneg %p2898
      $region140: #{generator_forward.5} parent=5 // pred_check_branch
        %2901 = sbr.rel (%p2899) target = $region142
      $region141: #{generator_forward.5} parent=5 // pred_region
        %s2902 = ssub.s32 %s8, 2
        // Predicated region
        $region143: #{generator_forward.5} parent=141 // pred_check
          %p2903 = pneg %p84
        $region144: #{generator_forward.5} parent=141 // pred_check_branch
          %2905 = sbr.rel (%p2903) target = $region146
        $region145: #{generator_forward.5} parent=141 // pred_region
          %s2906 = sand.u32 %s69, 1
          %s2907 = sand.u32 %s69, 1
          %s2908 = smul.addr %s2907, 64
          %s2909 = scalar_lea.vmem [#allocation3], %s2908
        $region146: #{generator_forward.5} parent=141 // pred_fallthru
          _
      $region142: #{generator_forward.5} parent=5 // pred_fallthru
        _
    $region6: #{generator_forward.5} parent=1 // loop_footer
      %s12 = sadd.s32 1, %s8
    $region7: #{generator_forward.5} parent=1 // loop_footer_branch
      %7 = sbr.rel target = $region3
    $region8: #{generator_forward.5} parent=1 // loop_exit
      _

</llo_original>
